<compile_context>
chip_gen: v7x
topology: tpu7x:2x2x1
jax: 0.10.0
libtpu: 0.0.40
codegen_flags: <defaults>
</compile_context>

<pallas_src>
import jax
import jax.numpy as jnp
from jax.experimental import pallas as pl
from jax.experimental.pallas import tpu as pltpu


# -----------------------------------------------------------------------------
# Fused kernel: per-point MLP -> global max pool -> MLP head -> padded logits.
# grid = (batch tiles,), fully parallel, no cross-step state.
# -----------------------------------------------------------------------------
def pointnet_fused_kernel(
    x_ref,                                   # (TB, N, Cin) f32  points-as-rows
    w1_ref, w2_ref, w3_ref, w4_ref, w5_ref,  # bf16: (Cin,64)(64,64)(64,64)(64,128)(128,E)
    bias_ref,                                # (8, 128) f32 packed folded-BN biases
    wl1_ref,                                 # (E, 256)  bf16  (BN6 scale folded in)
    b6_ref,                                  # (1, 256)  f32   folded BN6 bias
    wl2_ref,                                 # (256, 128) bf16  zero-padded to 128 cols
    bl2_ref,                                 # (1, 128)   f32   zero-padded
    out_ref,                                 # (TB, 128)  f32   lane-dense logits slab
):
    tb, n, cin = x_ref.shape
    emb = w5_ref.shape[1]

    # Every kernel_size=1 conv is a (M, Cin) @ (Cin, Cout) matmul, M = TB*N.
    h = x_ref[...].reshape(tb * n, cin).astype(jnp.bfloat16)

    def conv_bn_relu(h_bf16, w_ref, idx):
        cout = w_ref.shape[1]
        y = jnp.dot(h_bf16, w_ref[...], preferred_element_type=jnp.float32)
        return jnp.maximum(y + bias_ref[idx:idx + 1, :cout], 0.0)   # f32

    h = conv_bn_relu(h, w1_ref, 0)                       # (M, 64)  K=4 on MXU
    h = conv_bn_relu(h.astype(jnp.bfloat16), w2_ref, 1)  # (M, 64)
    h = conv_bn_relu(h.astype(jnp.bfloat16), w3_ref, 2)  # (M, 64)
    h = conv_bn_relu(h.astype(jnp.bfloat16), w4_ref, 3)  # (M, 128)
    h = conv_bn_relu(h.astype(jnp.bfloat16), w5_ref, 4)  # (M, E)

    # Global max pool over the points axis (single sublane reduce, no scratch).
    feat = jnp.max(h.reshape(tb, n, emb), axis=1)        # (TB, E) f32

    # Head: linear1 -> folded BN6 affine -> ReLU -> dropout(eval=no-op) -> linear2.
    g = jnp.dot(feat.astype(jnp.bfloat16), wl1_ref[...],
                preferred_element_type=jnp.float32)
    g = jnp.maximum(g + b6_ref[...], 0.0)                # (TB, 256)
    logits = jnp.dot(g.astype(jnp.bfloat16), wl2_ref[...],
                     preferred_element_type=jnp.float32) + bl2_ref[...]
    out_ref[...] = logits.astype(out_ref.dtype)          # (TB, 128) lane-dense


# -----------------------------------------------------------------------------
# Wrapper
# -----------------------------------------------------------------------------
def pointnet_forward(x_ncw, params, *, tb=None):
    """x_ncw: (B, Cin, N) f32 (PyTorch Conv1d layout). Returns logits (B, O) f32."""
    B, Cin, N = x_ncw.shape
    w1, w2, w3, w4, w5 = (params[k] for k in ("w1", "w2", "w3", "w4", "w5"))
    bias_slab, wl1, b6 = params["bias_slab"], params["wl1"], params["b6"]
    wl2p, bl2p, n_out = params["wl2"], params["bl2"], params["n_out"]
    Opad = wl2p.shape[1]

    # Points-as-rows layout for the kernel (tiny host-side transpose).
    x = jnp.transpose(x_ncw, (0, 2, 1))                  # (B, N, Cin)

    if tb is None:
        # >= 2 batch tiles so both v7x TensorCores get work; on v5e/v6e the
        # 2-step parallel grid is pipelined and essentially free.
        tb = B // 2 if (B % 2 == 0 and B >= 2) else B
    assert B % tb == 0, "B must be divisible by the batch tile"
    grid = (B // tb,)

    def const_spec(arr):
        nd = arr.ndim
        return pl.BlockSpec(arr.shape, lambda bt, _nd=nd: (0,) * _nd)

    out_padded = pl.pallas_call(
        pointnet_fused_kernel,
        out_shape=jax.ShapeDtypeStruct((B, Opad), jnp.float32),
        grid_spec=pltpu.PrefetchScalarGridSpec(
            num_scalar_prefetch=0,
            grid=grid,
            in_specs=[
                pl.BlockSpec((tb, N, Cin), lambda bt: (bt, 0, 0)),
                const_spec(w1), const_spec(w2), const_spec(w3),
                const_spec(w4), const_spec(w5), const_spec(bias_slab),
                const_spec(wl1), const_spec(b6), const_spec(wl2p),
                const_spec(bl2p),
            ],
            out_specs=pl.BlockSpec((tb, Opad), lambda bt: (bt, 0)),
        ),
        compiler_params=pltpu.CompilerParams(
            dimension_semantics=("parallel",),
        ),
    )(x, w1, w2, w3, w4, w5, bias_slab, wl1, b6, wl2p, bl2p)

    return out_padded[:, :n_out]


# -----------------------------------------------------------------------------
# Deterministic synthetic parameters (raw, PyTorch-like) + eval-mode folding
# -----------------------------------------------------------------------------
def make_raw_params(key, inp_channel, emb_dims, output_channels):
    dims = [inp_channel, 64, 64, 64, 128, emb_dims]
    keys = iter(jax.random.split(key, 32))

    conv_w = [jax.random.normal(next(keys), (cin, cout), jnp.float32) * 0.1
              for cin, cout in zip(dims[:-1], dims[1:])]

    def bn(c):
        gamma = 1.0 + 0.1 * jax.random.normal(next(keys), (c,), jnp.float32)
        beta = 0.1 * jax.random.normal(next(keys), (c,), jnp.float32)
        mean = 0.1 * jax.random.normal(next(keys), (c,), jnp.float32)
        var = 0.5 + jnp.abs(jax.random.normal(next(keys), (c,), jnp.float32))
        return gamma, beta, mean, var

    conv_bn = [bn(c) for c in dims[1:]]
    lin1_w = jax.random.normal(next(keys), (emb_dims, 256), jnp.float32) * 0.05
    bn6 = bn(256)
    lin2_w = jax.random.normal(next(keys), (256, output_channels), jnp.float32) * 0.05
    lin2_b = 0.1 * jax.random.normal(next(keys), (output_channels,), jnp.float32)
    return dict(conv_w=conv_w, conv_bn=conv_bn, lin1_w=lin1_w, bn6=bn6,
                lin2_w=lin2_w, lin2_b=lin2_b)


def fold_params(raw, matmul_dtype=jnp.bfloat16):
    """Fold eval-mode BN into weights, pack conv biases, pad head output to 128."""
    eps = 1e-5
    conv_w, biases = [], []
    for w, (g, b, m, v) in zip(raw["conv_w"], raw["conv_bn"]):
        s = g / jnp.sqrt(v + eps)
        conv_w.append((w * s[None, :]).astype(matmul_dtype))
        biases.append(b - m * s)

    width = max(128, max(int(b.shape[0]) for b in biases))
    width = ((width + 127) // 128) * 128
    slab = jnp.zeros((8, width), jnp.float32)
    for i, b in enumerate(biases):
        slab = slab.at[i, : b.shape[0]].set(b)

    g6, b6, m6, v6 = raw["bn6"]
    s6 = g6 / jnp.sqrt(v6 + eps)
    wl1 = (raw["lin1_w"] * s6[None, :]).astype(matmul_dtype)
    b6v = (b6 - m6 * s6)[None, :]

    n_out = raw["lin2_w"].shape[1]
    opad = ((n_out + 127) // 128) * 128
    wl2p = jnp.zeros((raw["lin2_w"].shape[0], opad), jnp.float32)
    wl2p = wl2p.at[:, :n_out].set(raw["lin2_w"]).astype(matmul_dtype)
    bl2p = jnp.zeros((1, opad), jnp.float32).at[0, :n_out].set(raw["lin2_b"])

    w1, w2, w3, w4, w5 = conv_w
    return dict(w1=w1, w2=w2, w3=w3, w4=w4, w5=w5, bias_slab=slab,
                wl1=wl1, b6=b6v, wl2=wl2p, bl2=bl2p, n_out=n_out)


# -----------------------------------------------------------------------------
# Pure-JAX f32 reference (raw params, eval-mode BN, dropout identity)
# -----------------------------------------------------------------------------
def pointnet_ref(x_bnc, raw):
    eps = 1e-5
    h = x_bnc
    for w, (g, b, m, v) in zip(raw["conv_w"], raw["conv_bn"]):
        y = jnp.einsum("bnc,cd->bnd", h, w)
        y = (y - m) / jnp.sqrt(v + eps) * g + b
        h = jnp.maximum(y, 0.0)
    feat = jnp.max(h, axis=1)                             # (B, E) max pool
    g6, b6, m6, v6 = raw["bn6"]
    y = feat @ raw["lin1_w"]
    y = (y - m6) / jnp.sqrt(v6 + eps) * g6 + b6
    y = jnp.maximum(y, 0.0)
    return y @ raw["lin2_w"] + raw["lin2_b"][None, :]


if __name__ == "__main__":
    # Small shapes consistent with the module's forward (PyTorch input is NCW).
    B, Cin, N = 16, 4, 256
    emb_dims, output_channels = 128, 16

    key = jax.random.PRNGKey(0)
    kx, kp = jax.random.split(key)
    x_ncw = jax.random.normal(kx, (B, Cin, N), jnp.float32)   # PyTorch (B, C, N)

    raw = make_raw_params(kp, Cin, emb_dims, output_channels)
    params = fold_params(raw)

    out = pointnet_forward(x_ncw, params)
    out = jax.block_until_ready(out)

    x_bnc = jnp.transpose(x_ncw, (0, 2, 1))
    ref = pointnet_ref(x_bnc, raw)
    assert out.shape == (B, output_channels)
    max_err = float(jnp.max(jnp.abs(out - ref)))
    # bf16 matmuls vs f32 reference -> loosened tolerance.
    assert jnp.allclose(out, ref, atol=3e-2, rtol=3e-2), f"mismatch vs ref: {max_err}"

    print("KERNEL_OK")
</pallas_src>

<mosaic_0001>
module attributes {stable_mosaic.version = 11 : i64} {
  func.func @pointnet_fused_kernel(%arg0: i32, %arg1: memref<8x256x4xf32, #tpu.memory_space<vmem>>, %arg2: memref<4x64xbf16, #tpu.memory_space<vmem>>, %arg3: memref<64x64xbf16, #tpu.memory_space<vmem>>, %arg4: memref<64x64xbf16, #tpu.memory_space<vmem>>, %arg5: memref<64x128xbf16, #tpu.memory_space<vmem>>, %arg6: memref<128x128xbf16, #tpu.memory_space<vmem>>, %arg7: memref<8x128xf32, #tpu.memory_space<vmem>>, %arg8: memref<128x256xbf16, #tpu.memory_space<vmem>>, %arg9: memref<1x256xf32, #tpu.memory_space<vmem>>, %arg10: memref<256x128xbf16, #tpu.memory_space<vmem>>, %arg11: memref<1x128xf32, #tpu.memory_space<vmem>>, %arg12: memref<8x128xf32, #tpu.memory_space<vmem>>) attributes {dimension_semantics = [#tpu.dimension_semantics<parallel>], iteration_bounds = array<i64: 2>, scalar_prefetch = 0 : i64, scratch_operands = 0 : i64, tpu.core_type = #tpu.core_type<tc>, window_params = [{transform_indices = @transform_0, window_bounds = array<i64: 8, 256, 4>}, {pipeline_mode = #tpu.pipeline_mode<synchronous>, transform_indices = @transform_1, window_bounds = array<i64: 4, 64>}, {pipeline_mode = #tpu.pipeline_mode<synchronous>, transform_indices = @transform_2, window_bounds = array<i64: 64, 64>}, {pipeline_mode = #tpu.pipeline_mode<synchronous>, transform_indices = @transform_3, window_bounds = array<i64: 64, 64>}, {pipeline_mode = #tpu.pipeline_mode<synchronous>, transform_indices = @transform_4, window_bounds = array<i64: 64, 128>}, {pipeline_mode = #tpu.pipeline_mode<synchronous>, transform_indices = @transform_5, window_bounds = array<i64: 128, 128>}, {pipeline_mode = #tpu.pipeline_mode<synchronous>, transform_indices = @transform_6, window_bounds = array<i64: 8, 128>}, {pipeline_mode = #tpu.pipeline_mode<synchronous>, transform_indices = @transform_7, window_bounds = array<i64: 128, 256>}, {pipeline_mode = #tpu.pipeline_mode<synchronous>, transform_indices = @transform_8, window_bounds = array<i64: 1, 256>}, {pipeline_mode = #tpu.pipeline_mode<synchronous>, transform_indices = @transform_9, window_bounds = array<i64: 256, 128>}, {pipeline_mode = #tpu.pipeline_mode<synchronous>, transform_indices = @transform_10, window_bounds = array<i64: 1, 128>}, {transform_indices = @transform_11, window_bounds = array<i64: 8, 128>}]} {
    %c0 = arith.constant 0 : index
    %c0_0 = arith.constant 0 : index
    %c0_1 = arith.constant 0 : index
    %0 = vector.load %arg1[%c0, %c0_0, %c0_1] : memref<8x256x4xf32, #tpu.memory_space<vmem>>, vector<8x256x4xf32>
    %1 = vector.shape_cast %0 : vector<8x256x4xf32> to vector<2048x4xf32>
    %2 = arith.truncf %1 : vector<2048x4xf32> to vector<2048x4xbf16>
    %c0_2 = arith.constant 0 : index
    %c0_3 = arith.constant 0 : index
    %3 = vector.load %arg2[%c0_2, %c0_3] : memref<4x64xbf16, #tpu.memory_space<vmem>>, vector<4x64xbf16>
    %cst = arith.constant dense<0.000000e+00> : vector<2048x64xf32>
    %4 = tpu.matmul %2, %3, %cst {dimension_numbers = #tpu.dot_dimension_numbers<[1], [0], [0], [1], [0, 0, 1, 1], [], []>} : vector<2048x4xbf16>, vector<4x64xbf16>, vector<2048x64xf32> -> vector<2048x64xf32>
    %c0_4 = arith.constant 0 : index
    %c0_5 = arith.constant 0 : index
    %5 = vector.load %arg7[%c0_4, %c0_5] : memref<8x128xf32, #tpu.memory_space<vmem>>, vector<1x64xf32>
    %6 = vector.broadcast %5 : vector<1x64xf32> to vector<2048x64xf32>
    %7 = arith.addf %4, %6 : vector<2048x64xf32>
    %cst_6 = arith.constant 0.000000e+00 : f32
    %8 = vector.broadcast %cst_6 : f32 to vector<2048x64xf32>
    %9 = arith.maximumf %7, %8 : vector<2048x64xf32>
    %10 = arith.truncf %9 : vector<2048x64xf32> to vector<2048x64xbf16>
    %c0_7 = arith.constant 0 : index
    %c0_8 = arith.constant 0 : index
    %11 = vector.load %arg3[%c0_7, %c0_8] : memref<64x64xbf16, #tpu.memory_space<vmem>>, vector<64x64xbf16>
    %cst_9 = arith.constant dense<0.000000e+00> : vector<2048x64xf32>
    %12 = tpu.matmul %10, %11, %cst_9 {dimension_numbers = #tpu.dot_dimension_numbers<[1], [0], [0], [1], [0, 0, 1, 1], [], []>} : vector<2048x64xbf16>, vector<64x64xbf16>, vector<2048x64xf32> -> vector<2048x64xf32>
    %c1 = arith.constant 1 : index
    %c0_10 = arith.constant 0 : index
    %13 = vector.load %arg7[%c1, %c0_10] : memref<8x128xf32, #tpu.memory_space<vmem>>, vector<1x64xf32>
    %14 = vector.broadcast %13 : vector<1x64xf32> to vector<2048x64xf32>
    %15 = arith.addf %12, %14 : vector<2048x64xf32>
    %cst_11 = arith.constant 0.000000e+00 : f32
    %16 = vector.broadcast %cst_11 : f32 to vector<2048x64xf32>
    %17 = arith.maximumf %15, %16 : vector<2048x64xf32>
    %18 = arith.truncf %17 : vector<2048x64xf32> to vector<2048x64xbf16>
    %c0_12 = arith.constant 0 : index
    %c0_13 = arith.constant 0 : index
    %19 = vector.load %arg4[%c0_12, %c0_13] : memref<64x64xbf16, #tpu.memory_space<vmem>>, vector<64x64xbf16>
    %cst_14 = arith.constant dense<0.000000e+00> : vector<2048x64xf32>
    %20 = tpu.matmul %18, %19, %cst_14 {dimension_numbers = #tpu.dot_dimension_numbers<[1], [0], [0], [1], [0, 0, 1, 1], [], []>} : vector<2048x64xbf16>, vector<64x64xbf16>, vector<2048x64xf32> -> vector<2048x64xf32>
    %c2 = arith.constant 2 : index
    %c0_15 = arith.constant 0 : index
    %21 = vector.load %arg7[%c2, %c0_15] : memref<8x128xf32, #tpu.memory_space<vmem>>, vector<1x64xf32>
    %22 = vector.broadcast %21 : vector<1x64xf32> to vector<2048x64xf32>
    %23 = arith.addf %20, %22 : vector<2048x64xf32>
    %cst_16 = arith.constant 0.000000e+00 : f32
    %24 = vector.broadcast %cst_16 : f32 to vector<2048x64xf32>
    %25 = arith.maximumf %23, %24 : vector<2048x64xf32>
    %26 = arith.truncf %25 : vector<2048x64xf32> to vector<2048x64xbf16>
    %c0_17 = arith.constant 0 : index
    %c0_18 = arith.constant 0 : index
    %27 = vector.load %arg5[%c0_17, %c0_18] : memref<64x128xbf16, #tpu.memory_space<vmem>>, vector<64x128xbf16>
    %cst_19 = arith.constant dense<0.000000e+00> : vector<2048x128xf32>
    %28 = tpu.matmul %26, %27, %cst_19 {dimension_numbers = #tpu.dot_dimension_numbers<[1], [0], [0], [1], [0, 0, 1, 1], [], []>} : vector<2048x64xbf16>, vector<64x128xbf16>, vector<2048x128xf32> -> vector<2048x128xf32>
    %c3 = arith.constant 3 : index
    %c0_20 = arith.constant 0 : index
    %29 = vector.load %arg7[%c3, %c0_20] : memref<8x128xf32, #tpu.memory_space<vmem>>, vector<1x128xf32>
    %30 = vector.broadcast %29 : vector<1x128xf32> to vector<2048x128xf32>
    %31 = arith.addf %28, %30 : vector<2048x128xf32>
    %cst_21 = arith.constant 0.000000e+00 : f32
    %32 = vector.broadcast %cst_21 : f32 to vector<2048x128xf32>
    %33 = arith.maximumf %31, %32 : vector<2048x128xf32>
    %34 = arith.truncf %33 : vector<2048x128xf32> to vector<2048x128xbf16>
    %c0_22 = arith.constant 0 : index
    %c0_23 = arith.constant 0 : index
    %35 = vector.load %arg6[%c0_22, %c0_23] : memref<128x128xbf16, #tpu.memory_space<vmem>>, vector<128x128xbf16>
    %cst_24 = arith.constant dense<0.000000e+00> : vector<2048x128xf32>
    %36 = tpu.matmul %34, %35, %cst_24 {dimension_numbers = #tpu.dot_dimension_numbers<[1], [0], [0], [1], [0, 0, 1, 1], [], []>} : vector<2048x128xbf16>, vector<128x128xbf16>, vector<2048x128xf32> -> vector<2048x128xf32>
    %c4 = arith.constant 4 : index
    %c0_25 = arith.constant 0 : index
    %37 = vector.load %arg7[%c4, %c0_25] : memref<8x128xf32, #tpu.memory_space<vmem>>, vector<1x128xf32>
    %38 = vector.broadcast %37 : vector<1x128xf32> to vector<2048x128xf32>
    %39 = arith.addf %36, %38 : vector<2048x128xf32>
    %cst_26 = arith.constant 0.000000e+00 : f32
    %40 = vector.broadcast %cst_26 : f32 to vector<2048x128xf32>
    %41 = arith.maximumf %39, %40 : vector<2048x128xf32>
    %42 = vector.shape_cast %41 : vector<2048x128xf32> to vector<8x256x128xf32>
    %cst_27 = arith.constant dense<0xFF800000> : vector<8x128xf32>
    %43 = vector.multi_reduction <maximumf>, %42, %cst_27 [1] : vector<8x256x128xf32> to vector<8x128xf32>
    %44 = arith.truncf %43 : vector<8x128xf32> to vector<8x128xbf16>
    %c0_28 = arith.constant 0 : index
    %c0_29 = arith.constant 0 : index
    %45 = vector.load %arg8[%c0_28, %c0_29] : memref<128x256xbf16, #tpu.memory_space<vmem>>, vector<128x256xbf16>
    %cst_30 = arith.constant dense<0.000000e+00> : vector<8x256xf32>
    %46 = tpu.matmul %44, %45, %cst_30 {dimension_numbers = #tpu.dot_dimension_numbers<[1], [0], [0], [1], [0, 0, 1, 1], [], []>} : vector<8x128xbf16>, vector<128x256xbf16>, vector<8x256xf32> -> vector<8x256xf32>
    %c0_31 = arith.constant 0 : index
    %c0_32 = arith.constant 0 : index
    %47 = vector.load %arg9[%c0_31, %c0_32] : memref<1x256xf32, #tpu.memory_space<vmem>>, vector<1x256xf32>
    %48 = vector.broadcast %47 : vector<1x256xf32> to vector<8x256xf32>
    %49 = arith.addf %46, %48 : vector<8x256xf32>
    %cst_33 = arith.constant 0.000000e+00 : f32
    %50 = vector.broadcast %cst_33 : f32 to vector<8x256xf32>
    %51 = arith.maximumf %49, %50 : vector<8x256xf32>
    %52 = arith.truncf %51 : vector<8x256xf32> to vector<8x256xbf16>
    %c0_34 = arith.constant 0 : index
    %c0_35 = arith.constant 0 : index
    %53 = vector.load %arg10[%c0_34, %c0_35] : memref<256x128xbf16, #tpu.memory_space<vmem>>, vector<256x128xbf16>
    %cst_36 = arith.constant dense<0.000000e+00> : vector<8x128xf32>
    %54 = tpu.matmul %52, %53, %cst_36 {dimension_numbers = #tpu.dot_dimension_numbers<[1], [0], [0], [1], [0, 0, 1, 1], [], []>} : vector<8x256xbf16>, vector<256x128xbf16>, vector<8x128xf32> -> vector<8x128xf32>
    %c0_37 = arith.constant 0 : index
    %c0_38 = arith.constant 0 : index
    %55 = vector.load %arg11[%c0_37, %c0_38] : memref<1x128xf32, #tpu.memory_space<vmem>>, vector<1x128xf32>
    %56 = vector.broadcast %55 : vector<1x128xf32> to vector<8x128xf32>
    %57 = arith.addf %54, %56 : vector<8x128xf32>
    %c0_39 = arith.constant 0 : index
    %c0_40 = arith.constant 0 : index
    %58 = vector.load %arg12[%c0_39, %c0_40] : memref<8x128xf32, #tpu.memory_space<vmem>>, vector<8x128xf32>
    tpu.vector_store %arg12[%c0_39, %c0_40], %57 {strides = array<i32>} : memref<8x128xf32, #tpu.memory_space<vmem>>, vector<8x128xf32>,
    return
  }
  func.func @transform_0(%arg0: i32) -> (i32, i32, i32) {
    %c0_i32 = arith.constant 0 : i32
    %c0_i32_0 = arith.constant 0 : i32
    %c0_i32_1 = arith.constant 0 : i32
    return %arg0, %c0_i32, %c0_i32_0 : i32, i32, i32
  }
  func.func @transform_1(%arg0: i32) -> (i32, i32) {
    %c0_i32 = arith.constant 0 : i32
    %c0_i32_0 = arith.constant 0 : i32
    %c0_i32_1 = arith.constant 0 : i32
    return %c0_i32, %c0_i32_0 : i32, i32
  }
  func.func @transform_2(%arg0: i32) -> (i32, i32) {
    %c0_i32 = arith.constant 0 : i32
    %c0_i32_0 = arith.constant 0 : i32
    %c0_i32_1 = arith.constant 0 : i32
    return %c0_i32, %c0_i32_0 : i32, i32
  }
  func.func @transform_3(%arg0: i32) -> (i32, i32) {
    %c0_i32 = arith.constant 0 : i32
    %c0_i32_0 = arith.constant 0 : i32
    %c0_i32_1 = arith.constant 0 : i32
    return %c0_i32, %c0_i32_0 : i32, i32
  }
  func.func @transform_4(%arg0: i32) -> (i32, i32) {
    %c0_i32 = arith.constant 0 : i32
    %c0_i32_0 = arith.constant 0 : i32
    %c0_i32_1 = arith.constant 0 : i32
    return %c0_i32, %c0_i32_0 : i32, i32
  }
  func.func @transform_5(%arg0: i32) -> (i32, i32) {
    %c0_i32 = arith.constant 0 : i32
    %c0_i32_0 = arith.constant 0 : i32
    %c0_i32_1 = arith.constant 0 : i32
    return %c0_i32, %c0_i32_0 : i32, i32
  }
  func.func @transform_6(%arg0: i32) -> (i32, i32) {
    %c0_i32 = arith.constant 0 : i32
    %c0_i32_0 = arith.constant 0 : i32
    %c0_i32_1 = arith.constant 0 : i32
    return %c0_i32, %c0_i32_0 : i32, i32
  }
  func.func @transform_7(%arg0: i32) -> (i32, i32) {
    %c0_i32 = arith.constant 0 : i32
    %c0_i32_0 = arith.constant 0 : i32
    %c0_i32_1 = arith.constant 0 : i32
    return %c0_i32, %c0_i32_0 : i32, i32
  }
  func.func @transform_8(%arg0: i32) -> (i32, i32) {
    %c0_i32 = arith.constant 0 : i32
    %c0_i32_0 = arith.constant 0 : i32
    %c0_i32_1 = arith.constant 0 : i32
    return %c0_i32, %c0_i32_0 : i32, i32
  }
  func.func @transform_9(%arg0: i32) -> (i32, i32) {
    %c0_i32 = arith.constant 0 : i32
    %c0_i32_0 = arith.constant 0 : i32
    %c0_i32_1 = arith.constant 0 : i32
    return %c0_i32, %c0_i32_0 : i32, i32
  }
  func.func @transform_10(%arg0: i32) -> (i32, i32) {
    %c0_i32 = arith.constant 0 : i32
    %c0_i32_0 = arith.constant 0 : i32
    %c0_i32_1 = arith.constant 0 : i32
    return %c0_i32, %c0_i32_0 : i32, i32
  }
  func.func @transform_11(%arg0: i32) -> (i32, i32) {
    %c0_i32 = arith.constant 0 : i32
    %c0_i32_0 = arith.constant 0 : i32
    return %arg0, %c0_i32 : i32, i32
  }
}

</mosaic_0001>

<llo_original>
// kernel: tpu_custom_call.1
$region0: #{tpu_custom_call.1}
  #allocation0 [shape = 'u32[]', space=smem, size = 0x4, offset = 0x4, fixed_abs, tag = 'smem constant byte address 0x4 - core index']
  #allocation1 [shape = 'u32[144,128]{1,0:T(1,128)}', space=vmem, size = 0x12000, scoped, tag = 'internal scratch']
  %s0 = inlined_call_operand.vmem [shape: f32[16,256,4], index: 0, kind: input, shape index: {}]
  %s1 = inlined_call_operand.vmem [shape: bf16[4,64], index: 1, kind: input, shape index: {}]
  %s2 = inlined_call_operand.vmem [shape: bf16[64,64], index: 2, kind: input, shape index: {}]
  %s3 = inlined_call_operand.vmem [shape: bf16[64,64], index: 3, kind: input, shape index: {}]
  %s4 = inlined_call_operand.vmem [shape: bf16[64,128], index: 4, kind: input, shape index: {}]
  %s5 = inlined_call_operand.vmem [shape: bf16[128,128], index: 5, kind: input, shape index: {}]
  %s6 = inlined_call_operand.vmem [shape: f32[8,128], index: 6, kind: input, shape index: {}]
  %s7 = inlined_call_operand.vmem [shape: bf16[128,256], index: 7, kind: input, shape index: {}]
  %s8 = inlined_call_operand.vmem [shape: f32[1,256], index: 8, kind: input, shape index: {}]
  %s9 = inlined_call_operand.vmem [shape: bf16[256,128], index: 9, kind: input, shape index: {}]
  %s10 = inlined_call_operand.vmem [shape: f32[1,128], index: 10, kind: input, shape index: {}]
  %s11 = inlined_call_operand.hbm [shape: f32[16,128], index: 11, kind: output, shape index: {}]
  %s12 = sld [smem:[#allocation0]]
  $region77: #{tpu_custom_call.1} parent=0
    _
  %s14 = ssub.s32 1, %s12
  %s15 = scalar_select 0, %s14, %s12
  $region1: #{tpu_custom_call.1} parent=0
    #allocation2 [shape = 'u8[8192]{0}', space=vmem, size = 0x2000, scoped, tag = 'output window, operand 0']
    #allocation3 [shape = 's32[2]{0}', space=sflag, size = 0x8, scoped, tag = 'scoped memory for tpu_custom_call.1']
    %16 = vsyncpa [#allocation3], 0
    %s17 = scalar_lea.sflag [#allocation3], 1
    %18 = vsyncpa %s17, 0
    loop: start=0, step=1, limit=4
    $region2: #{tpu_custom_call.1} parent=1 // loop_pre_header
      _
    $region3: #{tpu_custom_call.1} parent=1 // loop_header
      %s20 = sphi 0, %s24
      %p21 = scmp.ge.s32.totalorder %s20, 4
      %s30 = sphi 0, %s32
      %s33 = sphi 0, %s30
      %s34 = sphi 0, %s33
      %s50 = sphi 0, %s34
      %s54 = sphi 0, %s54
      %s56 = sphi 0, %s54
      %s57 = sphi 0, %s56
      %s71 = sphi 0, %s57
      %s75 = sphi 0, %s75
      %s77 = sphi 0, %s75
      %s78 = sphi 0, %s77
      %s92 = sphi 0, %s78
      %s96 = sphi 0, %s96
      %s98 = sphi 0, %s96
      %s99 = sphi 0, %s98
      %s113 = sphi 0, %s99
      %s117 = sphi 0, %s117
      %s119 = sphi 0, %s117
      %s120 = sphi 0, %s119
      %s134 = sphi 0, %s120
      %s138 = sphi 0, %s138
      %s140 = sphi 0, %s138
      %s141 = sphi 0, %s140
      %s155 = sphi 0, %s141
      %s159 = sphi 0, %s159
      %s161 = sphi 0, %s159
      %s162 = sphi 0, %s161
      %s176 = sphi 0, %s162
      %s180 = sphi 0, %s180
      %s182 = sphi 0, %s180
      %s183 = sphi 0, %s182
      %s197 = sphi 0, %s183
      %s201 = sphi 0, %s201
      %s203 = sphi 0, %s201
      %s204 = sphi 0, %s203
      %s218 = sphi 0, %s204
      %s222 = sphi 0, %s222
      %s224 = sphi 0, %s222
      %s225 = sphi 0, %s224
      %s239 = sphi 0, %s225
      %s243 = sphi 0, %s243
      %s245 = sphi 0, %s243
      %s246 = sphi 0, %s245
      %s260 = sphi 0, %s246
      %s266 = sphi 0, %s268
      %s269 = sphi 0, %s266
      %s270 = sphi 0, %s269
      %s286 = sphi 0, %s270
    $region4: #{tpu_custom_call.1} parent=1 // loop_header_branch
      %23 = sbr.rel (%p21) target = $region8
    $region5: #{tpu_custom_call.1} parent=1 // loop_body
      %s25 = ssub.s32 %s20, 1
      %s26 = ssub.s32 %s20, 2
      %s27 = sadd.s32 %s20, 1
      %s28 = ssub.s32 %s20, %s27
      %p29 = scmp.eq.s32.totalorder %s28, 0
      %s31 = sadd.s32 %s30, 1
      %s32 = scalar_select %p29, %s30, %s31
      %p35 = pneg %p29
      %p36 = scmp.eq.s32.totalorder %s20, 1
      %p37 = por %p35, %p36
      %p38 = scmp.ne.s32.totalorder %s30, %s33
      %p39 = scmp.eq.s32.totalorder %s20, 0
      %p40 = por %p38, %p39
      %p41 = scmp.ne.s32.totalorder %s30, %s33
      %p42 = scmp.eq.s32.totalorder %s25, 1
      %p43 = por %p41, %p42
      %p44 = scmp.ne.s32.totalorder %s33, %s34
      %p45 = scmp.eq.s32.totalorder %s25, 0
      %p46 = por %p44, %p45
      %p47 = scmp.ne.s32.totalorder %s33, %s34
      %p48 = scmp.eq.s32.totalorder %s26, 1
      %p49 = por %p47, %p48
      %p51 = scmp.ne.s32.totalorder %s34, %s50
      %p52 = scmp.eq.s32.totalorder %s26, 0
      %p53 = por %p51, %p52
      %s55 = sadd.s32 %s54, 1
      %p58 = scmp.eq.s32.totalorder %s20, 1
      %p59 = scmp.ne.s32.totalorder %s54, %s56
      %p60 = scmp.eq.s32.totalorder %s20, 0
      %p61 = por %p59, %p60
      %p62 = scmp.ne.s32.totalorder %s54, %s56
      %p63 = scmp.eq.s32.totalorder %s25, 1
      %p64 = por %p62, %p63
      %p65 = scmp.ne.s32.totalorder %s56, %s57
      %p66 = scmp.eq.s32.totalorder %s25, 0
      %p67 = por %p65, %p66
      %p68 = scmp.ne.s32.totalorder %s56, %s57
      %p69 = scmp.eq.s32.totalorder %s26, 1
      %p70 = por %p68, %p69
      %p72 = scmp.ne.s32.totalorder %s57, %s71
      %p73 = scmp.eq.s32.totalorder %s26, 0
      %p74 = por %p72, %p73
      %s76 = sadd.s32 %s75, 1
      %p79 = scmp.eq.s32.totalorder %s20, 1
      %p80 = scmp.ne.s32.totalorder %s75, %s77
      %p81 = scmp.eq.s32.totalorder %s20, 0
      %p82 = por %p80, %p81
      %p83 = scmp.ne.s32.totalorder %s75, %s77
      %p84 = scmp.eq.s32.totalorder %s25, 1
      %p85 = por %p83, %p84
      %p86 = scmp.ne.s32.totalorder %s77, %s78
      %p87 = scmp.eq.s32.totalorder %s25, 0
      %p88 = por %p86, %p87
      %p89 = scmp.ne.s32.totalorder %s77, %s78
      %p90 = scmp.eq.s32.totalorder %s26, 1
      %p91 = por %p89, %p90
      %p93 = scmp.ne.s32.totalorder %s78, %s92
      %p94 = scmp.eq.s32.totalorder %s26, 0
      %p95 = por %p93, %p94
      %s97 = sadd.s32 %s96, 1
      %p100 = scmp.eq.s32.totalorder %s20, 1
      %p101 = scmp.ne.s32.totalorder %s96, %s98
      %p102 = scmp.eq.s32.totalorder %s20, 0
      %p103 = por %p101, %p102
      %p104 = scmp.ne.s32.totalorder %s96, %s98
      %p105 = scmp.eq.s32.totalorder %s25, 1
      %p106 = por %p104, %p105
      %p107 = scmp.ne.s32.totalorder %s98, %s99
      %p108 = scmp.eq.s32.totalorder %s25, 0
      %p109 = por %p107, %p108
      %p110 = scmp.ne.s32.totalorder %s98, %s99
      %p111 = scmp.eq.s32.totalorder %s26, 1
      %p112 = por %p110, %p111
      %p114 = scmp.ne.s32.totalorder %s99, %s113
      %p115 = scmp.eq.s32.totalorder %s26, 0
      %p116 = por %p114, %p115
      %s118 = sadd.s32 %s117, 1
      %p121 = scmp.eq.s32.totalorder %s20, 1
      %p122 = scmp.ne.s32.totalorder %s117, %s119
      %p123 = scmp.eq.s32.totalorder %s20, 0
      %p124 = por %p122, %p123
      %p125 = scmp.ne.s32.totalorder %s117, %s119
      %p126 = scmp.eq.s32.totalorder %s25, 1
      %p127 = por %p125, %p126
      %p128 = scmp.ne.s32.totalorder %s119, %s120
      %p129 = scmp.eq.s32.totalorder %s25, 0
      %p130 = por %p128, %p129
      %p131 = scmp.ne.s32.totalorder %s119, %s120
      %p132 = scmp.eq.s32.totalorder %s26, 1
      %p133 = por %p131, %p132
      %p135 = scmp.ne.s32.totalorder %s120, %s134
      %p136 = scmp.eq.s32.totalorder %s26, 0
      %p137 = por %p135, %p136
      %s139 = sadd.s32 %s138, 1
      %p142 = scmp.eq.s32.totalorder %s20, 1
      %p143 = scmp.ne.s32.totalorder %s138, %s140
      %p144 = scmp.eq.s32.totalorder %s20, 0
      %p145 = por %p143, %p144
      %p146 = scmp.ne.s32.totalorder %s138, %s140
      %p147 = scmp.eq.s32.totalorder %s25, 1
      %p148 = por %p146, %p147
      %p149 = scmp.ne.s32.totalorder %s140, %s141
      %p150 = scmp.eq.s32.totalorder %s25, 0
      %p151 = por %p149, %p150
      %p152 = scmp.ne.s32.totalorder %s140, %s141
      %p153 = scmp.eq.s32.totalorder %s26, 1
      %p154 = por %p152, %p153
      %p156 = scmp.ne.s32.totalorder %s141, %s155
      %p157 = scmp.eq.s32.totalorder %s26, 0
      %p158 = por %p156, %p157
      %s160 = sadd.s32 %s159, 1
      %p163 = scmp.eq.s32.totalorder %s20, 1
      %p164 = scmp.ne.s32.totalorder %s159, %s161
      %p165 = scmp.eq.s32.totalorder %s20, 0
      %p166 = por %p164, %p165
      %p167 = scmp.ne.s32.totalorder %s159, %s161
      %p168 = scmp.eq.s32.totalorder %s25, 1
      %p169 = por %p167, %p168
      %p170 = scmp.ne.s32.totalorder %s161, %s162
      %p171 = scmp.eq.s32.totalorder %s25, 0
      %p172 = por %p170, %p171
      %p173 = scmp.ne.s32.totalorder %s161, %s162
      %p174 = scmp.eq.s32.totalorder %s26, 1
      %p175 = por %p173, %p174
      %p177 = scmp.ne.s32.totalorder %s162, %s176
      %p178 = scmp.eq.s32.totalorder %s26, 0
      %p179 = por %p177, %p178
      %s181 = sadd.s32 %s180, 1
      %p184 = scmp.eq.s32.totalorder %s20, 1
      %p185 = scmp.ne.s32.totalorder %s180, %s182
      %p186 = scmp.eq.s32.totalorder %s20, 0
      %p187 = por %p185, %p186
      %p188 = scmp.ne.s32.totalorder %s180, %s182
      %p189 = scmp.eq.s32.totalorder %s25, 1
      %p190 = por %p188, %p189
      %p191 = scmp.ne.s32.totalorder %s182, %s183
      %p192 = scmp.eq.s32.totalorder %s25, 0
      %p193 = por %p191, %p192
      %p194 = scmp.ne.s32.totalorder %s182, %s183
      %p195 = scmp.eq.s32.totalorder %s26, 1
      %p196 = por %p194, %p195
      %p198 = scmp.ne.s32.totalorder %s183, %s197
      %p199 = scmp.eq.s32.totalorder %s26, 0
      %p200 = por %p198, %p199
      %s202 = sadd.s32 %s201, 1
      %p205 = scmp.eq.s32.totalorder %s20, 1
      %p206 = scmp.ne.s32.totalorder %s201, %s203
      %p207 = scmp.eq.s32.totalorder %s20, 0
      %p208 = por %p206, %p207
      %p209 = scmp.ne.s32.totalorder %s201, %s203
      %p210 = scmp.eq.s32.totalorder %s25, 1
      %p211 = por %p209, %p210
      %p212 = scmp.ne.s32.totalorder %s203, %s204
      %p213 = scmp.eq.s32.totalorder %s25, 0
      %p214 = por %p212, %p213
      %p215 = scmp.ne.s32.totalorder %s203, %s204
      %p216 = scmp.eq.s32.totalorder %s26, 1
      %p217 = por %p215, %p216
      %p219 = scmp.ne.s32.totalorder %s204, %s218
      %p220 = scmp.eq.s32.totalorder %s26, 0
      %p221 = por %p219, %p220
      %s223 = sadd.s32 %s222, 1
      %p226 = scmp.eq.s32.totalorder %s20, 1
      %p227 = scmp.ne.s32.totalorder %s222, %s224
      %p228 = scmp.eq.s32.totalorder %s20, 0
      %p229 = por %p227, %p228
      %p230 = scmp.ne.s32.totalorder %s222, %s224
      %p231 = scmp.eq.s32.totalorder %s25, 1
      %p232 = por %p230, %p231
      %p233 = scmp.ne.s32.totalorder %s224, %s225
      %p234 = scmp.eq.s32.totalorder %s25, 0
      %p235 = por %p233, %p234
      %p236 = scmp.ne.s32.totalorder %s224, %s225
      %p237 = scmp.eq.s32.totalorder %s26, 1
      %p238 = por %p236, %p237
      %p240 = scmp.ne.s32.totalorder %s225, %s239
      %p241 = scmp.eq.s32.totalorder %s26, 0
      %p242 = por %p240, %p241
      %s244 = sadd.s32 %s243, 1
      %p247 = scmp.eq.s32.totalorder %s20, 1
      %p248 = scmp.ne.s32.totalorder %s243, %s245
      %p249 = scmp.eq.s32.totalorder %s20, 0
      %p250 = por %p248, %p249
      %p251 = scmp.ne.s32.totalorder %s243, %s245
      %p252 = scmp.eq.s32.totalorder %s25, 1
      %p253 = por %p251, %p252
      %p254 = scmp.ne.s32.totalorder %s245, %s246
      %p255 = scmp.eq.s32.totalorder %s25, 0
      %p256 = por %p254, %p255
      %p257 = scmp.ne.s32.totalorder %s245, %s246
      %p258 = scmp.eq.s32.totalorder %s26, 1
      %p259 = por %p257, %p258
      %p261 = scmp.ne.s32.totalorder %s246, %s260
      %p262 = scmp.eq.s32.totalorder %s26, 0
      %p263 = por %p261, %p262
      %s264 = ssub.s32 %s20, %s27
      %p265 = scmp.eq.s32.totalorder %s264, 0
      %s267 = sadd.s32 %s266, 1
      %s268 = scalar_select %p265, %s266, %s267
      %p271 = pneg %p265
      %p272 = scmp.eq.s32.totalorder %s20, 1
      %p273 = por %p271, %p272
      %p274 = scmp.ne.s32.totalorder %s266, %s269
      %p275 = scmp.eq.s32.totalorder %s20, 0
      %p276 = por %p274, %p275
      %p277 = scmp.ne.s32.totalorder %s266, %s269
      %p278 = scmp.eq.s32.totalorder %s25, 1
      %p279 = por %p277, %p278
      %p280 = scmp.ne.s32.totalorder %s269, %s270
      %p281 = scmp.eq.s32.totalorder %s25, 0
      %p282 = por %p280, %p281
      %p283 = scmp.ne.s32.totalorder %s269, %s270
      %p284 = scmp.eq.s32.totalorder %s26, 1
      %p285 = por %p283, %p284
      %p287 = scmp.ne.s32.totalorder %s270, %s286
      %p288 = scmp.eq.s32.totalorder %s26, 0
      %p289 = por %p287, %p288
      %p290 = scmp.le.s32.totalorder 1, %s20
      %p291 = scmp.lt.s32.totalorder %s20, 3
      %p292 = pnand %p290, %p291
      %p293 = pneg %p292
      // Predicated region
      $region9: #{tpu_custom_call.1} parent=5 // pred_check
        _
      $region10: #{tpu_custom_call.1} parent=5 // pred_check_branch
        %295 = sbr.rel (%p292) target = $region12
      $region11: #{tpu_custom_call.1} parent=5 // pred_region
        %s296 = ssub.s32 %s20, 1
        // Predicated region
        $region13: #{tpu_custom_call.1} parent=11 // pred_check
          %p297 = pneg %p67
        $region14: #{tpu_custom_call.1} parent=11 // pred_check_branch
          %299 = sbr.rel (%p297) target = $region16
        $region15: #{tpu_custom_call.1} parent=11 // pred_region
          _
        $region16: #{tpu_custom_call.1} parent=11 // pred_fallthru
          _
        // Predicated region
        $region17: #{tpu_custom_call.1} parent=11 // pred_check
          %p300 = pneg %p88
        $region18: #{tpu_custom_call.1} parent=11 // pred_check_branch
          %302 = sbr.rel (%p300) target = $region20
        $region19: #{tpu_custom_call.1} parent=11 // pred_region
          _
        $region20: #{tpu_custom_call.1} parent=11 // pred_fallthru
          _
        // Predicated region
        $region21: #{tpu_custom_call.1} parent=11 // pred_check
          %p303 = pneg %p109
        $region22: #{tpu_custom_call.1} parent=11 // pred_check_branch
          %305 = sbr.rel (%p303) target = $region24
        $region23: #{tpu_custom_call.1} parent=11 // pred_region
          _
        $region24: #{tpu_custom_call.1} parent=11 // pred_fallthru
          _
        // Predicated region
        $region25: #{tpu_custom_call.1} parent=11 // pred_check
          %p306 = pneg %p130
        $region26: #{tpu_custom_call.1} parent=11 // pred_check_branch
          %308 = sbr.rel (%p306) target = $region28
        $region27: #{tpu_custom_call.1} parent=11 // pred_region
          _
        $region28: #{tpu_custom_call.1} parent=11 // pred_fallthru
          _
        // Predicated region
        $region29: #{tpu_custom_call.1} parent=11 // pred_check
          %p309 = pneg %p151
        $region30: #{tpu_custom_call.1} parent=11 // pred_check_branch
          %311 = sbr.rel (%p309) target = $region32
        $region31: #{tpu_custom_call.1} parent=11 // pred_region
          _
        $region32: #{tpu_custom_call.1} parent=11 // pred_fallthru
          _
        // Predicated region
        $region33: #{tpu_custom_call.1} parent=11 // pred_check
          %p312 = pneg %p172
        $region34: #{tpu_custom_call.1} parent=11 // pred_check_branch
          %314 = sbr.rel (%p312) target = $region36
        $region35: #{tpu_custom_call.1} parent=11 // pred_region
          _
        $region36: #{tpu_custom_call.1} parent=11 // pred_fallthru
          _
        // Predicated region
        $region37: #{tpu_custom_call.1} parent=11 // pred_check
          %p315 = pneg %p193
        $region38: #{tpu_custom_call.1} parent=11 // pred_check_branch
          %317 = sbr.rel (%p315) target = $region40
        $region39: #{tpu_custom_call.1} parent=11 // pred_region
          _
        $region40: #{tpu_custom_call.1} parent=11 // pred_fallthru
          _
        // Predicated region
        $region41: #{tpu_custom_call.1} parent=11 // pred_check
          %p318 = pneg %p214
        $region42: #{tpu_custom_call.1} parent=11 // pred_check_branch
          %320 = sbr.rel (%p318) target = $region44
        $region43: #{tpu_custom_call.1} parent=11 // pred_region
          _
        $region44: #{tpu_custom_call.1} parent=11 // pred_fallthru
          _
        // Predicated region
        $region45: #{tpu_custom_call.1} parent=11 // pred_check
          %p321 = pneg %p235
        $region46: #{tpu_custom_call.1} parent=11 // pred_check_branch
          %323 = sbr.rel (%p321) target = $region48
        $region47: #{tpu_custom_call.1} parent=11 // pred_region
          _
        $region48: #{tpu_custom_call.1} parent=11 // pred_fallthru
          _
        // Predicated region
        $region49: #{tpu_custom_call.1} parent=11 // pred_check
          %p324 = pneg %p256
        $region50: #{tpu_custom_call.1} parent=11 // pred_check_branch
          %326 = sbr.rel (%p324) target = $region52
        $region51: #{tpu_custom_call.1} parent=11 // pred_region
          _
        $region52: #{tpu_custom_call.1} parent=11 // pred_fallthru
          _
      $region12: #{tpu_custom_call.1} parent=5 // pred_fallthru
        _
      %p327 = scmp.lt.s32.totalorder %s20, 2
      // Predicated region
      $region53: #{tpu_custom_call.1} parent=5 // pred_check
        %p328 = pneg %p327
      $region54: #{tpu_custom_call.1} parent=5 // pred_check_branch
        %330 = sbr.rel (%p328) target = $region56
      $region55: #{tpu_custom_call.1} parent=5 // pred_region
        // Predicated region
        $region57: #{tpu_custom_call.1} parent=55 // pred_check
          %p331 = pneg %p40
        $region58: #{tpu_custom_call.1} parent=55 // pred_check_branch
          %333 = sbr.rel (%p331) target = $region60
        $region59: #{tpu_custom_call.1} parent=55 // pred_region
          %s334 = smul.u32 8, %s20
          %p335 = scmp.lt.s32.totalorder %s334, 15
          %s336 = scalar_select %p335, %s334, 15
          %s337 = smul.addr %s336, 32
          %s338 = smul.addr %s337, 8
          %s339 = scalar_lea.vmem %s0, %s338
          %s340 = smul.u32 8, %s20
        $region60: #{tpu_custom_call.1} parent=55 // pred_fallthru
          _
      $region56: #{tpu_custom_call.1} parent=5 // pred_fallthru
        _
      %p341 = scmp.le.s32.totalorder 1, %s20
      %p342 = scmp.lt.s32.totalorder %s20, 3
      %p343 = pnand %p341, %p342
      %p344 = pneg %p343
      // Predicated region
      $region61: #{tpu_custom_call.1} parent=5 // pred_check
        _
      $region62: #{tpu_custom_call.1} parent=5 // pred_check_branch
        %346 = sbr.rel (%p343) target = $region64
      $region63: #{tpu_custom_call.1} parent=5 // pred_region
        %s347 = ssub.s32 %s20, 1
        %s348 = smul.u32 8, %s25
        %p349 = scmp.lt.s32.totalorder %s348, 15
        %s350 = scalar_select %p349, %s348, 15
        %s351 = smul.addr %s350, 32
        %s352 = smul.addr %s351, 8
        %s353 = scalar_lea.vmem %s0, %s352
        %p354 = pneg %p46
        %p355 = pneg %p43
        %p356 = pneg %p67
        %p357 = pneg %p64
        %p358 = pneg %p88
        %p359 = pneg %p85
        %p360 = pneg %p109
        %p361 = pneg %p106
        %p362 = pneg %p130
        %p363 = pneg %p127
        %p364 = pneg %p151
        %p365 = pneg %p148
        %p366 = pneg %p172
        %p367 = pneg %p169
        %p368 = pneg %p193
        %p369 = pneg %p190
        %p370 = pneg %p214
        %p371 = pneg %p211
        %p372 = pneg %p235
        %p373 = pneg %p232
        %p374 = pneg %p256
        %p375 = pneg %p253
        %p376 = pneg %p282
        %p377 = pneg %p279
        %s378 = sand.u32 %s269, 1
        %s379 = scalar_lea.sflag [#allocation3], %s378
        %s380 = sand.u32 %s269, 1
        %s381 = smul.addr %s380, 8
        %s382 = scalar_lea.vmem [#allocation2], %s381
        %s383 = smul.u32 8, %s25
        %p384 = scmp.lt.s32.totalorder %s383, 15
        %s385 = scalar_select %p384, %s383, 15
        %s386 = smul.addr %s385, 32
        %s387 = smul.addr %s386, 8
        %s388 = scalar_lea.vmem %s0, %s387
        %s389 = smul.u32 8, %s25
        %v391 = vld [vmem:[%s388] sm:$0xff]
        %v392 = vld [vmem:[%s388 + $0x8] sm:$0xff]
        %v393 = vld [vmem:[%s388 + $0x10] sm:$0xff]
        %v394 = vld [vmem:[%s388 + $0x18] sm:$0xff]
        %v395 = vld [vmem:[%s388 + $0x20] sm:$0xff]
        %v396 = vld [vmem:[%s388 + $0x28] sm:$0xff]
        %v397 = vld [vmem:[%s388 + $0x30] sm:$0xff]
        %v398 = vld [vmem:[%s388 + $0x38] sm:$0xff]
        %v399 = vld [vmem:[%s388 + $0x40] sm:$0xff]
        %v400 = vld [vmem:[%s388 + $0x48] sm:$0xff]
        %v401 = vld [vmem:[%s388 + $0x50] sm:$0xff]
        %v402 = vld [vmem:[%s388 + $0x58] sm:$0xff]
        %v403 = vld [vmem:[%s388 + $0x60] sm:$0xff]
        %v404 = vld [vmem:[%s388 + $0x68] sm:$0xff]
        %v405 = vld [vmem:[%s388 + $0x70] sm:$0xff]
        %v406 = vld [vmem:[%s388 + $0x78] sm:$0xff]
        %v407 = vld [vmem:[%s388 + $0x80] sm:$0xff]
        %v408 = vld [vmem:[%s388 + $0x88] sm:$0xff]
        %v409 = vld [vmem:[%s388 + $0x90] sm:$0xff]
        %v410 = vld [vmem:[%s388 + $0x98] sm:$0xff]
        %v411 = vld [vmem:[%s388 + $0xa0] sm:$0xff]
        %v412 = vld [vmem:[%s388 + $0xa8] sm:$0xff]
        %v413 = vld [vmem:[%s388 + $0xb0] sm:$0xff]
        %v414 = vld [vmem:[%s388 + $0xb8] sm:$0xff]
        %v415 = vld [vmem:[%s388 + $0xc0] sm:$0xff]
        %v416 = vld [vmem:[%s388 + $0xc8] sm:$0xff]
        %v417 = vld [vmem:[%s388 + $0xd0] sm:$0xff]
        %v418 = vld [vmem:[%s388 + $0xd8] sm:$0xff]
        %v419 = vld [vmem:[%s388 + $0xe0] sm:$0xff]
        %v420 = vld [vmem:[%s388 + $0xe8] sm:$0xff]
        %v421 = vld [vmem:[%s388 + $0xf0] sm:$0xff]
        %v422 = vld [vmem:[%s388 + $0xf8] sm:$0xff]
        %v423 = vld [vmem:[%s388 + $0x100] sm:$0xff]
        %v424 = vld [vmem:[%s388 + $0x108] sm:$0xff]
        %v425 = vld [vmem:[%s388 + $0x110] sm:$0xff]
        %v426 = vld [vmem:[%s388 + $0x118] sm:$0xff]
        %v427 = vld [vmem:[%s388 + $0x120] sm:$0xff]
        %v428 = vld [vmem:[%s388 + $0x128] sm:$0xff]
        %v429 = vld [vmem:[%s388 + $0x130] sm:$0xff]
        %v430 = vld [vmem:[%s388 + $0x138] sm:$0xff]
        %v431 = vld [vmem:[%s388 + $0x140] sm:$0xff]
        %v432 = vld [vmem:[%s388 + $0x148] sm:$0xff]
        %v433 = vld [vmem:[%s388 + $0x150] sm:$0xff]
        %v434 = vld [vmem:[%s388 + $0x158] sm:$0xff]
        %v435 = vld [vmem:[%s388 + $0x160] sm:$0xff]
        %v436 = vld [vmem:[%s388 + $0x168] sm:$0xff]
        %v437 = vld [vmem:[%s388 + $0x170] sm:$0xff]
        %v438 = vld [vmem:[%s388 + $0x178] sm:$0xff]
        %v439 = vld [vmem:[%s388 + $0x180] sm:$0xff]
        %v440 = vld [vmem:[%s388 + $0x188] sm:$0xff]
        %v441 = vld [vmem:[%s388 + $0x190] sm:$0xff]
        %v442 = vld [vmem:[%s388 + $0x198] sm:$0xff]
        %v443 = vld [vmem:[%s388 + $0x1a0] sm:$0xff]
        %v444 = vld [vmem:[%s388 + $0x1a8] sm:$0xff]
        %v445 = vld [vmem:[%s388 + $0x1b0] sm:$0xff]
        %v446 = vld [vmem:[%s388 + $0x1b8] sm:$0xff]
        %v447 = vld [vmem:[%s388 + $0x1c0] sm:$0xff]
        %v448 = vld [vmem:[%s388 + $0x1c8] sm:$0xff]
        %v449 = vld [vmem:[%s388 + $0x1d0] sm:$0xff]
        %v450 = vld [vmem:[%s388 + $0x1d8] sm:$0xff]
        %v451 = vld [vmem:[%s388 + $0x1e0] sm:$0xff]
        %v452 = vld [vmem:[%s388 + $0x1e8] sm:$0xff]
        %v453 = vld [vmem:[%s388 + $0x1f0] sm:$0xff]
        %v454 = vld [vmem:[%s388 + $0x1f8] sm:$0xff]
        %v455 = vld [vmem:[%s388 + $0x200] sm:$0xff]
        %v456 = vld [vmem:[%s388 + $0x208] sm:$0xff]
        %v457 = vld [vmem:[%s388 + $0x210] sm:$0xff]
        %v458 = vld [vmem:[%s388 + $0x218] sm:$0xff]
        %v459 = vld [vmem:[%s388 + $0x220] sm:$0xff]
        %v460 = vld [vmem:[%s388 + $0x228] sm:$0xff]
        %v461 = vld [vmem:[%s388 + $0x230] sm:$0xff]
        %v462 = vld [vmem:[%s388 + $0x238] sm:$0xff]
        %v463 = vld [vmem:[%s388 + $0x240] sm:$0xff]
        %v464 = vld [vmem:[%s388 + $0x248] sm:$0xff]
        %v465 = vld [vmem:[%s388 + $0x250] sm:$0xff]
        %v466 = vld [vmem:[%s388 + $0x258] sm:$0xff]
        %v467 = vld [vmem:[%s388 + $0x260] sm:$0xff]
        %v468 = vld [vmem:[%s388 + $0x268] sm:$0xff]
        %v469 = vld [vmem:[%s388 + $0x270] sm:$0xff]
        %v470 = vld [vmem:[%s388 + $0x278] sm:$0xff]
        %v471 = vld [vmem:[%s388 + $0x280] sm:$0xff]
        %v472 = vld [vmem:[%s388 + $0x288] sm:$0xff]
        %v473 = vld [vmem:[%s388 + $0x290] sm:$0xff]
        %v474 = vld [vmem:[%s388 + $0x298] sm:$0xff]
        %v475 = vld [vmem:[%s388 + $0x2a0] sm:$0xff]
        %v476 = vld [vmem:[%s388 + $0x2a8] sm:$0xff]
        %v477 = vld [vmem:[%s388 + $0x2b0] sm:$0xff]
        %v478 = vld [vmem:[%s388 + $0x2b8] sm:$0xff]
        %v479 = vld [vmem:[%s388 + $0x2c0] sm:$0xff]
        %v480 = vld [vmem:[%s388 + $0x2c8] sm:$0xff]
        %v481 = vld [vmem:[%s388 + $0x2d0] sm:$0xff]
        %v482 = vld [vmem:[%s388 + $0x2d8] sm:$0xff]
        %v483 = vld [vmem:[%s388 + $0x2e0] sm:$0xff]
        %v484 = vld [vmem:[%s388 + $0x2e8] sm:$0xff]
        %v485 = vld [vmem:[%s388 + $0x2f0] sm:$0xff]
        %v486 = vld [vmem:[%s388 + $0x2f8] sm:$0xff]
        %v487 = vld [vmem:[%s388 + $0x300] sm:$0xff]
        %v488 = vld [vmem:[%s388 + $0x308] sm:$0xff]
        %v489 = vld [vmem:[%s388 + $0x310] sm:$0xff]
        %v490 = vld [vmem:[%s388 + $0x318] sm:$0xff]
        %v491 = vld [vmem:[%s388 + $0x320] sm:$0xff]
        %v492 = vld [vmem:[%s388 + $0x328] sm:$0xff]
        %v493 = vld [vmem:[%s388 + $0x330] sm:$0xff]
        %v494 = vld [vmem:[%s388 + $0x338] sm:$0xff]
        %v495 = vld [vmem:[%s388 + $0x340] sm:$0xff]
        %v496 = vld [vmem:[%s388 + $0x348] sm:$0xff]
        %v497 = vld [vmem:[%s388 + $0x350] sm:$0xff]
        %v498 = vld [vmem:[%s388 + $0x358] sm:$0xff]
        %v499 = vld [vmem:[%s388 + $0x360] sm:$0xff]
        %v500 = vld [vmem:[%s388 + $0x368] sm:$0xff]
        %v501 = vld [vmem:[%s388 + $0x370] sm:$0xff]
        %v502 = vld [vmem:[%s388 + $0x378] sm:$0xff]
        %v503 = vld [vmem:[%s388 + $0x380] sm:$0xff]
        %v504 = vld [vmem:[%s388 + $0x388] sm:$0xff]
        %v505 = vld [vmem:[%s388 + $0x390] sm:$0xff]
        %v506 = vld [vmem:[%s388 + $0x398] sm:$0xff]
        %v507 = vld [vmem:[%s388 + $0x3a0] sm:$0xff]
        %v508 = vld [vmem:[%s388 + $0x3a8] sm:$0xff]
        %v509 = vld [vmem:[%s388 + $0x3b0] sm:$0xff]
        %v510 = vld [vmem:[%s388 + $0x3b8] sm:$0xff]
        %v511 = vld [vmem:[%s388 + $0x3c0] sm:$0xff]
        %v512 = vld [vmem:[%s388 + $0x3c8] sm:$0xff]
        %v513 = vld [vmem:[%s388 + $0x3d0] sm:$0xff]
        %v514 = vld [vmem:[%s388 + $0x3d8] sm:$0xff]
        %v515 = vld [vmem:[%s388 + $0x3e0] sm:$0xff]
        %v516 = vld [vmem:[%s388 + $0x3e8] sm:$0xff]
        %v517 = vld [vmem:[%s388 + $0x3f0] sm:$0xff]
        %v518 = vld [vmem:[%s388 + $0x3f8] sm:$0xff]
        %v519 = vld [vmem:[%s388 + $0x400] sm:$0xff]
        %v520 = vld [vmem:[%s388 + $0x408] sm:$0xff]
        %v521 = vld [vmem:[%s388 + $0x410] sm:$0xff]
        %v522 = vld [vmem:[%s388 + $0x418] sm:$0xff]
        %v523 = vld [vmem:[%s388 + $0x420] sm:$0xff]
        %v524 = vld [vmem:[%s388 + $0x428] sm:$0xff]
        %v525 = vld [vmem:[%s388 + $0x430] sm:$0xff]
        %v526 = vld [vmem:[%s388 + $0x438] sm:$0xff]
        %v527 = vld [vmem:[%s388 + $0x440] sm:$0xff]
        %v528 = vld [vmem:[%s388 + $0x448] sm:$0xff]
        %v529 = vld [vmem:[%s388 + $0x450] sm:$0xff]
        %v530 = vld [vmem:[%s388 + $0x458] sm:$0xff]
        %v531 = vld [vmem:[%s388 + $0x460] sm:$0xff]
        %v532 = vld [vmem:[%s388 + $0x468] sm:$0xff]
        %v533 = vld [vmem:[%s388 + $0x470] sm:$0xff]
        %v534 = vld [vmem:[%s388 + $0x478] sm:$0xff]
        %v535 = vld [vmem:[%s388 + $0x480] sm:$0xff]
        %v536 = vld [vmem:[%s388 + $0x488] sm:$0xff]
        %v537 = vld [vmem:[%s388 + $0x490] sm:$0xff]
        %v538 = vld [vmem:[%s388 + $0x498] sm:$0xff]
        %v539 = vld [vmem:[%s388 + $0x4a0] sm:$0xff]
        %v540 = vld [vmem:[%s388 + $0x4a8] sm:$0xff]
        %v541 = vld [vmem:[%s388 + $0x4b0] sm:$0xff]
        %v542 = vld [vmem:[%s388 + $0x4b8] sm:$0xff]
        %v543 = vld [vmem:[%s388 + $0x4c0] sm:$0xff]
        %v544 = vld [vmem:[%s388 + $0x4c8] sm:$0xff]
        %v545 = vld [vmem:[%s388 + $0x4d0] sm:$0xff]
        %v546 = vld [vmem:[%s388 + $0x4d8] sm:$0xff]
        %v547 = vld [vmem:[%s388 + $0x4e0] sm:$0xff]
        %v548 = vld [vmem:[%s388 + $0x4e8] sm:$0xff]
        %v549 = vld [vmem:[%s388 + $0x4f0] sm:$0xff]
        %v550 = vld [vmem:[%s388 + $0x4f8] sm:$0xff]
        %v551 = vld [vmem:[%s388 + $0x500] sm:$0xff]
        %v552 = vld [vmem:[%s388 + $0x508] sm:$0xff]
        %v553 = vld [vmem:[%s388 + $0x510] sm:$0xff]
        %v554 = vld [vmem:[%s388 + $0x518] sm:$0xff]
        %v555 = vld [vmem:[%s388 + $0x520] sm:$0xff]
        %v556 = vld [vmem:[%s388 + $0x528] sm:$0xff]
        %v557 = vld [vmem:[%s388 + $0x530] sm:$0xff]
        %v558 = vld [vmem:[%s388 + $0x538] sm:$0xff]
        %v559 = vld [vmem:[%s388 + $0x540] sm:$0xff]
        %v560 = vld [vmem:[%s388 + $0x548] sm:$0xff]
        %v561 = vld [vmem:[%s388 + $0x550] sm:$0xff]
        %v562 = vld [vmem:[%s388 + $0x558] sm:$0xff]
        %v563 = vld [vmem:[%s388 + $0x560] sm:$0xff]
        %v564 = vld [vmem:[%s388 + $0x568] sm:$0xff]
        %v565 = vld [vmem:[%s388 + $0x570] sm:$0xff]
        %v566 = vld [vmem:[%s388 + $0x578] sm:$0xff]
        %v567 = vld [vmem:[%s388 + $0x580] sm:$0xff]
        %v568 = vld [vmem:[%s388 + $0x588] sm:$0xff]
        %v569 = vld [vmem:[%s388 + $0x590] sm:$0xff]
        %v570 = vld [vmem:[%s388 + $0x598] sm:$0xff]
        %v571 = vld [vmem:[%s388 + $0x5a0] sm:$0xff]
        %v572 = vld [vmem:[%s388 + $0x5a8] sm:$0xff]
        %v573 = vld [vmem:[%s388 + $0x5b0] sm:$0xff]
        %v574 = vld [vmem:[%s388 + $0x5b8] sm:$0xff]
        %v575 = vld [vmem:[%s388 + $0x5c0] sm:$0xff]
        %v576 = vld [vmem:[%s388 + $0x5c8] sm:$0xff]
        %v577 = vld [vmem:[%s388 + $0x5d0] sm:$0xff]
        %v578 = vld [vmem:[%s388 + $0x5d8] sm:$0xff]
        %v579 = vld [vmem:[%s388 + $0x5e0] sm:$0xff]
        %v580 = vld [vmem:[%s388 + $0x5e8] sm:$0xff]
        %v581 = vld [vmem:[%s388 + $0x5f0] sm:$0xff]
        %v582 = vld [vmem:[%s388 + $0x5f8] sm:$0xff]
        %v583 = vld [vmem:[%s388 + $0x600] sm:$0xff]
        %v584 = vld [vmem:[%s388 + $0x608] sm:$0xff]
        %v585 = vld [vmem:[%s388 + $0x610] sm:$0xff]
        %v586 = vld [vmem:[%s388 + $0x618] sm:$0xff]
        %v587 = vld [vmem:[%s388 + $0x620] sm:$0xff]
        %v588 = vld [vmem:[%s388 + $0x628] sm:$0xff]
        %v589 = vld [vmem:[%s388 + $0x630] sm:$0xff]
        %v590 = vld [vmem:[%s388 + $0x638] sm:$0xff]
        %v591 = vld [vmem:[%s388 + $0x640] sm:$0xff]
        %v592 = vld [vmem:[%s388 + $0x648] sm:$0xff]
        %v593 = vld [vmem:[%s388 + $0x650] sm:$0xff]
        %v594 = vld [vmem:[%s388 + $0x658] sm:$0xff]
        %v595 = vld [vmem:[%s388 + $0x660] sm:$0xff]
        %v596 = vld [vmem:[%s388 + $0x668] sm:$0xff]
        %v597 = vld [vmem:[%s388 + $0x670] sm:$0xff]
        %v598 = vld [vmem:[%s388 + $0x678] sm:$0xff]
        %v599 = vld [vmem:[%s388 + $0x680] sm:$0xff]
        %v600 = vld [vmem:[%s388 + $0x688] sm:$0xff]
        %v601 = vld [vmem:[%s388 + $0x690] sm:$0xff]
        %v602 = vld [vmem:[%s388 + $0x698] sm:$0xff]
        %v603 = vld [vmem:[%s388 + $0x6a0] sm:$0xff]
        %v604 = vld [vmem:[%s388 + $0x6a8] sm:$0xff]
        %v605 = vld [vmem:[%s388 + $0x6b0] sm:$0xff]
        %v606 = vld [vmem:[%s388 + $0x6b8] sm:$0xff]
        %v607 = vld [vmem:[%s388 + $0x6c0] sm:$0xff]
        %v608 = vld [vmem:[%s388 + $0x6c8] sm:$0xff]
        %v609 = vld [vmem:[%s388 + $0x6d0] sm:$0xff]
        %v610 = vld [vmem:[%s388 + $0x6d8] sm:$0xff]
        %v611 = vld [vmem:[%s388 + $0x6e0] sm:$0xff]
        %v612 = vld [vmem:[%s388 + $0x6e8] sm:$0xff]
        %v613 = vld [vmem:[%s388 + $0x6f0] sm:$0xff]
        %v614 = vld [vmem:[%s388 + $0x6f8] sm:$0xff]
        %v615 = vld [vmem:[%s388 + $0x700] sm:$0xff]
        %v616 = vld [vmem:[%s388 + $0x708] sm:$0xff]
        %v617 = vld [vmem:[%s388 + $0x710] sm:$0xff]
        %v618 = vld [vmem:[%s388 + $0x718] sm:$0xff]
        %v619 = vld [vmem:[%s388 + $0x720] sm:$0xff]
        %v620 = vld [vmem:[%s388 + $0x728] sm:$0xff]
        %v621 = vld [vmem:[%s388 + $0x730] sm:$0xff]
        %v622 = vld [vmem:[%s388 + $0x738] sm:$0xff]
        %v623 = vld [vmem:[%s388 + $0x740] sm:$0xff]
        %v624 = vld [vmem:[%s388 + $0x748] sm:$0xff]
        %v625 = vld [vmem:[%s388 + $0x750] sm:$0xff]
        %v626 = vld [vmem:[%s388 + $0x758] sm:$0xff]
        %v627 = vld [vmem:[%s388 + $0x760] sm:$0xff]
        %v628 = vld [vmem:[%s388 + $0x768] sm:$0xff]
        %v629 = vld [vmem:[%s388 + $0x770] sm:$0xff]
        %v630 = vld [vmem:[%s388 + $0x778] sm:$0xff]
        %v631 = vld [vmem:[%s388 + $0x780] sm:$0xff]
        %v632 = vld [vmem:[%s388 + $0x788] sm:$0xff]
        %v633 = vld [vmem:[%s388 + $0x790] sm:$0xff]
        %v634 = vld [vmem:[%s388 + $0x798] sm:$0xff]
        %v635 = vld [vmem:[%s388 + $0x7a0] sm:$0xff]
        %v636 = vld [vmem:[%s388 + $0x7a8] sm:$0xff]
        %v637 = vld [vmem:[%s388 + $0x7b0] sm:$0xff]
        %v638 = vld [vmem:[%s388 + $0x7b8] sm:$0xff]
        %v639 = vld [vmem:[%s388 + $0x7c0] sm:$0xff]
        %v640 = vld [vmem:[%s388 + $0x7c8] sm:$0xff]
        %v641 = vld [vmem:[%s388 + $0x7d0] sm:$0xff]
        %v642 = vld [vmem:[%s388 + $0x7d8] sm:$0xff]
        %v643 = vld [vmem:[%s388 + $0x7e0] sm:$0xff]
        %v644 = vld [vmem:[%s388 + $0x7e8] sm:$0xff]
        %v645 = vld [vmem:[%s388 + $0x7f0] sm:$0xff]
        %v646 = vld [vmem:[%s388 + $0x7f8] sm:$0xff]
        %v647 = vpack.c.bf16 %v392, %v391
        %v648 = vpack.c.bf16 %v394, %v393
        %v649 = vpack.c.bf16 %v396, %v395
        %v650 = vpack.c.bf16 %v398, %v397
        %v651 = vpack.c.bf16 %v400, %v399
        %v652 = vpack.c.bf16 %v402, %v401
        %v653 = vpack.c.bf16 %v404, %v403
        %v654 = vpack.c.bf16 %v406, %v405
        %v655 = vpack.c.bf16 %v408, %v407
        %v656 = vpack.c.bf16 %v410, %v409
        %v657 = vpack.c.bf16 %v412, %v411
        %v658 = vpack.c.bf16 %v414, %v413
        %v659 = vpack.c.bf16 %v416, %v415
        %v660 = vpack.c.bf16 %v418, %v417
        %v661 = vpack.c.bf16 %v420, %v419
        %v662 = vpack.c.bf16 %v422, %v421
        %v663 = vpack.c.bf16 %v424, %v423
        %v664 = vpack.c.bf16 %v426, %v425
        %v665 = vpack.c.bf16 %v428, %v427
        %v666 = vpack.c.bf16 %v430, %v429
        %v667 = vpack.c.bf16 %v432, %v431
        %v668 = vpack.c.bf16 %v434, %v433
        %v669 = vpack.c.bf16 %v436, %v435
        %v670 = vpack.c.bf16 %v438, %v437
        %v671 = vpack.c.bf16 %v440, %v439
        %v672 = vpack.c.bf16 %v442, %v441
        %v673 = vpack.c.bf16 %v444, %v443
        %v674 = vpack.c.bf16 %v446, %v445
        %v675 = vpack.c.bf16 %v448, %v447
        %v676 = vpack.c.bf16 %v450, %v449
        %v677 = vpack.c.bf16 %v452, %v451
        %v678 = vpack.c.bf16 %v454, %v453
        %v679 = vpack.c.bf16 %v456, %v455
        %v680 = vpack.c.bf16 %v458, %v457
        %v681 = vpack.c.bf16 %v460, %v459
        %v682 = vpack.c.bf16 %v462, %v461
        %v683 = vpack.c.bf16 %v464, %v463
        %v684 = vpack.c.bf16 %v466, %v465
        %v685 = vpack.c.bf16 %v468, %v467
        %v686 = vpack.c.bf16 %v470, %v469
        %v687 = vpack.c.bf16 %v472, %v471
        %v688 = vpack.c.bf16 %v474, %v473
        %v689 = vpack.c.bf16 %v476, %v475
        %v690 = vpack.c.bf16 %v478, %v477
        %v691 = vpack.c.bf16 %v480, %v479
        %v692 = vpack.c.bf16 %v482, %v481
        %v693 = vpack.c.bf16 %v484, %v483
        %v694 = vpack.c.bf16 %v486, %v485
        %v695 = vpack.c.bf16 %v488, %v487
        %v696 = vpack.c.bf16 %v490, %v489
        %v697 = vpack.c.bf16 %v492, %v491
        %v698 = vpack.c.bf16 %v494, %v493
        %v699 = vpack.c.bf16 %v496, %v495
        %v700 = vpack.c.bf16 %v498, %v497
        %v701 = vpack.c.bf16 %v500, %v499
        %v702 = vpack.c.bf16 %v502, %v501
        %v703 = vpack.c.bf16 %v504, %v503
        %v704 = vpack.c.bf16 %v506, %v505
        %v705 = vpack.c.bf16 %v508, %v507
        %v706 = vpack.c.bf16 %v510, %v509
        %v707 = vpack.c.bf16 %v512, %v511
        %v708 = vpack.c.bf16 %v514, %v513
        %v709 = vpack.c.bf16 %v516, %v515
        %v710 = vpack.c.bf16 %v518, %v517
        %v711 = vpack.c.bf16 %v520, %v519
        %v712 = vpack.c.bf16 %v522, %v521
        %v713 = vpack.c.bf16 %v524, %v523
        %v714 = vpack.c.bf16 %v526, %v525
        %v715 = vpack.c.bf16 %v528, %v527
        %v716 = vpack.c.bf16 %v530, %v529
        %v717 = vpack.c.bf16 %v532, %v531
        %v718 = vpack.c.bf16 %v534, %v533
        %v719 = vpack.c.bf16 %v536, %v535
        %v720 = vpack.c.bf16 %v538, %v537
        %v721 = vpack.c.bf16 %v540, %v539
        %v722 = vpack.c.bf16 %v542, %v541
        %v723 = vpack.c.bf16 %v544, %v543
        %v724 = vpack.c.bf16 %v546, %v545
        %v725 = vpack.c.bf16 %v548, %v547
        %v726 = vpack.c.bf16 %v550, %v549
        %v727 = vpack.c.bf16 %v552, %v551
        %v728 = vpack.c.bf16 %v554, %v553
        %v729 = vpack.c.bf16 %v556, %v555
        %v730 = vpack.c.bf16 %v558, %v557
        %v731 = vpack.c.bf16 %v560, %v559
        %v732 = vpack.c.bf16 %v562, %v561
        %v733 = vpack.c.bf16 %v564, %v563
        %v734 = vpack.c.bf16 %v566, %v565
        %v735 = vpack.c.bf16 %v568, %v567
        %v736 = vpack.c.bf16 %v570, %v569
        %v737 = vpack.c.bf16 %v572, %v571
        %v738 = vpack.c.bf16 %v574, %v573
        %v739 = vpack.c.bf16 %v576, %v575
        %v740 = vpack.c.bf16 %v578, %v577
        %v741 = vpack.c.bf16 %v580, %v579
        %v742 = vpack.c.bf16 %v582, %v581
        %v743 = vpack.c.bf16 %v584, %v583
        %v744 = vpack.c.bf16 %v586, %v585
        %v745 = vpack.c.bf16 %v588, %v587
        %v746 = vpack.c.bf16 %v590, %v589
        %v747 = vpack.c.bf16 %v592, %v591
        %v748 = vpack.c.bf16 %v594, %v593
        %v749 = vpack.c.bf16 %v596, %v595
        %v750 = vpack.c.bf16 %v598, %v597
        %v751 = vpack.c.bf16 %v600, %v599
        %v752 = vpack.c.bf16 %v602, %v601
        %v753 = vpack.c.bf16 %v604, %v603
        %v754 = vpack.c.bf16 %v606, %v605
        %v755 = vpack.c.bf16 %v608, %v607
        %v756 = vpack.c.bf16 %v610, %v609
        %v757 = vpack.c.bf16 %v612, %v611
        %v758 = vpack.c.bf16 %v614, %v613
        %v759 = vpack.c.bf16 %v616, %v615
        %v760 = vpack.c.bf16 %v618, %v617
        %v761 = vpack.c.bf16 %v620, %v619
        %v762 = vpack.c.bf16 %v622, %v621
        %v763 = vpack.c.bf16 %v624, %v623
        %v764 = vpack.c.bf16 %v626, %v625
        %v765 = vpack.c.bf16 %v628, %v627
        %v766 = vpack.c.bf16 %v630, %v629
        %v767 = vpack.c.bf16 %v632, %v631
        %v768 = vpack.c.bf16 %v634, %v633
        %v769 = vpack.c.bf16 %v636, %v635
        %v770 = vpack.c.bf16 %v638, %v637
        %v771 = vpack.c.bf16 %v640, %v639
        %v772 = vpack.c.bf16 %v642, %v641
        %v773 = vpack.c.bf16 %v644, %v643
        %v774 = vpack.c.bf16 %v646, %v645
        %v775 = vld [vmem:[%s1] sm:$0x3]
        %v776 = vld [vmem:[%s6] sm:$0x1]
        %v777 = vlaneseq
        %v778 = vshrl.u32 %v777, 7
        %v779 = vsub.s32 0, %v778
        %v780 = vrot.slane %v776, %v779
        %vm781 = vcmask 31744
        %v783 = vsel %vm781, %v647, 0
        %v786 = vsel %vm781, %v648, 0
        %v789 = vsel %vm781, %v649, 0
        %v792 = vsel %vm781, %v650, 0
        %v795 = vsel %vm781, %v651, 0
        %v798 = vsel %vm781, %v652, 0
        %v801 = vsel %vm781, %v653, 0
        %v804 = vsel %vm781, %v654, 0
        %v807 = vsel %vm781, %v655, 0
        %v810 = vsel %vm781, %v656, 0
        %v813 = vsel %vm781, %v657, 0
        %v816 = vsel %vm781, %v658, 0
        %v819 = vsel %vm781, %v659, 0
        %v822 = vsel %vm781, %v660, 0
        %v825 = vsel %vm781, %v661, 0
        %v828 = vsel %vm781, %v662, 0
        %v831 = vsel %vm781, %v663, 0
        %v834 = vsel %vm781, %v664, 0
        %v837 = vsel %vm781, %v665, 0
        %v840 = vsel %vm781, %v666, 0
        %v843 = vsel %vm781, %v667, 0
        %v846 = vsel %vm781, %v668, 0
        %v849 = vsel %vm781, %v669, 0
        %v852 = vsel %vm781, %v670, 0
        %v855 = vsel %vm781, %v671, 0
        %v858 = vsel %vm781, %v672, 0
        %v861 = vsel %vm781, %v673, 0
        %v864 = vsel %vm781, %v674, 0
        %v867 = vsel %vm781, %v675, 0
        %v870 = vsel %vm781, %v676, 0
        %v873 = vsel %vm781, %v677, 0
        %v876 = vsel %vm781, %v678, 0
        %v879 = vsel %vm781, %v679, 0
        %v882 = vsel %vm781, %v680, 0
        %v885 = vsel %vm781, %v681, 0
        %v888 = vsel %vm781, %v682, 0
        %v891 = vsel %vm781, %v683, 0
        %v894 = vsel %vm781, %v684, 0
        %v897 = vsel %vm781, %v685, 0
        %v900 = vsel %vm781, %v686, 0
        %v903 = vsel %vm781, %v687, 0
        %v906 = vsel %vm781, %v688, 0
        %v909 = vsel %vm781, %v689, 0
        %v912 = vsel %vm781, %v690, 0
        %v915 = vsel %vm781, %v691, 0
        %v918 = vsel %vm781, %v692, 0
        %v921 = vsel %vm781, %v693, 0
        %v924 = vsel %vm781, %v694, 0
        %v927 = vsel %vm781, %v695, 0
        %v930 = vsel %vm781, %v696, 0
        %v933 = vsel %vm781, %v697, 0
        %v936 = vsel %vm781, %v698, 0
        %v939 = vsel %vm781, %v699, 0
        %v942 = vsel %vm781, %v700, 0
        %v945 = vsel %vm781, %v701, 0
        %v948 = vsel %vm781, %v702, 0
        %v951 = vsel %vm781, %v703, 0
        %v954 = vsel %vm781, %v704, 0
        %v957 = vsel %vm781, %v705, 0
        %v960 = vsel %vm781, %v706, 0
        %v963 = vsel %vm781, %v707, 0
        %v966 = vsel %vm781, %v708, 0
        %v969 = vsel %vm781, %v709, 0
        %v972 = vsel %vm781, %v710, 0
        %v975 = vsel %vm781, %v711, 0
        %v978 = vsel %vm781, %v712, 0
        %v981 = vsel %vm781, %v713, 0
        %v984 = vsel %vm781, %v714, 0
        %v987 = vsel %vm781, %v715, 0
        %v990 = vsel %vm781, %v716, 0
        %v993 = vsel %vm781, %v717, 0
        %v996 = vsel %vm781, %v718, 0
        %v999 = vsel %vm781, %v719, 0
        %v1002 = vsel %vm781, %v720, 0
        %v1005 = vsel %vm781, %v721, 0
        %v1008 = vsel %vm781, %v722, 0
        %v1011 = vsel %vm781, %v723, 0
        %v1014 = vsel %vm781, %v724, 0
        %v1017 = vsel %vm781, %v725, 0
        %v1020 = vsel %vm781, %v726, 0
        %v1023 = vsel %vm781, %v727, 0
        %v1026 = vsel %vm781, %v728, 0
        %v1029 = vsel %vm781, %v729, 0
        %v1032 = vsel %vm781, %v730, 0
        %v1035 = vsel %vm781, %v731, 0
        %v1038 = vsel %vm781, %v732, 0
        %v1041 = vsel %vm781, %v733, 0
        %v1044 = vsel %vm781, %v734, 0
        %v1047 = vsel %vm781, %v735, 0
        %v1050 = vsel %vm781, %v736, 0
        %v1053 = vsel %vm781, %v737, 0
        %v1056 = vsel %vm781, %v738, 0
        %v1059 = vsel %vm781, %v739, 0
        %v1062 = vsel %vm781, %v740, 0
        %v1065 = vsel %vm781, %v741, 0
        %v1068 = vsel %vm781, %v742, 0
        %v1071 = vsel %vm781, %v743, 0
        %v1074 = vsel %vm781, %v744, 0
        %v1077 = vsel %vm781, %v745, 0
        %v1080 = vsel %vm781, %v746, 0
        %v1083 = vsel %vm781, %v747, 0
        %v1086 = vsel %vm781, %v748, 0
        %v1089 = vsel %vm781, %v749, 0
        %v1092 = vsel %vm781, %v750, 0
        %v1095 = vsel %vm781, %v751, 0
        %v1098 = vsel %vm781, %v752, 0
        %v1101 = vsel %vm781, %v753, 0
        %v1104 = vsel %vm781, %v754, 0
        %v1107 = vsel %vm781, %v755, 0
        %v1110 = vsel %vm781, %v756, 0
        %v1113 = vsel %vm781, %v757, 0
        %v1116 = vsel %vm781, %v758, 0
        %v1119 = vsel %vm781, %v759, 0
        %v1122 = vsel %vm781, %v760, 0
        %v1125 = vsel %vm781, %v761, 0
        %v1128 = vsel %vm781, %v762, 0
        %v1131 = vsel %vm781, %v763, 0
        %v1134 = vsel %vm781, %v764, 0
        %v1137 = vsel %vm781, %v765, 0
        %v1140 = vsel %vm781, %v766, 0
        %v1143 = vsel %vm781, %v767, 0
        %v1146 = vsel %vm781, %v768, 0
        %v1149 = vsel %vm781, %v769, 0
        %v1152 = vsel %vm781, %v770, 0
        %v1155 = vsel %vm781, %v771, 0
        %v1158 = vsel %vm781, %v772, 0
        %v1161 = vsel %vm781, %v773, 0
        %v1164 = vsel %vm781, %v774, 0
        %vm1166 = vcmask 1041408
        %v1168 = vsel %vm1166, %v775, 0
        %1170 = vmatprep.subr.bf16.mxu0 0
        %1171 = vmatpush1.bf16.msra.mxu0 %v1168
        %1172 = vmatprep.subr.bf16.mxu0 0
        %1173 = vmatpush1.bf16.msra.mxu0 0
        %1174 = vmatprep.subr.bf16.mxu0 0
        %1175 = vmatpush1.bf16.msra.mxu0 0
        %1176 = vmatprep.subr.bf16.mxu0 0
        %1177 = vmatpush1.bf16.msra.mxu0 0
        %1178 = vmatprep.subr.bf16.mxu0 0
        %1179 = vmatpush1.bf16.msra.mxu0 0
        %1180 = vmatprep.subr.bf16.mxu0 0
        %1181 = vmatpush1.bf16.msra.mxu0 0
        %1182 = vmatprep.subr.bf16.mxu0 0
        %1183 = vmatpush1.bf16.msra.mxu0 0
        %1184 = vmatprep.subr.bf16.mxu0 0
        %1185 = vmatpush1.bf16.msra.mxu0 0
        %1186 = vmatprep.subr.bf16.mxu0 0
        %1187 = vmatpush1.bf16.msra.mxu0 0
        %1188 = vmatprep.subr.bf16.mxu0 0
        %1189 = vmatpush1.bf16.msra.mxu0 0
        %1190 = vmatprep.subr.bf16.mxu0 0
        %1191 = vmatpush1.bf16.msra.mxu0 0
        %1192 = vmatprep.subr.bf16.mxu0 0
        %1193 = vmatpush1.bf16.msra.mxu0 0
        %1194 = vmatprep.subr.bf16.mxu0 0
        %1195 = vmatpush1.bf16.msra.mxu0 0
        %1196 = vmatprep.subr.bf16.mxu0 0
        %1197 = vmatpush1.bf16.msra.mxu0 0
        %1198 = vmatprep.subr.bf16.mxu0 0
        %1199 = vmatpush1.bf16.msra.mxu0 0
        %1200 = vmatprep.subr.bf16.mxu0 0
        %1201 = vmatpush1.bf16.msra.mxu0 0
        %1202 = vmatprep.mubr.bf16.mxu0 0
        %1203 = vmatmul.mubr.bf16.gmra.mrb[0].mxu0 %v783
        %v1204 = vpop.f32.mrb[0].mxu0
        %v1205 = vadd.f32 %v780, %v1204
        %v1206 = vpop.f32.mrb[0].mxu0
        %v1207 = vpop.f32.mrb[0].mxu0
        %v1208 = vadd.f32 %v780, %v1207
        %v1209 = vpop.f32.mrb[0].mxu0
        %1210 = vmatprep.mubr.bf16.mxu0 0
        %1211 = vmatmul.mubr.bf16.gmra.mrb[0].mxu0 %v786
        %v1212 = vpop.f32.mrb[0].mxu0
        %v1213 = vadd.f32 %v780, %v1212
        %v1214 = vpop.f32.mrb[0].mxu0
        %v1215 = vpop.f32.mrb[0].mxu0
        %v1216 = vadd.f32 %v780, %v1215
        %v1217 = vpop.f32.mrb[0].mxu0
        %1218 = vmatprep.mubr.bf16.mxu0 0
        %1219 = vmatmul.mubr.bf16.gmra.mrb[0].mxu0 %v789
        %v1220 = vpop.f32.mrb[0].mxu0
        %v1221 = vadd.f32 %v780, %v1220
        %v1222 = vpop.f32.mrb[0].mxu0
        %v1223 = vpop.f32.mrb[0].mxu0
        %v1224 = vadd.f32 %v780, %v1223
        %v1225 = vpop.f32.mrb[0].mxu0
        %1226 = vmatprep.mubr.bf16.mxu0 0
        %1227 = vmatmul.mubr.bf16.gmra.mrb[0].mxu0 %v792
        %v1228 = vpop.f32.mrb[0].mxu0
        %v1229 = vadd.f32 %v780, %v1228
        %v1230 = vpop.f32.mrb[0].mxu0
        %v1231 = vpop.f32.mrb[0].mxu0
        %v1232 = vadd.f32 %v780, %v1231
        %v1233 = vpop.f32.mrb[0].mxu0
        %1234 = vmatprep.mubr.bf16.mxu0 0
        %1235 = vmatmul.mubr.bf16.gmra.mrb[0].mxu0 %v795
        %v1236 = vpop.f32.mrb[0].mxu0
        %v1237 = vadd.f32 %v780, %v1236
        %v1238 = vpop.f32.mrb[0].mxu0
        %v1239 = vpop.f32.mrb[0].mxu0
        %v1240 = vadd.f32 %v780, %v1239
        %v1241 = vpop.f32.mrb[0].mxu0
        %1242 = vmatprep.mubr.bf16.mxu0 0
        %1243 = vmatmul.mubr.bf16.gmra.mrb[0].mxu0 %v798
        %v1244 = vpop.f32.mrb[0].mxu0
        %v1245 = vadd.f32 %v780, %v1244
        %v1246 = vpop.f32.mrb[0].mxu0
        %v1247 = vpop.f32.mrb[0].mxu0
        %v1248 = vadd.f32 %v780, %v1247
        %v1249 = vpop.f32.mrb[0].mxu0
        %1250 = vmatprep.mubr.bf16.mxu0 0
        %1251 = vmatmul.mubr.bf16.gmra.mrb[0].mxu0 %v801
        %v1252 = vpop.f32.mrb[0].mxu0
        %v1253 = vadd.f32 %v780, %v1252
        %v1254 = vpop.f32.mrb[0].mxu0
        %v1255 = vpop.f32.mrb[0].mxu0
        %v1256 = vadd.f32 %v780, %v1255
        %v1257 = vpop.f32.mrb[0].mxu0
        %1258 = vmatprep.mubr.bf16.mxu0 0
        %1259 = vmatmul.mubr.bf16.gmra.mrb[0].mxu0 %v804
        %v1260 = vpop.f32.mrb[0].mxu0
        %v1261 = vadd.f32 %v780, %v1260
        %v1262 = vpop.f32.mrb[0].mxu0
        %v1263 = vpop.f32.mrb[0].mxu0
        %v1264 = vadd.f32 %v780, %v1263
        %v1265 = vpop.f32.mrb[0].mxu0
        %1266 = vmatprep.mubr.bf16.mxu0 0
        %1267 = vmatmul.mubr.bf16.gmra.mrb[0].mxu0 %v807
        %v1268 = vpop.f32.mrb[0].mxu0
        %v1269 = vadd.f32 %v780, %v1268
        %v1270 = vpop.f32.mrb[0].mxu0
        %v1271 = vpop.f32.mrb[0].mxu0
        %v1272 = vadd.f32 %v780, %v1271
        %v1273 = vpop.f32.mrb[0].mxu0
        %1274 = vmatprep.mubr.bf16.mxu0 0
        %1275 = vmatmul.mubr.bf16.gmra.mrb[0].mxu0 %v810
        %v1276 = vpop.f32.mrb[0].mxu0
        %v1277 = vadd.f32 %v780, %v1276
        %v1278 = vpop.f32.mrb[0].mxu0
        %v1279 = vpop.f32.mrb[0].mxu0
        %v1280 = vadd.f32 %v780, %v1279
        %v1281 = vpop.f32.mrb[0].mxu0
        %1282 = vmatprep.mubr.bf16.mxu0 0
        %1283 = vmatmul.mubr.bf16.gmra.mrb[0].mxu0 %v813
        %v1284 = vpop.f32.mrb[0].mxu0
        %v1285 = vadd.f32 %v780, %v1284
        %v1286 = vpop.f32.mrb[0].mxu0
        %v1287 = vpop.f32.mrb[0].mxu0
        %v1288 = vadd.f32 %v780, %v1287
        %v1289 = vpop.f32.mrb[0].mxu0
        %1290 = vmatprep.mubr.bf16.mxu0 0
        %1291 = vmatmul.mubr.bf16.gmra.mrb[0].mxu0 %v816
        %v1292 = vpop.f32.mrb[0].mxu0
        %v1293 = vadd.f32 %v780, %v1292
        %v1294 = vpop.f32.mrb[0].mxu0
        %v1295 = vpop.f32.mrb[0].mxu0
        %v1296 = vadd.f32 %v780, %v1295
        %v1297 = vpop.f32.mrb[0].mxu0
        %1298 = vmatprep.mubr.bf16.mxu0 0
        %1299 = vmatmul.mubr.bf16.gmra.mrb[0].mxu0 %v819
        %v1300 = vpop.f32.mrb[0].mxu0
        %v1301 = vadd.f32 %v780, %v1300
        %v1302 = vpop.f32.mrb[0].mxu0
        %v1303 = vpop.f32.mrb[0].mxu0
        %v1304 = vadd.f32 %v780, %v1303
        %v1305 = vpop.f32.mrb[0].mxu0
        %1306 = vmatprep.mubr.bf16.mxu0 0
        %1307 = vmatmul.mubr.bf16.gmra.mrb[0].mxu0 %v822
        %v1308 = vpop.f32.mrb[0].mxu0
        %v1309 = vadd.f32 %v780, %v1308
        %v1310 = vpop.f32.mrb[0].mxu0
        %v1311 = vpop.f32.mrb[0].mxu0
        %v1312 = vadd.f32 %v780, %v1311
        %v1313 = vpop.f32.mrb[0].mxu0
        %1314 = vmatprep.mubr.bf16.mxu0 0
        %1315 = vmatmul.mubr.bf16.gmra.mrb[0].mxu0 %v825
        %v1316 = vpop.f32.mrb[0].mxu0
        %v1317 = vadd.f32 %v780, %v1316
        %v1318 = vpop.f32.mrb[0].mxu0
        %v1319 = vpop.f32.mrb[0].mxu0
        %v1320 = vadd.f32 %v780, %v1319
        %v1321 = vpop.f32.mrb[0].mxu0
        %1322 = vmatprep.mubr.bf16.mxu0 0
        %1323 = vmatmul.mubr.bf16.gmra.mrb[0].mxu0 %v828
        %v1324 = vpop.f32.mrb[0].mxu0
        %v1325 = vadd.f32 %v780, %v1324
        %v1326 = vpop.f32.mrb[0].mxu0
        %v1327 = vpop.f32.mrb[0].mxu0
        %v1328 = vadd.f32 %v780, %v1327
        %v1329 = vpop.f32.mrb[0].mxu0
        %1330 = vmatprep.mubr.bf16.mxu0 0
        %1331 = vmatmul.mubr.bf16.gmra.mrb[0].mxu0 %v831
        %v1332 = vpop.f32.mrb[0].mxu0
        %v1333 = vadd.f32 %v780, %v1332
        %v1334 = vpop.f32.mrb[0].mxu0
        %v1335 = vpop.f32.mrb[0].mxu0
        %v1336 = vadd.f32 %v780, %v1335
        %v1337 = vpop.f32.mrb[0].mxu0
        %1338 = vmatprep.mubr.bf16.mxu0 0
        %1339 = vmatmul.mubr.bf16.gmra.mrb[0].mxu0 %v834
        %v1340 = vpop.f32.mrb[0].mxu0
        %v1341 = vadd.f32 %v780, %v1340
        %v1342 = vpop.f32.mrb[0].mxu0
        %v1343 = vpop.f32.mrb[0].mxu0
        %v1344 = vadd.f32 %v780, %v1343
        %v1345 = vpop.f32.mrb[0].mxu0
        %1346 = vmatprep.mubr.bf16.mxu0 0
        %1347 = vmatmul.mubr.bf16.gmra.mrb[0].mxu0 %v837
        %v1348 = vpop.f32.mrb[0].mxu0
        %v1349 = vadd.f32 %v780, %v1348
        %v1350 = vpop.f32.mrb[0].mxu0
        %v1351 = vpop.f32.mrb[0].mxu0
        %v1352 = vadd.f32 %v780, %v1351
        %v1353 = vpop.f32.mrb[0].mxu0
        %1354 = vmatprep.mubr.bf16.mxu0 0
        %1355 = vmatmul.mubr.bf16.gmra.mrb[0].mxu0 %v840
        %v1356 = vpop.f32.mrb[0].mxu0
        %v1357 = vadd.f32 %v780, %v1356
        %v1358 = vpop.f32.mrb[0].mxu0
        %v1359 = vpop.f32.mrb[0].mxu0
        %v1360 = vadd.f32 %v780, %v1359
        %v1361 = vpop.f32.mrb[0].mxu0
        %1362 = vmatprep.mubr.bf16.mxu0 0
        %1363 = vmatmul.mubr.bf16.gmra.mrb[0].mxu0 %v843
        %v1364 = vpop.f32.mrb[0].mxu0
        %v1365 = vadd.f32 %v780, %v1364
        %v1366 = vpop.f32.mrb[0].mxu0
        %v1367 = vpop.f32.mrb[0].mxu0
        %v1368 = vadd.f32 %v780, %v1367
        %v1369 = vpop.f32.mrb[0].mxu0
        %1370 = vmatprep.mubr.bf16.mxu0 0
        %1371 = vmatmul.mubr.bf16.gmra.mrb[0].mxu0 %v846
        %v1372 = vpop.f32.mrb[0].mxu0
        %v1373 = vadd.f32 %v780, %v1372
        %v1374 = vpop.f32.mrb[0].mxu0
        %v1375 = vpop.f32.mrb[0].mxu0
        %v1376 = vadd.f32 %v780, %v1375
        %v1377 = vpop.f32.mrb[0].mxu0
        %1378 = vmatprep.mubr.bf16.mxu0 0
        %1379 = vmatmul.mubr.bf16.gmra.mrb[0].mxu0 %v849
        %v1380 = vpop.f32.mrb[0].mxu0
        %v1381 = vadd.f32 %v780, %v1380
        %v1382 = vpop.f32.mrb[0].mxu0
        %v1383 = vpop.f32.mrb[0].mxu0
        %v1384 = vadd.f32 %v780, %v1383
        %v1385 = vpop.f32.mrb[0].mxu0
        %1386 = vmatprep.mubr.bf16.mxu0 0
        %1387 = vmatmul.mubr.bf16.gmra.mrb[0].mxu0 %v852
        %v1388 = vpop.f32.mrb[0].mxu0
        %v1389 = vadd.f32 %v780, %v1388
        %v1390 = vpop.f32.mrb[0].mxu0
        %v1391 = vpop.f32.mrb[0].mxu0
        %v1392 = vadd.f32 %v780, %v1391
        %v1393 = vpop.f32.mrb[0].mxu0
        %1394 = vmatprep.mubr.bf16.mxu0 0
        %1395 = vmatmul.mubr.bf16.gmra.mrb[0].mxu0 %v855
        %v1396 = vpop.f32.mrb[0].mxu0
        %v1397 = vadd.f32 %v780, %v1396
        %v1398 = vpop.f32.mrb[0].mxu0
        %v1399 = vpop.f32.mrb[0].mxu0
        %v1400 = vadd.f32 %v780, %v1399
        %v1401 = vpop.f32.mrb[0].mxu0
        %1402 = vmatprep.mubr.bf16.mxu0 0
        %1403 = vmatmul.mubr.bf16.gmra.mrb[0].mxu0 %v858
        %v1404 = vpop.f32.mrb[0].mxu0
        %v1405 = vadd.f32 %v780, %v1404
        %v1406 = vpop.f32.mrb[0].mxu0
        %v1407 = vpop.f32.mrb[0].mxu0
        %v1408 = vadd.f32 %v780, %v1407
        %v1409 = vpop.f32.mrb[0].mxu0
        %1410 = vmatprep.mubr.bf16.mxu0 0
        %1411 = vmatmul.mubr.bf16.gmra.mrb[0].mxu0 %v861
        %v1412 = vpop.f32.mrb[0].mxu0
        %v1413 = vadd.f32 %v780, %v1412
        %v1414 = vpop.f32.mrb[0].mxu0
        %v1415 = vpop.f32.mrb[0].mxu0
        %v1416 = vadd.f32 %v780, %v1415
        %v1417 = vpop.f32.mrb[0].mxu0
        %1418 = vmatprep.mubr.bf16.mxu0 0
        %1419 = vmatmul.mubr.bf16.gmra.mrb[0].mxu0 %v864
        %v1420 = vpop.f32.mrb[0].mxu0
        %v1421 = vadd.f32 %v780, %v1420
        %v1422 = vpop.f32.mrb[0].mxu0
        %v1423 = vpop.f32.mrb[0].mxu0
        %v1424 = vadd.f32 %v780, %v1423
        %v1425 = vpop.f32.mrb[0].mxu0
        %1426 = vmatprep.mubr.bf16.mxu0 0
        %1427 = vmatmul.mubr.bf16.gmra.mrb[0].mxu0 %v867
        %v1428 = vpop.f32.mrb[0].mxu0
        %v1429 = vadd.f32 %v780, %v1428
        %v1430 = vpop.f32.mrb[0].mxu0
        %v1431 = vpop.f32.mrb[0].mxu0
        %v1432 = vadd.f32 %v780, %v1431
        %v1433 = vpop.f32.mrb[0].mxu0
        %1434 = vmatprep.mubr.bf16.mxu0 0
        %1435 = vmatmul.mubr.bf16.gmra.mrb[0].mxu0 %v870
        %v1436 = vpop.f32.mrb[0].mxu0
        %v1437 = vadd.f32 %v780, %v1436
        %v1438 = vpop.f32.mrb[0].mxu0
        %v1439 = vpop.f32.mrb[0].mxu0
        %v1440 = vadd.f32 %v780, %v1439
        %v1441 = vpop.f32.mrb[0].mxu0
        %1442 = vmatprep.mubr.bf16.mxu0 0
        %1443 = vmatmul.mubr.bf16.gmra.mrb[0].mxu0 %v873
        %v1444 = vpop.f32.mrb[0].mxu0
        %v1445 = vadd.f32 %v780, %v1444
        %v1446 = vpop.f32.mrb[0].mxu0
        %v1447 = vpop.f32.mrb[0].mxu0
        %v1448 = vadd.f32 %v780, %v1447
        %v1449 = vpop.f32.mrb[0].mxu0
        %1450 = vmatprep.mubr.bf16.mxu0 0
        %1451 = vmatmul.mubr.bf16.gmra.mrb[0].mxu0 %v876
        %v1452 = vpop.f32.mrb[0].mxu0
        %v1453 = vadd.f32 %v780, %v1452
        %v1454 = vpop.f32.mrb[0].mxu0
        %v1455 = vpop.f32.mrb[0].mxu0
        %v1456 = vadd.f32 %v780, %v1455
        %v1457 = vpop.f32.mrb[0].mxu0
        %1458 = vmatprep.mubr.bf16.mxu0 0
        %1459 = vmatmul.mubr.bf16.gmra.mrb[0].mxu0 %v879
        %v1460 = vpop.f32.mrb[0].mxu0
        %v1461 = vadd.f32 %v780, %v1460
        %v1462 = vpop.f32.mrb[0].mxu0
        %v1463 = vpop.f32.mrb[0].mxu0
        %v1464 = vadd.f32 %v780, %v1463
        %v1465 = vpop.f32.mrb[0].mxu0
        %1466 = vmatprep.mubr.bf16.mxu0 0
        %1467 = vmatmul.mubr.bf16.gmra.mrb[0].mxu0 %v882
        %v1468 = vpop.f32.mrb[0].mxu0
        %v1469 = vadd.f32 %v780, %v1468
        %v1470 = vpop.f32.mrb[0].mxu0
        %v1471 = vpop.f32.mrb[0].mxu0
        %v1472 = vadd.f32 %v780, %v1471
        %v1473 = vpop.f32.mrb[0].mxu0
        %1474 = vmatprep.mubr.bf16.mxu0 0
        %1475 = vmatmul.mubr.bf16.gmra.mrb[0].mxu0 %v885
        %v1476 = vpop.f32.mrb[0].mxu0
        %v1477 = vadd.f32 %v780, %v1476
        %v1478 = vpop.f32.mrb[0].mxu0
        %v1479 = vpop.f32.mrb[0].mxu0
        %v1480 = vadd.f32 %v780, %v1479
        %v1481 = vpop.f32.mrb[0].mxu0
        %1482 = vmatprep.mubr.bf16.mxu0 0
        %1483 = vmatmul.mubr.bf16.gmra.mrb[0].mxu0 %v888
        %v1484 = vpop.f32.mrb[0].mxu0
        %v1485 = vadd.f32 %v780, %v1484
        %v1486 = vpop.f32.mrb[0].mxu0
        %v1487 = vpop.f32.mrb[0].mxu0
        %v1488 = vadd.f32 %v780, %v1487
        %v1489 = vpop.f32.mrb[0].mxu0
        %1490 = vmatprep.mubr.bf16.mxu0 0
        %1491 = vmatmul.mubr.bf16.gmra.mrb[0].mxu0 %v891
        %v1492 = vpop.f32.mrb[0].mxu0
        %v1493 = vadd.f32 %v780, %v1492
        %v1494 = vpop.f32.mrb[0].mxu0
        %v1495 = vpop.f32.mrb[0].mxu0
        %v1496 = vadd.f32 %v780, %v1495
        %v1497 = vpop.f32.mrb[0].mxu0
        %1498 = vmatprep.mubr.bf16.mxu0 0
        %1499 = vmatmul.mubr.bf16.gmra.mrb[0].mxu0 %v894
        %v1500 = vpop.f32.mrb[0].mxu0
        %v1501 = vadd.f32 %v780, %v1500
        %v1502 = vpop.f32.mrb[0].mxu0
        %v1503 = vpop.f32.mrb[0].mxu0
        %v1504 = vadd.f32 %v780, %v1503
        %v1505 = vpop.f32.mrb[0].mxu0
        %1506 = vmatprep.mubr.bf16.mxu0 0
        %1507 = vmatmul.mubr.bf16.gmra.mrb[0].mxu0 %v897
        %v1508 = vpop.f32.mrb[0].mxu0
        %v1509 = vadd.f32 %v780, %v1508
        %v1510 = vpop.f32.mrb[0].mxu0
        %v1511 = vpop.f32.mrb[0].mxu0
        %v1512 = vadd.f32 %v780, %v1511
        %v1513 = vpop.f32.mrb[0].mxu0
        %1514 = vmatprep.mubr.bf16.mxu0 0
        %1515 = vmatmul.mubr.bf16.gmra.mrb[0].mxu0 %v900
        %v1516 = vpop.f32.mrb[0].mxu0
        %v1517 = vadd.f32 %v780, %v1516
        %v1518 = vpop.f32.mrb[0].mxu0
        %v1519 = vpop.f32.mrb[0].mxu0
        %v1520 = vadd.f32 %v780, %v1519
        %v1521 = vpop.f32.mrb[0].mxu0
        %1522 = vmatprep.mubr.bf16.mxu0 0
        %1523 = vmatmul.mubr.bf16.gmra.mrb[0].mxu0 %v903
        %v1524 = vpop.f32.mrb[0].mxu0
        %v1525 = vadd.f32 %v780, %v1524
        %v1526 = vpop.f32.mrb[0].mxu0
        %v1527 = vpop.f32.mrb[0].mxu0
        %v1528 = vadd.f32 %v780, %v1527
        %v1529 = vpop.f32.mrb[0].mxu0
        %1530 = vmatprep.mubr.bf16.mxu0 0
        %1531 = vmatmul.mubr.bf16.gmra.mrb[0].mxu0 %v906
        %v1532 = vpop.f32.mrb[0].mxu0
        %v1533 = vadd.f32 %v780, %v1532
        %v1534 = vpop.f32.mrb[0].mxu0
        %v1535 = vpop.f32.mrb[0].mxu0
        %v1536 = vadd.f32 %v780, %v1535
        %v1537 = vpop.f32.mrb[0].mxu0
        %1538 = vmatprep.mubr.bf16.mxu0 0
        %1539 = vmatmul.mubr.bf16.gmra.mrb[0].mxu0 %v909
        %v1540 = vpop.f32.mrb[0].mxu0
        %v1541 = vadd.f32 %v780, %v1540
        %v1542 = vpop.f32.mrb[0].mxu0
        %v1543 = vpop.f32.mrb[0].mxu0
        %v1544 = vadd.f32 %v780, %v1543
        %v1545 = vpop.f32.mrb[0].mxu0
        %1546 = vmatprep.mubr.bf16.mxu0 0
        %1547 = vmatmul.mubr.bf16.gmra.mrb[0].mxu0 %v912
        %v1548 = vpop.f32.mrb[0].mxu0
        %v1549 = vadd.f32 %v780, %v1548
        %v1550 = vpop.f32.mrb[0].mxu0
        %v1551 = vpop.f32.mrb[0].mxu0
        %v1552 = vadd.f32 %v780, %v1551
        %v1553 = vpop.f32.mrb[0].mxu0
        %1554 = vmatprep.mubr.bf16.mxu0 0
        %1555 = vmatmul.mubr.bf16.gmra.mrb[0].mxu0 %v915
        %v1556 = vpop.f32.mrb[0].mxu0
        %v1557 = vadd.f32 %v780, %v1556
        %v1558 = vpop.f32.mrb[0].mxu0
        %v1559 = vpop.f32.mrb[0].mxu0
        %v1560 = vadd.f32 %v780, %v1559
        %v1561 = vpop.f32.mrb[0].mxu0
        %1562 = vmatprep.mubr.bf16.mxu0 0
        %1563 = vmatmul.mubr.bf16.gmra.mrb[0].mxu0 %v918
        %v1564 = vpop.f32.mrb[0].mxu0
        %v1565 = vadd.f32 %v780, %v1564
        %v1566 = vpop.f32.mrb[0].mxu0
        %v1567 = vpop.f32.mrb[0].mxu0
        %v1568 = vadd.f32 %v780, %v1567
        %v1569 = vpop.f32.mrb[0].mxu0
        %1570 = vmatprep.mubr.bf16.mxu0 0
        %1571 = vmatmul.mubr.bf16.gmra.mrb[0].mxu0 %v921
        %v1572 = vpop.f32.mrb[0].mxu0
        %v1573 = vadd.f32 %v780, %v1572
        %v1574 = vpop.f32.mrb[0].mxu0
        %v1575 = vpop.f32.mrb[0].mxu0
        %v1576 = vadd.f32 %v780, %v1575
        %v1577 = vpop.f32.mrb[0].mxu0
        %1578 = vmatprep.mubr.bf16.mxu0 0
        %1579 = vmatmul.mubr.bf16.gmra.mrb[0].mxu0 %v924
        %v1580 = vpop.f32.mrb[0].mxu0
        %v1581 = vadd.f32 %v780, %v1580
        %v1582 = vpop.f32.mrb[0].mxu0
        %v1583 = vpop.f32.mrb[0].mxu0
        %v1584 = vadd.f32 %v780, %v1583
        %v1585 = vpop.f32.mrb[0].mxu0
        %1586 = vmatprep.mubr.bf16.mxu0 0
        %1587 = vmatmul.mubr.bf16.gmra.mrb[0].mxu0 %v927
        %v1588 = vpop.f32.mrb[0].mxu0
        %v1589 = vadd.f32 %v780, %v1588
        %v1590 = vpop.f32.mrb[0].mxu0
        %v1591 = vpop.f32.mrb[0].mxu0
        %v1592 = vadd.f32 %v780, %v1591
        %v1593 = vpop.f32.mrb[0].mxu0
        %1594 = vmatprep.mubr.bf16.mxu0 0
        %1595 = vmatmul.mubr.bf16.gmra.mrb[0].mxu0 %v930
        %v1596 = vpop.f32.mrb[0].mxu0
        %v1597 = vadd.f32 %v780, %v1596
        %v1598 = vpop.f32.mrb[0].mxu0
        %v1599 = vpop.f32.mrb[0].mxu0
        %v1600 = vadd.f32 %v780, %v1599
        %v1601 = vpop.f32.mrb[0].mxu0
        %1602 = vmatprep.mubr.bf16.mxu0 0
        %1603 = vmatmul.mubr.bf16.gmra.mrb[0].mxu0 %v933
        %v1604 = vpop.f32.mrb[0].mxu0
        %v1605 = vadd.f32 %v780, %v1604
        %v1606 = vpop.f32.mrb[0].mxu0
        %v1607 = vpop.f32.mrb[0].mxu0
        %v1608 = vadd.f32 %v780, %v1607
        %v1609 = vpop.f32.mrb[0].mxu0
        %1610 = vmatprep.mubr.bf16.mxu0 0
        %1611 = vmatmul.mubr.bf16.gmra.mrb[0].mxu0 %v936
        %v1612 = vpop.f32.mrb[0].mxu0
        %v1613 = vadd.f32 %v780, %v1612
        %v1614 = vpop.f32.mrb[0].mxu0
        %v1615 = vpop.f32.mrb[0].mxu0
        %v1616 = vadd.f32 %v780, %v1615
        %v1617 = vpop.f32.mrb[0].mxu0
        %1618 = vmatprep.mubr.bf16.mxu0 0
        %1619 = vmatmul.mubr.bf16.gmra.mrb[0].mxu0 %v939
        %v1620 = vpop.f32.mrb[0].mxu0
        %v1621 = vadd.f32 %v780, %v1620
        %v1622 = vpop.f32.mrb[0].mxu0
        %v1623 = vpop.f32.mrb[0].mxu0
        %v1624 = vadd.f32 %v780, %v1623
        %v1625 = vpop.f32.mrb[0].mxu0
        %1626 = vmatprep.mubr.bf16.mxu0 0
        %1627 = vmatmul.mubr.bf16.gmra.mrb[0].mxu0 %v942
        %v1628 = vpop.f32.mrb[0].mxu0
        %v1629 = vadd.f32 %v780, %v1628
        %v1630 = vpop.f32.mrb[0].mxu0
        %v1631 = vpop.f32.mrb[0].mxu0
        %v1632 = vadd.f32 %v780, %v1631
        %v1633 = vpop.f32.mrb[0].mxu0
        %1634 = vmatprep.mubr.bf16.mxu0 0
        %1635 = vmatmul.mubr.bf16.gmra.mrb[0].mxu0 %v945
        %v1636 = vpop.f32.mrb[0].mxu0
        %v1637 = vadd.f32 %v780, %v1636
        %v1638 = vpop.f32.mrb[0].mxu0
        %v1639 = vpop.f32.mrb[0].mxu0
        %v1640 = vadd.f32 %v780, %v1639
        %v1641 = vpop.f32.mrb[0].mxu0
        %1642 = vmatprep.mubr.bf16.mxu0 0
        %1643 = vmatmul.mubr.bf16.gmra.mrb[0].mxu0 %v948
        %v1644 = vpop.f32.mrb[0].mxu0
        %v1645 = vadd.f32 %v780, %v1644
        %v1646 = vpop.f32.mrb[0].mxu0
        %v1647 = vpop.f32.mrb[0].mxu0
        %v1648 = vadd.f32 %v780, %v1647
        %v1649 = vpop.f32.mrb[0].mxu0
        %1650 = vmatprep.mubr.bf16.mxu0 0
        %1651 = vmatmul.mubr.bf16.gmra.mrb[0].mxu0 %v951
        %v1652 = vpop.f32.mrb[0].mxu0
        %v1653 = vadd.f32 %v780, %v1652
        %v1654 = vpop.f32.mrb[0].mxu0
        %v1655 = vpop.f32.mrb[0].mxu0
        %v1656 = vadd.f32 %v780, %v1655
        %v1657 = vpop.f32.mrb[0].mxu0
        %1658 = vmatprep.mubr.bf16.mxu0 0
        %1659 = vmatmul.mubr.bf16.gmra.mrb[0].mxu0 %v954
        %v1660 = vpop.f32.mrb[0].mxu0
        %v1661 = vadd.f32 %v780, %v1660
        %v1662 = vpop.f32.mrb[0].mxu0
        %v1663 = vpop.f32.mrb[0].mxu0
        %v1664 = vadd.f32 %v780, %v1663
        %v1665 = vpop.f32.mrb[0].mxu0
        %1666 = vmatprep.mubr.bf16.mxu0 0
        %1667 = vmatmul.mubr.bf16.gmra.mrb[0].mxu0 %v957
        %v1668 = vpop.f32.mrb[0].mxu0
        %v1669 = vadd.f32 %v780, %v1668
        %v1670 = vpop.f32.mrb[0].mxu0
        %v1671 = vpop.f32.mrb[0].mxu0
        %v1672 = vadd.f32 %v780, %v1671
        %v1673 = vpop.f32.mrb[0].mxu0
        %1674 = vmatprep.mubr.bf16.mxu0 0
        %1675 = vmatmul.mubr.bf16.gmra.mrb[0].mxu0 %v960
        %v1676 = vpop.f32.mrb[0].mxu0
        %v1677 = vadd.f32 %v780, %v1676
        %v1678 = vpop.f32.mrb[0].mxu0
        %v1679 = vpop.f32.mrb[0].mxu0
        %v1680 = vadd.f32 %v780, %v1679
        %v1681 = vpop.f32.mrb[0].mxu0
        %1682 = vmatprep.mubr.bf16.mxu0 0
        %1683 = vmatmul.mubr.bf16.gmra.mrb[0].mxu0 %v963
        %v1684 = vpop.f32.mrb[0].mxu0
        %v1685 = vadd.f32 %v780, %v1684
        %v1686 = vpop.f32.mrb[0].mxu0
        %v1687 = vpop.f32.mrb[0].mxu0
        %v1688 = vadd.f32 %v780, %v1687
        %v1689 = vpop.f32.mrb[0].mxu0
        %1690 = vmatprep.mubr.bf16.mxu0 0
        %1691 = vmatmul.mubr.bf16.gmra.mrb[0].mxu0 %v966
        %v1692 = vpop.f32.mrb[0].mxu0
        %v1693 = vadd.f32 %v780, %v1692
        %v1694 = vpop.f32.mrb[0].mxu0
        %v1695 = vpop.f32.mrb[0].mxu0
        %v1696 = vadd.f32 %v780, %v1695
        %v1697 = vpop.f32.mrb[0].mxu0
        %1698 = vmatprep.mubr.bf16.mxu0 0
        %1699 = vmatmul.mubr.bf16.gmra.mrb[0].mxu0 %v969
        %v1700 = vpop.f32.mrb[0].mxu0
        %v1701 = vadd.f32 %v780, %v1700
        %v1702 = vpop.f32.mrb[0].mxu0
        %v1703 = vpop.f32.mrb[0].mxu0
        %v1704 = vadd.f32 %v780, %v1703
        %v1705 = vpop.f32.mrb[0].mxu0
        %1706 = vmatprep.mubr.bf16.mxu0 0
        %1707 = vmatmul.mubr.bf16.gmra.mrb[0].mxu0 %v972
        %v1708 = vpop.f32.mrb[0].mxu0
        %v1709 = vadd.f32 %v780, %v1708
        %v1710 = vpop.f32.mrb[0].mxu0
        %v1711 = vpop.f32.mrb[0].mxu0
        %v1712 = vadd.f32 %v780, %v1711
        %v1713 = vpop.f32.mrb[0].mxu0
        %1714 = vmatprep.mubr.bf16.mxu0 0
        %1715 = vmatmul.mubr.bf16.gmra.mrb[0].mxu0 %v975
        %v1716 = vpop.f32.mrb[0].mxu0
        %v1717 = vadd.f32 %v780, %v1716
        %v1718 = vpop.f32.mrb[0].mxu0
        %v1719 = vpop.f32.mrb[0].mxu0
        %v1720 = vadd.f32 %v780, %v1719
        %v1721 = vpop.f32.mrb[0].mxu0
        %1722 = vmatprep.mubr.bf16.mxu0 0
        %1723 = vmatmul.mubr.bf16.gmra.mrb[0].mxu0 %v978
        %v1724 = vpop.f32.mrb[0].mxu0
        %v1725 = vadd.f32 %v780, %v1724
        %v1726 = vpop.f32.mrb[0].mxu0
        %v1727 = vpop.f32.mrb[0].mxu0
        %v1728 = vadd.f32 %v780, %v1727
        %v1729 = vpop.f32.mrb[0].mxu0
        %1730 = vmatprep.mubr.bf16.mxu0 0
        %1731 = vmatmul.mubr.bf16.gmra.mrb[0].mxu0 %v981
        %v1732 = vpop.f32.mrb[0].mxu0
        %v1733 = vadd.f32 %v780, %v1732
        %v1734 = vpop.f32.mrb[0].mxu0
        %v1735 = vpop.f32.mrb[0].mxu0
        %v1736 = vadd.f32 %v780, %v1735
        %v1737 = vpop.f32.mrb[0].mxu0
        %1738 = vmatprep.mubr.bf16.mxu0 0
        %1739 = vmatmul.mubr.bf16.gmra.mrb[0].mxu0 %v984
        %v1740 = vpop.f32.mrb[0].mxu0
        %v1741 = vadd.f32 %v780, %v1740
        %v1742 = vpop.f32.mrb[0].mxu0
        %v1743 = vpop.f32.mrb[0].mxu0
        %v1744 = vadd.f32 %v780, %v1743
        %v1745 = vpop.f32.mrb[0].mxu0
        %1746 = vmatprep.mubr.bf16.mxu0 0
        %1747 = vmatmul.mubr.bf16.gmra.mrb[0].mxu0 %v987
        %v1748 = vpop.f32.mrb[0].mxu0
        %v1749 = vadd.f32 %v780, %v1748
        %v1750 = vpop.f32.mrb[0].mxu0
        %v1751 = vpop.f32.mrb[0].mxu0
        %v1752 = vadd.f32 %v780, %v1751
        %v1753 = vpop.f32.mrb[0].mxu0
        %1754 = vmatprep.mubr.bf16.mxu0 0
        %1755 = vmatmul.mubr.bf16.gmra.mrb[0].mxu0 %v990
        %v1756 = vpop.f32.mrb[0].mxu0
        %v1757 = vadd.f32 %v780, %v1756
        %v1758 = vpop.f32.mrb[0].mxu0
        %v1759 = vpop.f32.mrb[0].mxu0
        %v1760 = vadd.f32 %v780, %v1759
        %v1761 = vpop.f32.mrb[0].mxu0
        %1762 = vmatprep.mubr.bf16.mxu0 0
        %1763 = vmatmul.mubr.bf16.gmra.mrb[0].mxu0 %v993
        %v1764 = vpop.f32.mrb[0].mxu0
        %v1765 = vadd.f32 %v780, %v1764
        %v1766 = vpop.f32.mrb[0].mxu0
        %v1767 = vpop.f32.mrb[0].mxu0
        %v1768 = vadd.f32 %v780, %v1767
        %v1769 = vpop.f32.mrb[0].mxu0
        %1770 = vmatprep.mubr.bf16.mxu0 0
        %1771 = vmatmul.mubr.bf16.gmra.mrb[0].mxu0 %v996
        %v1772 = vpop.f32.mrb[0].mxu0
        %v1773 = vadd.f32 %v780, %v1772
        %v1774 = vpop.f32.mrb[0].mxu0
        %v1775 = vpop.f32.mrb[0].mxu0
        %v1776 = vadd.f32 %v780, %v1775
        %v1777 = vpop.f32.mrb[0].mxu0
        %1778 = vmatprep.mubr.bf16.mxu0 0
        %1779 = vmatmul.mubr.bf16.gmra.mrb[0].mxu0 %v999
        %v1780 = vpop.f32.mrb[0].mxu0
        %v1781 = vadd.f32 %v780, %v1780
        %v1782 = vpop.f32.mrb[0].mxu0
        %v1783 = vpop.f32.mrb[0].mxu0
        %v1784 = vadd.f32 %v780, %v1783
        %v1785 = vpop.f32.mrb[0].mxu0
        %1786 = vmatprep.mubr.bf16.mxu0 0
        %1787 = vmatmul.mubr.bf16.gmra.mrb[0].mxu0 %v1002
        %v1788 = vpop.f32.mrb[0].mxu0
        %v1789 = vadd.f32 %v780, %v1788
        %v1790 = vpop.f32.mrb[0].mxu0
        %v1791 = vpop.f32.mrb[0].mxu0
        %v1792 = vadd.f32 %v780, %v1791
        %v1793 = vpop.f32.mrb[0].mxu0
        %1794 = vmatprep.mubr.bf16.mxu0 0
        %1795 = vmatmul.mubr.bf16.gmra.mrb[0].mxu0 %v1005
        %v1796 = vpop.f32.mrb[0].mxu0
        %v1797 = vadd.f32 %v780, %v1796
        %v1798 = vpop.f32.mrb[0].mxu0
        %v1799 = vpop.f32.mrb[0].mxu0
        %v1800 = vadd.f32 %v780, %v1799
        %v1801 = vpop.f32.mrb[0].mxu0
        %1802 = vmatprep.mubr.bf16.mxu0 0
        %1803 = vmatmul.mubr.bf16.gmra.mrb[0].mxu0 %v1008
        %v1804 = vpop.f32.mrb[0].mxu0
        %v1805 = vadd.f32 %v780, %v1804
        %v1806 = vpop.f32.mrb[0].mxu0
        %v1807 = vpop.f32.mrb[0].mxu0
        %v1808 = vadd.f32 %v780, %v1807
        %v1809 = vpop.f32.mrb[0].mxu0
        %1810 = vmatprep.mubr.bf16.mxu0 0
        %1811 = vmatmul.mubr.bf16.gmra.mrb[0].mxu0 %v1011
        %v1812 = vpop.f32.mrb[0].mxu0
        %v1813 = vadd.f32 %v780, %v1812
        %v1814 = vpop.f32.mrb[0].mxu0
        %v1815 = vpop.f32.mrb[0].mxu0
        %v1816 = vadd.f32 %v780, %v1815
        %v1817 = vpop.f32.mrb[0].mxu0
        %1818 = vmatprep.mubr.bf16.mxu0 0
        %1819 = vmatmul.mubr.bf16.gmra.mrb[0].mxu0 %v1014
        %v1820 = vpop.f32.mrb[0].mxu0
        %v1821 = vadd.f32 %v780, %v1820
        %v1822 = vpop.f32.mrb[0].mxu0
        %v1823 = vpop.f32.mrb[0].mxu0
        %v1824 = vadd.f32 %v780, %v1823
        %v1825 = vpop.f32.mrb[0].mxu0
        %1826 = vmatprep.mubr.bf16.mxu0 0
        %1827 = vmatmul.mubr.bf16.gmra.mrb[0].mxu0 %v1017
        %v1828 = vpop.f32.mrb[0].mxu0
        %v1829 = vadd.f32 %v780, %v1828
        %v1830 = vpop.f32.mrb[0].mxu0
        %v1831 = vpop.f32.mrb[0].mxu0
        %v1832 = vadd.f32 %v780, %v1831
        %v1833 = vpop.f32.mrb[0].mxu0
        %1834 = vmatprep.mubr.bf16.mxu0 0
        %1835 = vmatmul.mubr.bf16.gmra.mrb[0].mxu0 %v1020
        %v1836 = vpop.f32.mrb[0].mxu0
        %v1837 = vadd.f32 %v780, %v1836
        %v1838 = vpop.f32.mrb[0].mxu0
        %v1839 = vpop.f32.mrb[0].mxu0
        %v1840 = vadd.f32 %v780, %v1839
        %v1841 = vpop.f32.mrb[0].mxu0
        %1842 = vmatprep.mubr.bf16.mxu0 0
        %1843 = vmatmul.mubr.bf16.gmra.mrb[0].mxu0 %v1023
        %v1844 = vpop.f32.mrb[0].mxu0
        %v1845 = vadd.f32 %v780, %v1844
        %v1846 = vpop.f32.mrb[0].mxu0
        %v1847 = vpop.f32.mrb[0].mxu0
        %v1848 = vadd.f32 %v780, %v1847
        %v1849 = vpop.f32.mrb[0].mxu0
        %1850 = vmatprep.mubr.bf16.mxu0 0
        %1851 = vmatmul.mubr.bf16.gmra.mrb[0].mxu0 %v1026
        %v1852 = vpop.f32.mrb[0].mxu0
        %v1853 = vadd.f32 %v780, %v1852
        %v1854 = vpop.f32.mrb[0].mxu0
        %v1855 = vpop.f32.mrb[0].mxu0
        %v1856 = vadd.f32 %v780, %v1855
        %v1857 = vpop.f32.mrb[0].mxu0
        %1858 = vmatprep.mubr.bf16.mxu0 0
        %1859 = vmatmul.mubr.bf16.gmra.mrb[0].mxu0 %v1029
        %v1860 = vpop.f32.mrb[0].mxu0
        %v1861 = vadd.f32 %v780, %v1860
        %v1862 = vpop.f32.mrb[0].mxu0
        %v1863 = vpop.f32.mrb[0].mxu0
        %v1864 = vadd.f32 %v780, %v1863
        %v1865 = vpop.f32.mrb[0].mxu0
        %1866 = vmatprep.mubr.bf16.mxu0 0
        %1867 = vmatmul.mubr.bf16.gmra.mrb[0].mxu0 %v1032
        %v1868 = vpop.f32.mrb[0].mxu0
        %v1869 = vadd.f32 %v780, %v1868
        %v1870 = vpop.f32.mrb[0].mxu0
        %v1871 = vpop.f32.mrb[0].mxu0
        %v1872 = vadd.f32 %v780, %v1871
        %v1873 = vpop.f32.mrb[0].mxu0
        %1874 = vmatprep.mubr.bf16.mxu0 0
        %1875 = vmatmul.mubr.bf16.gmra.mrb[0].mxu0 %v1035
        %v1876 = vpop.f32.mrb[0].mxu0
        %v1877 = vadd.f32 %v780, %v1876
        %v1878 = vpop.f32.mrb[0].mxu0
        %v1879 = vpop.f32.mrb[0].mxu0
        %v1880 = vadd.f32 %v780, %v1879
        %v1881 = vpop.f32.mrb[0].mxu0
        %1882 = vmatprep.mubr.bf16.mxu0 0
        %1883 = vmatmul.mubr.bf16.gmra.mrb[0].mxu0 %v1038
        %v1884 = vpop.f32.mrb[0].mxu0
        %v1885 = vadd.f32 %v780, %v1884
        %v1886 = vpop.f32.mrb[0].mxu0
        %v1887 = vpop.f32.mrb[0].mxu0
        %v1888 = vadd.f32 %v780, %v1887
        %v1889 = vpop.f32.mrb[0].mxu0
        %1890 = vmatprep.mubr.bf16.mxu0 0
        %1891 = vmatmul.mubr.bf16.gmra.mrb[0].mxu0 %v1041
        %v1892 = vpop.f32.mrb[0].mxu0
        %v1893 = vadd.f32 %v780, %v1892
        %v1894 = vpop.f32.mrb[0].mxu0
        %v1895 = vpop.f32.mrb[0].mxu0
        %v1896 = vadd.f32 %v780, %v1895
        %v1897 = vpop.f32.mrb[0].mxu0
        %1898 = vmatprep.mubr.bf16.mxu0 0
        %1899 = vmatmul.mubr.bf16.gmra.mrb[0].mxu0 %v1044
        %v1900 = vpop.f32.mrb[0].mxu0
        %v1901 = vadd.f32 %v780, %v1900
        %v1902 = vpop.f32.mrb[0].mxu0
        %v1903 = vpop.f32.mrb[0].mxu0
        %v1904 = vadd.f32 %v780, %v1903
        %v1905 = vpop.f32.mrb[0].mxu0
        %1906 = vmatprep.mubr.bf16.mxu0 0
        %1907 = vmatmul.mubr.bf16.gmra.mrb[0].mxu0 %v1047
        %v1908 = vpop.f32.mrb[0].mxu0
        %v1909 = vadd.f32 %v780, %v1908
        %v1910 = vpop.f32.mrb[0].mxu0
        %v1911 = vpop.f32.mrb[0].mxu0
        %v1912 = vadd.f32 %v780, %v1911
        %v1913 = vpop.f32.mrb[0].mxu0
        %1914 = vmatprep.mubr.bf16.mxu0 0
        %1915 = vmatmul.mubr.bf16.gmra.mrb[0].mxu0 %v1050
        %v1916 = vpop.f32.mrb[0].mxu0
        %v1917 = vadd.f32 %v780, %v1916
        %v1918 = vpop.f32.mrb[0].mxu0
        %v1919 = vpop.f32.mrb[0].mxu0
        %v1920 = vadd.f32 %v780, %v1919
        %v1921 = vpop.f32.mrb[0].mxu0
        %1922 = vmatprep.mubr.bf16.mxu0 0
        %1923 = vmatmul.mubr.bf16.gmra.mrb[0].mxu0 %v1053
        %v1924 = vpop.f32.mrb[0].mxu0
        %v1925 = vadd.f32 %v780, %v1924
        %v1926 = vpop.f32.mrb[0].mxu0
        %v1927 = vpop.f32.mrb[0].mxu0
        %v1928 = vadd.f32 %v780, %v1927
        %v1929 = vpop.f32.mrb[0].mxu0
        %1930 = vmatprep.mubr.bf16.mxu0 0
        %1931 = vmatmul.mubr.bf16.gmra.mrb[0].mxu0 %v1056
        %v1932 = vpop.f32.mrb[0].mxu0
        %v1933 = vadd.f32 %v780, %v1932
        %v1934 = vpop.f32.mrb[0].mxu0
        %v1935 = vpop.f32.mrb[0].mxu0
        %v1936 = vadd.f32 %v780, %v1935
        %v1937 = vpop.f32.mrb[0].mxu0
        %1938 = vmatprep.mubr.bf16.mxu0 0
        %1939 = vmatmul.mubr.bf16.gmra.mrb[0].mxu0 %v1059
        %v1940 = vpop.f32.mrb[0].mxu0
        %v1941 = vadd.f32 %v780, %v1940
        %v1942 = vpop.f32.mrb[0].mxu0
        %v1943 = vpop.f32.mrb[0].mxu0
        %v1944 = vadd.f32 %v780, %v1943
        %v1945 = vpop.f32.mrb[0].mxu0
        %1946 = vmatprep.mubr.bf16.mxu0 0
        %1947 = vmatmul.mubr.bf16.gmra.mrb[0].mxu0 %v1062
        %v1948 = vpop.f32.mrb[0].mxu0
        %v1949 = vadd.f32 %v780, %v1948
        %v1950 = vpop.f32.mrb[0].mxu0
        %v1951 = vpop.f32.mrb[0].mxu0
        %v1952 = vadd.f32 %v780, %v1951
        %v1953 = vpop.f32.mrb[0].mxu0
        %1954 = vmatprep.mubr.bf16.mxu0 0
        %1955 = vmatmul.mubr.bf16.gmra.mrb[0].mxu0 %v1065
        %v1956 = vpop.f32.mrb[0].mxu0
        %v1957 = vadd.f32 %v780, %v1956
        %v1958 = vpop.f32.mrb[0].mxu0
        %v1959 = vpop.f32.mrb[0].mxu0
        %v1960 = vadd.f32 %v780, %v1959
        %v1961 = vpop.f32.mrb[0].mxu0
        %1962 = vmatprep.mubr.bf16.mxu0 0
        %1963 = vmatmul.mubr.bf16.gmra.mrb[0].mxu0 %v1068
        %v1964 = vpop.f32.mrb[0].mxu0
        %v1965 = vadd.f32 %v780, %v1964
        %v1966 = vpop.f32.mrb[0].mxu0
        %v1967 = vpop.f32.mrb[0].mxu0
        %v1968 = vadd.f32 %v780, %v1967
        %v1969 = vpop.f32.mrb[0].mxu0
        %1970 = vmatprep.mubr.bf16.mxu0 0
        %1971 = vmatmul.mubr.bf16.gmra.mrb[0].mxu0 %v1071
        %v1972 = vpop.f32.mrb[0].mxu0
        %v1973 = vadd.f32 %v780, %v1972
        %v1974 = vpop.f32.mrb[0].mxu0
        %v1975 = vpop.f32.mrb[0].mxu0
        %v1976 = vadd.f32 %v780, %v1975
        %v1977 = vpop.f32.mrb[0].mxu0
        %1978 = vmatprep.mubr.bf16.mxu0 0
        %1979 = vmatmul.mubr.bf16.gmra.mrb[0].mxu0 %v1074
        %v1980 = vpop.f32.mrb[0].mxu0
        %v1981 = vadd.f32 %v780, %v1980
        %v1982 = vpop.f32.mrb[0].mxu0
        %v1983 = vpop.f32.mrb[0].mxu0
        %v1984 = vadd.f32 %v780, %v1983
        %v1985 = vpop.f32.mrb[0].mxu0
        %1986 = vmatprep.mubr.bf16.mxu0 0
        %1987 = vmatmul.mubr.bf16.gmra.mrb[0].mxu0 %v1077
        %v1988 = vpop.f32.mrb[0].mxu0
        %v1989 = vadd.f32 %v780, %v1988
        %v1990 = vpop.f32.mrb[0].mxu0
        %v1991 = vpop.f32.mrb[0].mxu0
        %v1992 = vadd.f32 %v780, %v1991
        %v1993 = vpop.f32.mrb[0].mxu0
        %1994 = vmatprep.mubr.bf16.mxu0 0
        %1995 = vmatmul.mubr.bf16.gmra.mrb[0].mxu0 %v1080
        %v1996 = vpop.f32.mrb[0].mxu0
        %v1997 = vadd.f32 %v780, %v1996
        %v1998 = vpop.f32.mrb[0].mxu0
        %v1999 = vpop.f32.mrb[0].mxu0
        %v2000 = vadd.f32 %v780, %v1999
        %v2001 = vpop.f32.mrb[0].mxu0
        %2002 = vmatprep.mubr.bf16.mxu0 0
        %2003 = vmatmul.mubr.bf16.gmra.mrb[0].mxu0 %v1083
        %v2004 = vpop.f32.mrb[0].mxu0
        %v2005 = vadd.f32 %v780, %v2004
        %v2006 = vpop.f32.mrb[0].mxu0
        %v2007 = vpop.f32.mrb[0].mxu0
        %v2008 = vadd.f32 %v780, %v2007
        %v2009 = vpop.f32.mrb[0].mxu0
        %2010 = vmatprep.mubr.bf16.mxu0 0
        %2011 = vmatmul.mubr.bf16.gmra.mrb[0].mxu0 %v1086
        %v2012 = vpop.f32.mrb[0].mxu0
        %v2013 = vadd.f32 %v780, %v2012
        %v2014 = vpop.f32.mrb[0].mxu0
        %v2015 = vpop.f32.mrb[0].mxu0
        %v2016 = vadd.f32 %v780, %v2015
        %v2017 = vpop.f32.mrb[0].mxu0
        %2018 = vmatprep.mubr.bf16.mxu0 0
        %2019 = vmatmul.mubr.bf16.gmra.mrb[0].mxu0 %v1089
        %v2020 = vpop.f32.mrb[0].mxu0
        %v2021 = vadd.f32 %v780, %v2020
        %v2022 = vpop.f32.mrb[0].mxu0
        %v2023 = vpop.f32.mrb[0].mxu0
        %v2024 = vadd.f32 %v780, %v2023
        %v2025 = vpop.f32.mrb[0].mxu0
        %2026 = vmatprep.mubr.bf16.mxu0 0
        %2027 = vmatmul.mubr.bf16.gmra.mrb[0].mxu0 %v1092
        %v2028 = vpop.f32.mrb[0].mxu0
        %v2029 = vadd.f32 %v780, %v2028
        %v2030 = vpop.f32.mrb[0].mxu0
        %v2031 = vpop.f32.mrb[0].mxu0
        %v2032 = vadd.f32 %v780, %v2031
        %v2033 = vpop.f32.mrb[0].mxu0
        %2034 = vmatprep.mubr.bf16.mxu0 0
        %2035 = vmatmul.mubr.bf16.gmra.mrb[0].mxu0 %v1095
        %v2036 = vpop.f32.mrb[0].mxu0
        %v2037 = vadd.f32 %v780, %v2036
        %v2038 = vpop.f32.mrb[0].mxu0
        %v2039 = vpop.f32.mrb[0].mxu0
        %v2040 = vadd.f32 %v780, %v2039
        %v2041 = vpop.f32.mrb[0].mxu0
        %2042 = vmatprep.mubr.bf16.mxu0 0
        %2043 = vmatmul.mubr.bf16.gmra.mrb[0].mxu0 %v1098
        %v2044 = vpop.f32.mrb[0].mxu0
        %v2045 = vadd.f32 %v780, %v2044
        %v2046 = vpop.f32.mrb[0].mxu0
        %v2047 = vpop.f32.mrb[0].mxu0
        %v2048 = vadd.f32 %v780, %v2047
        %v2049 = vpop.f32.mrb[0].mxu0
        %2050 = vmatprep.mubr.bf16.mxu0 0
        %2051 = vmatmul.mubr.bf16.gmra.mrb[0].mxu0 %v1101
        %v2052 = vpop.f32.mrb[0].mxu0
        %v2053 = vadd.f32 %v780, %v2052
        %v2054 = vpop.f32.mrb[0].mxu0
        %v2055 = vpop.f32.mrb[0].mxu0
        %v2056 = vadd.f32 %v780, %v2055
        %v2057 = vpop.f32.mrb[0].mxu0
        %2058 = vmatprep.mubr.bf16.mxu0 0
        %2059 = vmatmul.mubr.bf16.gmra.mrb[0].mxu0 %v1104
        %v2060 = vpop.f32.mrb[0].mxu0
        %v2061 = vadd.f32 %v780, %v2060
        %v2062 = vpop.f32.mrb[0].mxu0
        %v2063 = vpop.f32.mrb[0].mxu0
        %v2064 = vadd.f32 %v780, %v2063
        %v2065 = vpop.f32.mrb[0].mxu0
        %2066 = vmatprep.mubr.bf16.mxu0 0
        %2067 = vmatmul.mubr.bf16.gmra.mrb[0].mxu0 %v1107
        %v2068 = vpop.f32.mrb[0].mxu0
        %v2069 = vadd.f32 %v780, %v2068
        %v2070 = vpop.f32.mrb[0].mxu0
        %v2071 = vpop.f32.mrb[0].mxu0
        %v2072 = vadd.f32 %v780, %v2071
        %v2073 = vpop.f32.mrb[0].mxu0
        %2074 = vmatprep.mubr.bf16.mxu0 0
        %2075 = vmatmul.mubr.bf16.gmra.mrb[0].mxu0 %v1110
        %v2076 = vpop.f32.mrb[0].mxu0
        %v2077 = vadd.f32 %v780, %v2076
        %v2078 = vpop.f32.mrb[0].mxu0
        %v2079 = vpop.f32.mrb[0].mxu0
        %v2080 = vadd.f32 %v780, %v2079
        %v2081 = vpop.f32.mrb[0].mxu0
        %2082 = vmatprep.mubr.bf16.mxu0 0
        %2083 = vmatmul.mubr.bf16.gmra.mrb[0].mxu0 %v1113
        %v2084 = vpop.f32.mrb[0].mxu0
        %v2085 = vadd.f32 %v780, %v2084
        %v2086 = vpop.f32.mrb[0].mxu0
        %v2087 = vpop.f32.mrb[0].mxu0
        %v2088 = vadd.f32 %v780, %v2087
        %v2089 = vpop.f32.mrb[0].mxu0
        %2090 = vmatprep.mubr.bf16.mxu0 0
        %2091 = vmatmul.mubr.bf16.gmra.mrb[0].mxu0 %v1116
        %v2092 = vpop.f32.mrb[0].mxu0
        %v2093 = vadd.f32 %v780, %v2092
        %v2094 = vpop.f32.mrb[0].mxu0
        %v2095 = vpop.f32.mrb[0].mxu0
        %v2096 = vadd.f32 %v780, %v2095
        %v2097 = vpop.f32.mrb[0].mxu0
        %2098 = vmatprep.mubr.bf16.mxu0 0
        %2099 = vmatmul.mubr.bf16.gmra.mrb[0].mxu0 %v1119
        %v2100 = vpop.f32.mrb[0].mxu0
        %v2101 = vadd.f32 %v780, %v2100
        %v2102 = vpop.f32.mrb[0].mxu0
        %v2103 = vpop.f32.mrb[0].mxu0
        %v2104 = vadd.f32 %v780, %v2103
        %v2105 = vpop.f32.mrb[0].mxu0
        %2106 = vmatprep.mubr.bf16.mxu0 0
        %2107 = vmatmul.mubr.bf16.gmra.mrb[0].mxu0 %v1122
        %v2108 = vpop.f32.mrb[0].mxu0
        %v2109 = vadd.f32 %v780, %v2108
        %v2110 = vpop.f32.mrb[0].mxu0
        %v2111 = vpop.f32.mrb[0].mxu0
        %v2112 = vadd.f32 %v780, %v2111
        %v2113 = vpop.f32.mrb[0].mxu0
        %2114 = vmatprep.mubr.bf16.mxu0 0
        %2115 = vmatmul.mubr.bf16.gmra.mrb[0].mxu0 %v1125
        %v2116 = vpop.f32.mrb[0].mxu0
        %v2117 = vadd.f32 %v780, %v2116
        %v2118 = vpop.f32.mrb[0].mxu0
        %v2119 = vpop.f32.mrb[0].mxu0
        %v2120 = vadd.f32 %v780, %v2119
        %v2121 = vpop.f32.mrb[0].mxu0
        %2122 = vmatprep.mubr.bf16.mxu0 0
        %2123 = vmatmul.mubr.bf16.gmra.mrb[0].mxu0 %v1128
        %v2124 = vpop.f32.mrb[0].mxu0
        %v2125 = vadd.f32 %v780, %v2124
        %v2126 = vpop.f32.mrb[0].mxu0
        %v2127 = vpop.f32.mrb[0].mxu0
        %v2128 = vadd.f32 %v780, %v2127
        %v2129 = vpop.f32.mrb[0].mxu0
        %2130 = vmatprep.mubr.bf16.mxu0 0
        %2131 = vmatmul.mubr.bf16.gmra.mrb[0].mxu0 %v1131
        %v2132 = vpop.f32.mrb[0].mxu0
        %v2133 = vadd.f32 %v780, %v2132
        %v2134 = vpop.f32.mrb[0].mxu0
        %v2135 = vpop.f32.mrb[0].mxu0
        %v2136 = vadd.f32 %v780, %v2135
        %v2137 = vpop.f32.mrb[0].mxu0
        %2138 = vmatprep.mubr.bf16.mxu0 0
        %2139 = vmatmul.mubr.bf16.gmra.mrb[0].mxu0 %v1134
        %v2140 = vpop.f32.mrb[0].mxu0
        %v2141 = vadd.f32 %v780, %v2140
        %v2142 = vpop.f32.mrb[0].mxu0
        %v2143 = vpop.f32.mrb[0].mxu0
        %v2144 = vadd.f32 %v780, %v2143
        %v2145 = vpop.f32.mrb[0].mxu0
        %2146 = vmatprep.mubr.bf16.mxu0 0
        %2147 = vmatmul.mubr.bf16.gmra.mrb[0].mxu0 %v1137
        %v2148 = vpop.f32.mrb[0].mxu0
        %v2149 = vadd.f32 %v780, %v2148
        %v2150 = vpop.f32.mrb[0].mxu0
        %v2151 = vpop.f32.mrb[0].mxu0
        %v2152 = vadd.f32 %v780, %v2151
        %v2153 = vpop.f32.mrb[0].mxu0
        %2154 = vmatprep.mubr.bf16.mxu0 0
        %2155 = vmatmul.mubr.bf16.gmra.mrb[0].mxu0 %v1140
        %v2156 = vpop.f32.mrb[0].mxu0
        %v2157 = vadd.f32 %v780, %v2156
        %v2158 = vpop.f32.mrb[0].mxu0
        %v2159 = vpop.f32.mrb[0].mxu0
        %v2160 = vadd.f32 %v780, %v2159
        %v2161 = vpop.f32.mrb[0].mxu0
        %2162 = vmatprep.mubr.bf16.mxu0 0
        %2163 = vmatmul.mubr.bf16.gmra.mrb[0].mxu0 %v1143
        %v2164 = vpop.f32.mrb[0].mxu0
        %v2165 = vadd.f32 %v780, %v2164
        %v2166 = vpop.f32.mrb[0].mxu0
        %v2167 = vpop.f32.mrb[0].mxu0
        %v2168 = vadd.f32 %v780, %v2167
        %v2169 = vpop.f32.mrb[0].mxu0
        %2170 = vmatprep.mubr.bf16.mxu0 0
        %2171 = vmatmul.mubr.bf16.gmra.mrb[0].mxu0 %v1146
        %v2172 = vpop.f32.mrb[0].mxu0
        %v2173 = vadd.f32 %v780, %v2172
        %v2174 = vpop.f32.mrb[0].mxu0
        %v2175 = vpop.f32.mrb[0].mxu0
        %v2176 = vadd.f32 %v780, %v2175
        %v2177 = vpop.f32.mrb[0].mxu0
        %2178 = vmatprep.mubr.bf16.mxu0 0
        %2179 = vmatmul.mubr.bf16.gmra.mrb[0].mxu0 %v1149
        %v2180 = vpop.f32.mrb[0].mxu0
        %v2181 = vadd.f32 %v780, %v2180
        %v2182 = vpop.f32.mrb[0].mxu0
        %v2183 = vpop.f32.mrb[0].mxu0
        %v2184 = vadd.f32 %v780, %v2183
        %v2185 = vpop.f32.mrb[0].mxu0
        %2186 = vmatprep.mubr.bf16.mxu0 0
        %2187 = vmatmul.mubr.bf16.gmra.mrb[0].mxu0 %v1152
        %v2188 = vpop.f32.mrb[0].mxu0
        %v2189 = vadd.f32 %v780, %v2188
        %v2190 = vpop.f32.mrb[0].mxu0
        %v2191 = vpop.f32.mrb[0].mxu0
        %v2192 = vadd.f32 %v780, %v2191
        %v2193 = vpop.f32.mrb[0].mxu0
        %2194 = vmatprep.mubr.bf16.mxu0 0
        %2195 = vmatmul.mubr.bf16.gmra.mrb[0].mxu0 %v1155
        %v2196 = vpop.f32.mrb[0].mxu0
        %v2197 = vadd.f32 %v780, %v2196
        %v2198 = vpop.f32.mrb[0].mxu0
        %v2199 = vpop.f32.mrb[0].mxu0
        %v2200 = vadd.f32 %v780, %v2199
        %v2201 = vpop.f32.mrb[0].mxu0
        %2202 = vmatprep.mubr.bf16.mxu0 0
        %2203 = vmatmul.mubr.bf16.gmra.mrb[0].mxu0 %v1158
        %v2204 = vpop.f32.mrb[0].mxu0
        %v2205 = vadd.f32 %v780, %v2204
        %v2206 = vpop.f32.mrb[0].mxu0
        %v2207 = vpop.f32.mrb[0].mxu0
        %v2208 = vadd.f32 %v780, %v2207
        %v2209 = vpop.f32.mrb[0].mxu0
        %2210 = vmatprep.mubr.bf16.mxu0 0
        %2211 = vmatmul.mubr.bf16.gmra.mrb[0].mxu0 %v1161
        %v2212 = vpop.f32.mrb[0].mxu0
        %v2213 = vadd.f32 %v780, %v2212
        %v2214 = vpop.f32.mrb[0].mxu0
        %v2215 = vpop.f32.mrb[0].mxu0
        %v2216 = vadd.f32 %v780, %v2215
        %v2217 = vpop.f32.mrb[0].mxu0
        %2218 = vmatprep.mubr.bf16.mxu0 0
        %2219 = vmatmul.mubr.bf16.gmra.mrb[0].mxu0 %v1164
        %v2220 = vpop.f32.mrb[0].mxu0
        %v2221 = vadd.f32 %v780, %v2220
        %v2222 = vpop.f32.mrb[0].mxu0
        %v2223 = vpop.f32.mrb[0].mxu0
        %v2224 = vadd.f32 %v780, %v2223
        %v2225 = vpop.f32.mrb[0].mxu0
        %2226 = vdwg.mxu0
        %v2227 = vmax.f32 %v1205, 0.0
        %v2228 = vmax.f32 %v1208, 0.0
        %v2229 = vmax.f32 %v1213, 0.0
        %v2230 = vmax.f32 %v1216, 0.0
        %v2231 = vmax.f32 %v1221, 0.0
        %v2232 = vmax.f32 %v1224, 0.0
        %v2233 = vmax.f32 %v1229, 0.0
        %v2234 = vmax.f32 %v1232, 0.0
        %v2235 = vmax.f32 %v1237, 0.0
        %v2236 = vmax.f32 %v1240, 0.0
        %v2237 = vmax.f32 %v1245, 0.0
        %v2238 = vmax.f32 %v1248, 0.0
        %v2239 = vmax.f32 %v1253, 0.0
        %v2240 = vmax.f32 %v1256, 0.0
        %v2241 = vmax.f32 %v1261, 0.0
        %v2242 = vmax.f32 %v1264, 0.0
        %v2243 = vmax.f32 %v1269, 0.0
        %v2244 = vmax.f32 %v1272, 0.0
        %v2245 = vmax.f32 %v1277, 0.0
        %v2246 = vmax.f32 %v1280, 0.0
        %v2247 = vmax.f32 %v1285, 0.0
        %v2248 = vmax.f32 %v1288, 0.0
        %v2249 = vmax.f32 %v1293, 0.0
        %v2250 = vmax.f32 %v1296, 0.0
        %v2251 = vmax.f32 %v1301, 0.0
        %v2252 = vmax.f32 %v1304, 0.0
        %v2253 = vmax.f32 %v1309, 0.0
        %v2254 = vmax.f32 %v1312, 0.0
        %v2255 = vmax.f32 %v1317, 0.0
        %v2256 = vmax.f32 %v1320, 0.0
        %v2257 = vmax.f32 %v1325, 0.0
        %v2258 = vmax.f32 %v1328, 0.0
        %v2259 = vmax.f32 %v1333, 0.0
        %v2260 = vmax.f32 %v1336, 0.0
        %v2261 = vmax.f32 %v1341, 0.0
        %v2262 = vmax.f32 %v1344, 0.0
        %v2263 = vmax.f32 %v1349, 0.0
        %v2264 = vmax.f32 %v1352, 0.0
        %v2265 = vmax.f32 %v1357, 0.0
        %v2266 = vmax.f32 %v1360, 0.0
        %v2267 = vmax.f32 %v1365, 0.0
        %v2268 = vmax.f32 %v1368, 0.0
        %v2269 = vmax.f32 %v1373, 0.0
        %v2270 = vmax.f32 %v1376, 0.0
        %v2271 = vmax.f32 %v1381, 0.0
        %v2272 = vmax.f32 %v1384, 0.0
        %v2273 = vmax.f32 %v1389, 0.0
        %v2274 = vmax.f32 %v1392, 0.0
        %v2275 = vmax.f32 %v1397, 0.0
        %v2276 = vmax.f32 %v1400, 0.0
        %v2277 = vmax.f32 %v1405, 0.0
        %v2278 = vmax.f32 %v1408, 0.0
        %v2279 = vmax.f32 %v1413, 0.0
        %v2280 = vmax.f32 %v1416, 0.0
        %v2281 = vmax.f32 %v1421, 0.0
        %v2282 = vmax.f32 %v1424, 0.0
        %v2283 = vmax.f32 %v1429, 0.0
        %v2284 = vmax.f32 %v1432, 0.0
        %v2285 = vmax.f32 %v1437, 0.0
        %v2286 = vmax.f32 %v1440, 0.0
        %v2287 = vmax.f32 %v1445, 0.0
        %v2288 = vmax.f32 %v1448, 0.0
        %v2289 = vmax.f32 %v1453, 0.0
        %v2290 = vmax.f32 %v1456, 0.0
        %v2291 = vmax.f32 %v1461, 0.0
        %v2292 = vmax.f32 %v1464, 0.0
        %v2293 = vmax.f32 %v1469, 0.0
        %v2294 = vmax.f32 %v1472, 0.0
        %v2295 = vmax.f32 %v1477, 0.0
        %v2296 = vmax.f32 %v1480, 0.0
        %v2297 = vmax.f32 %v1485, 0.0
        %v2298 = vmax.f32 %v1488, 0.0
        %v2299 = vmax.f32 %v1493, 0.0
        %v2300 = vmax.f32 %v1496, 0.0
        %v2301 = vmax.f32 %v1501, 0.0
        %v2302 = vmax.f32 %v1504, 0.0
        %v2303 = vmax.f32 %v1509, 0.0
        %v2304 = vmax.f32 %v1512, 0.0
        %v2305 = vmax.f32 %v1517, 0.0
        %v2306 = vmax.f32 %v1520, 0.0
        %v2307 = vmax.f32 %v1525, 0.0
        %v2308 = vmax.f32 %v1528, 0.0
        %v2309 = vmax.f32 %v1533, 0.0
        %v2310 = vmax.f32 %v1536, 0.0
        %v2311 = vmax.f32 %v1541, 0.0
        %v2312 = vmax.f32 %v1544, 0.0
        %v2313 = vmax.f32 %v1549, 0.0
        %v2314 = vmax.f32 %v1552, 0.0
        %v2315 = vmax.f32 %v1557, 0.0
        %v2316 = vmax.f32 %v1560, 0.0
        %v2317 = vmax.f32 %v1565, 0.0
        %v2318 = vmax.f32 %v1568, 0.0
        %v2319 = vmax.f32 %v1573, 0.0
        %v2320 = vmax.f32 %v1576, 0.0
        %v2321 = vmax.f32 %v1581, 0.0
        %v2322 = vmax.f32 %v1584, 0.0
        %v2323 = vmax.f32 %v1589, 0.0
        %v2324 = vmax.f32 %v1592, 0.0
        %v2325 = vmax.f32 %v1597, 0.0
        %v2326 = vmax.f32 %v1600, 0.0
        %v2327 = vmax.f32 %v1605, 0.0
        %v2328 = vmax.f32 %v1608, 0.0
        %v2329 = vmax.f32 %v1613, 0.0
        %v2330 = vmax.f32 %v1616, 0.0
        %v2331 = vmax.f32 %v1621, 0.0
        %v2332 = vmax.f32 %v1624, 0.0
        %v2333 = vmax.f32 %v1629, 0.0
        %v2334 = vmax.f32 %v1632, 0.0
        %v2335 = vmax.f32 %v1637, 0.0
        %v2336 = vmax.f32 %v1640, 0.0
        %v2337 = vmax.f32 %v1645, 0.0
        %v2338 = vmax.f32 %v1648, 0.0
        %v2339 = vmax.f32 %v1653, 0.0
        %v2340 = vmax.f32 %v1656, 0.0
        %v2341 = vmax.f32 %v1661, 0.0
        %v2342 = vmax.f32 %v1664, 0.0
        %v2343 = vmax.f32 %v1669, 0.0
        %v2344 = vmax.f32 %v1672, 0.0
        %v2345 = vmax.f32 %v1677, 0.0
        %v2346 = vmax.f32 %v1680, 0.0
        %v2347 = vmax.f32 %v1685, 0.0
        %v2348 = vmax.f32 %v1688, 0.0
        %v2349 = vmax.f32 %v1693, 0.0
        %v2350 = vmax.f32 %v1696, 0.0
        %v2351 = vmax.f32 %v1701, 0.0
        %v2352 = vmax.f32 %v1704, 0.0
        %v2353 = vmax.f32 %v1709, 0.0
        %v2354 = vmax.f32 %v1712, 0.0
        %v2355 = vmax.f32 %v1717, 0.0
        %v2356 = vmax.f32 %v1720, 0.0
        %v2357 = vmax.f32 %v1725, 0.0
        %v2358 = vmax.f32 %v1728, 0.0
        %v2359 = vmax.f32 %v1733, 0.0
        %v2360 = vmax.f32 %v1736, 0.0
        %v2361 = vmax.f32 %v1741, 0.0
        %v2362 = vmax.f32 %v1744, 0.0
        %v2363 = vmax.f32 %v1749, 0.0
        %v2364 = vmax.f32 %v1752, 0.0
        %v2365 = vmax.f32 %v1757, 0.0
        %v2366 = vmax.f32 %v1760, 0.0
        %v2367 = vmax.f32 %v1765, 0.0
        %v2368 = vmax.f32 %v1768, 0.0
        %v2369 = vmax.f32 %v1773, 0.0
        %v2370 = vmax.f32 %v1776, 0.0
        %v2371 = vmax.f32 %v1781, 0.0
        %v2372 = vmax.f32 %v1784, 0.0
        %v2373 = vmax.f32 %v1789, 0.0
        %v2374 = vmax.f32 %v1792, 0.0
        %v2375 = vmax.f32 %v1797, 0.0
        %v2376 = vmax.f32 %v1800, 0.0
        %v2377 = vmax.f32 %v1805, 0.0
        %v2378 = vmax.f32 %v1808, 0.0
        %v2379 = vmax.f32 %v1813, 0.0
        %v2380 = vmax.f32 %v1816, 0.0
        %v2381 = vmax.f32 %v1821, 0.0
        %v2382 = vmax.f32 %v1824, 0.0
        %v2383 = vmax.f32 %v1829, 0.0
        %v2384 = vmax.f32 %v1832, 0.0
        %v2385 = vmax.f32 %v1837, 0.0
        %v2386 = vmax.f32 %v1840, 0.0
        %v2387 = vmax.f32 %v1845, 0.0
        %v2388 = vmax.f32 %v1848, 0.0
        %v2389 = vmax.f32 %v1853, 0.0
        %v2390 = vmax.f32 %v1856, 0.0
        %v2391 = vmax.f32 %v1861, 0.0
        %v2392 = vmax.f32 %v1864, 0.0
        %v2393 = vmax.f32 %v1869, 0.0
        %v2394 = vmax.f32 %v1872, 0.0
        %v2395 = vmax.f32 %v1877, 0.0
        %v2396 = vmax.f32 %v1880, 0.0
        %v2397 = vmax.f32 %v1885, 0.0
        %v2398 = vmax.f32 %v1888, 0.0
        %v2399 = vmax.f32 %v1893, 0.0
        %v2400 = vmax.f32 %v1896, 0.0
        %v2401 = vmax.f32 %v1901, 0.0
        %v2402 = vmax.f32 %v1904, 0.0
        %v2403 = vmax.f32 %v1909, 0.0
        %v2404 = vmax.f32 %v1912, 0.0
        %v2405 = vmax.f32 %v1917, 0.0
        %v2406 = vmax.f32 %v1920, 0.0
        %v2407 = vmax.f32 %v1925, 0.0
        %v2408 = vmax.f32 %v1928, 0.0
        %v2409 = vmax.f32 %v1933, 0.0
        %v2410 = vmax.f32 %v1936, 0.0
        %v2411 = vmax.f32 %v1941, 0.0
        %v2412 = vmax.f32 %v1944, 0.0
        %v2413 = vmax.f32 %v1949, 0.0
        %v2414 = vmax.f32 %v1952, 0.0
        %v2415 = vmax.f32 %v1957, 0.0
        %v2416 = vmax.f32 %v1960, 0.0
        %v2417 = vmax.f32 %v1965, 0.0
        %v2418 = vmax.f32 %v1968, 0.0
        %v2419 = vmax.f32 %v1973, 0.0
        %v2420 = vmax.f32 %v1976, 0.0
        %v2421 = vmax.f32 %v1981, 0.0
        %v2422 = vmax.f32 %v1984, 0.0
        %v2423 = vmax.f32 %v1989, 0.0
        %v2424 = vmax.f32 %v1992, 0.0
        %v2425 = vmax.f32 %v1997, 0.0
        %v2426 = vmax.f32 %v2000, 0.0
        %v2427 = vmax.f32 %v2005, 0.0
        %v2428 = vmax.f32 %v2008, 0.0
        %v2429 = vmax.f32 %v2013, 0.0
        %v2430 = vmax.f32 %v2016, 0.0
        %v2431 = vmax.f32 %v2021, 0.0
        %v2432 = vmax.f32 %v2024, 0.0
        %v2433 = vmax.f32 %v2029, 0.0
        %v2434 = vmax.f32 %v2032, 0.0
        %v2435 = vmax.f32 %v2037, 0.0
        %v2436 = vmax.f32 %v2040, 0.0
        %v2437 = vmax.f32 %v2045, 0.0
        %v2438 = vmax.f32 %v2048, 0.0
        %v2439 = vmax.f32 %v2053, 0.0
        %v2440 = vmax.f32 %v2056, 0.0
        %v2441 = vmax.f32 %v2061, 0.0
        %v2442 = vmax.f32 %v2064, 0.0
        %v2443 = vmax.f32 %v2069, 0.0
        %v2444 = vmax.f32 %v2072, 0.0
        %v2445 = vmax.f32 %v2077, 0.0
        %v2446 = vmax.f32 %v2080, 0.0
        %v2447 = vmax.f32 %v2085, 0.0
        %v2448 = vmax.f32 %v2088, 0.0
        %v2449 = vmax.f32 %v2093, 0.0
        %v2450 = vmax.f32 %v2096, 0.0
        %v2451 = vmax.f32 %v2101, 0.0
        %v2452 = vmax.f32 %v2104, 0.0
        %v2453 = vmax.f32 %v2109, 0.0
        %v2454 = vmax.f32 %v2112, 0.0
        %v2455 = vmax.f32 %v2117, 0.0
        %v2456 = vmax.f32 %v2120, 0.0
        %v2457 = vmax.f32 %v2125, 0.0
        %v2458 = vmax.f32 %v2128, 0.0
        %v2459 = vmax.f32 %v2133, 0.0
        %v2460 = vmax.f32 %v2136, 0.0
        %v2461 = vmax.f32 %v2141, 0.0
        %v2462 = vmax.f32 %v2144, 0.0
        %v2463 = vmax.f32 %v2149, 0.0
        %v2464 = vmax.f32 %v2152, 0.0
        %v2465 = vmax.f32 %v2157, 0.0
        %v2466 = vmax.f32 %v2160, 0.0
        %v2467 = vmax.f32 %v2165, 0.0
        %v2468 = vmax.f32 %v2168, 0.0
        %v2469 = vmax.f32 %v2173, 0.0
        %v2470 = vmax.f32 %v2176, 0.0
        %v2471 = vmax.f32 %v2181, 0.0
        %v2472 = vmax.f32 %v2184, 0.0
        %v2473 = vmax.f32 %v2189, 0.0
        %v2474 = vmax.f32 %v2192, 0.0
        %v2475 = vmax.f32 %v2197, 0.0
        %v2476 = vmax.f32 %v2200, 0.0
        %v2477 = vmax.f32 %v2205, 0.0
        %v2478 = vmax.f32 %v2208, 0.0
        %v2479 = vmax.f32 %v2213, 0.0
        %v2480 = vmax.f32 %v2216, 0.0
        %v2481 = vmax.f32 %v2221, 0.0
        %v2482 = vmax.f32 %v2224, 0.0
        %v2483 = vpack.c.bf16 %v2228, %v2227
        %v2484 = vpack.c.bf16 %v2230, %v2229
        %v2485 = vpack.c.bf16 %v2232, %v2231
        %v2486 = vpack.c.bf16 %v2234, %v2233
        %v2487 = vpack.c.bf16 %v2236, %v2235
        %v2488 = vpack.c.bf16 %v2238, %v2237
        %v2489 = vpack.c.bf16 %v2240, %v2239
        %v2490 = vpack.c.bf16 %v2242, %v2241
        %v2491 = vpack.c.bf16 %v2244, %v2243
        %v2492 = vpack.c.bf16 %v2246, %v2245
        %v2493 = vpack.c.bf16 %v2248, %v2247
        %v2494 = vpack.c.bf16 %v2250, %v2249
        %v2495 = vpack.c.bf16 %v2252, %v2251
        %v2496 = vpack.c.bf16 %v2254, %v2253
        %v2497 = vpack.c.bf16 %v2256, %v2255
        %v2498 = vpack.c.bf16 %v2258, %v2257
        %v2499 = vpack.c.bf16 %v2260, %v2259
        %v2500 = vpack.c.bf16 %v2262, %v2261
        %v2501 = vpack.c.bf16 %v2264, %v2263
        %v2502 = vpack.c.bf16 %v2266, %v2265
        %v2503 = vpack.c.bf16 %v2268, %v2267
        %v2504 = vpack.c.bf16 %v2270, %v2269
        %v2505 = vpack.c.bf16 %v2272, %v2271
        %v2506 = vpack.c.bf16 %v2274, %v2273
        %v2507 = vpack.c.bf16 %v2276, %v2275
        %v2508 = vpack.c.bf16 %v2278, %v2277
        %v2509 = vpack.c.bf16 %v2280, %v2279
        %v2510 = vpack.c.bf16 %v2282, %v2281
        %v2511 = vpack.c.bf16 %v2284, %v2283
        %v2512 = vpack.c.bf16 %v2286, %v2285
        %v2513 = vpack.c.bf16 %v2288, %v2287
        %v2514 = vpack.c.bf16 %v2290, %v2289
        %v2515 = vpack.c.bf16 %v2292, %v2291
        %v2516 = vpack.c.bf16 %v2294, %v2293
        %v2517 = vpack.c.bf16 %v2296, %v2295
        %v2518 = vpack.c.bf16 %v2298, %v2297
        %v2519 = vpack.c.bf16 %v2300, %v2299
        %v2520 = vpack.c.bf16 %v2302, %v2301
        %v2521 = vpack.c.bf16 %v2304, %v2303
        %v2522 = vpack.c.bf16 %v2306, %v2305
        %v2523 = vpack.c.bf16 %v2308, %v2307
        %v2524 = vpack.c.bf16 %v2310, %v2309
        %v2525 = vpack.c.bf16 %v2312, %v2311
        %v2526 = vpack.c.bf16 %v2314, %v2313
        %v2527 = vpack.c.bf16 %v2316, %v2315
        %v2528 = vpack.c.bf16 %v2318, %v2317
        %v2529 = vpack.c.bf16 %v2320, %v2319
        %v2530 = vpack.c.bf16 %v2322, %v2321
        %v2531 = vpack.c.bf16 %v2324, %v2323
        %v2532 = vpack.c.bf16 %v2326, %v2325
        %v2533 = vpack.c.bf16 %v2328, %v2327
        %v2534 = vpack.c.bf16 %v2330, %v2329
        %v2535 = vpack.c.bf16 %v2332, %v2331
        %v2536 = vpack.c.bf16 %v2334, %v2333
        %v2537 = vpack.c.bf16 %v2336, %v2335
        %v2538 = vpack.c.bf16 %v2338, %v2337
        %v2539 = vpack.c.bf16 %v2340, %v2339
        %v2540 = vpack.c.bf16 %v2342, %v2341
        %v2541 = vpack.c.bf16 %v2344, %v2343
        %v2542 = vpack.c.bf16 %v2346, %v2345
        %v2543 = vpack.c.bf16 %v2348, %v2347
        %v2544 = vpack.c.bf16 %v2350, %v2349
        %v2545 = vpack.c.bf16 %v2352, %v2351
        %v2546 = vpack.c.bf16 %v2354, %v2353
        %v2547 = vpack.c.bf16 %v2356, %v2355
        %v2548 = vpack.c.bf16 %v2358, %v2357
        %v2549 = vpack.c.bf16 %v2360, %v2359
        %v2550 = vpack.c.bf16 %v2362, %v2361
        %v2551 = vpack.c.bf16 %v2364, %v2363
        %v2552 = vpack.c.bf16 %v2366, %v2365
        %v2553 = vpack.c.bf16 %v2368, %v2367
        %v2554 = vpack.c.bf16 %v2370, %v2369
        %v2555 = vpack.c.bf16 %v2372, %v2371
        %v2556 = vpack.c.bf16 %v2374, %v2373
        %v2557 = vpack.c.bf16 %v2376, %v2375
        %v2558 = vpack.c.bf16 %v2378, %v2377
        %v2559 = vpack.c.bf16 %v2380, %v2379
        %v2560 = vpack.c.bf16 %v2382, %v2381
        %v2561 = vpack.c.bf16 %v2384, %v2383
        %v2562 = vpack.c.bf16 %v2386, %v2385
        %v2563 = vpack.c.bf16 %v2388, %v2387
        %v2564 = vpack.c.bf16 %v2390, %v2389
        %v2565 = vpack.c.bf16 %v2392, %v2391
        %v2566 = vpack.c.bf16 %v2394, %v2393
        %v2567 = vpack.c.bf16 %v2396, %v2395
        %v2568 = vpack.c.bf16 %v2398, %v2397
        %v2569 = vpack.c.bf16 %v2400, %v2399
        %v2570 = vpack.c.bf16 %v2402, %v2401
        %v2571 = vpack.c.bf16 %v2404, %v2403
        %v2572 = vpack.c.bf16 %v2406, %v2405
        %v2573 = vpack.c.bf16 %v2408, %v2407
        %v2574 = vpack.c.bf16 %v2410, %v2409
        %v2575 = vpack.c.bf16 %v2412, %v2411
        %v2576 = vpack.c.bf16 %v2414, %v2413
        %v2577 = vpack.c.bf16 %v2416, %v2415
        %v2578 = vpack.c.bf16 %v2418, %v2417
        %v2579 = vpack.c.bf16 %v2420, %v2419
        %v2580 = vpack.c.bf16 %v2422, %v2421
        %v2581 = vpack.c.bf16 %v2424, %v2423
        %v2582 = vpack.c.bf16 %v2426, %v2425
        %v2583 = vpack.c.bf16 %v2428, %v2427
        %v2584 = vpack.c.bf16 %v2430, %v2429
        %v2585 = vpack.c.bf16 %v2432, %v2431
        %v2586 = vpack.c.bf16 %v2434, %v2433
        %v2587 = vpack.c.bf16 %v2436, %v2435
        %v2588 = vpack.c.bf16 %v2438, %v2437
        %v2589 = vpack.c.bf16 %v2440, %v2439
        %v2590 = vpack.c.bf16 %v2442, %v2441
        %v2591 = vpack.c.bf16 %v2444, %v2443
        %v2592 = vpack.c.bf16 %v2446, %v2445
        %v2593 = vpack.c.bf16 %v2448, %v2447
        %v2594 = vpack.c.bf16 %v2450, %v2449
        %v2595 = vpack.c.bf16 %v2452, %v2451
        %v2596 = vpack.c.bf16 %v2454, %v2453
        %v2597 = vpack.c.bf16 %v2456, %v2455
        %v2598 = vpack.c.bf16 %v2458, %v2457
        %v2599 = vpack.c.bf16 %v2460, %v2459
        %v2600 = vpack.c.bf16 %v2462, %v2461
        %v2601 = vpack.c.bf16 %v2464, %v2463
        %v2602 = vpack.c.bf16 %v2466, %v2465
        %v2603 = vpack.c.bf16 %v2468, %v2467
        %v2604 = vpack.c.bf16 %v2470, %v2469
        %v2605 = vpack.c.bf16 %v2472, %v2471
        %v2606 = vpack.c.bf16 %v2474, %v2473
        %v2607 = vpack.c.bf16 %v2476, %v2475
        %v2608 = vpack.c.bf16 %v2478, %v2477
        %v2609 = vpack.c.bf16 %v2480, %v2479
        %v2610 = vpack.c.bf16 %v2482, %v2481
        %v2611 = vld [vmem:[%s2] sm:$0xf]
        %v2612 = vld [vmem:[%s2 + $0x4] sm:$0xf]
        %v2613 = vld [vmem:[%s2 + $0x8] sm:$0xf]
        %v2614 = vld [vmem:[%s2 + $0xc] sm:$0xf]
        %v2615 = vld [vmem:[%s2 + $0x10] sm:$0xf]
        %v2616 = vld [vmem:[%s2 + $0x14] sm:$0xf]
        %v2617 = vld [vmem:[%s2 + $0x18] sm:$0xf]
        %v2618 = vld [vmem:[%s2 + $0x1c] sm:$0xf]
        %v2619 = vld [vmem:[%s6 + $0x1] sm:$0x1]
        %v2620 = vlaneseq
        %v2621 = vshrl.u32 %v2620, 7
        %v2622 = vsub.s32 0, %v2621
        %v2623 = vrot.slane %v2619, %v2622
        %v2632 = vunpack.c.l.b16 %v2611
        %v2633 = vunpack.c.l.b16 %v2612
        %v2634 = vunpack.c.l.b16 %v2613
        %v2635 = vunpack.c.l.b16 %v2614
        %v2636 = vunpack.c.l.b16 %v2615
        %v2637 = vunpack.c.l.b16 %v2616
        %v2638 = vunpack.c.l.b16 %v2617
        %v2639 = vunpack.c.l.b16 %v2618
        %v2640 = vpack.c.b16 %v2633, %v2632
        %v2641 = vpack.c.b16 %v2635, %v2634
        %v2642 = vpack.c.b16 %v2637, %v2636
        %v2643 = vpack.c.b16 %v2639, %v2638
        %vm2648 = vcmask 523264
        %v2650 = vsel %vm2648, %v2483, 0
        %v2653 = vsel %vm2648, %v2484, 0
        %v2656 = vsel %vm2648, %v2485, 0
        %v2659 = vsel %vm2648, %v2486, 0
        %v2662 = vsel %vm2648, %v2487, 0
        %v2665 = vsel %vm2648, %v2488, 0
        %v2668 = vsel %vm2648, %v2489, 0
        %v2671 = vsel %vm2648, %v2490, 0
        %v2674 = vsel %vm2648, %v2491, 0
        %v2677 = vsel %vm2648, %v2492, 0
        %v2680 = vsel %vm2648, %v2493, 0
        %v2683 = vsel %vm2648, %v2494, 0
        %v2686 = vsel %vm2648, %v2495, 0
        %v2689 = vsel %vm2648, %v2496, 0
        %v2692 = vsel %vm2648, %v2497, 0
        %v2695 = vsel %vm2648, %v2498, 0
        %v2698 = vsel %vm2648, %v2499, 0
        %v2701 = vsel %vm2648, %v2500, 0
        %v2704 = vsel %vm2648, %v2501, 0
        %v2707 = vsel %vm2648, %v2502, 0
        %v2710 = vsel %vm2648, %v2503, 0
        %v2713 = vsel %vm2648, %v2504, 0
        %v2716 = vsel %vm2648, %v2505, 0
        %v2719 = vsel %vm2648, %v2506, 0
        %v2722 = vsel %vm2648, %v2507, 0
        %v2725 = vsel %vm2648, %v2508, 0
        %v2728 = vsel %vm2648, %v2509, 0
        %v2731 = vsel %vm2648, %v2510, 0
        %v2734 = vsel %vm2648, %v2511, 0
        %v2737 = vsel %vm2648, %v2512, 0
        %v2740 = vsel %vm2648, %v2513, 0
        %v2743 = vsel %vm2648, %v2514, 0
        %v2746 = vsel %vm2648, %v2515, 0
        %v2749 = vsel %vm2648, %v2516, 0
        %v2752 = vsel %vm2648, %v2517, 0
        %v2755 = vsel %vm2648, %v2518, 0
        %v2758 = vsel %vm2648, %v2519, 0
        %v2761 = vsel %vm2648, %v2520, 0
        %v2764 = vsel %vm2648, %v2521, 0
        %v2767 = vsel %vm2648, %v2522, 0
        %v2770 = vsel %vm2648, %v2523, 0
        %v2773 = vsel %vm2648, %v2524, 0
        %v2776 = vsel %vm2648, %v2525, 0
        %v2779 = vsel %vm2648, %v2526, 0
        %v2782 = vsel %vm2648, %v2527, 0
        %v2785 = vsel %vm2648, %v2528, 0
        %v2788 = vsel %vm2648, %v2529, 0
        %v2791 = vsel %vm2648, %v2530, 0
        %v2794 = vsel %vm2648, %v2531, 0
        %v2797 = vsel %vm2648, %v2532, 0
        %v2800 = vsel %vm2648, %v2533, 0
        %v2803 = vsel %vm2648, %v2534, 0
        %v2806 = vsel %vm2648, %v2535, 0
        %v2809 = vsel %vm2648, %v2536, 0
        %v2812 = vsel %vm2648, %v2537, 0
        %v2815 = vsel %vm2648, %v2538, 0
        %v2818 = vsel %vm2648, %v2539, 0
        %v2821 = vsel %vm2648, %v2540, 0
        %v2824 = vsel %vm2648, %v2541, 0
        %v2827 = vsel %vm2648, %v2542, 0
        %v2830 = vsel %vm2648, %v2543, 0
        %v2833 = vsel %vm2648, %v2544, 0
        %v2836 = vsel %vm2648, %v2545, 0
        %v2839 = vsel %vm2648, %v2546, 0
        %v2842 = vsel %vm2648, %v2547, 0
        %v2845 = vsel %vm2648, %v2548, 0
        %v2848 = vsel %vm2648, %v2549, 0
        %v2851 = vsel %vm2648, %v2550, 0
        %v2854 = vsel %vm2648, %v2551, 0
        %v2857 = vsel %vm2648, %v2552, 0
        %v2860 = vsel %vm2648, %v2553, 0
        %v2863 = vsel %vm2648, %v2554, 0
        %v2866 = vsel %vm2648, %v2555, 0
        %v2869 = vsel %vm2648, %v2556, 0
        %v2872 = vsel %vm2648, %v2557, 0
        %v2875 = vsel %vm2648, %v2558, 0
        %v2878 = vsel %vm2648, %v2559, 0
        %v2881 = vsel %vm2648, %v2560, 0
        %v2884 = vsel %vm2648, %v2561, 0
        %v2887 = vsel %vm2648, %v2562, 0
        %v2890 = vsel %vm2648, %v2563, 0
        %v2893 = vsel %vm2648, %v2564, 0
        %v2896 = vsel %vm2648, %v2565, 0
        %v2899 = vsel %vm2648, %v2566, 0
        %v2902 = vsel %vm2648, %v2567, 0
        %v2905 = vsel %vm2648, %v2568, 0
        %v2908 = vsel %vm2648, %v2569, 0
        %v2911 = vsel %vm2648, %v2570, 0
        %v2914 = vsel %vm2648, %v2571, 0
        %v2917 = vsel %vm2648, %v2572, 0
        %v2920 = vsel %vm2648, %v2573, 0
        %v2923 = vsel %vm2648, %v2574, 0
        %v2926 = vsel %vm2648, %v2575, 0
        %v2929 = vsel %vm2648, %v2576, 0
        %v2932 = vsel %vm2648, %v2577, 0
        %v2935 = vsel %vm2648, %v2578, 0
        %v2938 = vsel %vm2648, %v2579, 0
        %v2941 = vsel %vm2648, %v2580, 0
        %v2944 = vsel %vm2648, %v2581, 0
        %v2947 = vsel %vm2648, %v2582, 0
        %v2950 = vsel %vm2648, %v2583, 0
        %v2953 = vsel %vm2648, %v2584, 0
        %v2956 = vsel %vm2648, %v2585, 0
        %v2959 = vsel %vm2648, %v2586, 0
        %v2962 = vsel %vm2648, %v2587, 0
        %v2965 = vsel %vm2648, %v2588, 0
        %v2968 = vsel %vm2648, %v2589, 0
        %v2971 = vsel %vm2648, %v2590, 0
        %v2974 = vsel %vm2648, %v2591, 0
        %v2977 = vsel %vm2648, %v2592, 0
        %v2980 = vsel %vm2648, %v2593, 0
        %v2983 = vsel %vm2648, %v2594, 0
        %v2986 = vsel %vm2648, %v2595, 0
        %v2989 = vsel %vm2648, %v2596, 0
        %v2992 = vsel %vm2648, %v2597, 0
        %v2995 = vsel %vm2648, %v2598, 0
        %v2998 = vsel %vm2648, %v2599, 0
        %v3001 = vsel %vm2648, %v2600, 0
        %v3004 = vsel %vm2648, %v2601, 0
        %v3007 = vsel %vm2648, %v2602, 0
        %v3010 = vsel %vm2648, %v2603, 0
        %v3013 = vsel %vm2648, %v2604, 0
        %v3016 = vsel %vm2648, %v2605, 0
        %v3019 = vsel %vm2648, %v2606, 0
        %v3022 = vsel %vm2648, %v2607, 0
        %v3025 = vsel %vm2648, %v2608, 0
        %v3028 = vsel %vm2648, %v2609, 0
        %v3031 = vsel %vm2648, %v2610, 0
        %3033 = vmatprep.subr.bf16.mxu0 0
        %3034 = vmatpush1.bf16.msra.mxu0 %v2640
        %3035 = vmatprep.subr.bf16.mxu0 0
        %3036 = vmatpush1.bf16.msra.mxu0 %v2641
        %3037 = vmatprep.subr.bf16.mxu0 0
        %3038 = vmatpush1.bf16.msra.mxu0 %v2642
        %3039 = vmatprep.subr.bf16.mxu0 0
        %3040 = vmatpush1.bf16.msra.mxu0 %v2643
        %3041 = vmatprep.subr.bf16.mxu0 0
        %3042 = vmatpush1.bf16.msra.mxu0 0
        %3043 = vmatprep.subr.bf16.mxu0 0
        %3044 = vmatpush1.bf16.msra.mxu0 0
        %3045 = vmatprep.subr.bf16.mxu0 0
        %3046 = vmatpush1.bf16.msra.mxu0 0
        %3047 = vmatprep.subr.bf16.mxu0 0
        %3048 = vmatpush1.bf16.msra.mxu0 0
        %3049 = vmatprep.subr.bf16.mxu0 0
        %3050 = vmatpush1.bf16.msra.mxu0 0
        %3051 = vmatprep.subr.bf16.mxu0 0
        %3052 = vmatpush1.bf16.msra.mxu0 0
        %3053 = vmatprep.subr.bf16.mxu0 0
        %3054 = vmatpush1.bf16.msra.mxu0 0
        %3055 = vmatprep.subr.bf16.mxu0 0
        %3056 = vmatpush1.bf16.msra.mxu0 0
        %3057 = vmatprep.subr.bf16.mxu0 0
        %3058 = vmatpush1.bf16.msra.mxu0 0
        %3059 = vmatprep.subr.bf16.mxu0 0
        %3060 = vmatpush1.bf16.msra.mxu0 0
        %3061 = vmatprep.subr.bf16.mxu0 0
        %3062 = vmatpush1.bf16.msra.mxu0 0
        %3063 = vmatprep.subr.bf16.mxu0 0
        %3064 = vmatpush1.bf16.msra.mxu0 0
        %3065 = vmatprep.mubr.bf16.mxu0 0
        %3066 = vmatmul.mubr.bf16.gmra.mrb[0].mxu0 %v2650
        %v3067 = vpop.f32.mrb[0].mxu0
        %v3068 = vadd.f32 %v2623, %v3067
        %v3069 = vpop.f32.mrb[0].mxu0
        %v3070 = vpop.f32.mrb[0].mxu0
        %v3071 = vadd.f32 %v2623, %v3070
        %v3072 = vpop.f32.mrb[0].mxu0
        %3073 = vmatprep.mubr.bf16.mxu0 0
        %3074 = vmatmul.mubr.bf16.gmra.mrb[0].mxu0 %v2653
        %v3075 = vpop.f32.mrb[0].mxu0
        %v3076 = vadd.f32 %v2623, %v3075
        %v3077 = vpop.f32.mrb[0].mxu0
        %v3078 = vpop.f32.mrb[0].mxu0
        %v3079 = vadd.f32 %v2623, %v3078
        %v3080 = vpop.f32.mrb[0].mxu0
        %3081 = vmatprep.mubr.bf16.mxu0 0
        %3082 = vmatmul.mubr.bf16.gmra.mrb[0].mxu0 %v2656
        %v3083 = vpop.f32.mrb[0].mxu0
        %v3084 = vadd.f32 %v2623, %v3083
        %v3085 = vpop.f32.mrb[0].mxu0
        %v3086 = vpop.f32.mrb[0].mxu0
        %v3087 = vadd.f32 %v2623, %v3086
        %v3088 = vpop.f32.mrb[0].mxu0
        %3089 = vmatprep.mubr.bf16.mxu0 0
        %3090 = vmatmul.mubr.bf16.gmra.mrb[0].mxu0 %v2659
        %v3091 = vpop.f32.mrb[0].mxu0
        %v3092 = vadd.f32 %v2623, %v3091
        %v3093 = vpop.f32.mrb[0].mxu0
        %v3094 = vpop.f32.mrb[0].mxu0
        %v3095 = vadd.f32 %v2623, %v3094
        %v3096 = vpop.f32.mrb[0].mxu0
        %3097 = vmatprep.mubr.bf16.mxu0 0
        %3098 = vmatmul.mubr.bf16.gmra.mrb[0].mxu0 %v2662
        %v3099 = vpop.f32.mrb[0].mxu0
        %v3100 = vadd.f32 %v2623, %v3099
        %v3101 = vpop.f32.mrb[0].mxu0
        %v3102 = vpop.f32.mrb[0].mxu0
        %v3103 = vadd.f32 %v2623, %v3102
        %v3104 = vpop.f32.mrb[0].mxu0
        %3105 = vmatprep.mubr.bf16.mxu0 0
        %3106 = vmatmul.mubr.bf16.gmra.mrb[0].mxu0 %v2665
        %v3107 = vpop.f32.mrb[0].mxu0
        %v3108 = vadd.f32 %v2623, %v3107
        %v3109 = vpop.f32.mrb[0].mxu0
        %v3110 = vpop.f32.mrb[0].mxu0
        %v3111 = vadd.f32 %v2623, %v3110
        %v3112 = vpop.f32.mrb[0].mxu0
        %3113 = vmatprep.mubr.bf16.mxu0 0
        %3114 = vmatmul.mubr.bf16.gmra.mrb[0].mxu0 %v2668
        %v3115 = vpop.f32.mrb[0].mxu0
        %v3116 = vadd.f32 %v2623, %v3115
        %v3117 = vpop.f32.mrb[0].mxu0
        %v3118 = vpop.f32.mrb[0].mxu0
        %v3119 = vadd.f32 %v2623, %v3118
        %v3120 = vpop.f32.mrb[0].mxu0
        %3121 = vmatprep.mubr.bf16.mxu0 0
        %3122 = vmatmul.mubr.bf16.gmra.mrb[0].mxu0 %v2671
        %v3123 = vpop.f32.mrb[0].mxu0
        %v3124 = vadd.f32 %v2623, %v3123
        %v3125 = vpop.f32.mrb[0].mxu0
        %v3126 = vpop.f32.mrb[0].mxu0
        %v3127 = vadd.f32 %v2623, %v3126
        %v3128 = vpop.f32.mrb[0].mxu0
        %3129 = vmatprep.mubr.bf16.mxu0 0
        %3130 = vmatmul.mubr.bf16.gmra.mrb[0].mxu0 %v2674
        %v3131 = vpop.f32.mrb[0].mxu0
        %v3132 = vadd.f32 %v2623, %v3131
        %v3133 = vpop.f32.mrb[0].mxu0
        %v3134 = vpop.f32.mrb[0].mxu0
        %v3135 = vadd.f32 %v2623, %v3134
        %v3136 = vpop.f32.mrb[0].mxu0
        %3137 = vmatprep.mubr.bf16.mxu0 0
        %3138 = vmatmul.mubr.bf16.gmra.mrb[0].mxu0 %v2677
        %v3139 = vpop.f32.mrb[0].mxu0
        %v3140 = vadd.f32 %v2623, %v3139
        %v3141 = vpop.f32.mrb[0].mxu0
        %v3142 = vpop.f32.mrb[0].mxu0
        %v3143 = vadd.f32 %v2623, %v3142
        %v3144 = vpop.f32.mrb[0].mxu0
        %3145 = vmatprep.mubr.bf16.mxu0 0
        %3146 = vmatmul.mubr.bf16.gmra.mrb[0].mxu0 %v2680
        %v3147 = vpop.f32.mrb[0].mxu0
        %v3148 = vadd.f32 %v2623, %v3147
        %v3149 = vpop.f32.mrb[0].mxu0
        %v3150 = vpop.f32.mrb[0].mxu0
        %v3151 = vadd.f32 %v2623, %v3150
        %v3152 = vpop.f32.mrb[0].mxu0
        %3153 = vmatprep.mubr.bf16.mxu0 0
        %3154 = vmatmul.mubr.bf16.gmra.mrb[0].mxu0 %v2683
        %v3155 = vpop.f32.mrb[0].mxu0
        %v3156 = vadd.f32 %v2623, %v3155
        %v3157 = vpop.f32.mrb[0].mxu0
        %v3158 = vpop.f32.mrb[0].mxu0
        %v3159 = vadd.f32 %v2623, %v3158
        %v3160 = vpop.f32.mrb[0].mxu0
        %3161 = vmatprep.mubr.bf16.mxu0 0
        %3162 = vmatmul.mubr.bf16.gmra.mrb[0].mxu0 %v2686
        %v3163 = vpop.f32.mrb[0].mxu0
        %v3164 = vadd.f32 %v2623, %v3163
        %v3165 = vpop.f32.mrb[0].mxu0
        %v3166 = vpop.f32.mrb[0].mxu0
        %v3167 = vadd.f32 %v2623, %v3166
        %v3168 = vpop.f32.mrb[0].mxu0
        %3169 = vmatprep.mubr.bf16.mxu0 0
        %3170 = vmatmul.mubr.bf16.gmra.mrb[0].mxu0 %v2689
        %v3171 = vpop.f32.mrb[0].mxu0
        %v3172 = vadd.f32 %v2623, %v3171
        %v3173 = vpop.f32.mrb[0].mxu0
        %v3174 = vpop.f32.mrb[0].mxu0
        %v3175 = vadd.f32 %v2623, %v3174
        %v3176 = vpop.f32.mrb[0].mxu0
        %3177 = vmatprep.mubr.bf16.mxu0 0
        %3178 = vmatmul.mubr.bf16.gmra.mrb[0].mxu0 %v2692
        %v3179 = vpop.f32.mrb[0].mxu0
        %v3180 = vadd.f32 %v2623, %v3179
        %v3181 = vpop.f32.mrb[0].mxu0
        %v3182 = vpop.f32.mrb[0].mxu0
        %v3183 = vadd.f32 %v2623, %v3182
        %v3184 = vpop.f32.mrb[0].mxu0
        %3185 = vmatprep.mubr.bf16.mxu0 0
        %3186 = vmatmul.mubr.bf16.gmra.mrb[0].mxu0 %v2695
        %v3187 = vpop.f32.mrb[0].mxu0
        %v3188 = vadd.f32 %v2623, %v3187
        %v3189 = vpop.f32.mrb[0].mxu0
        %v3190 = vpop.f32.mrb[0].mxu0
        %v3191 = vadd.f32 %v2623, %v3190
        %v3192 = vpop.f32.mrb[0].mxu0
        %3193 = vmatprep.mubr.bf16.mxu0 0
        %3194 = vmatmul.mubr.bf16.gmra.mrb[0].mxu0 %v2698
        %v3195 = vpop.f32.mrb[0].mxu0
        %v3196 = vadd.f32 %v2623, %v3195
        %v3197 = vpop.f32.mrb[0].mxu0
        %v3198 = vpop.f32.mrb[0].mxu0
        %v3199 = vadd.f32 %v2623, %v3198
        %v3200 = vpop.f32.mrb[0].mxu0
        %3201 = vmatprep.mubr.bf16.mxu0 0
        %3202 = vmatmul.mubr.bf16.gmra.mrb[0].mxu0 %v2701
        %v3203 = vpop.f32.mrb[0].mxu0
        %v3204 = vadd.f32 %v2623, %v3203
        %v3205 = vpop.f32.mrb[0].mxu0
        %v3206 = vpop.f32.mrb[0].mxu0
        %v3207 = vadd.f32 %v2623, %v3206
        %v3208 = vpop.f32.mrb[0].mxu0
        %3209 = vmatprep.mubr.bf16.mxu0 0
        %3210 = vmatmul.mubr.bf16.gmra.mrb[0].mxu0 %v2704
        %v3211 = vpop.f32.mrb[0].mxu0
        %v3212 = vadd.f32 %v2623, %v3211
        %v3213 = vpop.f32.mrb[0].mxu0
        %v3214 = vpop.f32.mrb[0].mxu0
        %v3215 = vadd.f32 %v2623, %v3214
        %v3216 = vpop.f32.mrb[0].mxu0
        %3217 = vmatprep.mubr.bf16.mxu0 0
        %3218 = vmatmul.mubr.bf16.gmra.mrb[0].mxu0 %v2707
        %v3219 = vpop.f32.mrb[0].mxu0
        %v3220 = vadd.f32 %v2623, %v3219
        %v3221 = vpop.f32.mrb[0].mxu0
        %v3222 = vpop.f32.mrb[0].mxu0
        %v3223 = vadd.f32 %v2623, %v3222
        %v3224 = vpop.f32.mrb[0].mxu0
        %3225 = vmatprep.mubr.bf16.mxu0 0
        %3226 = vmatmul.mubr.bf16.gmra.mrb[0].mxu0 %v2710
        %v3227 = vpop.f32.mrb[0].mxu0
        %v3228 = vadd.f32 %v2623, %v3227
        %v3229 = vpop.f32.mrb[0].mxu0
        %v3230 = vpop.f32.mrb[0].mxu0
        %v3231 = vadd.f32 %v2623, %v3230
        %v3232 = vpop.f32.mrb[0].mxu0
        %3233 = vmatprep.mubr.bf16.mxu0 0
        %3234 = vmatmul.mubr.bf16.gmra.mrb[0].mxu0 %v2713
        %v3235 = vpop.f32.mrb[0].mxu0
        %v3236 = vadd.f32 %v2623, %v3235
        %v3237 = vpop.f32.mrb[0].mxu0
        %v3238 = vpop.f32.mrb[0].mxu0
        %v3239 = vadd.f32 %v2623, %v3238
        %v3240 = vpop.f32.mrb[0].mxu0
        %3241 = vmatprep.mubr.bf16.mxu0 0
        %3242 = vmatmul.mubr.bf16.gmra.mrb[0].mxu0 %v2716
        %v3243 = vpop.f32.mrb[0].mxu0
        %v3244 = vadd.f32 %v2623, %v3243
        %v3245 = vpop.f32.mrb[0].mxu0
        %v3246 = vpop.f32.mrb[0].mxu0
        %v3247 = vadd.f32 %v2623, %v3246
        %v3248 = vpop.f32.mrb[0].mxu0
        %3249 = vmatprep.mubr.bf16.mxu0 0
        %3250 = vmatmul.mubr.bf16.gmra.mrb[0].mxu0 %v2719
        %v3251 = vpop.f32.mrb[0].mxu0
        %v3252 = vadd.f32 %v2623, %v3251
        %v3253 = vpop.f32.mrb[0].mxu0
        %v3254 = vpop.f32.mrb[0].mxu0
        %v3255 = vadd.f32 %v2623, %v3254
        %v3256 = vpop.f32.mrb[0].mxu0
        %3257 = vmatprep.mubr.bf16.mxu0 0
        %3258 = vmatmul.mubr.bf16.gmra.mrb[0].mxu0 %v2722
        %v3259 = vpop.f32.mrb[0].mxu0
        %v3260 = vadd.f32 %v2623, %v3259
        %v3261 = vpop.f32.mrb[0].mxu0
        %v3262 = vpop.f32.mrb[0].mxu0
        %v3263 = vadd.f32 %v2623, %v3262
        %v3264 = vpop.f32.mrb[0].mxu0
        %3265 = vmatprep.mubr.bf16.mxu0 0
        %3266 = vmatmul.mubr.bf16.gmra.mrb[0].mxu0 %v2725
        %v3267 = vpop.f32.mrb[0].mxu0
        %v3268 = vadd.f32 %v2623, %v3267
        %v3269 = vpop.f32.mrb[0].mxu0
        %v3270 = vpop.f32.mrb[0].mxu0
        %v3271 = vadd.f32 %v2623, %v3270
        %v3272 = vpop.f32.mrb[0].mxu0
        %3273 = vmatprep.mubr.bf16.mxu0 0
        %3274 = vmatmul.mubr.bf16.gmra.mrb[0].mxu0 %v2728
        %v3275 = vpop.f32.mrb[0].mxu0
        %v3276 = vadd.f32 %v2623, %v3275
        %v3277 = vpop.f32.mrb[0].mxu0
        %v3278 = vpop.f32.mrb[0].mxu0
        %v3279 = vadd.f32 %v2623, %v3278
        %v3280 = vpop.f32.mrb[0].mxu0
        %3281 = vmatprep.mubr.bf16.mxu0 0
        %3282 = vmatmul.mubr.bf16.gmra.mrb[0].mxu0 %v2731
        %v3283 = vpop.f32.mrb[0].mxu0
        %v3284 = vadd.f32 %v2623, %v3283
        %v3285 = vpop.f32.mrb[0].mxu0
        %v3286 = vpop.f32.mrb[0].mxu0
        %v3287 = vadd.f32 %v2623, %v3286
        %v3288 = vpop.f32.mrb[0].mxu0
        %3289 = vmatprep.mubr.bf16.mxu0 0
        %3290 = vmatmul.mubr.bf16.gmra.mrb[0].mxu0 %v2734
        %v3291 = vpop.f32.mrb[0].mxu0
        %v3292 = vadd.f32 %v2623, %v3291
        %v3293 = vpop.f32.mrb[0].mxu0
        %v3294 = vpop.f32.mrb[0].mxu0
        %v3295 = vadd.f32 %v2623, %v3294
        %v3296 = vpop.f32.mrb[0].mxu0
        %3297 = vmatprep.mubr.bf16.mxu0 0
        %3298 = vmatmul.mubr.bf16.gmra.mrb[0].mxu0 %v2737
        %v3299 = vpop.f32.mrb[0].mxu0
        %v3300 = vadd.f32 %v2623, %v3299
        %v3301 = vpop.f32.mrb[0].mxu0
        %v3302 = vpop.f32.mrb[0].mxu0
        %v3303 = vadd.f32 %v2623, %v3302
        %v3304 = vpop.f32.mrb[0].mxu0
        %3305 = vmatprep.mubr.bf16.mxu0 0
        %3306 = vmatmul.mubr.bf16.gmra.mrb[0].mxu0 %v2740
        %v3307 = vpop.f32.mrb[0].mxu0
        %v3308 = vadd.f32 %v2623, %v3307
        %v3309 = vpop.f32.mrb[0].mxu0
        %v3310 = vpop.f32.mrb[0].mxu0
        %v3311 = vadd.f32 %v2623, %v3310
        %v3312 = vpop.f32.mrb[0].mxu0
        %3313 = vmatprep.mubr.bf16.mxu0 0
        %3314 = vmatmul.mubr.bf16.gmra.mrb[0].mxu0 %v2743
        %v3315 = vpop.f32.mrb[0].mxu0
        %v3316 = vadd.f32 %v2623, %v3315
        %v3317 = vpop.f32.mrb[0].mxu0
        %v3318 = vpop.f32.mrb[0].mxu0
        %v3319 = vadd.f32 %v2623, %v3318
        %v3320 = vpop.f32.mrb[0].mxu0
        %3321 = vmatprep.mubr.bf16.mxu0 0
        %3322 = vmatmul.mubr.bf16.gmra.mrb[0].mxu0 %v2746
        %v3323 = vpop.f32.mrb[0].mxu0
        %v3324 = vadd.f32 %v2623, %v3323
        %v3325 = vpop.f32.mrb[0].mxu0
        %v3326 = vpop.f32.mrb[0].mxu0
        %v3327 = vadd.f32 %v2623, %v3326
        %v3328 = vpop.f32.mrb[0].mxu0
        %3329 = vmatprep.mubr.bf16.mxu0 0
        %3330 = vmatmul.mubr.bf16.gmra.mrb[0].mxu0 %v2749
        %v3331 = vpop.f32.mrb[0].mxu0
        %v3332 = vadd.f32 %v2623, %v3331
        %v3333 = vpop.f32.mrb[0].mxu0
        %v3334 = vpop.f32.mrb[0].mxu0
        %v3335 = vadd.f32 %v2623, %v3334
        %v3336 = vpop.f32.mrb[0].mxu0
        %3337 = vmatprep.mubr.bf16.mxu0 0
        %3338 = vmatmul.mubr.bf16.gmra.mrb[0].mxu0 %v2752
        %v3339 = vpop.f32.mrb[0].mxu0
        %v3340 = vadd.f32 %v2623, %v3339
        %v3341 = vpop.f32.mrb[0].mxu0
        %v3342 = vpop.f32.mrb[0].mxu0
        %v3343 = vadd.f32 %v2623, %v3342
        %v3344 = vpop.f32.mrb[0].mxu0
        %3345 = vmatprep.mubr.bf16.mxu0 0
        %3346 = vmatmul.mubr.bf16.gmra.mrb[0].mxu0 %v2755
        %v3347 = vpop.f32.mrb[0].mxu0
        %v3348 = vadd.f32 %v2623, %v3347
        %v3349 = vpop.f32.mrb[0].mxu0
        %v3350 = vpop.f32.mrb[0].mxu0
        %v3351 = vadd.f32 %v2623, %v3350
        %v3352 = vpop.f32.mrb[0].mxu0
        %3353 = vmatprep.mubr.bf16.mxu0 0
        %3354 = vmatmul.mubr.bf16.gmra.mrb[0].mxu0 %v2758
        %v3355 = vpop.f32.mrb[0].mxu0
        %v3356 = vadd.f32 %v2623, %v3355
        %v3357 = vpop.f32.mrb[0].mxu0
        %v3358 = vpop.f32.mrb[0].mxu0
        %v3359 = vadd.f32 %v2623, %v3358
        %v3360 = vpop.f32.mrb[0].mxu0
        %3361 = vmatprep.mubr.bf16.mxu0 0
        %3362 = vmatmul.mubr.bf16.gmra.mrb[0].mxu0 %v2761
        %v3363 = vpop.f32.mrb[0].mxu0
        %v3364 = vadd.f32 %v2623, %v3363
        %v3365 = vpop.f32.mrb[0].mxu0
        %v3366 = vpop.f32.mrb[0].mxu0
        %v3367 = vadd.f32 %v2623, %v3366
        %v3368 = vpop.f32.mrb[0].mxu0
        %3369 = vmatprep.mubr.bf16.mxu0 0
        %3370 = vmatmul.mubr.bf16.gmra.mrb[0].mxu0 %v2764
        %v3371 = vpop.f32.mrb[0].mxu0
        %v3372 = vadd.f32 %v2623, %v3371
        %v3373 = vpop.f32.mrb[0].mxu0
        %v3374 = vpop.f32.mrb[0].mxu0
        %v3375 = vadd.f32 %v2623, %v3374
        %v3376 = vpop.f32.mrb[0].mxu0
        %3377 = vmatprep.mubr.bf16.mxu0 0
        %3378 = vmatmul.mubr.bf16.gmra.mrb[0].mxu0 %v2767
        %v3379 = vpop.f32.mrb[0].mxu0
        %v3380 = vadd.f32 %v2623, %v3379
        %v3381 = vpop.f32.mrb[0].mxu0
        %v3382 = vpop.f32.mrb[0].mxu0
        %v3383 = vadd.f32 %v2623, %v3382
        %v3384 = vpop.f32.mrb[0].mxu0
        %3385 = vmatprep.mubr.bf16.mxu0 0
        %3386 = vmatmul.mubr.bf16.gmra.mrb[0].mxu0 %v2770
        %v3387 = vpop.f32.mrb[0].mxu0
        %v3388 = vadd.f32 %v2623, %v3387
        %v3389 = vpop.f32.mrb[0].mxu0
        %v3390 = vpop.f32.mrb[0].mxu0
        %v3391 = vadd.f32 %v2623, %v3390
        %v3392 = vpop.f32.mrb[0].mxu0
        %3393 = vmatprep.mubr.bf16.mxu0 0
        %3394 = vmatmul.mubr.bf16.gmra.mrb[0].mxu0 %v2773
        %v3395 = vpop.f32.mrb[0].mxu0
        %v3396 = vadd.f32 %v2623, %v3395
        %v3397 = vpop.f32.mrb[0].mxu0
        %v3398 = vpop.f32.mrb[0].mxu0
        %v3399 = vadd.f32 %v2623, %v3398
        %v3400 = vpop.f32.mrb[0].mxu0
        %3401 = vmatprep.mubr.bf16.mxu0 0
        %3402 = vmatmul.mubr.bf16.gmra.mrb[0].mxu0 %v2776
        %v3403 = vpop.f32.mrb[0].mxu0
        %v3404 = vadd.f32 %v2623, %v3403
        %v3405 = vpop.f32.mrb[0].mxu0
        %v3406 = vpop.f32.mrb[0].mxu0
        %v3407 = vadd.f32 %v2623, %v3406
        %v3408 = vpop.f32.mrb[0].mxu0
        %3409 = vmatprep.mubr.bf16.mxu0 0
        %3410 = vmatmul.mubr.bf16.gmra.mrb[0].mxu0 %v2779
        %v3411 = vpop.f32.mrb[0].mxu0
        %v3412 = vadd.f32 %v2623, %v3411
        %v3413 = vpop.f32.mrb[0].mxu0
        %v3414 = vpop.f32.mrb[0].mxu0
        %v3415 = vadd.f32 %v2623, %v3414
        %v3416 = vpop.f32.mrb[0].mxu0
        %3417 = vmatprep.mubr.bf16.mxu0 0
        %3418 = vmatmul.mubr.bf16.gmra.mrb[0].mxu0 %v2782
        %v3419 = vpop.f32.mrb[0].mxu0
        %v3420 = vadd.f32 %v2623, %v3419
        %v3421 = vpop.f32.mrb[0].mxu0
        %v3422 = vpop.f32.mrb[0].mxu0
        %v3423 = vadd.f32 %v2623, %v3422
        %v3424 = vpop.f32.mrb[0].mxu0
        %3425 = vmatprep.mubr.bf16.mxu0 0
        %3426 = vmatmul.mubr.bf16.gmra.mrb[0].mxu0 %v2785
        %v3427 = vpop.f32.mrb[0].mxu0
        %v3428 = vadd.f32 %v2623, %v3427
        %v3429 = vpop.f32.mrb[0].mxu0
        %v3430 = vpop.f32.mrb[0].mxu0
        %v3431 = vadd.f32 %v2623, %v3430
        %v3432 = vpop.f32.mrb[0].mxu0
        %3433 = vmatprep.mubr.bf16.mxu0 0
        %3434 = vmatmul.mubr.bf16.gmra.mrb[0].mxu0 %v2788
        %v3435 = vpop.f32.mrb[0].mxu0
        %v3436 = vadd.f32 %v2623, %v3435
        %v3437 = vpop.f32.mrb[0].mxu0
        %v3438 = vpop.f32.mrb[0].mxu0
        %v3439 = vadd.f32 %v2623, %v3438
        %v3440 = vpop.f32.mrb[0].mxu0
        %3441 = vmatprep.mubr.bf16.mxu0 0
        %3442 = vmatmul.mubr.bf16.gmra.mrb[0].mxu0 %v2791
        %v3443 = vpop.f32.mrb[0].mxu0
        %v3444 = vadd.f32 %v2623, %v3443
        %v3445 = vpop.f32.mrb[0].mxu0
        %v3446 = vpop.f32.mrb[0].mxu0
        %v3447 = vadd.f32 %v2623, %v3446
        %v3448 = vpop.f32.mrb[0].mxu0
        %3449 = vmatprep.mubr.bf16.mxu0 0
        %3450 = vmatmul.mubr.bf16.gmra.mrb[0].mxu0 %v2794
        %v3451 = vpop.f32.mrb[0].mxu0
        %v3452 = vadd.f32 %v2623, %v3451
        %v3453 = vpop.f32.mrb[0].mxu0
        %v3454 = vpop.f32.mrb[0].mxu0
        %v3455 = vadd.f32 %v2623, %v3454
        %v3456 = vpop.f32.mrb[0].mxu0
        %3457 = vmatprep.mubr.bf16.mxu0 0
        %3458 = vmatmul.mubr.bf16.gmra.mrb[0].mxu0 %v2797
        %v3459 = vpop.f32.mrb[0].mxu0
        %v3460 = vadd.f32 %v2623, %v3459
        %v3461 = vpop.f32.mrb[0].mxu0
        %v3462 = vpop.f32.mrb[0].mxu0
        %v3463 = vadd.f32 %v2623, %v3462
        %v3464 = vpop.f32.mrb[0].mxu0
        %3465 = vmatprep.mubr.bf16.mxu0 0
        %3466 = vmatmul.mubr.bf16.gmra.mrb[0].mxu0 %v2800
        %v3467 = vpop.f32.mrb[0].mxu0
        %v3468 = vadd.f32 %v2623, %v3467
        %v3469 = vpop.f32.mrb[0].mxu0
        %v3470 = vpop.f32.mrb[0].mxu0
        %v3471 = vadd.f32 %v2623, %v3470
        %v3472 = vpop.f32.mrb[0].mxu0
        %3473 = vmatprep.mubr.bf16.mxu0 0
        %3474 = vmatmul.mubr.bf16.gmra.mrb[0].mxu0 %v2803
        %v3475 = vpop.f32.mrb[0].mxu0
        %v3476 = vadd.f32 %v2623, %v3475
        %v3477 = vpop.f32.mrb[0].mxu0
        %v3478 = vpop.f32.mrb[0].mxu0
        %v3479 = vadd.f32 %v2623, %v3478
        %v3480 = vpop.f32.mrb[0].mxu0
        %3481 = vmatprep.mubr.bf16.mxu0 0
        %3482 = vmatmul.mubr.bf16.gmra.mrb[0].mxu0 %v2806
        %v3483 = vpop.f32.mrb[0].mxu0
        %v3484 = vadd.f32 %v2623, %v3483
        %v3485 = vpop.f32.mrb[0].mxu0
        %v3486 = vpop.f32.mrb[0].mxu0
        %v3487 = vadd.f32 %v2623, %v3486
        %v3488 = vpop.f32.mrb[0].mxu0
        %3489 = vmatprep.mubr.bf16.mxu0 0
        %3490 = vmatmul.mubr.bf16.gmra.mrb[0].mxu0 %v2809
        %v3491 = vpop.f32.mrb[0].mxu0
        %v3492 = vadd.f32 %v2623, %v3491
        %v3493 = vpop.f32.mrb[0].mxu0
        %v3494 = vpop.f32.mrb[0].mxu0
        %v3495 = vadd.f32 %v2623, %v3494
        %v3496 = vpop.f32.mrb[0].mxu0
        %3497 = vmatprep.mubr.bf16.mxu0 0
        %3498 = vmatmul.mubr.bf16.gmra.mrb[0].mxu0 %v2812
        %v3499 = vpop.f32.mrb[0].mxu0
        %v3500 = vadd.f32 %v2623, %v3499
        %v3501 = vpop.f32.mrb[0].mxu0
        %v3502 = vpop.f32.mrb[0].mxu0
        %v3503 = vadd.f32 %v2623, %v3502
        %v3504 = vpop.f32.mrb[0].mxu0
        %3505 = vmatprep.mubr.bf16.mxu0 0
        %3506 = vmatmul.mubr.bf16.gmra.mrb[0].mxu0 %v2815
        %v3507 = vpop.f32.mrb[0].mxu0
        %v3508 = vadd.f32 %v2623, %v3507
        %v3509 = vpop.f32.mrb[0].mxu0
        %v3510 = vpop.f32.mrb[0].mxu0
        %v3511 = vadd.f32 %v2623, %v3510
        %v3512 = vpop.f32.mrb[0].mxu0
        %3513 = vmatprep.mubr.bf16.mxu0 0
        %3514 = vmatmul.mubr.bf16.gmra.mrb[0].mxu0 %v2818
        %v3515 = vpop.f32.mrb[0].mxu0
        %v3516 = vadd.f32 %v2623, %v3515
        %v3517 = vpop.f32.mrb[0].mxu0
        %v3518 = vpop.f32.mrb[0].mxu0
        %v3519 = vadd.f32 %v2623, %v3518
        %v3520 = vpop.f32.mrb[0].mxu0
        %3521 = vmatprep.mubr.bf16.mxu0 0
        %3522 = vmatmul.mubr.bf16.gmra.mrb[0].mxu0 %v2821
        %v3523 = vpop.f32.mrb[0].mxu0
        %v3524 = vadd.f32 %v2623, %v3523
        %v3525 = vpop.f32.mrb[0].mxu0
        %v3526 = vpop.f32.mrb[0].mxu0
        %v3527 = vadd.f32 %v2623, %v3526
        %v3528 = vpop.f32.mrb[0].mxu0
        %3529 = vmatprep.mubr.bf16.mxu0 0
        %3530 = vmatmul.mubr.bf16.gmra.mrb[0].mxu0 %v2824
        %v3531 = vpop.f32.mrb[0].mxu0
        %v3532 = vadd.f32 %v2623, %v3531
        %v3533 = vpop.f32.mrb[0].mxu0
        %v3534 = vpop.f32.mrb[0].mxu0
        %v3535 = vadd.f32 %v2623, %v3534
        %v3536 = vpop.f32.mrb[0].mxu0
        %3537 = vmatprep.mubr.bf16.mxu0 0
        %3538 = vmatmul.mubr.bf16.gmra.mrb[0].mxu0 %v2827
        %v3539 = vpop.f32.mrb[0].mxu0
        %v3540 = vadd.f32 %v2623, %v3539
        %v3541 = vpop.f32.mrb[0].mxu0
        %v3542 = vpop.f32.mrb[0].mxu0
        %v3543 = vadd.f32 %v2623, %v3542
        %v3544 = vpop.f32.mrb[0].mxu0
        %3545 = vmatprep.mubr.bf16.mxu0 0
        %3546 = vmatmul.mubr.bf16.gmra.mrb[0].mxu0 %v2830
        %v3547 = vpop.f32.mrb[0].mxu0
        %v3548 = vadd.f32 %v2623, %v3547
        %v3549 = vpop.f32.mrb[0].mxu0
        %v3550 = vpop.f32.mrb[0].mxu0
        %v3551 = vadd.f32 %v2623, %v3550
        %v3552 = vpop.f32.mrb[0].mxu0
        %3553 = vmatprep.mubr.bf16.mxu0 0
        %3554 = vmatmul.mubr.bf16.gmra.mrb[0].mxu0 %v2833
        %v3555 = vpop.f32.mrb[0].mxu0
        %v3556 = vadd.f32 %v2623, %v3555
        %v3557 = vpop.f32.mrb[0].mxu0
        %v3558 = vpop.f32.mrb[0].mxu0
        %v3559 = vadd.f32 %v2623, %v3558
        %v3560 = vpop.f32.mrb[0].mxu0
        %3561 = vmatprep.mubr.bf16.mxu0 0
        %3562 = vmatmul.mubr.bf16.gmra.mrb[0].mxu0 %v2836
        %v3563 = vpop.f32.mrb[0].mxu0
        %v3564 = vadd.f32 %v2623, %v3563
        %v3565 = vpop.f32.mrb[0].mxu0
        %v3566 = vpop.f32.mrb[0].mxu0
        %v3567 = vadd.f32 %v2623, %v3566
        %v3568 = vpop.f32.mrb[0].mxu0
        %3569 = vmatprep.mubr.bf16.mxu0 0
        %3570 = vmatmul.mubr.bf16.gmra.mrb[0].mxu0 %v2839
        %v3571 = vpop.f32.mrb[0].mxu0
        %v3572 = vadd.f32 %v2623, %v3571
        %v3573 = vpop.f32.mrb[0].mxu0
        %v3574 = vpop.f32.mrb[0].mxu0
        %v3575 = vadd.f32 %v2623, %v3574
        %v3576 = vpop.f32.mrb[0].mxu0
        %3577 = vmatprep.mubr.bf16.mxu0 0
        %3578 = vmatmul.mubr.bf16.gmra.mrb[0].mxu0 %v2842
        %v3579 = vpop.f32.mrb[0].mxu0
        %v3580 = vadd.f32 %v2623, %v3579
        %v3581 = vpop.f32.mrb[0].mxu0
        %v3582 = vpop.f32.mrb[0].mxu0
        %v3583 = vadd.f32 %v2623, %v3582
        %v3584 = vpop.f32.mrb[0].mxu0
        %3585 = vmatprep.mubr.bf16.mxu0 0
        %3586 = vmatmul.mubr.bf16.gmra.mrb[0].mxu0 %v2845
        %v3587 = vpop.f32.mrb[0].mxu0
        %v3588 = vadd.f32 %v2623, %v3587
        %v3589 = vpop.f32.mrb[0].mxu0
        %v3590 = vpop.f32.mrb[0].mxu0
        %v3591 = vadd.f32 %v2623, %v3590
        %v3592 = vpop.f32.mrb[0].mxu0
        %3593 = vmatprep.mubr.bf16.mxu0 0
        %3594 = vmatmul.mubr.bf16.gmra.mrb[0].mxu0 %v2848
        %v3595 = vpop.f32.mrb[0].mxu0
        %v3596 = vadd.f32 %v2623, %v3595
        %v3597 = vpop.f32.mrb[0].mxu0
        %v3598 = vpop.f32.mrb[0].mxu0
        %v3599 = vadd.f32 %v2623, %v3598
        %v3600 = vpop.f32.mrb[0].mxu0
        %3601 = vmatprep.mubr.bf16.mxu0 0
        %3602 = vmatmul.mubr.bf16.gmra.mrb[0].mxu0 %v2851
        %v3603 = vpop.f32.mrb[0].mxu0
        %v3604 = vadd.f32 %v2623, %v3603
        %v3605 = vpop.f32.mrb[0].mxu0
        %v3606 = vpop.f32.mrb[0].mxu0
        %v3607 = vadd.f32 %v2623, %v3606
        %v3608 = vpop.f32.mrb[0].mxu0
        %3609 = vmatprep.mubr.bf16.mxu0 0
        %3610 = vmatmul.mubr.bf16.gmra.mrb[0].mxu0 %v2854
        %v3611 = vpop.f32.mrb[0].mxu0
        %v3612 = vadd.f32 %v2623, %v3611
        %v3613 = vpop.f32.mrb[0].mxu0
        %v3614 = vpop.f32.mrb[0].mxu0
        %v3615 = vadd.f32 %v2623, %v3614
        %v3616 = vpop.f32.mrb[0].mxu0
        %3617 = vmatprep.mubr.bf16.mxu0 0
        %3618 = vmatmul.mubr.bf16.gmra.mrb[0].mxu0 %v2857
        %v3619 = vpop.f32.mrb[0].mxu0
        %v3620 = vadd.f32 %v2623, %v3619
        %v3621 = vpop.f32.mrb[0].mxu0
        %v3622 = vpop.f32.mrb[0].mxu0
        %v3623 = vadd.f32 %v2623, %v3622
        %v3624 = vpop.f32.mrb[0].mxu0
        %3625 = vmatprep.mubr.bf16.mxu0 0
        %3626 = vmatmul.mubr.bf16.gmra.mrb[0].mxu0 %v2860
        %v3627 = vpop.f32.mrb[0].mxu0
        %v3628 = vadd.f32 %v2623, %v3627
        %v3629 = vpop.f32.mrb[0].mxu0
        %v3630 = vpop.f32.mrb[0].mxu0
        %v3631 = vadd.f32 %v2623, %v3630
        %v3632 = vpop.f32.mrb[0].mxu0
        %3633 = vmatprep.mubr.bf16.mxu0 0
        %3634 = vmatmul.mubr.bf16.gmra.mrb[0].mxu0 %v2863
        %v3635 = vpop.f32.mrb[0].mxu0
        %v3636 = vadd.f32 %v2623, %v3635
        %v3637 = vpop.f32.mrb[0].mxu0
        %v3638 = vpop.f32.mrb[0].mxu0
        %v3639 = vadd.f32 %v2623, %v3638
        %v3640 = vpop.f32.mrb[0].mxu0
        %3641 = vmatprep.mubr.bf16.mxu0 0
        %3642 = vmatmul.mubr.bf16.gmra.mrb[0].mxu0 %v2866
        %v3643 = vpop.f32.mrb[0].mxu0
        %v3644 = vadd.f32 %v2623, %v3643
        %v3645 = vpop.f32.mrb[0].mxu0
        %v3646 = vpop.f32.mrb[0].mxu0
        %v3647 = vadd.f32 %v2623, %v3646
        %v3648 = vpop.f32.mrb[0].mxu0
        %3649 = vmatprep.mubr.bf16.mxu0 0
        %3650 = vmatmul.mubr.bf16.gmra.mrb[0].mxu0 %v2869
        %v3651 = vpop.f32.mrb[0].mxu0
        %v3652 = vadd.f32 %v2623, %v3651
        %v3653 = vpop.f32.mrb[0].mxu0
        %v3654 = vpop.f32.mrb[0].mxu0
        %v3655 = vadd.f32 %v2623, %v3654
        %v3656 = vpop.f32.mrb[0].mxu0
        %3657 = vmatprep.mubr.bf16.mxu0 0
        %3658 = vmatmul.mubr.bf16.gmra.mrb[0].mxu0 %v2872
        %v3659 = vpop.f32.mrb[0].mxu0
        %v3660 = vadd.f32 %v2623, %v3659
        %v3661 = vpop.f32.mrb[0].mxu0
        %v3662 = vpop.f32.mrb[0].mxu0
        %v3663 = vadd.f32 %v2623, %v3662
        %v3664 = vpop.f32.mrb[0].mxu0
        %3665 = vmatprep.mubr.bf16.mxu0 0
        %3666 = vmatmul.mubr.bf16.gmra.mrb[0].mxu0 %v2875
        %v3667 = vpop.f32.mrb[0].mxu0
        %v3668 = vadd.f32 %v2623, %v3667
        %v3669 = vpop.f32.mrb[0].mxu0
        %v3670 = vpop.f32.mrb[0].mxu0
        %v3671 = vadd.f32 %v2623, %v3670
        %v3672 = vpop.f32.mrb[0].mxu0
        %3673 = vmatprep.mubr.bf16.mxu0 0
        %3674 = vmatmul.mubr.bf16.gmra.mrb[0].mxu0 %v2878
        %v3675 = vpop.f32.mrb[0].mxu0
        %v3676 = vadd.f32 %v2623, %v3675
        %v3677 = vpop.f32.mrb[0].mxu0
        %v3678 = vpop.f32.mrb[0].mxu0
        %v3679 = vadd.f32 %v2623, %v3678
        %v3680 = vpop.f32.mrb[0].mxu0
        %3681 = vmatprep.mubr.bf16.mxu0 0
        %3682 = vmatmul.mubr.bf16.gmra.mrb[0].mxu0 %v2881
        %v3683 = vpop.f32.mrb[0].mxu0
        %v3684 = vadd.f32 %v2623, %v3683
        %v3685 = vpop.f32.mrb[0].mxu0
        %v3686 = vpop.f32.mrb[0].mxu0
        %v3687 = vadd.f32 %v2623, %v3686
        %v3688 = vpop.f32.mrb[0].mxu0
        %3689 = vmatprep.mubr.bf16.mxu0 0
        %3690 = vmatmul.mubr.bf16.gmra.mrb[0].mxu0 %v2884
        %v3691 = vpop.f32.mrb[0].mxu0
        %v3692 = vadd.f32 %v2623, %v3691
        %v3693 = vpop.f32.mrb[0].mxu0
        %v3694 = vpop.f32.mrb[0].mxu0
        %v3695 = vadd.f32 %v2623, %v3694
        %v3696 = vpop.f32.mrb[0].mxu0
        %3697 = vmatprep.mubr.bf16.mxu0 0
        %3698 = vmatmul.mubr.bf16.gmra.mrb[0].mxu0 %v2887
        %v3699 = vpop.f32.mrb[0].mxu0
        %v3700 = vadd.f32 %v2623, %v3699
        %v3701 = vpop.f32.mrb[0].mxu0
        %v3702 = vpop.f32.mrb[0].mxu0
        %v3703 = vadd.f32 %v2623, %v3702
        %v3704 = vpop.f32.mrb[0].mxu0
        %3705 = vmatprep.mubr.bf16.mxu0 0
        %3706 = vmatmul.mubr.bf16.gmra.mrb[0].mxu0 %v2890
        %v3707 = vpop.f32.mrb[0].mxu0
        %v3708 = vadd.f32 %v2623, %v3707
        %v3709 = vpop.f32.mrb[0].mxu0
        %v3710 = vpop.f32.mrb[0].mxu0
        %v3711 = vadd.f32 %v2623, %v3710
        %v3712 = vpop.f32.mrb[0].mxu0
        %3713 = vmatprep.mubr.bf16.mxu0 0
        %3714 = vmatmul.mubr.bf16.gmra.mrb[0].mxu0 %v2893
        %v3715 = vpop.f32.mrb[0].mxu0
        %v3716 = vadd.f32 %v2623, %v3715
        %v3717 = vpop.f32.mrb[0].mxu0
        %v3718 = vpop.f32.mrb[0].mxu0
        %v3719 = vadd.f32 %v2623, %v3718
        %v3720 = vpop.f32.mrb[0].mxu0
        %3721 = vmatprep.mubr.bf16.mxu0 0
        %3722 = vmatmul.mubr.bf16.gmra.mrb[0].mxu0 %v2896
        %v3723 = vpop.f32.mrb[0].mxu0
        %v3724 = vadd.f32 %v2623, %v3723
        %v3725 = vpop.f32.mrb[0].mxu0
        %v3726 = vpop.f32.mrb[0].mxu0
        %v3727 = vadd.f32 %v2623, %v3726
        %v3728 = vpop.f32.mrb[0].mxu0
        %3729 = vmatprep.mubr.bf16.mxu0 0
        %3730 = vmatmul.mubr.bf16.gmra.mrb[0].mxu0 %v2899
        %v3731 = vpop.f32.mrb[0].mxu0
        %v3732 = vadd.f32 %v2623, %v3731
        %v3733 = vpop.f32.mrb[0].mxu0
        %v3734 = vpop.f32.mrb[0].mxu0
        %v3735 = vadd.f32 %v2623, %v3734
        %v3736 = vpop.f32.mrb[0].mxu0
        %3737 = vmatprep.mubr.bf16.mxu0 0
        %3738 = vmatmul.mubr.bf16.gmra.mrb[0].mxu0 %v2902
        %v3739 = vpop.f32.mrb[0].mxu0
        %v3740 = vadd.f32 %v2623, %v3739
        %v3741 = vpop.f32.mrb[0].mxu0
        %v3742 = vpop.f32.mrb[0].mxu0
        %v3743 = vadd.f32 %v2623, %v3742
        %v3744 = vpop.f32.mrb[0].mxu0
        %3745 = vmatprep.mubr.bf16.mxu0 0
        %3746 = vmatmul.mubr.bf16.gmra.mrb[0].mxu0 %v2905
        %v3747 = vpop.f32.mrb[0].mxu0
        %v3748 = vadd.f32 %v2623, %v3747
        %v3749 = vpop.f32.mrb[0].mxu0
        %v3750 = vpop.f32.mrb[0].mxu0
        %v3751 = vadd.f32 %v2623, %v3750
        %v3752 = vpop.f32.mrb[0].mxu0
        %3753 = vmatprep.mubr.bf16.mxu0 0
        %3754 = vmatmul.mubr.bf16.gmra.mrb[0].mxu0 %v2908
        %v3755 = vpop.f32.mrb[0].mxu0
        %v3756 = vadd.f32 %v2623, %v3755
        %v3757 = vpop.f32.mrb[0].mxu0
        %v3758 = vpop.f32.mrb[0].mxu0
        %v3759 = vadd.f32 %v2623, %v3758
        %v3760 = vpop.f32.mrb[0].mxu0
        %3761 = vmatprep.mubr.bf16.mxu0 0
        %3762 = vmatmul.mubr.bf16.gmra.mrb[0].mxu0 %v2911
        %v3763 = vpop.f32.mrb[0].mxu0
        %v3764 = vadd.f32 %v2623, %v3763
        %v3765 = vpop.f32.mrb[0].mxu0
        %v3766 = vpop.f32.mrb[0].mxu0
        %v3767 = vadd.f32 %v2623, %v3766
        %v3768 = vpop.f32.mrb[0].mxu0
        %3769 = vmatprep.mubr.bf16.mxu0 0
        %3770 = vmatmul.mubr.bf16.gmra.mrb[0].mxu0 %v2914
        %v3771 = vpop.f32.mrb[0].mxu0
        %v3772 = vadd.f32 %v2623, %v3771
        %v3773 = vpop.f32.mrb[0].mxu0
        %v3774 = vpop.f32.mrb[0].mxu0
        %v3775 = vadd.f32 %v2623, %v3774
        %v3776 = vpop.f32.mrb[0].mxu0
        %3777 = vmatprep.mubr.bf16.mxu0 0
        %3778 = vmatmul.mubr.bf16.gmra.mrb[0].mxu0 %v2917
        %v3779 = vpop.f32.mrb[0].mxu0
        %v3780 = vadd.f32 %v2623, %v3779
        %v3781 = vpop.f32.mrb[0].mxu0
        %v3782 = vpop.f32.mrb[0].mxu0
        %v3783 = vadd.f32 %v2623, %v3782
        %v3784 = vpop.f32.mrb[0].mxu0
        %3785 = vmatprep.mubr.bf16.mxu0 0
        %3786 = vmatmul.mubr.bf16.gmra.mrb[0].mxu0 %v2920
        %v3787 = vpop.f32.mrb[0].mxu0
        %v3788 = vadd.f32 %v2623, %v3787
        %v3789 = vpop.f32.mrb[0].mxu0
        %v3790 = vpop.f32.mrb[0].mxu0
        %v3791 = vadd.f32 %v2623, %v3790
        %v3792 = vpop.f32.mrb[0].mxu0
        %3793 = vmatprep.mubr.bf16.mxu0 0
        %3794 = vmatmul.mubr.bf16.gmra.mrb[0].mxu0 %v2923
        %v3795 = vpop.f32.mrb[0].mxu0
        %v3796 = vadd.f32 %v2623, %v3795
        %v3797 = vpop.f32.mrb[0].mxu0
        %v3798 = vpop.f32.mrb[0].mxu0
        %v3799 = vadd.f32 %v2623, %v3798
        %v3800 = vpop.f32.mrb[0].mxu0
        %3801 = vmatprep.mubr.bf16.mxu0 0
        %3802 = vmatmul.mubr.bf16.gmra.mrb[0].mxu0 %v2926
        %v3803 = vpop.f32.mrb[0].mxu0
        %v3804 = vadd.f32 %v2623, %v3803
        %v3805 = vpop.f32.mrb[0].mxu0
        %v3806 = vpop.f32.mrb[0].mxu0
        %v3807 = vadd.f32 %v2623, %v3806
        %v3808 = vpop.f32.mrb[0].mxu0
        %3809 = vmatprep.mubr.bf16.mxu0 0
        %3810 = vmatmul.mubr.bf16.gmra.mrb[0].mxu0 %v2929
        %v3811 = vpop.f32.mrb[0].mxu0
        %v3812 = vadd.f32 %v2623, %v3811
        %v3813 = vpop.f32.mrb[0].mxu0
        %v3814 = vpop.f32.mrb[0].mxu0
        %v3815 = vadd.f32 %v2623, %v3814
        %v3816 = vpop.f32.mrb[0].mxu0
        %3817 = vmatprep.mubr.bf16.mxu0 0
        %3818 = vmatmul.mubr.bf16.gmra.mrb[0].mxu0 %v2932
        %v3819 = vpop.f32.mrb[0].mxu0
        %v3820 = vadd.f32 %v2623, %v3819
        %v3821 = vpop.f32.mrb[0].mxu0
        %v3822 = vpop.f32.mrb[0].mxu0
        %v3823 = vadd.f32 %v2623, %v3822
        %v3824 = vpop.f32.mrb[0].mxu0
        %3825 = vmatprep.mubr.bf16.mxu0 0
        %3826 = vmatmul.mubr.bf16.gmra.mrb[0].mxu0 %v2935
        %v3827 = vpop.f32.mrb[0].mxu0
        %v3828 = vadd.f32 %v2623, %v3827
        %v3829 = vpop.f32.mrb[0].mxu0
        %v3830 = vpop.f32.mrb[0].mxu0
        %v3831 = vadd.f32 %v2623, %v3830
        %v3832 = vpop.f32.mrb[0].mxu0
        %3833 = vmatprep.mubr.bf16.mxu0 0
        %3834 = vmatmul.mubr.bf16.gmra.mrb[0].mxu0 %v2938
        %v3835 = vpop.f32.mrb[0].mxu0
        %v3836 = vadd.f32 %v2623, %v3835
        %v3837 = vpop.f32.mrb[0].mxu0
        %v3838 = vpop.f32.mrb[0].mxu0
        %v3839 = vadd.f32 %v2623, %v3838
        %v3840 = vpop.f32.mrb[0].mxu0
        %3841 = vmatprep.mubr.bf16.mxu0 0
        %3842 = vmatmul.mubr.bf16.gmra.mrb[0].mxu0 %v2941
        %v3843 = vpop.f32.mrb[0].mxu0
        %v3844 = vadd.f32 %v2623, %v3843
        %v3845 = vpop.f32.mrb[0].mxu0
        %v3846 = vpop.f32.mrb[0].mxu0
        %v3847 = vadd.f32 %v2623, %v3846
        %v3848 = vpop.f32.mrb[0].mxu0
        %3849 = vmatprep.mubr.bf16.mxu0 0
        %3850 = vmatmul.mubr.bf16.gmra.mrb[0].mxu0 %v2944
        %v3851 = vpop.f32.mrb[0].mxu0
        %v3852 = vadd.f32 %v2623, %v3851
        %v3853 = vpop.f32.mrb[0].mxu0
        %v3854 = vpop.f32.mrb[0].mxu0
        %v3855 = vadd.f32 %v2623, %v3854
        %v3856 = vpop.f32.mrb[0].mxu0
        %3857 = vmatprep.mubr.bf16.mxu0 0
        %3858 = vmatmul.mubr.bf16.gmra.mrb[0].mxu0 %v2947
        %v3859 = vpop.f32.mrb[0].mxu0
        %v3860 = vadd.f32 %v2623, %v3859
        %v3861 = vpop.f32.mrb[0].mxu0
        %v3862 = vpop.f32.mrb[0].mxu0
        %v3863 = vadd.f32 %v2623, %v3862
        %v3864 = vpop.f32.mrb[0].mxu0
        %3865 = vmatprep.mubr.bf16.mxu0 0
        %3866 = vmatmul.mubr.bf16.gmra.mrb[0].mxu0 %v2950
        %v3867 = vpop.f32.mrb[0].mxu0
        %v3868 = vadd.f32 %v2623, %v3867
        %v3869 = vpop.f32.mrb[0].mxu0
        %v3870 = vpop.f32.mrb[0].mxu0
        %v3871 = vadd.f32 %v2623, %v3870
        %v3872 = vpop.f32.mrb[0].mxu0
        %3873 = vmatprep.mubr.bf16.mxu0 0
        %3874 = vmatmul.mubr.bf16.gmra.mrb[0].mxu0 %v2953
        %v3875 = vpop.f32.mrb[0].mxu0
        %v3876 = vadd.f32 %v2623, %v3875
        %v3877 = vpop.f32.mrb[0].mxu0
        %v3878 = vpop.f32.mrb[0].mxu0
        %v3879 = vadd.f32 %v2623, %v3878
        %v3880 = vpop.f32.mrb[0].mxu0
        %3881 = vmatprep.mubr.bf16.mxu0 0
        %3882 = vmatmul.mubr.bf16.gmra.mrb[0].mxu0 %v2956
        %v3883 = vpop.f32.mrb[0].mxu0
        %v3884 = vadd.f32 %v2623, %v3883
        %v3885 = vpop.f32.mrb[0].mxu0
        %v3886 = vpop.f32.mrb[0].mxu0
        %v3887 = vadd.f32 %v2623, %v3886
        %v3888 = vpop.f32.mrb[0].mxu0
        %3889 = vmatprep.mubr.bf16.mxu0 0
        %3890 = vmatmul.mubr.bf16.gmra.mrb[0].mxu0 %v2959
        %v3891 = vpop.f32.mrb[0].mxu0
        %v3892 = vadd.f32 %v2623, %v3891
        %v3893 = vpop.f32.mrb[0].mxu0
        %v3894 = vpop.f32.mrb[0].mxu0
        %v3895 = vadd.f32 %v2623, %v3894
        %v3896 = vpop.f32.mrb[0].mxu0
        %3897 = vmatprep.mubr.bf16.mxu0 0
        %3898 = vmatmul.mubr.bf16.gmra.mrb[0].mxu0 %v2962
        %v3899 = vpop.f32.mrb[0].mxu0
        %v3900 = vadd.f32 %v2623, %v3899
        %v3901 = vpop.f32.mrb[0].mxu0
        %v3902 = vpop.f32.mrb[0].mxu0
        %v3903 = vadd.f32 %v2623, %v3902
        %v3904 = vpop.f32.mrb[0].mxu0
        %3905 = vmatprep.mubr.bf16.mxu0 0
        %3906 = vmatmul.mubr.bf16.gmra.mrb[0].mxu0 %v2965
        %v3907 = vpop.f32.mrb[0].mxu0
        %v3908 = vadd.f32 %v2623, %v3907
        %v3909 = vpop.f32.mrb[0].mxu0
        %v3910 = vpop.f32.mrb[0].mxu0
        %v3911 = vadd.f32 %v2623, %v3910
        %v3912 = vpop.f32.mrb[0].mxu0
        %3913 = vmatprep.mubr.bf16.mxu0 0
        %3914 = vmatmul.mubr.bf16.gmra.mrb[0].mxu0 %v2968
        %v3915 = vpop.f32.mrb[0].mxu0
        %v3916 = vadd.f32 %v2623, %v3915
        %v3917 = vpop.f32.mrb[0].mxu0
        %v3918 = vpop.f32.mrb[0].mxu0
        %v3919 = vadd.f32 %v2623, %v3918
        %v3920 = vpop.f32.mrb[0].mxu0
        %3921 = vmatprep.mubr.bf16.mxu0 0
        %3922 = vmatmul.mubr.bf16.gmra.mrb[0].mxu0 %v2971
        %v3923 = vpop.f32.mrb[0].mxu0
        %v3924 = vadd.f32 %v2623, %v3923
        %v3925 = vpop.f32.mrb[0].mxu0
        %v3926 = vpop.f32.mrb[0].mxu0
        %v3927 = vadd.f32 %v2623, %v3926
        %v3928 = vpop.f32.mrb[0].mxu0
        %3929 = vmatprep.mubr.bf16.mxu0 0
        %3930 = vmatmul.mubr.bf16.gmra.mrb[0].mxu0 %v2974
        %v3931 = vpop.f32.mrb[0].mxu0
        %v3932 = vadd.f32 %v2623, %v3931
        %v3933 = vpop.f32.mrb[0].mxu0
        %v3934 = vpop.f32.mrb[0].mxu0
        %v3935 = vadd.f32 %v2623, %v3934
        %v3936 = vpop.f32.mrb[0].mxu0
        %3937 = vmatprep.mubr.bf16.mxu0 0
        %3938 = vmatmul.mubr.bf16.gmra.mrb[0].mxu0 %v2977
        %v3939 = vpop.f32.mrb[0].mxu0
        %v3940 = vadd.f32 %v2623, %v3939
        %v3941 = vpop.f32.mrb[0].mxu0
        %v3942 = vpop.f32.mrb[0].mxu0
        %v3943 = vadd.f32 %v2623, %v3942
        %v3944 = vpop.f32.mrb[0].mxu0
        %3945 = vmatprep.mubr.bf16.mxu0 0
        %3946 = vmatmul.mubr.bf16.gmra.mrb[0].mxu0 %v2980
        %v3947 = vpop.f32.mrb[0].mxu0
        %v3948 = vadd.f32 %v2623, %v3947
        %v3949 = vpop.f32.mrb[0].mxu0
        %v3950 = vpop.f32.mrb[0].mxu0
        %v3951 = vadd.f32 %v2623, %v3950
        %v3952 = vpop.f32.mrb[0].mxu0
        %3953 = vmatprep.mubr.bf16.mxu0 0
        %3954 = vmatmul.mubr.bf16.gmra.mrb[0].mxu0 %v2983
        %v3955 = vpop.f32.mrb[0].mxu0
        %v3956 = vadd.f32 %v2623, %v3955
        %v3957 = vpop.f32.mrb[0].mxu0
        %v3958 = vpop.f32.mrb[0].mxu0
        %v3959 = vadd.f32 %v2623, %v3958
        %v3960 = vpop.f32.mrb[0].mxu0
        %3961 = vmatprep.mubr.bf16.mxu0 0
        %3962 = vmatmul.mubr.bf16.gmra.mrb[0].mxu0 %v2986
        %v3963 = vpop.f32.mrb[0].mxu0
        %v3964 = vadd.f32 %v2623, %v3963
        %v3965 = vpop.f32.mrb[0].mxu0
        %v3966 = vpop.f32.mrb[0].mxu0
        %v3967 = vadd.f32 %v2623, %v3966
        %v3968 = vpop.f32.mrb[0].mxu0
        %3969 = vmatprep.mubr.bf16.mxu0 0
        %3970 = vmatmul.mubr.bf16.gmra.mrb[0].mxu0 %v2989
        %v3971 = vpop.f32.mrb[0].mxu0
        %v3972 = vadd.f32 %v2623, %v3971
        %v3973 = vpop.f32.mrb[0].mxu0
        %v3974 = vpop.f32.mrb[0].mxu0
        %v3975 = vadd.f32 %v2623, %v3974
        %v3976 = vpop.f32.mrb[0].mxu0
        %3977 = vmatprep.mubr.bf16.mxu0 0
        %3978 = vmatmul.mubr.bf16.gmra.mrb[0].mxu0 %v2992
        %v3979 = vpop.f32.mrb[0].mxu0
        %v3980 = vadd.f32 %v2623, %v3979
        %v3981 = vpop.f32.mrb[0].mxu0
        %v3982 = vpop.f32.mrb[0].mxu0
        %v3983 = vadd.f32 %v2623, %v3982
        %v3984 = vpop.f32.mrb[0].mxu0
        %3985 = vmatprep.mubr.bf16.mxu0 0
        %3986 = vmatmul.mubr.bf16.gmra.mrb[0].mxu0 %v2995
        %v3987 = vpop.f32.mrb[0].mxu0
        %v3988 = vadd.f32 %v2623, %v3987
        %v3989 = vpop.f32.mrb[0].mxu0
        %v3990 = vpop.f32.mrb[0].mxu0
        %v3991 = vadd.f32 %v2623, %v3990
        %v3992 = vpop.f32.mrb[0].mxu0
        %3993 = vmatprep.mubr.bf16.mxu0 0
        %3994 = vmatmul.mubr.bf16.gmra.mrb[0].mxu0 %v2998
        %v3995 = vpop.f32.mrb[0].mxu0
        %v3996 = vadd.f32 %v2623, %v3995
        %v3997 = vpop.f32.mrb[0].mxu0
        %v3998 = vpop.f32.mrb[0].mxu0
        %v3999 = vadd.f32 %v2623, %v3998
        %v4000 = vpop.f32.mrb[0].mxu0
        %4001 = vmatprep.mubr.bf16.mxu0 0
        %4002 = vmatmul.mubr.bf16.gmra.mrb[0].mxu0 %v3001
        %v4003 = vpop.f32.mrb[0].mxu0
        %v4004 = vadd.f32 %v2623, %v4003
        %v4005 = vpop.f32.mrb[0].mxu0
        %v4006 = vpop.f32.mrb[0].mxu0
        %v4007 = vadd.f32 %v2623, %v4006
        %v4008 = vpop.f32.mrb[0].mxu0
        %4009 = vmatprep.mubr.bf16.mxu0 0
        %4010 = vmatmul.mubr.bf16.gmra.mrb[0].mxu0 %v3004
        %v4011 = vpop.f32.mrb[0].mxu0
        %v4012 = vadd.f32 %v2623, %v4011
        %v4013 = vpop.f32.mrb[0].mxu0
        %v4014 = vpop.f32.mrb[0].mxu0
        %v4015 = vadd.f32 %v2623, %v4014
        %v4016 = vpop.f32.mrb[0].mxu0
        %4017 = vmatprep.mubr.bf16.mxu0 0
        %4018 = vmatmul.mubr.bf16.gmra.mrb[0].mxu0 %v3007
        %v4019 = vpop.f32.mrb[0].mxu0
        %v4020 = vadd.f32 %v2623, %v4019
        %v4021 = vpop.f32.mrb[0].mxu0
        %v4022 = vpop.f32.mrb[0].mxu0
        %v4023 = vadd.f32 %v2623, %v4022
        %v4024 = vpop.f32.mrb[0].mxu0
        %4025 = vmatprep.mubr.bf16.mxu0 0
        %4026 = vmatmul.mubr.bf16.gmra.mrb[0].mxu0 %v3010
        %v4027 = vpop.f32.mrb[0].mxu0
        %v4028 = vadd.f32 %v2623, %v4027
        %v4029 = vpop.f32.mrb[0].mxu0
        %v4030 = vpop.f32.mrb[0].mxu0
        %v4031 = vadd.f32 %v2623, %v4030
        %v4032 = vpop.f32.mrb[0].mxu0
        %4033 = vmatprep.mubr.bf16.mxu0 0
        %4034 = vmatmul.mubr.bf16.gmra.mrb[0].mxu0 %v3013
        %v4035 = vpop.f32.mrb[0].mxu0
        %v4036 = vadd.f32 %v2623, %v4035
        %v4037 = vpop.f32.mrb[0].mxu0
        %v4038 = vpop.f32.mrb[0].mxu0
        %v4039 = vadd.f32 %v2623, %v4038
        %v4040 = vpop.f32.mrb[0].mxu0
        %4041 = vmatprep.mubr.bf16.mxu0 0
        %4042 = vmatmul.mubr.bf16.gmra.mrb[0].mxu0 %v3016
        %v4043 = vpop.f32.mrb[0].mxu0
        %v4044 = vadd.f32 %v2623, %v4043
        %v4045 = vpop.f32.mrb[0].mxu0
        %v4046 = vpop.f32.mrb[0].mxu0
        %v4047 = vadd.f32 %v2623, %v4046
        %v4048 = vpop.f32.mrb[0].mxu0
        %4049 = vmatprep.mubr.bf16.mxu0 0
        %4050 = vmatmul.mubr.bf16.gmra.mrb[0].mxu0 %v3019
        %v4051 = vpop.f32.mrb[0].mxu0
        %v4052 = vadd.f32 %v2623, %v4051
        %v4053 = vpop.f32.mrb[0].mxu0
        %v4054 = vpop.f32.mrb[0].mxu0
        %v4055 = vadd.f32 %v2623, %v4054
        %v4056 = vpop.f32.mrb[0].mxu0
        %4057 = vmatprep.mubr.bf16.mxu0 0
        %4058 = vmatmul.mubr.bf16.gmra.mrb[0].mxu0 %v3022
        %v4059 = vpop.f32.mrb[0].mxu0
        %v4060 = vadd.f32 %v2623, %v4059
        %v4061 = vpop.f32.mrb[0].mxu0
        %v4062 = vpop.f32.mrb[0].mxu0
        %v4063 = vadd.f32 %v2623, %v4062
        %v4064 = vpop.f32.mrb[0].mxu0
        %4065 = vmatprep.mubr.bf16.mxu0 0
        %4066 = vmatmul.mubr.bf16.gmra.mrb[0].mxu0 %v3025
        %v4067 = vpop.f32.mrb[0].mxu0
        %v4068 = vadd.f32 %v2623, %v4067
        %v4069 = vpop.f32.mrb[0].mxu0
        %v4070 = vpop.f32.mrb[0].mxu0
        %v4071 = vadd.f32 %v2623, %v4070
        %v4072 = vpop.f32.mrb[0].mxu0
        %4073 = vmatprep.mubr.bf16.mxu0 0
        %4074 = vmatmul.mubr.bf16.gmra.mrb[0].mxu0 %v3028
        %v4075 = vpop.f32.mrb[0].mxu0
        %v4076 = vadd.f32 %v2623, %v4075
        %v4077 = vpop.f32.mrb[0].mxu0
        %v4078 = vpop.f32.mrb[0].mxu0
        %v4079 = vadd.f32 %v2623, %v4078
        %v4080 = vpop.f32.mrb[0].mxu0
        %4081 = vmatprep.mubr.bf16.mxu0 0
        %4082 = vmatmul.mubr.bf16.gmra.mrb[0].mxu0 %v3031
        %v4083 = vpop.f32.mrb[0].mxu0
        %v4084 = vadd.f32 %v2623, %v4083
        %v4085 = vpop.f32.mrb[0].mxu0
        %v4086 = vpop.f32.mrb[0].mxu0
        %v4087 = vadd.f32 %v2623, %v4086
        %v4088 = vpop.f32.mrb[0].mxu0
        %4089 = vdwg.mxu0
        %v4090 = vmax.f32 %v3068, 0.0
        %v4091 = vmax.f32 %v3071, 0.0
        %v4092 = vmax.f32 %v3076, 0.0
        %v4093 = vmax.f32 %v3079, 0.0
        %v4094 = vmax.f32 %v3084, 0.0
        %v4095 = vmax.f32 %v3087, 0.0
        %v4096 = vmax.f32 %v3092, 0.0
        %v4097 = vmax.f32 %v3095, 0.0
        %v4098 = vmax.f32 %v3100, 0.0
        %v4099 = vmax.f32 %v3103, 0.0
        %v4100 = vmax.f32 %v3108, 0.0
        %v4101 = vmax.f32 %v3111, 0.0
        %v4102 = vmax.f32 %v3116, 0.0
        %v4103 = vmax.f32 %v3119, 0.0
        %v4104 = vmax.f32 %v3124, 0.0
        %v4105 = vmax.f32 %v3127, 0.0
        %v4106 = vmax.f32 %v3132, 0.0
        %v4107 = vmax.f32 %v3135, 0.0
        %v4108 = vmax.f32 %v3140, 0.0
        %v4109 = vmax.f32 %v3143, 0.0
        %v4110 = vmax.f32 %v3148, 0.0
        %v4111 = vmax.f32 %v3151, 0.0
        %v4112 = vmax.f32 %v3156, 0.0
        %v4113 = vmax.f32 %v3159, 0.0
        %v4114 = vmax.f32 %v3164, 0.0
        %v4115 = vmax.f32 %v3167, 0.0
        %v4116 = vmax.f32 %v3172, 0.0
        %v4117 = vmax.f32 %v3175, 0.0
        %v4118 = vmax.f32 %v3180, 0.0
        %v4119 = vmax.f32 %v3183, 0.0
        %v4120 = vmax.f32 %v3188, 0.0
        %v4121 = vmax.f32 %v3191, 0.0
        %v4122 = vmax.f32 %v3196, 0.0
        %v4123 = vmax.f32 %v3199, 0.0
        %v4124 = vmax.f32 %v3204, 0.0
        %v4125 = vmax.f32 %v3207, 0.0
        %v4126 = vmax.f32 %v3212, 0.0
        %v4127 = vmax.f32 %v3215, 0.0
        %v4128 = vmax.f32 %v3220, 0.0
        %v4129 = vmax.f32 %v3223, 0.0
        %v4130 = vmax.f32 %v3228, 0.0
        %v4131 = vmax.f32 %v3231, 0.0
        %v4132 = vmax.f32 %v3236, 0.0
        %v4133 = vmax.f32 %v3239, 0.0
        %v4134 = vmax.f32 %v3244, 0.0
        %v4135 = vmax.f32 %v3247, 0.0
        %v4136 = vmax.f32 %v3252, 0.0
        %v4137 = vmax.f32 %v3255, 0.0
        %v4138 = vmax.f32 %v3260, 0.0
        %v4139 = vmax.f32 %v3263, 0.0
        %v4140 = vmax.f32 %v3268, 0.0
        %v4141 = vmax.f32 %v3271, 0.0
        %v4142 = vmax.f32 %v3276, 0.0
        %v4143 = vmax.f32 %v3279, 0.0
        %v4144 = vmax.f32 %v3284, 0.0
        %v4145 = vmax.f32 %v3287, 0.0
        %v4146 = vmax.f32 %v3292, 0.0
        %v4147 = vmax.f32 %v3295, 0.0
        %v4148 = vmax.f32 %v3300, 0.0
        %v4149 = vmax.f32 %v3303, 0.0
        %v4150 = vmax.f32 %v3308, 0.0
        %v4151 = vmax.f32 %v3311, 0.0
        %v4152 = vmax.f32 %v3316, 0.0
        %v4153 = vmax.f32 %v3319, 0.0
        %v4154 = vmax.f32 %v3324, 0.0
        %v4155 = vmax.f32 %v3327, 0.0
        %v4156 = vmax.f32 %v3332, 0.0
        %v4157 = vmax.f32 %v3335, 0.0
        %v4158 = vmax.f32 %v3340, 0.0
        %v4159 = vmax.f32 %v3343, 0.0
        %v4160 = vmax.f32 %v3348, 0.0
        %v4161 = vmax.f32 %v3351, 0.0
        %v4162 = vmax.f32 %v3356, 0.0
        %v4163 = vmax.f32 %v3359, 0.0
        %v4164 = vmax.f32 %v3364, 0.0
        %v4165 = vmax.f32 %v3367, 0.0
        %v4166 = vmax.f32 %v3372, 0.0
        %v4167 = vmax.f32 %v3375, 0.0
        %v4168 = vmax.f32 %v3380, 0.0
        %v4169 = vmax.f32 %v3383, 0.0
        %v4170 = vmax.f32 %v3388, 0.0
        %v4171 = vmax.f32 %v3391, 0.0
        %v4172 = vmax.f32 %v3396, 0.0
        %v4173 = vmax.f32 %v3399, 0.0
        %v4174 = vmax.f32 %v3404, 0.0
        %v4175 = vmax.f32 %v3407, 0.0
        %v4176 = vmax.f32 %v3412, 0.0
        %v4177 = vmax.f32 %v3415, 0.0
        %v4178 = vmax.f32 %v3420, 0.0
        %v4179 = vmax.f32 %v3423, 0.0
        %v4180 = vmax.f32 %v3428, 0.0
        %v4181 = vmax.f32 %v3431, 0.0
        %v4182 = vmax.f32 %v3436, 0.0
        %v4183 = vmax.f32 %v3439, 0.0
        %v4184 = vmax.f32 %v3444, 0.0
        %v4185 = vmax.f32 %v3447, 0.0
        %v4186 = vmax.f32 %v3452, 0.0
        %v4187 = vmax.f32 %v3455, 0.0
        %v4188 = vmax.f32 %v3460, 0.0
        %v4189 = vmax.f32 %v3463, 0.0
        %v4190 = vmax.f32 %v3468, 0.0
        %v4191 = vmax.f32 %v3471, 0.0
        %v4192 = vmax.f32 %v3476, 0.0
        %v4193 = vmax.f32 %v3479, 0.0
        %v4194 = vmax.f32 %v3484, 0.0
        %v4195 = vmax.f32 %v3487, 0.0
        %v4196 = vmax.f32 %v3492, 0.0
        %v4197 = vmax.f32 %v3495, 0.0
        %v4198 = vmax.f32 %v3500, 0.0
        %v4199 = vmax.f32 %v3503, 0.0
        %v4200 = vmax.f32 %v3508, 0.0
        %v4201 = vmax.f32 %v3511, 0.0
        %v4202 = vmax.f32 %v3516, 0.0
        %v4203 = vmax.f32 %v3519, 0.0
        %v4204 = vmax.f32 %v3524, 0.0
        %v4205 = vmax.f32 %v3527, 0.0
        %v4206 = vmax.f32 %v3532, 0.0
        %v4207 = vmax.f32 %v3535, 0.0
        %v4208 = vmax.f32 %v3540, 0.0
        %v4209 = vmax.f32 %v3543, 0.0
        %v4210 = vmax.f32 %v3548, 0.0
        %v4211 = vmax.f32 %v3551, 0.0
        %v4212 = vmax.f32 %v3556, 0.0
        %v4213 = vmax.f32 %v3559, 0.0
        %v4214 = vmax.f32 %v3564, 0.0
        %v4215 = vmax.f32 %v3567, 0.0
        %v4216 = vmax.f32 %v3572, 0.0
        %v4217 = vmax.f32 %v3575, 0.0
        %v4218 = vmax.f32 %v3580, 0.0
        %v4219 = vmax.f32 %v3583, 0.0
        %v4220 = vmax.f32 %v3588, 0.0
        %v4221 = vmax.f32 %v3591, 0.0
        %v4222 = vmax.f32 %v3596, 0.0
        %v4223 = vmax.f32 %v3599, 0.0
        %v4224 = vmax.f32 %v3604, 0.0
        %v4225 = vmax.f32 %v3607, 0.0
        %v4226 = vmax.f32 %v3612, 0.0
        %v4227 = vmax.f32 %v3615, 0.0
        %v4228 = vmax.f32 %v3620, 0.0
        %v4229 = vmax.f32 %v3623, 0.0
        %v4230 = vmax.f32 %v3628, 0.0
        %v4231 = vmax.f32 %v3631, 0.0
        %v4232 = vmax.f32 %v3636, 0.0
        %v4233 = vmax.f32 %v3639, 0.0
        %v4234 = vmax.f32 %v3644, 0.0
        %v4235 = vmax.f32 %v3647, 0.0
        %v4236 = vmax.f32 %v3652, 0.0
        %v4237 = vmax.f32 %v3655, 0.0
        %v4238 = vmax.f32 %v3660, 0.0
        %v4239 = vmax.f32 %v3663, 0.0
        %v4240 = vmax.f32 %v3668, 0.0
        %v4241 = vmax.f32 %v3671, 0.0
        %v4242 = vmax.f32 %v3676, 0.0
        %v4243 = vmax.f32 %v3679, 0.0
        %v4244 = vmax.f32 %v3684, 0.0
        %v4245 = vmax.f32 %v3687, 0.0
        %v4246 = vmax.f32 %v3692, 0.0
        %v4247 = vmax.f32 %v3695, 0.0
        %v4248 = vmax.f32 %v3700, 0.0
        %v4249 = vmax.f32 %v3703, 0.0
        %v4250 = vmax.f32 %v3708, 0.0
        %v4251 = vmax.f32 %v3711, 0.0
        %v4252 = vmax.f32 %v3716, 0.0
        %v4253 = vmax.f32 %v3719, 0.0
        %v4254 = vmax.f32 %v3724, 0.0
        %v4255 = vmax.f32 %v3727, 0.0
        %v4256 = vmax.f32 %v3732, 0.0
        %v4257 = vmax.f32 %v3735, 0.0
        %v4258 = vmax.f32 %v3740, 0.0
        %v4259 = vmax.f32 %v3743, 0.0
        %v4260 = vmax.f32 %v3748, 0.0
        %v4261 = vmax.f32 %v3751, 0.0
        %v4262 = vmax.f32 %v3756, 0.0
        %v4263 = vmax.f32 %v3759, 0.0
        %v4264 = vmax.f32 %v3764, 0.0
        %v4265 = vmax.f32 %v3767, 0.0
        %v4266 = vmax.f32 %v3772, 0.0
        %v4267 = vmax.f32 %v3775, 0.0
        %v4268 = vmax.f32 %v3780, 0.0
        %v4269 = vmax.f32 %v3783, 0.0
        %v4270 = vmax.f32 %v3788, 0.0
        %v4271 = vmax.f32 %v3791, 0.0
        %v4272 = vmax.f32 %v3796, 0.0
        %v4273 = vmax.f32 %v3799, 0.0
        %v4274 = vmax.f32 %v3804, 0.0
        %v4275 = vmax.f32 %v3807, 0.0
        %v4276 = vmax.f32 %v3812, 0.0
        %v4277 = vmax.f32 %v3815, 0.0
        %v4278 = vmax.f32 %v3820, 0.0
        %v4279 = vmax.f32 %v3823, 0.0
        %v4280 = vmax.f32 %v3828, 0.0
        %v4281 = vmax.f32 %v3831, 0.0
        %v4282 = vmax.f32 %v3836, 0.0
        %v4283 = vmax.f32 %v3839, 0.0
        %v4284 = vmax.f32 %v3844, 0.0
        %v4285 = vmax.f32 %v3847, 0.0
        %v4286 = vmax.f32 %v3852, 0.0
        %v4287 = vmax.f32 %v3855, 0.0
        %v4288 = vmax.f32 %v3860, 0.0
        %v4289 = vmax.f32 %v3863, 0.0
        %v4290 = vmax.f32 %v3868, 0.0
        %v4291 = vmax.f32 %v3871, 0.0
        %v4292 = vmax.f32 %v3876, 0.0
        %v4293 = vmax.f32 %v3879, 0.0
        %v4294 = vmax.f32 %v3884, 0.0
        %v4295 = vmax.f32 %v3887, 0.0
        %v4296 = vmax.f32 %v3892, 0.0
        %v4297 = vmax.f32 %v3895, 0.0
        %v4298 = vmax.f32 %v3900, 0.0
        %v4299 = vmax.f32 %v3903, 0.0
        %v4300 = vmax.f32 %v3908, 0.0
        %v4301 = vmax.f32 %v3911, 0.0
        %v4302 = vmax.f32 %v3916, 0.0
        %v4303 = vmax.f32 %v3919, 0.0
        %v4304 = vmax.f32 %v3924, 0.0
        %v4305 = vmax.f32 %v3927, 0.0
        %v4306 = vmax.f32 %v3932, 0.0
        %v4307 = vmax.f32 %v3935, 0.0
        %v4308 = vmax.f32 %v3940, 0.0
        %v4309 = vmax.f32 %v3943, 0.0
        %v4310 = vmax.f32 %v3948, 0.0
        %v4311 = vmax.f32 %v3951, 0.0
        %v4312 = vmax.f32 %v3956, 0.0
        %v4313 = vmax.f32 %v3959, 0.0
        %v4314 = vmax.f32 %v3964, 0.0
        %v4315 = vmax.f32 %v3967, 0.0
        %v4316 = vmax.f32 %v3972, 0.0
        %v4317 = vmax.f32 %v3975, 0.0
        %v4318 = vmax.f32 %v3980, 0.0
        %v4319 = vmax.f32 %v3983, 0.0
        %v4320 = vmax.f32 %v3988, 0.0
        %v4321 = vmax.f32 %v3991, 0.0
        %v4322 = vmax.f32 %v3996, 0.0
        %v4323 = vmax.f32 %v3999, 0.0
        %v4324 = vmax.f32 %v4004, 0.0
        %v4325 = vmax.f32 %v4007, 0.0
        %v4326 = vmax.f32 %v4012, 0.0
        %v4327 = vmax.f32 %v4015, 0.0
        %v4328 = vmax.f32 %v4020, 0.0
        %v4329 = vmax.f32 %v4023, 0.0
        %v4330 = vmax.f32 %v4028, 0.0
        %v4331 = vmax.f32 %v4031, 0.0
        %v4332 = vmax.f32 %v4036, 0.0
        %v4333 = vmax.f32 %v4039, 0.0
        %v4334 = vmax.f32 %v4044, 0.0
        %v4335 = vmax.f32 %v4047, 0.0
        %v4336 = vmax.f32 %v4052, 0.0
        %v4337 = vmax.f32 %v4055, 0.0
        %v4338 = vmax.f32 %v4060, 0.0
        %v4339 = vmax.f32 %v4063, 0.0
        %v4340 = vmax.f32 %v4068, 0.0
        %v4341 = vmax.f32 %v4071, 0.0
        %v4342 = vmax.f32 %v4076, 0.0
        %v4343 = vmax.f32 %v4079, 0.0
        %v4344 = vmax.f32 %v4084, 0.0
        %v4345 = vmax.f32 %v4087, 0.0
        %v4346 = vpack.c.bf16 %v4091, %v4090
        %v4347 = vpack.c.bf16 %v4093, %v4092
        %v4348 = vpack.c.bf16 %v4095, %v4094
        %v4349 = vpack.c.bf16 %v4097, %v4096
        %v4350 = vpack.c.bf16 %v4099, %v4098
        %v4351 = vpack.c.bf16 %v4101, %v4100
        %v4352 = vpack.c.bf16 %v4103, %v4102
        %v4353 = vpack.c.bf16 %v4105, %v4104
        %v4354 = vpack.c.bf16 %v4107, %v4106
        %v4355 = vpack.c.bf16 %v4109, %v4108
        %v4356 = vpack.c.bf16 %v4111, %v4110
        %v4357 = vpack.c.bf16 %v4113, %v4112
        %v4358 = vpack.c.bf16 %v4115, %v4114
        %v4359 = vpack.c.bf16 %v4117, %v4116
        %v4360 = vpack.c.bf16 %v4119, %v4118
        %v4361 = vpack.c.bf16 %v4121, %v4120
        %v4362 = vpack.c.bf16 %v4123, %v4122
        %v4363 = vpack.c.bf16 %v4125, %v4124
        %v4364 = vpack.c.bf16 %v4127, %v4126
        %v4365 = vpack.c.bf16 %v4129, %v4128
        %v4366 = vpack.c.bf16 %v4131, %v4130
        %v4367 = vpack.c.bf16 %v4133, %v4132
        %v4368 = vpack.c.bf16 %v4135, %v4134
        %v4369 = vpack.c.bf16 %v4137, %v4136
        %v4370 = vpack.c.bf16 %v4139, %v4138
        %v4371 = vpack.c.bf16 %v4141, %v4140
        %v4372 = vpack.c.bf16 %v4143, %v4142
        %v4373 = vpack.c.bf16 %v4145, %v4144
        %v4374 = vpack.c.bf16 %v4147, %v4146
        %v4375 = vpack.c.bf16 %v4149, %v4148
        %v4376 = vpack.c.bf16 %v4151, %v4150
        %v4377 = vpack.c.bf16 %v4153, %v4152
        %v4378 = vpack.c.bf16 %v4155, %v4154
        %v4379 = vpack.c.bf16 %v4157, %v4156
        %v4380 = vpack.c.bf16 %v4159, %v4158
        %v4381 = vpack.c.bf16 %v4161, %v4160
        %v4382 = vpack.c.bf16 %v4163, %v4162
        %v4383 = vpack.c.bf16 %v4165, %v4164
        %v4384 = vpack.c.bf16 %v4167, %v4166
        %v4385 = vpack.c.bf16 %v4169, %v4168
        %v4386 = vpack.c.bf16 %v4171, %v4170
        %v4387 = vpack.c.bf16 %v4173, %v4172
        %v4388 = vpack.c.bf16 %v4175, %v4174
        %v4389 = vpack.c.bf16 %v4177, %v4176
        %v4390 = vpack.c.bf16 %v4179, %v4178
        %v4391 = vpack.c.bf16 %v4181, %v4180
        %v4392 = vpack.c.bf16 %v4183, %v4182
        %v4393 = vpack.c.bf16 %v4185, %v4184
        %v4394 = vpack.c.bf16 %v4187, %v4186
        %v4395 = vpack.c.bf16 %v4189, %v4188
        %v4396 = vpack.c.bf16 %v4191, %v4190
        %v4397 = vpack.c.bf16 %v4193, %v4192
        %v4398 = vpack.c.bf16 %v4195, %v4194
        %v4399 = vpack.c.bf16 %v4197, %v4196
        %v4400 = vpack.c.bf16 %v4199, %v4198
        %v4401 = vpack.c.bf16 %v4201, %v4200
        %v4402 = vpack.c.bf16 %v4203, %v4202
        %v4403 = vpack.c.bf16 %v4205, %v4204
        %v4404 = vpack.c.bf16 %v4207, %v4206
        %v4405 = vpack.c.bf16 %v4209, %v4208
        %v4406 = vpack.c.bf16 %v4211, %v4210
        %v4407 = vpack.c.bf16 %v4213, %v4212
        %v4408 = vpack.c.bf16 %v4215, %v4214
        %v4409 = vpack.c.bf16 %v4217, %v4216
        %v4410 = vpack.c.bf16 %v4219, %v4218
        %v4411 = vpack.c.bf16 %v4221, %v4220
        %v4412 = vpack.c.bf16 %v4223, %v4222
        %v4413 = vpack.c.bf16 %v4225, %v4224
        %v4414 = vpack.c.bf16 %v4227, %v4226
        %v4415 = vpack.c.bf16 %v4229, %v4228
        %v4416 = vpack.c.bf16 %v4231, %v4230
        %v4417 = vpack.c.bf16 %v4233, %v4232
        %v4418 = vpack.c.bf16 %v4235, %v4234
        %v4419 = vpack.c.bf16 %v4237, %v4236
        %v4420 = vpack.c.bf16 %v4239, %v4238
        %v4421 = vpack.c.bf16 %v4241, %v4240
        %v4422 = vpack.c.bf16 %v4243, %v4242
        %v4423 = vpack.c.bf16 %v4245, %v4244
        %v4424 = vpack.c.bf16 %v4247, %v4246
        %v4425 = vpack.c.bf16 %v4249, %v4248
        %v4426 = vpack.c.bf16 %v4251, %v4250
        %v4427 = vpack.c.bf16 %v4253, %v4252
        %v4428 = vpack.c.bf16 %v4255, %v4254
        %v4429 = vpack.c.bf16 %v4257, %v4256
        %v4430 = vpack.c.bf16 %v4259, %v4258
        %v4431 = vpack.c.bf16 %v4261, %v4260
        %v4432 = vpack.c.bf16 %v4263, %v4262
        %v4433 = vpack.c.bf16 %v4265, %v4264
        %v4434 = vpack.c.bf16 %v4267, %v4266
        %v4435 = vpack.c.bf16 %v4269, %v4268
        %v4436 = vpack.c.bf16 %v4271, %v4270
        %v4437 = vpack.c.bf16 %v4273, %v4272
        %v4438 = vpack.c.bf16 %v4275, %v4274
        %v4439 = vpack.c.bf16 %v4277, %v4276
        %v4440 = vpack.c.bf16 %v4279, %v4278
        %v4441 = vpack.c.bf16 %v4281, %v4280
        %v4442 = vpack.c.bf16 %v4283, %v4282
        %v4443 = vpack.c.bf16 %v4285, %v4284
        %v4444 = vpack.c.bf16 %v4287, %v4286
        %v4445 = vpack.c.bf16 %v4289, %v4288
        %v4446 = vpack.c.bf16 %v4291, %v4290
        %v4447 = vpack.c.bf16 %v4293, %v4292
        %v4448 = vpack.c.bf16 %v4295, %v4294
        %v4449 = vpack.c.bf16 %v4297, %v4296
        %v4450 = vpack.c.bf16 %v4299, %v4298
        %v4451 = vpack.c.bf16 %v4301, %v4300
        %v4452 = vpack.c.bf16 %v4303, %v4302
        %v4453 = vpack.c.bf16 %v4305, %v4304
        %v4454 = vpack.c.bf16 %v4307, %v4306
        %v4455 = vpack.c.bf16 %v4309, %v4308
        %v4456 = vpack.c.bf16 %v4311, %v4310
        %v4457 = vpack.c.bf16 %v4313, %v4312
        %v4458 = vpack.c.bf16 %v4315, %v4314
        %v4459 = vpack.c.bf16 %v4317, %v4316
        %v4460 = vpack.c.bf16 %v4319, %v4318
        %v4461 = vpack.c.bf16 %v4321, %v4320
        %v4462 = vpack.c.bf16 %v4323, %v4322
        %v4463 = vpack.c.bf16 %v4325, %v4324
        %v4464 = vpack.c.bf16 %v4327, %v4326
        %v4465 = vpack.c.bf16 %v4329, %v4328
        %v4466 = vpack.c.bf16 %v4331, %v4330
        %v4467 = vpack.c.bf16 %v4333, %v4332
        %v4468 = vpack.c.bf16 %v4335, %v4334
        %v4469 = vpack.c.bf16 %v4337, %v4336
        %v4470 = vpack.c.bf16 %v4339, %v4338
        %v4471 = vpack.c.bf16 %v4341, %v4340
        %v4472 = vpack.c.bf16 %v4343, %v4342
        %v4473 = vpack.c.bf16 %v4345, %v4344
        %v4474 = vld [vmem:[%s3] sm:$0xf]
        %v4475 = vld [vmem:[%s3 + $0x4] sm:$0xf]
        %v4476 = vld [vmem:[%s3 + $0x8] sm:$0xf]
        %v4477 = vld [vmem:[%s3 + $0xc] sm:$0xf]
        %v4478 = vld [vmem:[%s3 + $0x10] sm:$0xf]
        %v4479 = vld [vmem:[%s3 + $0x14] sm:$0xf]
        %v4480 = vld [vmem:[%s3 + $0x18] sm:$0xf]
        %v4481 = vld [vmem:[%s3 + $0x1c] sm:$0xf]
        %v4482 = vld [vmem:[%s6 + $0x2] sm:$0x1]
        %v4483 = vlaneseq
        %v4484 = vshrl.u32 %v4483, 7
        %v4485 = vsub.s32 0, %v4484
        %v4486 = vrot.slane %v4482, %v4485
        %v4495 = vunpack.c.l.b16 %v4474
        %v4496 = vunpack.c.l.b16 %v4475
        %v4497 = vunpack.c.l.b16 %v4476
        %v4498 = vunpack.c.l.b16 %v4477
        %v4499 = vunpack.c.l.b16 %v4478
        %v4500 = vunpack.c.l.b16 %v4479
        %v4501 = vunpack.c.l.b16 %v4480
        %v4502 = vunpack.c.l.b16 %v4481
        %v4503 = vpack.c.b16 %v4496, %v4495
        %v4504 = vpack.c.b16 %v4498, %v4497
        %v4505 = vpack.c.b16 %v4500, %v4499
        %v4506 = vpack.c.b16 %v4502, %v4501
        %v4512 = vsel %vm2648, %v4346, 0
        %v4515 = vsel %vm2648, %v4347, 0
        %v4518 = vsel %vm2648, %v4348, 0
        %v4521 = vsel %vm2648, %v4349, 0
        %v4524 = vsel %vm2648, %v4350, 0
        %v4527 = vsel %vm2648, %v4351, 0
        %v4530 = vsel %vm2648, %v4352, 0
        %v4533 = vsel %vm2648, %v4353, 0
        %v4536 = vsel %vm2648, %v4354, 0
        %v4539 = vsel %vm2648, %v4355, 0
        %v4542 = vsel %vm2648, %v4356, 0
        %v4545 = vsel %vm2648, %v4357, 0
        %v4548 = vsel %vm2648, %v4358, 0
        %v4551 = vsel %vm2648, %v4359, 0
        %v4554 = vsel %vm2648, %v4360, 0
        %v4557 = vsel %vm2648, %v4361, 0
        %v4560 = vsel %vm2648, %v4362, 0
        %v4563 = vsel %vm2648, %v4363, 0
        %v4566 = vsel %vm2648, %v4364, 0
        %v4569 = vsel %vm2648, %v4365, 0
        %v4572 = vsel %vm2648, %v4366, 0
        %v4575 = vsel %vm2648, %v4367, 0
        %v4578 = vsel %vm2648, %v4368, 0
        %v4581 = vsel %vm2648, %v4369, 0
        %v4584 = vsel %vm2648, %v4370, 0
        %v4587 = vsel %vm2648, %v4371, 0
        %v4590 = vsel %vm2648, %v4372, 0
        %v4593 = vsel %vm2648, %v4373, 0
        %v4596 = vsel %vm2648, %v4374, 0
        %v4599 = vsel %vm2648, %v4375, 0
        %v4602 = vsel %vm2648, %v4376, 0
        %v4605 = vsel %vm2648, %v4377, 0
        %v4608 = vsel %vm2648, %v4378, 0
        %v4611 = vsel %vm2648, %v4379, 0
        %v4614 = vsel %vm2648, %v4380, 0
        %v4617 = vsel %vm2648, %v4381, 0
        %v4620 = vsel %vm2648, %v4382, 0
        %v4623 = vsel %vm2648, %v4383, 0
        %v4626 = vsel %vm2648, %v4384, 0
        %v4629 = vsel %vm2648, %v4385, 0
        %v4632 = vsel %vm2648, %v4386, 0
        %v4635 = vsel %vm2648, %v4387, 0
        %v4638 = vsel %vm2648, %v4388, 0
        %v4641 = vsel %vm2648, %v4389, 0
        %v4644 = vsel %vm2648, %v4390, 0
        %v4647 = vsel %vm2648, %v4391, 0
        %v4650 = vsel %vm2648, %v4392, 0
        %v4653 = vsel %vm2648, %v4393, 0
        %v4656 = vsel %vm2648, %v4394, 0
        %v4659 = vsel %vm2648, %v4395, 0
        %v4662 = vsel %vm2648, %v4396, 0
        %v4665 = vsel %vm2648, %v4397, 0
        %v4668 = vsel %vm2648, %v4398, 0
        %v4671 = vsel %vm2648, %v4399, 0
        %v4674 = vsel %vm2648, %v4400, 0
        %v4677 = vsel %vm2648, %v4401, 0
        %v4680 = vsel %vm2648, %v4402, 0
        %v4683 = vsel %vm2648, %v4403, 0
        %v4686 = vsel %vm2648, %v4404, 0
        %v4689 = vsel %vm2648, %v4405, 0
        %v4692 = vsel %vm2648, %v4406, 0
        %v4695 = vsel %vm2648, %v4407, 0
        %v4698 = vsel %vm2648, %v4408, 0
        %v4701 = vsel %vm2648, %v4409, 0
        %v4704 = vsel %vm2648, %v4410, 0
        %v4707 = vsel %vm2648, %v4411, 0
        %v4710 = vsel %vm2648, %v4412, 0
        %v4713 = vsel %vm2648, %v4413, 0
        %v4716 = vsel %vm2648, %v4414, 0
        %v4719 = vsel %vm2648, %v4415, 0
        %v4722 = vsel %vm2648, %v4416, 0
        %v4725 = vsel %vm2648, %v4417, 0
        %v4728 = vsel %vm2648, %v4418, 0
        %v4731 = vsel %vm2648, %v4419, 0
        %v4734 = vsel %vm2648, %v4420, 0
        %v4737 = vsel %vm2648, %v4421, 0
        %v4740 = vsel %vm2648, %v4422, 0
        %v4743 = vsel %vm2648, %v4423, 0
        %v4746 = vsel %vm2648, %v4424, 0
        %v4749 = vsel %vm2648, %v4425, 0
        %v4752 = vsel %vm2648, %v4426, 0
        %v4755 = vsel %vm2648, %v4427, 0
        %v4758 = vsel %vm2648, %v4428, 0
        %v4761 = vsel %vm2648, %v4429, 0
        %v4764 = vsel %vm2648, %v4430, 0
        %v4767 = vsel %vm2648, %v4431, 0
        %v4770 = vsel %vm2648, %v4432, 0
        %v4773 = vsel %vm2648, %v4433, 0
        %v4776 = vsel %vm2648, %v4434, 0
        %v4779 = vsel %vm2648, %v4435, 0
        %v4782 = vsel %vm2648, %v4436, 0
        %v4785 = vsel %vm2648, %v4437, 0
        %v4788 = vsel %vm2648, %v4438, 0
        %v4791 = vsel %vm2648, %v4439, 0
        %v4794 = vsel %vm2648, %v4440, 0
        %v4797 = vsel %vm2648, %v4441, 0
        %v4800 = vsel %vm2648, %v4442, 0
        %v4803 = vsel %vm2648, %v4443, 0
        %v4806 = vsel %vm2648, %v4444, 0
        %v4809 = vsel %vm2648, %v4445, 0
        %v4812 = vsel %vm2648, %v4446, 0
        %v4815 = vsel %vm2648, %v4447, 0
        %v4818 = vsel %vm2648, %v4448, 0
        %v4821 = vsel %vm2648, %v4449, 0
        %v4824 = vsel %vm2648, %v4450, 0
        %v4827 = vsel %vm2648, %v4451, 0
        %v4830 = vsel %vm2648, %v4452, 0
        %v4833 = vsel %vm2648, %v4453, 0
        %v4836 = vsel %vm2648, %v4454, 0
        %v4839 = vsel %vm2648, %v4455, 0
        %v4842 = vsel %vm2648, %v4456, 0
        %v4845 = vsel %vm2648, %v4457, 0
        %v4848 = vsel %vm2648, %v4458, 0
        %v4851 = vsel %vm2648, %v4459, 0
        %v4854 = vsel %vm2648, %v4460, 0
        %v4857 = vsel %vm2648, %v4461, 0
        %v4860 = vsel %vm2648, %v4462, 0
        %v4863 = vsel %vm2648, %v4463, 0
        %v4866 = vsel %vm2648, %v4464, 0
        %v4869 = vsel %vm2648, %v4465, 0
        %v4872 = vsel %vm2648, %v4466, 0
        %v4875 = vsel %vm2648, %v4467, 0
        %v4878 = vsel %vm2648, %v4468, 0
        %v4881 = vsel %vm2648, %v4469, 0
        %v4884 = vsel %vm2648, %v4470, 0
        %v4887 = vsel %vm2648, %v4471, 0
        %v4890 = vsel %vm2648, %v4472, 0
        %v4893 = vsel %vm2648, %v4473, 0
        %4895 = vmatprep.subr.bf16.mxu0 0
        %4896 = vmatpush1.bf16.msra.mxu0 %v4503
        %4897 = vmatprep.subr.bf16.mxu0 0
        %4898 = vmatpush1.bf16.msra.mxu0 %v4504
        %4899 = vmatprep.subr.bf16.mxu0 0
        %4900 = vmatpush1.bf16.msra.mxu0 %v4505
        %4901 = vmatprep.subr.bf16.mxu0 0
        %4902 = vmatpush1.bf16.msra.mxu0 %v4506
        %4903 = vmatprep.subr.bf16.mxu0 0
        %4904 = vmatpush1.bf16.msra.mxu0 0
        %4905 = vmatprep.subr.bf16.mxu0 0
        %4906 = vmatpush1.bf16.msra.mxu0 0
        %4907 = vmatprep.subr.bf16.mxu0 0
        %4908 = vmatpush1.bf16.msra.mxu0 0
        %4909 = vmatprep.subr.bf16.mxu0 0
        %4910 = vmatpush1.bf16.msra.mxu0 0
        %4911 = vmatprep.subr.bf16.mxu0 0
        %4912 = vmatpush1.bf16.msra.mxu0 0
        %4913 = vmatprep.subr.bf16.mxu0 0
        %4914 = vmatpush1.bf16.msra.mxu0 0
        %4915 = vmatprep.subr.bf16.mxu0 0
        %4916 = vmatpush1.bf16.msra.mxu0 0
        %4917 = vmatprep.subr.bf16.mxu0 0
        %4918 = vmatpush1.bf16.msra.mxu0 0
        %4919 = vmatprep.subr.bf16.mxu0 0
        %4920 = vmatpush1.bf16.msra.mxu0 0
        %4921 = vmatprep.subr.bf16.mxu0 0
        %4922 = vmatpush1.bf16.msra.mxu0 0
        %4923 = vmatprep.subr.bf16.mxu0 0
        %4924 = vmatpush1.bf16.msra.mxu0 0
        %4925 = vmatprep.subr.bf16.mxu0 0
        %4926 = vmatpush1.bf16.msra.mxu0 0
        %4927 = vmatprep.mubr.bf16.mxu0 0
        %4928 = vmatmul.mubr.bf16.gmra.mrb[0].mxu0 %v4512
        %v4929 = vpop.f32.mrb[0].mxu0
        %v4930 = vadd.f32 %v4486, %v4929
        %v4931 = vpop.f32.mrb[0].mxu0
        %v4932 = vpop.f32.mrb[0].mxu0
        %v4933 = vadd.f32 %v4486, %v4932
        %v4934 = vpop.f32.mrb[0].mxu0
        %4935 = vmatprep.mubr.bf16.mxu0 0
        %4936 = vmatmul.mubr.bf16.gmra.mrb[0].mxu0 %v4515
        %v4937 = vpop.f32.mrb[0].mxu0
        %v4938 = vadd.f32 %v4486, %v4937
        %v4939 = vpop.f32.mrb[0].mxu0
        %v4940 = vpop.f32.mrb[0].mxu0
        %v4941 = vadd.f32 %v4486, %v4940
        %v4942 = vpop.f32.mrb[0].mxu0
        %4943 = vmatprep.mubr.bf16.mxu0 0
        %4944 = vmatmul.mubr.bf16.gmra.mrb[0].mxu0 %v4518
        %v4945 = vpop.f32.mrb[0].mxu0
        %v4946 = vadd.f32 %v4486, %v4945
        %v4947 = vpop.f32.mrb[0].mxu0
        %v4948 = vpop.f32.mrb[0].mxu0
        %v4949 = vadd.f32 %v4486, %v4948
        %v4950 = vpop.f32.mrb[0].mxu0
        %4951 = vmatprep.mubr.bf16.mxu0 0
        %4952 = vmatmul.mubr.bf16.gmra.mrb[0].mxu0 %v4521
        %v4953 = vpop.f32.mrb[0].mxu0
        %v4954 = vadd.f32 %v4486, %v4953
        %v4955 = vpop.f32.mrb[0].mxu0
        %v4956 = vpop.f32.mrb[0].mxu0
        %v4957 = vadd.f32 %v4486, %v4956
        %v4958 = vpop.f32.mrb[0].mxu0
        %4959 = vmatprep.mubr.bf16.mxu0 0
        %4960 = vmatmul.mubr.bf16.gmra.mrb[0].mxu0 %v4524
        %v4961 = vpop.f32.mrb[0].mxu0
        %v4962 = vadd.f32 %v4486, %v4961
        %v4963 = vpop.f32.mrb[0].mxu0
        %v4964 = vpop.f32.mrb[0].mxu0
        %v4965 = vadd.f32 %v4486, %v4964
        %v4966 = vpop.f32.mrb[0].mxu0
        %4967 = vmatprep.mubr.bf16.mxu0 0
        %4968 = vmatmul.mubr.bf16.gmra.mrb[0].mxu0 %v4527
        %v4969 = vpop.f32.mrb[0].mxu0
        %v4970 = vadd.f32 %v4486, %v4969
        %v4971 = vpop.f32.mrb[0].mxu0
        %v4972 = vpop.f32.mrb[0].mxu0
        %v4973 = vadd.f32 %v4486, %v4972
        %v4974 = vpop.f32.mrb[0].mxu0
        %4975 = vmatprep.mubr.bf16.mxu0 0
        %4976 = vmatmul.mubr.bf16.gmra.mrb[0].mxu0 %v4530
        %v4977 = vpop.f32.mrb[0].mxu0
        %v4978 = vadd.f32 %v4486, %v4977
        %v4979 = vpop.f32.mrb[0].mxu0
        %v4980 = vpop.f32.mrb[0].mxu0
        %v4981 = vadd.f32 %v4486, %v4980
        %v4982 = vpop.f32.mrb[0].mxu0
        %4983 = vmatprep.mubr.bf16.mxu0 0
        %4984 = vmatmul.mubr.bf16.gmra.mrb[0].mxu0 %v4533
        %v4985 = vpop.f32.mrb[0].mxu0
        %v4986 = vadd.f32 %v4486, %v4985
        %v4987 = vpop.f32.mrb[0].mxu0
        %v4988 = vpop.f32.mrb[0].mxu0
        %v4989 = vadd.f32 %v4486, %v4988
        %v4990 = vpop.f32.mrb[0].mxu0
        %4991 = vmatprep.mubr.bf16.mxu0 0
        %4992 = vmatmul.mubr.bf16.gmra.mrb[0].mxu0 %v4536
        %v4993 = vpop.f32.mrb[0].mxu0
        %v4994 = vadd.f32 %v4486, %v4993
        %v4995 = vpop.f32.mrb[0].mxu0
        %v4996 = vpop.f32.mrb[0].mxu0
        %v4997 = vadd.f32 %v4486, %v4996
        %v4998 = vpop.f32.mrb[0].mxu0
        %4999 = vmatprep.mubr.bf16.mxu0 0
        %5000 = vmatmul.mubr.bf16.gmra.mrb[0].mxu0 %v4539
        %v5001 = vpop.f32.mrb[0].mxu0
        %v5002 = vadd.f32 %v4486, %v5001
        %v5003 = vpop.f32.mrb[0].mxu0
        %v5004 = vpop.f32.mrb[0].mxu0
        %v5005 = vadd.f32 %v4486, %v5004
        %v5006 = vpop.f32.mrb[0].mxu0
        %5007 = vmatprep.mubr.bf16.mxu0 0
        %5008 = vmatmul.mubr.bf16.gmra.mrb[0].mxu0 %v4542
        %v5009 = vpop.f32.mrb[0].mxu0
        %v5010 = vadd.f32 %v4486, %v5009
        %v5011 = vpop.f32.mrb[0].mxu0
        %v5012 = vpop.f32.mrb[0].mxu0
        %v5013 = vadd.f32 %v4486, %v5012
        %v5014 = vpop.f32.mrb[0].mxu0
        %5015 = vmatprep.mubr.bf16.mxu0 0
        %5016 = vmatmul.mubr.bf16.gmra.mrb[0].mxu0 %v4545
        %v5017 = vpop.f32.mrb[0].mxu0
        %v5018 = vadd.f32 %v4486, %v5017
        %v5019 = vpop.f32.mrb[0].mxu0
        %v5020 = vpop.f32.mrb[0].mxu0
        %v5021 = vadd.f32 %v4486, %v5020
        %v5022 = vpop.f32.mrb[0].mxu0
        %5023 = vmatprep.mubr.bf16.mxu0 0
        %5024 = vmatmul.mubr.bf16.gmra.mrb[0].mxu0 %v4548
        %v5025 = vpop.f32.mrb[0].mxu0
        %v5026 = vadd.f32 %v4486, %v5025
        %v5027 = vpop.f32.mrb[0].mxu0
        %v5028 = vpop.f32.mrb[0].mxu0
        %v5029 = vadd.f32 %v4486, %v5028
        %v5030 = vpop.f32.mrb[0].mxu0
        %5031 = vmatprep.mubr.bf16.mxu0 0
        %5032 = vmatmul.mubr.bf16.gmra.mrb[0].mxu0 %v4551
        %v5033 = vpop.f32.mrb[0].mxu0
        %v5034 = vadd.f32 %v4486, %v5033
        %v5035 = vpop.f32.mrb[0].mxu0
        %v5036 = vpop.f32.mrb[0].mxu0
        %v5037 = vadd.f32 %v4486, %v5036
        %v5038 = vpop.f32.mrb[0].mxu0
        %5039 = vmatprep.mubr.bf16.mxu0 0
        %5040 = vmatmul.mubr.bf16.gmra.mrb[0].mxu0 %v4554
        %v5041 = vpop.f32.mrb[0].mxu0
        %v5042 = vadd.f32 %v4486, %v5041
        %v5043 = vpop.f32.mrb[0].mxu0
        %v5044 = vpop.f32.mrb[0].mxu0
        %v5045 = vadd.f32 %v4486, %v5044
        %v5046 = vpop.f32.mrb[0].mxu0
        %5047 = vmatprep.mubr.bf16.mxu0 0
        %5048 = vmatmul.mubr.bf16.gmra.mrb[0].mxu0 %v4557
        %v5049 = vpop.f32.mrb[0].mxu0
        %v5050 = vadd.f32 %v4486, %v5049
        %v5051 = vpop.f32.mrb[0].mxu0
        %v5052 = vpop.f32.mrb[0].mxu0
        %v5053 = vadd.f32 %v4486, %v5052
        %v5054 = vpop.f32.mrb[0].mxu0
        %5055 = vmatprep.mubr.bf16.mxu0 0
        %5056 = vmatmul.mubr.bf16.gmra.mrb[0].mxu0 %v4560
        %v5057 = vpop.f32.mrb[0].mxu0
        %v5058 = vadd.f32 %v4486, %v5057
        %v5059 = vpop.f32.mrb[0].mxu0
        %v5060 = vpop.f32.mrb[0].mxu0
        %v5061 = vadd.f32 %v4486, %v5060
        %v5062 = vpop.f32.mrb[0].mxu0
        %5063 = vmatprep.mubr.bf16.mxu0 0
        %5064 = vmatmul.mubr.bf16.gmra.mrb[0].mxu0 %v4563
        %v5065 = vpop.f32.mrb[0].mxu0
        %v5066 = vadd.f32 %v4486, %v5065
        %v5067 = vpop.f32.mrb[0].mxu0
        %v5068 = vpop.f32.mrb[0].mxu0
        %v5069 = vadd.f32 %v4486, %v5068
        %v5070 = vpop.f32.mrb[0].mxu0
        %5071 = vmatprep.mubr.bf16.mxu0 0
        %5072 = vmatmul.mubr.bf16.gmra.mrb[0].mxu0 %v4566
        %v5073 = vpop.f32.mrb[0].mxu0
        %v5074 = vadd.f32 %v4486, %v5073
        %v5075 = vpop.f32.mrb[0].mxu0
        %v5076 = vpop.f32.mrb[0].mxu0
        %v5077 = vadd.f32 %v4486, %v5076
        %v5078 = vpop.f32.mrb[0].mxu0
        %5079 = vmatprep.mubr.bf16.mxu0 0
        %5080 = vmatmul.mubr.bf16.gmra.mrb[0].mxu0 %v4569
        %v5081 = vpop.f32.mrb[0].mxu0
        %v5082 = vadd.f32 %v4486, %v5081
        %v5083 = vpop.f32.mrb[0].mxu0
        %v5084 = vpop.f32.mrb[0].mxu0
        %v5085 = vadd.f32 %v4486, %v5084
        %v5086 = vpop.f32.mrb[0].mxu0
        %5087 = vmatprep.mubr.bf16.mxu0 0
        %5088 = vmatmul.mubr.bf16.gmra.mrb[0].mxu0 %v4572
        %v5089 = vpop.f32.mrb[0].mxu0
        %v5090 = vadd.f32 %v4486, %v5089
        %v5091 = vpop.f32.mrb[0].mxu0
        %v5092 = vpop.f32.mrb[0].mxu0
        %v5093 = vadd.f32 %v4486, %v5092
        %v5094 = vpop.f32.mrb[0].mxu0
        %5095 = vmatprep.mubr.bf16.mxu0 0
        %5096 = vmatmul.mubr.bf16.gmra.mrb[0].mxu0 %v4575
        %v5097 = vpop.f32.mrb[0].mxu0
        %v5098 = vadd.f32 %v4486, %v5097
        %v5099 = vpop.f32.mrb[0].mxu0
        %v5100 = vpop.f32.mrb[0].mxu0
        %v5101 = vadd.f32 %v4486, %v5100
        %v5102 = vpop.f32.mrb[0].mxu0
        %5103 = vmatprep.mubr.bf16.mxu0 0
        %5104 = vmatmul.mubr.bf16.gmra.mrb[0].mxu0 %v4578
        %v5105 = vpop.f32.mrb[0].mxu0
        %v5106 = vadd.f32 %v4486, %v5105
        %v5107 = vpop.f32.mrb[0].mxu0
        %v5108 = vpop.f32.mrb[0].mxu0
        %v5109 = vadd.f32 %v4486, %v5108
        %v5110 = vpop.f32.mrb[0].mxu0
        %5111 = vmatprep.mubr.bf16.mxu0 0
        %5112 = vmatmul.mubr.bf16.gmra.mrb[0].mxu0 %v4581
        %v5113 = vpop.f32.mrb[0].mxu0
        %v5114 = vadd.f32 %v4486, %v5113
        %v5115 = vpop.f32.mrb[0].mxu0
        %v5116 = vpop.f32.mrb[0].mxu0
        %v5117 = vadd.f32 %v4486, %v5116
        %v5118 = vpop.f32.mrb[0].mxu0
        %5119 = vmatprep.mubr.bf16.mxu0 0
        %5120 = vmatmul.mubr.bf16.gmra.mrb[0].mxu0 %v4584
        %v5121 = vpop.f32.mrb[0].mxu0
        %v5122 = vadd.f32 %v4486, %v5121
        %v5123 = vpop.f32.mrb[0].mxu0
        %v5124 = vpop.f32.mrb[0].mxu0
        %v5125 = vadd.f32 %v4486, %v5124
        %v5126 = vpop.f32.mrb[0].mxu0
        %5127 = vmatprep.mubr.bf16.mxu0 0
        %5128 = vmatmul.mubr.bf16.gmra.mrb[0].mxu0 %v4587
        %v5129 = vpop.f32.mrb[0].mxu0
        %v5130 = vadd.f32 %v4486, %v5129
        %v5131 = vpop.f32.mrb[0].mxu0
        %v5132 = vpop.f32.mrb[0].mxu0
        %v5133 = vadd.f32 %v4486, %v5132
        %v5134 = vpop.f32.mrb[0].mxu0
        %5135 = vmatprep.mubr.bf16.mxu0 0
        %5136 = vmatmul.mubr.bf16.gmra.mrb[0].mxu0 %v4590
        %v5137 = vpop.f32.mrb[0].mxu0
        %v5138 = vadd.f32 %v4486, %v5137
        %v5139 = vpop.f32.mrb[0].mxu0
        %v5140 = vpop.f32.mrb[0].mxu0
        %v5141 = vadd.f32 %v4486, %v5140
        %v5142 = vpop.f32.mrb[0].mxu0
        %5143 = vmatprep.mubr.bf16.mxu0 0
        %5144 = vmatmul.mubr.bf16.gmra.mrb[0].mxu0 %v4593
        %v5145 = vpop.f32.mrb[0].mxu0
        %v5146 = vadd.f32 %v4486, %v5145
        %v5147 = vpop.f32.mrb[0].mxu0
        %v5148 = vpop.f32.mrb[0].mxu0
        %v5149 = vadd.f32 %v4486, %v5148
        %v5150 = vpop.f32.mrb[0].mxu0
        %5151 = vmatprep.mubr.bf16.mxu0 0
        %5152 = vmatmul.mubr.bf16.gmra.mrb[0].mxu0 %v4596
        %v5153 = vpop.f32.mrb[0].mxu0
        %v5154 = vadd.f32 %v4486, %v5153
        %v5155 = vpop.f32.mrb[0].mxu0
        %v5156 = vpop.f32.mrb[0].mxu0
        %v5157 = vadd.f32 %v4486, %v5156
        %v5158 = vpop.f32.mrb[0].mxu0
        %5159 = vmatprep.mubr.bf16.mxu0 0
        %5160 = vmatmul.mubr.bf16.gmra.mrb[0].mxu0 %v4599
        %v5161 = vpop.f32.mrb[0].mxu0
        %v5162 = vadd.f32 %v4486, %v5161
        %v5163 = vpop.f32.mrb[0].mxu0
        %v5164 = vpop.f32.mrb[0].mxu0
        %v5165 = vadd.f32 %v4486, %v5164
        %v5166 = vpop.f32.mrb[0].mxu0
        %5167 = vmatprep.mubr.bf16.mxu0 0
        %5168 = vmatmul.mubr.bf16.gmra.mrb[0].mxu0 %v4602
        %v5169 = vpop.f32.mrb[0].mxu0
        %v5170 = vadd.f32 %v4486, %v5169
        %v5171 = vpop.f32.mrb[0].mxu0
        %v5172 = vpop.f32.mrb[0].mxu0
        %v5173 = vadd.f32 %v4486, %v5172
        %v5174 = vpop.f32.mrb[0].mxu0
        %5175 = vmatprep.mubr.bf16.mxu0 0
        %5176 = vmatmul.mubr.bf16.gmra.mrb[0].mxu0 %v4605
        %v5177 = vpop.f32.mrb[0].mxu0
        %v5178 = vadd.f32 %v4486, %v5177
        %v5179 = vpop.f32.mrb[0].mxu0
        %v5180 = vpop.f32.mrb[0].mxu0
        %v5181 = vadd.f32 %v4486, %v5180
        %v5182 = vpop.f32.mrb[0].mxu0
        %5183 = vmatprep.mubr.bf16.mxu0 0
        %5184 = vmatmul.mubr.bf16.gmra.mrb[0].mxu0 %v4608
        %v5185 = vpop.f32.mrb[0].mxu0
        %v5186 = vadd.f32 %v4486, %v5185
        %v5187 = vpop.f32.mrb[0].mxu0
        %v5188 = vpop.f32.mrb[0].mxu0
        %v5189 = vadd.f32 %v4486, %v5188
        %v5190 = vpop.f32.mrb[0].mxu0
        %5191 = vmatprep.mubr.bf16.mxu0 0
        %5192 = vmatmul.mubr.bf16.gmra.mrb[0].mxu0 %v4611
        %v5193 = vpop.f32.mrb[0].mxu0
        %v5194 = vadd.f32 %v4486, %v5193
        %v5195 = vpop.f32.mrb[0].mxu0
        %v5196 = vpop.f32.mrb[0].mxu0
        %v5197 = vadd.f32 %v4486, %v5196
        %v5198 = vpop.f32.mrb[0].mxu0
        %5199 = vmatprep.mubr.bf16.mxu0 0
        %5200 = vmatmul.mubr.bf16.gmra.mrb[0].mxu0 %v4614
        %v5201 = vpop.f32.mrb[0].mxu0
        %v5202 = vadd.f32 %v4486, %v5201
        %v5203 = vpop.f32.mrb[0].mxu0
        %v5204 = vpop.f32.mrb[0].mxu0
        %v5205 = vadd.f32 %v4486, %v5204
        %v5206 = vpop.f32.mrb[0].mxu0
        %5207 = vmatprep.mubr.bf16.mxu0 0
        %5208 = vmatmul.mubr.bf16.gmra.mrb[0].mxu0 %v4617
        %v5209 = vpop.f32.mrb[0].mxu0
        %v5210 = vadd.f32 %v4486, %v5209
        %v5211 = vpop.f32.mrb[0].mxu0
        %v5212 = vpop.f32.mrb[0].mxu0
        %v5213 = vadd.f32 %v4486, %v5212
        %v5214 = vpop.f32.mrb[0].mxu0
        %5215 = vmatprep.mubr.bf16.mxu0 0
        %5216 = vmatmul.mubr.bf16.gmra.mrb[0].mxu0 %v4620
        %v5217 = vpop.f32.mrb[0].mxu0
        %v5218 = vadd.f32 %v4486, %v5217
        %v5219 = vpop.f32.mrb[0].mxu0
        %v5220 = vpop.f32.mrb[0].mxu0
        %v5221 = vadd.f32 %v4486, %v5220
        %v5222 = vpop.f32.mrb[0].mxu0
        %5223 = vmatprep.mubr.bf16.mxu0 0
        %5224 = vmatmul.mubr.bf16.gmra.mrb[0].mxu0 %v4623
        %v5225 = vpop.f32.mrb[0].mxu0
        %v5226 = vadd.f32 %v4486, %v5225
        %v5227 = vpop.f32.mrb[0].mxu0
        %v5228 = vpop.f32.mrb[0].mxu0
        %v5229 = vadd.f32 %v4486, %v5228
        %v5230 = vpop.f32.mrb[0].mxu0
        %5231 = vmatprep.mubr.bf16.mxu0 0
        %5232 = vmatmul.mubr.bf16.gmra.mrb[0].mxu0 %v4626
        %v5233 = vpop.f32.mrb[0].mxu0
        %v5234 = vadd.f32 %v4486, %v5233
        %v5235 = vpop.f32.mrb[0].mxu0
        %v5236 = vpop.f32.mrb[0].mxu0
        %v5237 = vadd.f32 %v4486, %v5236
        %v5238 = vpop.f32.mrb[0].mxu0
        %5239 = vmatprep.mubr.bf16.mxu0 0
        %5240 = vmatmul.mubr.bf16.gmra.mrb[0].mxu0 %v4629
        %v5241 = vpop.f32.mrb[0].mxu0
        %v5242 = vadd.f32 %v4486, %v5241
        %v5243 = vpop.f32.mrb[0].mxu0
        %v5244 = vpop.f32.mrb[0].mxu0
        %v5245 = vadd.f32 %v4486, %v5244
        %v5246 = vpop.f32.mrb[0].mxu0
        %5247 = vmatprep.mubr.bf16.mxu0 0
        %5248 = vmatmul.mubr.bf16.gmra.mrb[0].mxu0 %v4632
        %v5249 = vpop.f32.mrb[0].mxu0
        %v5250 = vadd.f32 %v4486, %v5249
        %v5251 = vpop.f32.mrb[0].mxu0
        %v5252 = vpop.f32.mrb[0].mxu0
        %v5253 = vadd.f32 %v4486, %v5252
        %v5254 = vpop.f32.mrb[0].mxu0
        %5255 = vmatprep.mubr.bf16.mxu0 0
        %5256 = vmatmul.mubr.bf16.gmra.mrb[0].mxu0 %v4635
        %v5257 = vpop.f32.mrb[0].mxu0
        %v5258 = vadd.f32 %v4486, %v5257
        %v5259 = vpop.f32.mrb[0].mxu0
        %v5260 = vpop.f32.mrb[0].mxu0
        %v5261 = vadd.f32 %v4486, %v5260
        %v5262 = vpop.f32.mrb[0].mxu0
        %5263 = vmatprep.mubr.bf16.mxu0 0
        %5264 = vmatmul.mubr.bf16.gmra.mrb[0].mxu0 %v4638
        %v5265 = vpop.f32.mrb[0].mxu0
        %v5266 = vadd.f32 %v4486, %v5265
        %v5267 = vpop.f32.mrb[0].mxu0
        %v5268 = vpop.f32.mrb[0].mxu0
        %v5269 = vadd.f32 %v4486, %v5268
        %v5270 = vpop.f32.mrb[0].mxu0
        %5271 = vmatprep.mubr.bf16.mxu0 0
        %5272 = vmatmul.mubr.bf16.gmra.mrb[0].mxu0 %v4641
        %v5273 = vpop.f32.mrb[0].mxu0
        %v5274 = vadd.f32 %v4486, %v5273
        %v5275 = vpop.f32.mrb[0].mxu0
        %v5276 = vpop.f32.mrb[0].mxu0
        %v5277 = vadd.f32 %v4486, %v5276
        %v5278 = vpop.f32.mrb[0].mxu0
        %5279 = vmatprep.mubr.bf16.mxu0 0
        %5280 = vmatmul.mubr.bf16.gmra.mrb[0].mxu0 %v4644
        %v5281 = vpop.f32.mrb[0].mxu0
        %v5282 = vadd.f32 %v4486, %v5281
        %v5283 = vpop.f32.mrb[0].mxu0
        %v5284 = vpop.f32.mrb[0].mxu0
        %v5285 = vadd.f32 %v4486, %v5284
        %v5286 = vpop.f32.mrb[0].mxu0
        %5287 = vmatprep.mubr.bf16.mxu0 0
        %5288 = vmatmul.mubr.bf16.gmra.mrb[0].mxu0 %v4647
        %v5289 = vpop.f32.mrb[0].mxu0
        %v5290 = vadd.f32 %v4486, %v5289
        %v5291 = vpop.f32.mrb[0].mxu0
        %v5292 = vpop.f32.mrb[0].mxu0
        %v5293 = vadd.f32 %v4486, %v5292
        %v5294 = vpop.f32.mrb[0].mxu0
        %5295 = vmatprep.mubr.bf16.mxu0 0
        %5296 = vmatmul.mubr.bf16.gmra.mrb[0].mxu0 %v4650
        %v5297 = vpop.f32.mrb[0].mxu0
        %v5298 = vadd.f32 %v4486, %v5297
        %v5299 = vpop.f32.mrb[0].mxu0
        %v5300 = vpop.f32.mrb[0].mxu0
        %v5301 = vadd.f32 %v4486, %v5300
        %v5302 = vpop.f32.mrb[0].mxu0
        %5303 = vmatprep.mubr.bf16.mxu0 0
        %5304 = vmatmul.mubr.bf16.gmra.mrb[0].mxu0 %v4653
        %v5305 = vpop.f32.mrb[0].mxu0
        %v5306 = vadd.f32 %v4486, %v5305
        %v5307 = vpop.f32.mrb[0].mxu0
        %v5308 = vpop.f32.mrb[0].mxu0
        %v5309 = vadd.f32 %v4486, %v5308
        %v5310 = vpop.f32.mrb[0].mxu0
        %5311 = vmatprep.mubr.bf16.mxu0 0
        %5312 = vmatmul.mubr.bf16.gmra.mrb[0].mxu0 %v4656
        %v5313 = vpop.f32.mrb[0].mxu0
        %v5314 = vadd.f32 %v4486, %v5313
        %v5315 = vpop.f32.mrb[0].mxu0
        %v5316 = vpop.f32.mrb[0].mxu0
        %v5317 = vadd.f32 %v4486, %v5316
        %v5318 = vpop.f32.mrb[0].mxu0
        %5319 = vmatprep.mubr.bf16.mxu0 0
        %5320 = vmatmul.mubr.bf16.gmra.mrb[0].mxu0 %v4659
        %v5321 = vpop.f32.mrb[0].mxu0
        %v5322 = vadd.f32 %v4486, %v5321
        %v5323 = vpop.f32.mrb[0].mxu0
        %v5324 = vpop.f32.mrb[0].mxu0
        %v5325 = vadd.f32 %v4486, %v5324
        %v5326 = vpop.f32.mrb[0].mxu0
        %5327 = vmatprep.mubr.bf16.mxu0 0
        %5328 = vmatmul.mubr.bf16.gmra.mrb[0].mxu0 %v4662
        %v5329 = vpop.f32.mrb[0].mxu0
        %v5330 = vadd.f32 %v4486, %v5329
        %v5331 = vpop.f32.mrb[0].mxu0
        %v5332 = vpop.f32.mrb[0].mxu0
        %v5333 = vadd.f32 %v4486, %v5332
        %v5334 = vpop.f32.mrb[0].mxu0
        %5335 = vmatprep.mubr.bf16.mxu0 0
        %5336 = vmatmul.mubr.bf16.gmra.mrb[0].mxu0 %v4665
        %v5337 = vpop.f32.mrb[0].mxu0
        %v5338 = vadd.f32 %v4486, %v5337
        %v5339 = vpop.f32.mrb[0].mxu0
        %v5340 = vpop.f32.mrb[0].mxu0
        %v5341 = vadd.f32 %v4486, %v5340
        %v5342 = vpop.f32.mrb[0].mxu0
        %5343 = vmatprep.mubr.bf16.mxu0 0
        %5344 = vmatmul.mubr.bf16.gmra.mrb[0].mxu0 %v4668
        %v5345 = vpop.f32.mrb[0].mxu0
        %v5346 = vadd.f32 %v4486, %v5345
        %v5347 = vpop.f32.mrb[0].mxu0
        %v5348 = vpop.f32.mrb[0].mxu0
        %v5349 = vadd.f32 %v4486, %v5348
        %v5350 = vpop.f32.mrb[0].mxu0
        %5351 = vmatprep.mubr.bf16.mxu0 0
        %5352 = vmatmul.mubr.bf16.gmra.mrb[0].mxu0 %v4671
        %v5353 = vpop.f32.mrb[0].mxu0
        %v5354 = vadd.f32 %v4486, %v5353
        %v5355 = vpop.f32.mrb[0].mxu0
        %v5356 = vpop.f32.mrb[0].mxu0
        %v5357 = vadd.f32 %v4486, %v5356
        %v5358 = vpop.f32.mrb[0].mxu0
        %5359 = vmatprep.mubr.bf16.mxu0 0
        %5360 = vmatmul.mubr.bf16.gmra.mrb[0].mxu0 %v4674
        %v5361 = vpop.f32.mrb[0].mxu0
        %v5362 = vadd.f32 %v4486, %v5361
        %v5363 = vpop.f32.mrb[0].mxu0
        %v5364 = vpop.f32.mrb[0].mxu0
        %v5365 = vadd.f32 %v4486, %v5364
        %v5366 = vpop.f32.mrb[0].mxu0
        %5367 = vmatprep.mubr.bf16.mxu0 0
        %5368 = vmatmul.mubr.bf16.gmra.mrb[0].mxu0 %v4677
        %v5369 = vpop.f32.mrb[0].mxu0
        %v5370 = vadd.f32 %v4486, %v5369
        %v5371 = vpop.f32.mrb[0].mxu0
        %v5372 = vpop.f32.mrb[0].mxu0
        %v5373 = vadd.f32 %v4486, %v5372
        %v5374 = vpop.f32.mrb[0].mxu0
        %5375 = vmatprep.mubr.bf16.mxu0 0
        %5376 = vmatmul.mubr.bf16.gmra.mrb[0].mxu0 %v4680
        %v5377 = vpop.f32.mrb[0].mxu0
        %v5378 = vadd.f32 %v4486, %v5377
        %v5379 = vpop.f32.mrb[0].mxu0
        %v5380 = vpop.f32.mrb[0].mxu0
        %v5381 = vadd.f32 %v4486, %v5380
        %v5382 = vpop.f32.mrb[0].mxu0
        %5383 = vmatprep.mubr.bf16.mxu0 0
        %5384 = vmatmul.mubr.bf16.gmra.mrb[0].mxu0 %v4683
        %v5385 = vpop.f32.mrb[0].mxu0
        %v5386 = vadd.f32 %v4486, %v5385
        %v5387 = vpop.f32.mrb[0].mxu0
        %v5388 = vpop.f32.mrb[0].mxu0
        %v5389 = vadd.f32 %v4486, %v5388
        %v5390 = vpop.f32.mrb[0].mxu0
        %5391 = vmatprep.mubr.bf16.mxu0 0
        %5392 = vmatmul.mubr.bf16.gmra.mrb[0].mxu0 %v4686
        %v5393 = vpop.f32.mrb[0].mxu0
        %v5394 = vadd.f32 %v4486, %v5393
        %v5395 = vpop.f32.mrb[0].mxu0
        %v5396 = vpop.f32.mrb[0].mxu0
        %v5397 = vadd.f32 %v4486, %v5396
        %v5398 = vpop.f32.mrb[0].mxu0
        %5399 = vmatprep.mubr.bf16.mxu0 0
        %5400 = vmatmul.mubr.bf16.gmra.mrb[0].mxu0 %v4689
        %v5401 = vpop.f32.mrb[0].mxu0
        %v5402 = vadd.f32 %v4486, %v5401
        %v5403 = vpop.f32.mrb[0].mxu0
        %v5404 = vpop.f32.mrb[0].mxu0
        %v5405 = vadd.f32 %v4486, %v5404
        %v5406 = vpop.f32.mrb[0].mxu0
        %5407 = vmatprep.mubr.bf16.mxu0 0
        %5408 = vmatmul.mubr.bf16.gmra.mrb[0].mxu0 %v4692
        %v5409 = vpop.f32.mrb[0].mxu0
        %v5410 = vadd.f32 %v4486, %v5409
        %v5411 = vpop.f32.mrb[0].mxu0
        %v5412 = vpop.f32.mrb[0].mxu0
        %v5413 = vadd.f32 %v4486, %v5412
        %v5414 = vpop.f32.mrb[0].mxu0
        %5415 = vmatprep.mubr.bf16.mxu0 0
        %5416 = vmatmul.mubr.bf16.gmra.mrb[0].mxu0 %v4695
        %v5417 = vpop.f32.mrb[0].mxu0
        %v5418 = vadd.f32 %v4486, %v5417
        %v5419 = vpop.f32.mrb[0].mxu0
        %v5420 = vpop.f32.mrb[0].mxu0
        %v5421 = vadd.f32 %v4486, %v5420
        %v5422 = vpop.f32.mrb[0].mxu0
        %5423 = vmatprep.mubr.bf16.mxu0 0
        %5424 = vmatmul.mubr.bf16.gmra.mrb[0].mxu0 %v4698
        %v5425 = vpop.f32.mrb[0].mxu0
        %v5426 = vadd.f32 %v4486, %v5425
        %v5427 = vpop.f32.mrb[0].mxu0
        %v5428 = vpop.f32.mrb[0].mxu0
        %v5429 = vadd.f32 %v4486, %v5428
        %v5430 = vpop.f32.mrb[0].mxu0
        %5431 = vmatprep.mubr.bf16.mxu0 0
        %5432 = vmatmul.mubr.bf16.gmra.mrb[0].mxu0 %v4701
        %v5433 = vpop.f32.mrb[0].mxu0
        %v5434 = vadd.f32 %v4486, %v5433
        %v5435 = vpop.f32.mrb[0].mxu0
        %v5436 = vpop.f32.mrb[0].mxu0
        %v5437 = vadd.f32 %v4486, %v5436
        %v5438 = vpop.f32.mrb[0].mxu0
        %5439 = vmatprep.mubr.bf16.mxu0 0
        %5440 = vmatmul.mubr.bf16.gmra.mrb[0].mxu0 %v4704
        %v5441 = vpop.f32.mrb[0].mxu0
        %v5442 = vadd.f32 %v4486, %v5441
        %v5443 = vpop.f32.mrb[0].mxu0
        %v5444 = vpop.f32.mrb[0].mxu0
        %v5445 = vadd.f32 %v4486, %v5444
        %v5446 = vpop.f32.mrb[0].mxu0
        %5447 = vmatprep.mubr.bf16.mxu0 0
        %5448 = vmatmul.mubr.bf16.gmra.mrb[0].mxu0 %v4707
        %v5449 = vpop.f32.mrb[0].mxu0
        %v5450 = vadd.f32 %v4486, %v5449
        %v5451 = vpop.f32.mrb[0].mxu0
        %v5452 = vpop.f32.mrb[0].mxu0
        %v5453 = vadd.f32 %v4486, %v5452
        %v5454 = vpop.f32.mrb[0].mxu0
        %5455 = vmatprep.mubr.bf16.mxu0 0
        %5456 = vmatmul.mubr.bf16.gmra.mrb[0].mxu0 %v4710
        %v5457 = vpop.f32.mrb[0].mxu0
        %v5458 = vadd.f32 %v4486, %v5457
        %v5459 = vpop.f32.mrb[0].mxu0
        %v5460 = vpop.f32.mrb[0].mxu0
        %v5461 = vadd.f32 %v4486, %v5460
        %v5462 = vpop.f32.mrb[0].mxu0
        %5463 = vmatprep.mubr.bf16.mxu0 0
        %5464 = vmatmul.mubr.bf16.gmra.mrb[0].mxu0 %v4713
        %v5465 = vpop.f32.mrb[0].mxu0
        %v5466 = vadd.f32 %v4486, %v5465
        %v5467 = vpop.f32.mrb[0].mxu0
        %v5468 = vpop.f32.mrb[0].mxu0
        %v5469 = vadd.f32 %v4486, %v5468
        %v5470 = vpop.f32.mrb[0].mxu0
        %5471 = vmatprep.mubr.bf16.mxu0 0
        %5472 = vmatmul.mubr.bf16.gmra.mrb[0].mxu0 %v4716
        %v5473 = vpop.f32.mrb[0].mxu0
        %v5474 = vadd.f32 %v4486, %v5473
        %v5475 = vpop.f32.mrb[0].mxu0
        %v5476 = vpop.f32.mrb[0].mxu0
        %v5477 = vadd.f32 %v4486, %v5476
        %v5478 = vpop.f32.mrb[0].mxu0
        %5479 = vmatprep.mubr.bf16.mxu0 0
        %5480 = vmatmul.mubr.bf16.gmra.mrb[0].mxu0 %v4719
        %v5481 = vpop.f32.mrb[0].mxu0
        %v5482 = vadd.f32 %v4486, %v5481
        %v5483 = vpop.f32.mrb[0].mxu0
        %v5484 = vpop.f32.mrb[0].mxu0
        %v5485 = vadd.f32 %v4486, %v5484
        %v5486 = vpop.f32.mrb[0].mxu0
        %5487 = vmatprep.mubr.bf16.mxu0 0
        %5488 = vmatmul.mubr.bf16.gmra.mrb[0].mxu0 %v4722
        %v5489 = vpop.f32.mrb[0].mxu0
        %v5490 = vadd.f32 %v4486, %v5489
        %v5491 = vpop.f32.mrb[0].mxu0
        %v5492 = vpop.f32.mrb[0].mxu0
        %v5493 = vadd.f32 %v4486, %v5492
        %v5494 = vpop.f32.mrb[0].mxu0
        %5495 = vmatprep.mubr.bf16.mxu0 0
        %5496 = vmatmul.mubr.bf16.gmra.mrb[0].mxu0 %v4725
        %v5497 = vpop.f32.mrb[0].mxu0
        %v5498 = vadd.f32 %v4486, %v5497
        %v5499 = vpop.f32.mrb[0].mxu0
        %v5500 = vpop.f32.mrb[0].mxu0
        %v5501 = vadd.f32 %v4486, %v5500
        %v5502 = vpop.f32.mrb[0].mxu0
        %5503 = vmatprep.mubr.bf16.mxu0 0
        %5504 = vmatmul.mubr.bf16.gmra.mrb[0].mxu0 %v4728
        %v5505 = vpop.f32.mrb[0].mxu0
        %v5506 = vadd.f32 %v4486, %v5505
        %v5507 = vpop.f32.mrb[0].mxu0
        %v5508 = vpop.f32.mrb[0].mxu0
        %v5509 = vadd.f32 %v4486, %v5508
        %v5510 = vpop.f32.mrb[0].mxu0
        %5511 = vmatprep.mubr.bf16.mxu0 0
        %5512 = vmatmul.mubr.bf16.gmra.mrb[0].mxu0 %v4731
        %v5513 = vpop.f32.mrb[0].mxu0
        %v5514 = vadd.f32 %v4486, %v5513
        %v5515 = vpop.f32.mrb[0].mxu0
        %v5516 = vpop.f32.mrb[0].mxu0
        %v5517 = vadd.f32 %v4486, %v5516
        %v5518 = vpop.f32.mrb[0].mxu0
        %5519 = vmatprep.mubr.bf16.mxu0 0
        %5520 = vmatmul.mubr.bf16.gmra.mrb[0].mxu0 %v4734
        %v5521 = vpop.f32.mrb[0].mxu0
        %v5522 = vadd.f32 %v4486, %v5521
        %v5523 = vpop.f32.mrb[0].mxu0
        %v5524 = vpop.f32.mrb[0].mxu0
        %v5525 = vadd.f32 %v4486, %v5524
        %v5526 = vpop.f32.mrb[0].mxu0
        %5527 = vmatprep.mubr.bf16.mxu0 0
        %5528 = vmatmul.mubr.bf16.gmra.mrb[0].mxu0 %v4737
        %v5529 = vpop.f32.mrb[0].mxu0
        %v5530 = vadd.f32 %v4486, %v5529
        %v5531 = vpop.f32.mrb[0].mxu0
        %v5532 = vpop.f32.mrb[0].mxu0
        %v5533 = vadd.f32 %v4486, %v5532
        %v5534 = vpop.f32.mrb[0].mxu0
        %5535 = vmatprep.mubr.bf16.mxu0 0
        %5536 = vmatmul.mubr.bf16.gmra.mrb[0].mxu0 %v4740
        %v5537 = vpop.f32.mrb[0].mxu0
        %v5538 = vadd.f32 %v4486, %v5537
        %v5539 = vpop.f32.mrb[0].mxu0
        %v5540 = vpop.f32.mrb[0].mxu0
        %v5541 = vadd.f32 %v4486, %v5540
        %v5542 = vpop.f32.mrb[0].mxu0
        %5543 = vmatprep.mubr.bf16.mxu0 0
        %5544 = vmatmul.mubr.bf16.gmra.mrb[0].mxu0 %v4743
        %v5545 = vpop.f32.mrb[0].mxu0
        %v5546 = vadd.f32 %v4486, %v5545
        %v5547 = vpop.f32.mrb[0].mxu0
        %v5548 = vpop.f32.mrb[0].mxu0
        %v5549 = vadd.f32 %v4486, %v5548
        %v5550 = vpop.f32.mrb[0].mxu0
        %5551 = vmatprep.mubr.bf16.mxu0 0
        %5552 = vmatmul.mubr.bf16.gmra.mrb[0].mxu0 %v4746
        %v5553 = vpop.f32.mrb[0].mxu0
        %v5554 = vadd.f32 %v4486, %v5553
        %v5555 = vpop.f32.mrb[0].mxu0
        %v5556 = vpop.f32.mrb[0].mxu0
        %v5557 = vadd.f32 %v4486, %v5556
        %v5558 = vpop.f32.mrb[0].mxu0
        %5559 = vmatprep.mubr.bf16.mxu0 0
        %5560 = vmatmul.mubr.bf16.gmra.mrb[0].mxu0 %v4749
        %v5561 = vpop.f32.mrb[0].mxu0
        %v5562 = vadd.f32 %v4486, %v5561
        %v5563 = vpop.f32.mrb[0].mxu0
        %v5564 = vpop.f32.mrb[0].mxu0
        %v5565 = vadd.f32 %v4486, %v5564
        %v5566 = vpop.f32.mrb[0].mxu0
        %5567 = vmatprep.mubr.bf16.mxu0 0
        %5568 = vmatmul.mubr.bf16.gmra.mrb[0].mxu0 %v4752
        %v5569 = vpop.f32.mrb[0].mxu0
        %v5570 = vadd.f32 %v4486, %v5569
        %v5571 = vpop.f32.mrb[0].mxu0
        %v5572 = vpop.f32.mrb[0].mxu0
        %v5573 = vadd.f32 %v4486, %v5572
        %v5574 = vpop.f32.mrb[0].mxu0
        %5575 = vmatprep.mubr.bf16.mxu0 0
        %5576 = vmatmul.mubr.bf16.gmra.mrb[0].mxu0 %v4755
        %v5577 = vpop.f32.mrb[0].mxu0
        %v5578 = vadd.f32 %v4486, %v5577
        %v5579 = vpop.f32.mrb[0].mxu0
        %v5580 = vpop.f32.mrb[0].mxu0
        %v5581 = vadd.f32 %v4486, %v5580
        %v5582 = vpop.f32.mrb[0].mxu0
        %5583 = vmatprep.mubr.bf16.mxu0 0
        %5584 = vmatmul.mubr.bf16.gmra.mrb[0].mxu0 %v4758
        %v5585 = vpop.f32.mrb[0].mxu0
        %v5586 = vadd.f32 %v4486, %v5585
        %v5587 = vpop.f32.mrb[0].mxu0
        %v5588 = vpop.f32.mrb[0].mxu0
        %v5589 = vadd.f32 %v4486, %v5588
        %v5590 = vpop.f32.mrb[0].mxu0
        %5591 = vmatprep.mubr.bf16.mxu0 0
        %5592 = vmatmul.mubr.bf16.gmra.mrb[0].mxu0 %v4761
        %v5593 = vpop.f32.mrb[0].mxu0
        %v5594 = vadd.f32 %v4486, %v5593
        %v5595 = vpop.f32.mrb[0].mxu0
        %v5596 = vpop.f32.mrb[0].mxu0
        %v5597 = vadd.f32 %v4486, %v5596
        %v5598 = vpop.f32.mrb[0].mxu0
        %5599 = vmatprep.mubr.bf16.mxu0 0
        %5600 = vmatmul.mubr.bf16.gmra.mrb[0].mxu0 %v4764
        %v5601 = vpop.f32.mrb[0].mxu0
        %v5602 = vadd.f32 %v4486, %v5601
        %v5603 = vpop.f32.mrb[0].mxu0
        %v5604 = vpop.f32.mrb[0].mxu0
        %v5605 = vadd.f32 %v4486, %v5604
        %v5606 = vpop.f32.mrb[0].mxu0
        %5607 = vmatprep.mubr.bf16.mxu0 0
        %5608 = vmatmul.mubr.bf16.gmra.mrb[0].mxu0 %v4767
        %v5609 = vpop.f32.mrb[0].mxu0
        %v5610 = vadd.f32 %v4486, %v5609
        %v5611 = vpop.f32.mrb[0].mxu0
        %v5612 = vpop.f32.mrb[0].mxu0
        %v5613 = vadd.f32 %v4486, %v5612
        %v5614 = vpop.f32.mrb[0].mxu0
        %5615 = vmatprep.mubr.bf16.mxu0 0
        %5616 = vmatmul.mubr.bf16.gmra.mrb[0].mxu0 %v4770
        %v5617 = vpop.f32.mrb[0].mxu0
        %v5618 = vadd.f32 %v4486, %v5617
        %v5619 = vpop.f32.mrb[0].mxu0
        %v5620 = vpop.f32.mrb[0].mxu0
        %v5621 = vadd.f32 %v4486, %v5620
        %v5622 = vpop.f32.mrb[0].mxu0
        %5623 = vmatprep.mubr.bf16.mxu0 0
        %5624 = vmatmul.mubr.bf16.gmra.mrb[0].mxu0 %v4773
        %v5625 = vpop.f32.mrb[0].mxu0
        %v5626 = vadd.f32 %v4486, %v5625
        %v5627 = vpop.f32.mrb[0].mxu0
        %v5628 = vpop.f32.mrb[0].mxu0
        %v5629 = vadd.f32 %v4486, %v5628
        %v5630 = vpop.f32.mrb[0].mxu0
        %5631 = vmatprep.mubr.bf16.mxu0 0
        %5632 = vmatmul.mubr.bf16.gmra.mrb[0].mxu0 %v4776
        %v5633 = vpop.f32.mrb[0].mxu0
        %v5634 = vadd.f32 %v4486, %v5633
        %v5635 = vpop.f32.mrb[0].mxu0
        %v5636 = vpop.f32.mrb[0].mxu0
        %v5637 = vadd.f32 %v4486, %v5636
        %v5638 = vpop.f32.mrb[0].mxu0
        %5639 = vmatprep.mubr.bf16.mxu0 0
        %5640 = vmatmul.mubr.bf16.gmra.mrb[0].mxu0 %v4779
        %v5641 = vpop.f32.mrb[0].mxu0
        %v5642 = vadd.f32 %v4486, %v5641
        %v5643 = vpop.f32.mrb[0].mxu0
        %v5644 = vpop.f32.mrb[0].mxu0
        %v5645 = vadd.f32 %v4486, %v5644
        %v5646 = vpop.f32.mrb[0].mxu0
        %5647 = vmatprep.mubr.bf16.mxu0 0
        %5648 = vmatmul.mubr.bf16.gmra.mrb[0].mxu0 %v4782
        %v5649 = vpop.f32.mrb[0].mxu0
        %v5650 = vadd.f32 %v4486, %v5649
        %v5651 = vpop.f32.mrb[0].mxu0
        %v5652 = vpop.f32.mrb[0].mxu0
        %v5653 = vadd.f32 %v4486, %v5652
        %v5654 = vpop.f32.mrb[0].mxu0
        %5655 = vmatprep.mubr.bf16.mxu0 0
        %5656 = vmatmul.mubr.bf16.gmra.mrb[0].mxu0 %v4785
        %v5657 = vpop.f32.mrb[0].mxu0
        %v5658 = vadd.f32 %v4486, %v5657
        %v5659 = vpop.f32.mrb[0].mxu0
        %v5660 = vpop.f32.mrb[0].mxu0
        %v5661 = vadd.f32 %v4486, %v5660
        %v5662 = vpop.f32.mrb[0].mxu0
        %5663 = vmatprep.mubr.bf16.mxu0 0
        %5664 = vmatmul.mubr.bf16.gmra.mrb[0].mxu0 %v4788
        %v5665 = vpop.f32.mrb[0].mxu0
        %v5666 = vadd.f32 %v4486, %v5665
        %v5667 = vpop.f32.mrb[0].mxu0
        %v5668 = vpop.f32.mrb[0].mxu0
        %v5669 = vadd.f32 %v4486, %v5668
        %v5670 = vpop.f32.mrb[0].mxu0
        %5671 = vmatprep.mubr.bf16.mxu0 0
        %5672 = vmatmul.mubr.bf16.gmra.mrb[0].mxu0 %v4791
        %v5673 = vpop.f32.mrb[0].mxu0
        %v5674 = vadd.f32 %v4486, %v5673
        %v5675 = vpop.f32.mrb[0].mxu0
        %v5676 = vpop.f32.mrb[0].mxu0
        %v5677 = vadd.f32 %v4486, %v5676
        %v5678 = vpop.f32.mrb[0].mxu0
        %5679 = vmatprep.mubr.bf16.mxu0 0
        %5680 = vmatmul.mubr.bf16.gmra.mrb[0].mxu0 %v4794
        %v5681 = vpop.f32.mrb[0].mxu0
        %v5682 = vadd.f32 %v4486, %v5681
        %v5683 = vpop.f32.mrb[0].mxu0
        %v5684 = vpop.f32.mrb[0].mxu0
        %v5685 = vadd.f32 %v4486, %v5684
        %v5686 = vpop.f32.mrb[0].mxu0
        %5687 = vmatprep.mubr.bf16.mxu0 0
        %5688 = vmatmul.mubr.bf16.gmra.mrb[0].mxu0 %v4797
        %v5689 = vpop.f32.mrb[0].mxu0
        %v5690 = vadd.f32 %v4486, %v5689
        %v5691 = vpop.f32.mrb[0].mxu0
        %v5692 = vpop.f32.mrb[0].mxu0
        %v5693 = vadd.f32 %v4486, %v5692
        %v5694 = vpop.f32.mrb[0].mxu0
        %5695 = vmatprep.mubr.bf16.mxu0 0
        %5696 = vmatmul.mubr.bf16.gmra.mrb[0].mxu0 %v4800
        %v5697 = vpop.f32.mrb[0].mxu0
        %v5698 = vadd.f32 %v4486, %v5697
        %v5699 = vpop.f32.mrb[0].mxu0
        %v5700 = vpop.f32.mrb[0].mxu0
        %v5701 = vadd.f32 %v4486, %v5700
        %v5702 = vpop.f32.mrb[0].mxu0
        %5703 = vmatprep.mubr.bf16.mxu0 0
        %5704 = vmatmul.mubr.bf16.gmra.mrb[0].mxu0 %v4803
        %v5705 = vpop.f32.mrb[0].mxu0
        %v5706 = vadd.f32 %v4486, %v5705
        %v5707 = vpop.f32.mrb[0].mxu0
        %v5708 = vpop.f32.mrb[0].mxu0
        %v5709 = vadd.f32 %v4486, %v5708
        %v5710 = vpop.f32.mrb[0].mxu0
        %5711 = vmatprep.mubr.bf16.mxu0 0
        %5712 = vmatmul.mubr.bf16.gmra.mrb[0].mxu0 %v4806
        %v5713 = vpop.f32.mrb[0].mxu0
        %v5714 = vadd.f32 %v4486, %v5713
        %v5715 = vpop.f32.mrb[0].mxu0
        %v5716 = vpop.f32.mrb[0].mxu0
        %v5717 = vadd.f32 %v4486, %v5716
        %v5718 = vpop.f32.mrb[0].mxu0
        %5719 = vmatprep.mubr.bf16.mxu0 0
        %5720 = vmatmul.mubr.bf16.gmra.mrb[0].mxu0 %v4809
        %v5721 = vpop.f32.mrb[0].mxu0
        %v5722 = vadd.f32 %v4486, %v5721
        %v5723 = vpop.f32.mrb[0].mxu0
        %v5724 = vpop.f32.mrb[0].mxu0
        %v5725 = vadd.f32 %v4486, %v5724
        %v5726 = vpop.f32.mrb[0].mxu0
        %5727 = vmatprep.mubr.bf16.mxu0 0
        %5728 = vmatmul.mubr.bf16.gmra.mrb[0].mxu0 %v4812
        %v5729 = vpop.f32.mrb[0].mxu0
        %v5730 = vadd.f32 %v4486, %v5729
        %v5731 = vpop.f32.mrb[0].mxu0
        %v5732 = vpop.f32.mrb[0].mxu0
        %v5733 = vadd.f32 %v4486, %v5732
        %v5734 = vpop.f32.mrb[0].mxu0
        %5735 = vmatprep.mubr.bf16.mxu0 0
        %5736 = vmatmul.mubr.bf16.gmra.mrb[0].mxu0 %v4815
        %v5737 = vpop.f32.mrb[0].mxu0
        %v5738 = vadd.f32 %v4486, %v5737
        %v5739 = vpop.f32.mrb[0].mxu0
        %v5740 = vpop.f32.mrb[0].mxu0
        %v5741 = vadd.f32 %v4486, %v5740
        %v5742 = vpop.f32.mrb[0].mxu0
        %5743 = vmatprep.mubr.bf16.mxu0 0
        %5744 = vmatmul.mubr.bf16.gmra.mrb[0].mxu0 %v4818
        %v5745 = vpop.f32.mrb[0].mxu0
        %v5746 = vadd.f32 %v4486, %v5745
        %v5747 = vpop.f32.mrb[0].mxu0
        %v5748 = vpop.f32.mrb[0].mxu0
        %v5749 = vadd.f32 %v4486, %v5748
        %v5750 = vpop.f32.mrb[0].mxu0
        %5751 = vmatprep.mubr.bf16.mxu0 0
        %5752 = vmatmul.mubr.bf16.gmra.mrb[0].mxu0 %v4821
        %v5753 = vpop.f32.mrb[0].mxu0
        %v5754 = vadd.f32 %v4486, %v5753
        %v5755 = vpop.f32.mrb[0].mxu0
        %v5756 = vpop.f32.mrb[0].mxu0
        %v5757 = vadd.f32 %v4486, %v5756
        %v5758 = vpop.f32.mrb[0].mxu0
        %5759 = vmatprep.mubr.bf16.mxu0 0
        %5760 = vmatmul.mubr.bf16.gmra.mrb[0].mxu0 %v4824
        %v5761 = vpop.f32.mrb[0].mxu0
        %v5762 = vadd.f32 %v4486, %v5761
        %v5763 = vpop.f32.mrb[0].mxu0
        %v5764 = vpop.f32.mrb[0].mxu0
        %v5765 = vadd.f32 %v4486, %v5764
        %v5766 = vpop.f32.mrb[0].mxu0
        %5767 = vmatprep.mubr.bf16.mxu0 0
        %5768 = vmatmul.mubr.bf16.gmra.mrb[0].mxu0 %v4827
        %v5769 = vpop.f32.mrb[0].mxu0
        %v5770 = vadd.f32 %v4486, %v5769
        %v5771 = vpop.f32.mrb[0].mxu0
        %v5772 = vpop.f32.mrb[0].mxu0
        %v5773 = vadd.f32 %v4486, %v5772
        %v5774 = vpop.f32.mrb[0].mxu0
        %5775 = vmatprep.mubr.bf16.mxu0 0
        %5776 = vmatmul.mubr.bf16.gmra.mrb[0].mxu0 %v4830
        %v5777 = vpop.f32.mrb[0].mxu0
        %v5778 = vadd.f32 %v4486, %v5777
        %v5779 = vpop.f32.mrb[0].mxu0
        %v5780 = vpop.f32.mrb[0].mxu0
        %v5781 = vadd.f32 %v4486, %v5780
        %v5782 = vpop.f32.mrb[0].mxu0
        %5783 = vmatprep.mubr.bf16.mxu0 0
        %5784 = vmatmul.mubr.bf16.gmra.mrb[0].mxu0 %v4833
        %v5785 = vpop.f32.mrb[0].mxu0
        %v5786 = vadd.f32 %v4486, %v5785
        %v5787 = vpop.f32.mrb[0].mxu0
        %v5788 = vpop.f32.mrb[0].mxu0
        %v5789 = vadd.f32 %v4486, %v5788
        %v5790 = vpop.f32.mrb[0].mxu0
        %5791 = vmatprep.mubr.bf16.mxu0 0
        %5792 = vmatmul.mubr.bf16.gmra.mrb[0].mxu0 %v4836
        %v5793 = vpop.f32.mrb[0].mxu0
        %v5794 = vadd.f32 %v4486, %v5793
        %v5795 = vpop.f32.mrb[0].mxu0
        %v5796 = vpop.f32.mrb[0].mxu0
        %v5797 = vadd.f32 %v4486, %v5796
        %v5798 = vpop.f32.mrb[0].mxu0
        %5799 = vmatprep.mubr.bf16.mxu0 0
        %5800 = vmatmul.mubr.bf16.gmra.mrb[0].mxu0 %v4839
        %v5801 = vpop.f32.mrb[0].mxu0
        %v5802 = vadd.f32 %v4486, %v5801
        %v5803 = vpop.f32.mrb[0].mxu0
        %v5804 = vpop.f32.mrb[0].mxu0
        %v5805 = vadd.f32 %v4486, %v5804
        %v5806 = vpop.f32.mrb[0].mxu0
        %5807 = vmatprep.mubr.bf16.mxu0 0
        %5808 = vmatmul.mubr.bf16.gmra.mrb[0].mxu0 %v4842
        %v5809 = vpop.f32.mrb[0].mxu0
        %v5810 = vadd.f32 %v4486, %v5809
        %v5811 = vpop.f32.mrb[0].mxu0
        %v5812 = vpop.f32.mrb[0].mxu0
        %v5813 = vadd.f32 %v4486, %v5812
        %v5814 = vpop.f32.mrb[0].mxu0
        %5815 = vmatprep.mubr.bf16.mxu0 0
        %5816 = vmatmul.mubr.bf16.gmra.mrb[0].mxu0 %v4845
        %v5817 = vpop.f32.mrb[0].mxu0
        %v5818 = vadd.f32 %v4486, %v5817
        %v5819 = vpop.f32.mrb[0].mxu0
        %v5820 = vpop.f32.mrb[0].mxu0
        %v5821 = vadd.f32 %v4486, %v5820
        %v5822 = vpop.f32.mrb[0].mxu0
        %5823 = vmatprep.mubr.bf16.mxu0 0
        %5824 = vmatmul.mubr.bf16.gmra.mrb[0].mxu0 %v4848
        %v5825 = vpop.f32.mrb[0].mxu0
        %v5826 = vadd.f32 %v4486, %v5825
        %v5827 = vpop.f32.mrb[0].mxu0
        %v5828 = vpop.f32.mrb[0].mxu0
        %v5829 = vadd.f32 %v4486, %v5828
        %v5830 = vpop.f32.mrb[0].mxu0
        %5831 = vmatprep.mubr.bf16.mxu0 0
        %5832 = vmatmul.mubr.bf16.gmra.mrb[0].mxu0 %v4851
        %v5833 = vpop.f32.mrb[0].mxu0
        %v5834 = vadd.f32 %v4486, %v5833
        %v5835 = vpop.f32.mrb[0].mxu0
        %v5836 = vpop.f32.mrb[0].mxu0
        %v5837 = vadd.f32 %v4486, %v5836
        %v5838 = vpop.f32.mrb[0].mxu0
        %5839 = vmatprep.mubr.bf16.mxu0 0
        %5840 = vmatmul.mubr.bf16.gmra.mrb[0].mxu0 %v4854
        %v5841 = vpop.f32.mrb[0].mxu0
        %v5842 = vadd.f32 %v4486, %v5841
        %v5843 = vpop.f32.mrb[0].mxu0
        %v5844 = vpop.f32.mrb[0].mxu0
        %v5845 = vadd.f32 %v4486, %v5844
        %v5846 = vpop.f32.mrb[0].mxu0
        %5847 = vmatprep.mubr.bf16.mxu0 0
        %5848 = vmatmul.mubr.bf16.gmra.mrb[0].mxu0 %v4857
        %v5849 = vpop.f32.mrb[0].mxu0
        %v5850 = vadd.f32 %v4486, %v5849
        %v5851 = vpop.f32.mrb[0].mxu0
        %v5852 = vpop.f32.mrb[0].mxu0
        %v5853 = vadd.f32 %v4486, %v5852
        %v5854 = vpop.f32.mrb[0].mxu0
        %5855 = vmatprep.mubr.bf16.mxu0 0
        %5856 = vmatmul.mubr.bf16.gmra.mrb[0].mxu0 %v4860
        %v5857 = vpop.f32.mrb[0].mxu0
        %v5858 = vadd.f32 %v4486, %v5857
        %v5859 = vpop.f32.mrb[0].mxu0
        %v5860 = vpop.f32.mrb[0].mxu0
        %v5861 = vadd.f32 %v4486, %v5860
        %v5862 = vpop.f32.mrb[0].mxu0
        %5863 = vmatprep.mubr.bf16.mxu0 0
        %5864 = vmatmul.mubr.bf16.gmra.mrb[0].mxu0 %v4863
        %v5865 = vpop.f32.mrb[0].mxu0
        %v5866 = vadd.f32 %v4486, %v5865
        %v5867 = vpop.f32.mrb[0].mxu0
        %v5868 = vpop.f32.mrb[0].mxu0
        %v5869 = vadd.f32 %v4486, %v5868
        %v5870 = vpop.f32.mrb[0].mxu0
        %5871 = vmatprep.mubr.bf16.mxu0 0
        %5872 = vmatmul.mubr.bf16.gmra.mrb[0].mxu0 %v4866
        %v5873 = vpop.f32.mrb[0].mxu0
        %v5874 = vadd.f32 %v4486, %v5873
        %v5875 = vpop.f32.mrb[0].mxu0
        %v5876 = vpop.f32.mrb[0].mxu0
        %v5877 = vadd.f32 %v4486, %v5876
        %v5878 = vpop.f32.mrb[0].mxu0
        %5879 = vmatprep.mubr.bf16.mxu0 0
        %5880 = vmatmul.mubr.bf16.gmra.mrb[0].mxu0 %v4869
        %v5881 = vpop.f32.mrb[0].mxu0
        %v5882 = vadd.f32 %v4486, %v5881
        %v5883 = vpop.f32.mrb[0].mxu0
        %v5884 = vpop.f32.mrb[0].mxu0
        %v5885 = vadd.f32 %v4486, %v5884
        %v5886 = vpop.f32.mrb[0].mxu0
        %5887 = vmatprep.mubr.bf16.mxu0 0
        %5888 = vmatmul.mubr.bf16.gmra.mrb[0].mxu0 %v4872
        %v5889 = vpop.f32.mrb[0].mxu0
        %v5890 = vadd.f32 %v4486, %v5889
        %v5891 = vpop.f32.mrb[0].mxu0
        %v5892 = vpop.f32.mrb[0].mxu0
        %v5893 = vadd.f32 %v4486, %v5892
        %v5894 = vpop.f32.mrb[0].mxu0
        %5895 = vmatprep.mubr.bf16.mxu0 0
        %5896 = vmatmul.mubr.bf16.gmra.mrb[0].mxu0 %v4875
        %v5897 = vpop.f32.mrb[0].mxu0
        %v5898 = vadd.f32 %v4486, %v5897
        %v5899 = vpop.f32.mrb[0].mxu0
        %v5900 = vpop.f32.mrb[0].mxu0
        %v5901 = vadd.f32 %v4486, %v5900
        %v5902 = vpop.f32.mrb[0].mxu0
        %5903 = vmatprep.mubr.bf16.mxu0 0
        %5904 = vmatmul.mubr.bf16.gmra.mrb[0].mxu0 %v4878
        %v5905 = vpop.f32.mrb[0].mxu0
        %v5906 = vadd.f32 %v4486, %v5905
        %v5907 = vpop.f32.mrb[0].mxu0
        %v5908 = vpop.f32.mrb[0].mxu0
        %v5909 = vadd.f32 %v4486, %v5908
        %v5910 = vpop.f32.mrb[0].mxu0
        %5911 = vmatprep.mubr.bf16.mxu0 0
        %5912 = vmatmul.mubr.bf16.gmra.mrb[0].mxu0 %v4881
        %v5913 = vpop.f32.mrb[0].mxu0
        %v5914 = vadd.f32 %v4486, %v5913
        %v5915 = vpop.f32.mrb[0].mxu0
        %v5916 = vpop.f32.mrb[0].mxu0
        %v5917 = vadd.f32 %v4486, %v5916
        %v5918 = vpop.f32.mrb[0].mxu0
        %5919 = vmatprep.mubr.bf16.mxu0 0
        %5920 = vmatmul.mubr.bf16.gmra.mrb[0].mxu0 %v4884
        %v5921 = vpop.f32.mrb[0].mxu0
        %v5922 = vadd.f32 %v4486, %v5921
        %v5923 = vpop.f32.mrb[0].mxu0
        %v5924 = vpop.f32.mrb[0].mxu0
        %v5925 = vadd.f32 %v4486, %v5924
        %v5926 = vpop.f32.mrb[0].mxu0
        %5927 = vmatprep.mubr.bf16.mxu0 0
        %5928 = vmatmul.mubr.bf16.gmra.mrb[0].mxu0 %v4887
        %v5929 = vpop.f32.mrb[0].mxu0
        %v5930 = vadd.f32 %v4486, %v5929
        %v5931 = vpop.f32.mrb[0].mxu0
        %v5932 = vpop.f32.mrb[0].mxu0
        %v5933 = vadd.f32 %v4486, %v5932
        %v5934 = vpop.f32.mrb[0].mxu0
        %5935 = vmatprep.mubr.bf16.mxu0 0
        %5936 = vmatmul.mubr.bf16.gmra.mrb[0].mxu0 %v4890
        %v5937 = vpop.f32.mrb[0].mxu0
        %v5938 = vadd.f32 %v4486, %v5937
        %v5939 = vpop.f32.mrb[0].mxu0
        %v5940 = vpop.f32.mrb[0].mxu0
        %v5941 = vadd.f32 %v4486, %v5940
        %v5942 = vpop.f32.mrb[0].mxu0
        %5943 = vmatprep.mubr.bf16.mxu0 0
        %5944 = vmatmul.mubr.bf16.gmra.mrb[0].mxu0 %v4893
        %v5945 = vpop.f32.mrb[0].mxu0
        %v5946 = vadd.f32 %v4486, %v5945
        %v5947 = vpop.f32.mrb[0].mxu0
        %v5948 = vpop.f32.mrb[0].mxu0
        %v5949 = vadd.f32 %v4486, %v5948
        %v5950 = vpop.f32.mrb[0].mxu0
        %5951 = vdwg.mxu0
        %v5952 = vmax.f32 %v4930, 0.0
        %v5953 = vmax.f32 %v4933, 0.0
        %v5954 = vmax.f32 %v4938, 0.0
        %v5955 = vmax.f32 %v4941, 0.0
        %v5956 = vmax.f32 %v4946, 0.0
        %v5957 = vmax.f32 %v4949, 0.0
        %v5958 = vmax.f32 %v4954, 0.0
        %v5959 = vmax.f32 %v4957, 0.0
        %v5960 = vmax.f32 %v4962, 0.0
        %v5961 = vmax.f32 %v4965, 0.0
        %v5962 = vmax.f32 %v4970, 0.0
        %v5963 = vmax.f32 %v4973, 0.0
        %v5964 = vmax.f32 %v4978, 0.0
        %v5965 = vmax.f32 %v4981, 0.0
        %v5966 = vmax.f32 %v4986, 0.0
        %v5967 = vmax.f32 %v4989, 0.0
        %v5968 = vmax.f32 %v4994, 0.0
        %v5969 = vmax.f32 %v4997, 0.0
        %v5970 = vmax.f32 %v5002, 0.0
        %v5971 = vmax.f32 %v5005, 0.0
        %v5972 = vmax.f32 %v5010, 0.0
        %v5973 = vmax.f32 %v5013, 0.0
        %v5974 = vmax.f32 %v5018, 0.0
        %v5975 = vmax.f32 %v5021, 0.0
        %v5976 = vmax.f32 %v5026, 0.0
        %v5977 = vmax.f32 %v5029, 0.0
        %v5978 = vmax.f32 %v5034, 0.0
        %v5979 = vmax.f32 %v5037, 0.0
        %v5980 = vmax.f32 %v5042, 0.0
        %v5981 = vmax.f32 %v5045, 0.0
        %v5982 = vmax.f32 %v5050, 0.0
        %v5983 = vmax.f32 %v5053, 0.0
        %v5984 = vmax.f32 %v5058, 0.0
        %v5985 = vmax.f32 %v5061, 0.0
        %v5986 = vmax.f32 %v5066, 0.0
        %v5987 = vmax.f32 %v5069, 0.0
        %v5988 = vmax.f32 %v5074, 0.0
        %v5989 = vmax.f32 %v5077, 0.0
        %v5990 = vmax.f32 %v5082, 0.0
        %v5991 = vmax.f32 %v5085, 0.0
        %v5992 = vmax.f32 %v5090, 0.0
        %v5993 = vmax.f32 %v5093, 0.0
        %v5994 = vmax.f32 %v5098, 0.0
        %v5995 = vmax.f32 %v5101, 0.0
        %v5996 = vmax.f32 %v5106, 0.0
        %v5997 = vmax.f32 %v5109, 0.0
        %v5998 = vmax.f32 %v5114, 0.0
        %v5999 = vmax.f32 %v5117, 0.0
        %v6000 = vmax.f32 %v5122, 0.0
        %v6001 = vmax.f32 %v5125, 0.0
        %v6002 = vmax.f32 %v5130, 0.0
        %v6003 = vmax.f32 %v5133, 0.0
        %v6004 = vmax.f32 %v5138, 0.0
        %v6005 = vmax.f32 %v5141, 0.0
        %v6006 = vmax.f32 %v5146, 0.0
        %v6007 = vmax.f32 %v5149, 0.0
        %v6008 = vmax.f32 %v5154, 0.0
        %v6009 = vmax.f32 %v5157, 0.0
        %v6010 = vmax.f32 %v5162, 0.0
        %v6011 = vmax.f32 %v5165, 0.0
        %v6012 = vmax.f32 %v5170, 0.0
        %v6013 = vmax.f32 %v5173, 0.0
        %v6014 = vmax.f32 %v5178, 0.0
        %v6015 = vmax.f32 %v5181, 0.0
        %v6016 = vmax.f32 %v5186, 0.0
        %v6017 = vmax.f32 %v5189, 0.0
        %v6018 = vmax.f32 %v5194, 0.0
        %v6019 = vmax.f32 %v5197, 0.0
        %v6020 = vmax.f32 %v5202, 0.0
        %v6021 = vmax.f32 %v5205, 0.0
        %v6022 = vmax.f32 %v5210, 0.0
        %v6023 = vmax.f32 %v5213, 0.0
        %v6024 = vmax.f32 %v5218, 0.0
        %v6025 = vmax.f32 %v5221, 0.0
        %v6026 = vmax.f32 %v5226, 0.0
        %v6027 = vmax.f32 %v5229, 0.0
        %v6028 = vmax.f32 %v5234, 0.0
        %v6029 = vmax.f32 %v5237, 0.0
        %v6030 = vmax.f32 %v5242, 0.0
        %v6031 = vmax.f32 %v5245, 0.0
        %v6032 = vmax.f32 %v5250, 0.0
        %v6033 = vmax.f32 %v5253, 0.0
        %v6034 = vmax.f32 %v5258, 0.0
        %v6035 = vmax.f32 %v5261, 0.0
        %v6036 = vmax.f32 %v5266, 0.0
        %v6037 = vmax.f32 %v5269, 0.0
        %v6038 = vmax.f32 %v5274, 0.0
        %v6039 = vmax.f32 %v5277, 0.0
        %v6040 = vmax.f32 %v5282, 0.0
        %v6041 = vmax.f32 %v5285, 0.0
        %v6042 = vmax.f32 %v5290, 0.0
        %v6043 = vmax.f32 %v5293, 0.0
        %v6044 = vmax.f32 %v5298, 0.0
        %v6045 = vmax.f32 %v5301, 0.0
        %v6046 = vmax.f32 %v5306, 0.0
        %v6047 = vmax.f32 %v5309, 0.0
        %v6048 = vmax.f32 %v5314, 0.0
        %v6049 = vmax.f32 %v5317, 0.0
        %v6050 = vmax.f32 %v5322, 0.0
        %v6051 = vmax.f32 %v5325, 0.0
        %v6052 = vmax.f32 %v5330, 0.0
        %v6053 = vmax.f32 %v5333, 0.0
        %v6054 = vmax.f32 %v5338, 0.0
        %v6055 = vmax.f32 %v5341, 0.0
        %v6056 = vmax.f32 %v5346, 0.0
        %v6057 = vmax.f32 %v5349, 0.0
        %v6058 = vmax.f32 %v5354, 0.0
        %v6059 = vmax.f32 %v5357, 0.0
        %v6060 = vmax.f32 %v5362, 0.0
        %v6061 = vmax.f32 %v5365, 0.0
        %v6062 = vmax.f32 %v5370, 0.0
        %v6063 = vmax.f32 %v5373, 0.0
        %v6064 = vmax.f32 %v5378, 0.0
        %v6065 = vmax.f32 %v5381, 0.0
        %v6066 = vmax.f32 %v5386, 0.0
        %v6067 = vmax.f32 %v5389, 0.0
        %v6068 = vmax.f32 %v5394, 0.0
        %v6069 = vmax.f32 %v5397, 0.0
        %v6070 = vmax.f32 %v5402, 0.0
        %v6071 = vmax.f32 %v5405, 0.0
        %v6072 = vmax.f32 %v5410, 0.0
        %v6073 = vmax.f32 %v5413, 0.0
        %v6074 = vmax.f32 %v5418, 0.0
        %v6075 = vmax.f32 %v5421, 0.0
        %v6076 = vmax.f32 %v5426, 0.0
        %v6077 = vmax.f32 %v5429, 0.0
        %v6078 = vmax.f32 %v5434, 0.0
        %v6079 = vmax.f32 %v5437, 0.0
        %v6080 = vmax.f32 %v5442, 0.0
        %v6081 = vmax.f32 %v5445, 0.0
        %v6082 = vmax.f32 %v5450, 0.0
        %v6083 = vmax.f32 %v5453, 0.0
        %v6084 = vmax.f32 %v5458, 0.0
        %v6085 = vmax.f32 %v5461, 0.0
        %v6086 = vmax.f32 %v5466, 0.0
        %v6087 = vmax.f32 %v5469, 0.0
        %v6088 = vmax.f32 %v5474, 0.0
        %v6089 = vmax.f32 %v5477, 0.0
        %v6090 = vmax.f32 %v5482, 0.0
        %v6091 = vmax.f32 %v5485, 0.0
        %v6092 = vmax.f32 %v5490, 0.0
        %v6093 = vmax.f32 %v5493, 0.0
        %v6094 = vmax.f32 %v5498, 0.0
        %v6095 = vmax.f32 %v5501, 0.0
        %v6096 = vmax.f32 %v5506, 0.0
        %v6097 = vmax.f32 %v5509, 0.0
        %v6098 = vmax.f32 %v5514, 0.0
        %v6099 = vmax.f32 %v5517, 0.0
        %v6100 = vmax.f32 %v5522, 0.0
        %v6101 = vmax.f32 %v5525, 0.0
        %v6102 = vmax.f32 %v5530, 0.0
        %v6103 = vmax.f32 %v5533, 0.0
        %v6104 = vmax.f32 %v5538, 0.0
        %v6105 = vmax.f32 %v5541, 0.0
        %v6106 = vmax.f32 %v5546, 0.0
        %v6107 = vmax.f32 %v5549, 0.0
        %v6108 = vmax.f32 %v5554, 0.0
        %v6109 = vmax.f32 %v5557, 0.0
        %v6110 = vmax.f32 %v5562, 0.0
        %v6111 = vmax.f32 %v5565, 0.0
        %v6112 = vmax.f32 %v5570, 0.0
        %v6113 = vmax.f32 %v5573, 0.0
        %v6114 = vmax.f32 %v5578, 0.0
        %v6115 = vmax.f32 %v5581, 0.0
        %v6116 = vmax.f32 %v5586, 0.0
        %v6117 = vmax.f32 %v5589, 0.0
        %v6118 = vmax.f32 %v5594, 0.0
        %v6119 = vmax.f32 %v5597, 0.0
        %v6120 = vmax.f32 %v5602, 0.0
        %v6121 = vmax.f32 %v5605, 0.0
        %v6122 = vmax.f32 %v5610, 0.0
        %v6123 = vmax.f32 %v5613, 0.0
        %v6124 = vmax.f32 %v5618, 0.0
        %v6125 = vmax.f32 %v5621, 0.0
        %v6126 = vmax.f32 %v5626, 0.0
        %v6127 = vmax.f32 %v5629, 0.0
        %v6128 = vmax.f32 %v5634, 0.0
        %v6129 = vmax.f32 %v5637, 0.0
        %v6130 = vmax.f32 %v5642, 0.0
        %v6131 = vmax.f32 %v5645, 0.0
        %v6132 = vmax.f32 %v5650, 0.0
        %v6133 = vmax.f32 %v5653, 0.0
        %v6134 = vmax.f32 %v5658, 0.0
        %v6135 = vmax.f32 %v5661, 0.0
        %v6136 = vmax.f32 %v5666, 0.0
        %v6137 = vmax.f32 %v5669, 0.0
        %v6138 = vmax.f32 %v5674, 0.0
        %v6139 = vmax.f32 %v5677, 0.0
        %v6140 = vmax.f32 %v5682, 0.0
        %v6141 = vmax.f32 %v5685, 0.0
        %v6142 = vmax.f32 %v5690, 0.0
        %v6143 = vmax.f32 %v5693, 0.0
        %v6144 = vmax.f32 %v5698, 0.0
        %v6145 = vmax.f32 %v5701, 0.0
        %v6146 = vmax.f32 %v5706, 0.0
        %v6147 = vmax.f32 %v5709, 0.0
        %v6148 = vmax.f32 %v5714, 0.0
        %v6149 = vmax.f32 %v5717, 0.0
        %v6150 = vmax.f32 %v5722, 0.0
        %v6151 = vmax.f32 %v5725, 0.0
        %v6152 = vmax.f32 %v5730, 0.0
        %v6153 = vmax.f32 %v5733, 0.0
        %v6154 = vmax.f32 %v5738, 0.0
        %v6155 = vmax.f32 %v5741, 0.0
        %v6156 = vmax.f32 %v5746, 0.0
        %v6157 = vmax.f32 %v5749, 0.0
        %v6158 = vmax.f32 %v5754, 0.0
        %v6159 = vmax.f32 %v5757, 0.0
        %v6160 = vmax.f32 %v5762, 0.0
        %v6161 = vmax.f32 %v5765, 0.0
        %v6162 = vmax.f32 %v5770, 0.0
        %v6163 = vmax.f32 %v5773, 0.0
        %v6164 = vmax.f32 %v5778, 0.0
        %v6165 = vmax.f32 %v5781, 0.0
        %v6166 = vmax.f32 %v5786, 0.0
        %v6167 = vmax.f32 %v5789, 0.0
        %v6168 = vmax.f32 %v5794, 0.0
        %v6169 = vmax.f32 %v5797, 0.0
        %v6170 = vmax.f32 %v5802, 0.0
        %v6171 = vmax.f32 %v5805, 0.0
        %v6172 = vmax.f32 %v5810, 0.0
        %v6173 = vmax.f32 %v5813, 0.0
        %v6174 = vmax.f32 %v5818, 0.0
        %v6175 = vmax.f32 %v5821, 0.0
        %v6176 = vmax.f32 %v5826, 0.0
        %v6177 = vmax.f32 %v5829, 0.0
        %v6178 = vmax.f32 %v5834, 0.0
        %v6179 = vmax.f32 %v5837, 0.0
        %v6180 = vmax.f32 %v5842, 0.0
        %v6181 = vmax.f32 %v5845, 0.0
        %v6182 = vmax.f32 %v5850, 0.0
        %v6183 = vmax.f32 %v5853, 0.0
        %v6184 = vmax.f32 %v5858, 0.0
        %v6185 = vmax.f32 %v5861, 0.0
        %v6186 = vmax.f32 %v5866, 0.0
        %v6187 = vmax.f32 %v5869, 0.0
        %v6188 = vmax.f32 %v5874, 0.0
        %v6189 = vmax.f32 %v5877, 0.0
        %v6190 = vmax.f32 %v5882, 0.0
        %v6191 = vmax.f32 %v5885, 0.0
        %v6192 = vmax.f32 %v5890, 0.0
        %v6193 = vmax.f32 %v5893, 0.0
        %v6194 = vmax.f32 %v5898, 0.0
        %v6195 = vmax.f32 %v5901, 0.0
        %v6196 = vmax.f32 %v5906, 0.0
        %v6197 = vmax.f32 %v5909, 0.0
        %v6198 = vmax.f32 %v5914, 0.0
        %v6199 = vmax.f32 %v5917, 0.0
        %v6200 = vmax.f32 %v5922, 0.0
        %v6201 = vmax.f32 %v5925, 0.0
        %v6202 = vmax.f32 %v5930, 0.0
        %v6203 = vmax.f32 %v5933, 0.0
        %v6204 = vmax.f32 %v5938, 0.0
        %v6205 = vmax.f32 %v5941, 0.0
        %v6206 = vmax.f32 %v5946, 0.0
        %v6207 = vmax.f32 %v5949, 0.0
        %v6208 = vpack.c.bf16 %v5953, %v5952
        %v6209 = vpack.c.bf16 %v5955, %v5954
        %v6210 = vpack.c.bf16 %v5957, %v5956
        %v6211 = vpack.c.bf16 %v5959, %v5958
        %v6212 = vpack.c.bf16 %v5961, %v5960
        %v6213 = vpack.c.bf16 %v5963, %v5962
        %v6214 = vpack.c.bf16 %v5965, %v5964
        %v6215 = vpack.c.bf16 %v5967, %v5966
        %v6216 = vpack.c.bf16 %v5969, %v5968
        %v6217 = vpack.c.bf16 %v5971, %v5970
        %v6218 = vpack.c.bf16 %v5973, %v5972
        %v6219 = vpack.c.bf16 %v5975, %v5974
        %v6220 = vpack.c.bf16 %v5977, %v5976
        %v6221 = vpack.c.bf16 %v5979, %v5978
        %v6222 = vpack.c.bf16 %v5981, %v5980
        %v6223 = vpack.c.bf16 %v5983, %v5982
        %v6224 = vpack.c.bf16 %v5985, %v5984
        %v6225 = vpack.c.bf16 %v5987, %v5986
        %v6226 = vpack.c.bf16 %v5989, %v5988
        %v6227 = vpack.c.bf16 %v5991, %v5990
        %v6228 = vpack.c.bf16 %v5993, %v5992
        %v6229 = vpack.c.bf16 %v5995, %v5994
        %v6230 = vpack.c.bf16 %v5997, %v5996
        %v6231 = vpack.c.bf16 %v5999, %v5998
        %v6232 = vpack.c.bf16 %v6001, %v6000
        %v6233 = vpack.c.bf16 %v6003, %v6002
        %v6234 = vpack.c.bf16 %v6005, %v6004
        %v6235 = vpack.c.bf16 %v6007, %v6006
        %v6236 = vpack.c.bf16 %v6009, %v6008
        %v6237 = vpack.c.bf16 %v6011, %v6010
        %v6238 = vpack.c.bf16 %v6013, %v6012
        %v6239 = vpack.c.bf16 %v6015, %v6014
        %v6240 = vpack.c.bf16 %v6017, %v6016
        %v6241 = vpack.c.bf16 %v6019, %v6018
        %v6242 = vpack.c.bf16 %v6021, %v6020
        %v6243 = vpack.c.bf16 %v6023, %v6022
        %v6244 = vpack.c.bf16 %v6025, %v6024
        %v6245 = vpack.c.bf16 %v6027, %v6026
        %v6246 = vpack.c.bf16 %v6029, %v6028
        %v6247 = vpack.c.bf16 %v6031, %v6030
        %v6248 = vpack.c.bf16 %v6033, %v6032
        %v6249 = vpack.c.bf16 %v6035, %v6034
        %v6250 = vpack.c.bf16 %v6037, %v6036
        %v6251 = vpack.c.bf16 %v6039, %v6038
        %v6252 = vpack.c.bf16 %v6041, %v6040
        %v6253 = vpack.c.bf16 %v6043, %v6042
        %v6254 = vpack.c.bf16 %v6045, %v6044
        %v6255 = vpack.c.bf16 %v6047, %v6046
        %v6256 = vpack.c.bf16 %v6049, %v6048
        %v6257 = vpack.c.bf16 %v6051, %v6050
        %v6258 = vpack.c.bf16 %v6053, %v6052
        %v6259 = vpack.c.bf16 %v6055, %v6054
        %v6260 = vpack.c.bf16 %v6057, %v6056
        %v6261 = vpack.c.bf16 %v6059, %v6058
        %v6262 = vpack.c.bf16 %v6061, %v6060
        %v6263 = vpack.c.bf16 %v6063, %v6062
        %v6264 = vpack.c.bf16 %v6065, %v6064
        %v6265 = vpack.c.bf16 %v6067, %v6066
        %v6266 = vpack.c.bf16 %v6069, %v6068
        %v6267 = vpack.c.bf16 %v6071, %v6070
        %v6268 = vpack.c.bf16 %v6073, %v6072
        %v6269 = vpack.c.bf16 %v6075, %v6074
        %v6270 = vpack.c.bf16 %v6077, %v6076
        %v6271 = vpack.c.bf16 %v6079, %v6078
        %v6272 = vpack.c.bf16 %v6081, %v6080
        %v6273 = vpack.c.bf16 %v6083, %v6082
        %v6274 = vpack.c.bf16 %v6085, %v6084
        %v6275 = vpack.c.bf16 %v6087, %v6086
        %v6276 = vpack.c.bf16 %v6089, %v6088
        %v6277 = vpack.c.bf16 %v6091, %v6090
        %v6278 = vpack.c.bf16 %v6093, %v6092
        %v6279 = vpack.c.bf16 %v6095, %v6094
        %v6280 = vpack.c.bf16 %v6097, %v6096
        %v6281 = vpack.c.bf16 %v6099, %v6098
        %v6282 = vpack.c.bf16 %v6101, %v6100
        %v6283 = vpack.c.bf16 %v6103, %v6102
        %v6284 = vpack.c.bf16 %v6105, %v6104
        %v6285 = vpack.c.bf16 %v6107, %v6106
        %v6286 = vpack.c.bf16 %v6109, %v6108
        %v6287 = vpack.c.bf16 %v6111, %v6110
        %v6288 = vpack.c.bf16 %v6113, %v6112
        %v6289 = vpack.c.bf16 %v6115, %v6114
        %v6290 = vpack.c.bf16 %v6117, %v6116
        %v6291 = vpack.c.bf16 %v6119, %v6118
        %v6292 = vpack.c.bf16 %v6121, %v6120
        %v6293 = vpack.c.bf16 %v6123, %v6122
        %v6294 = vpack.c.bf16 %v6125, %v6124
        %v6295 = vpack.c.bf16 %v6127, %v6126
        %v6296 = vpack.c.bf16 %v6129, %v6128
        %v6297 = vpack.c.bf16 %v6131, %v6130
        %v6298 = vpack.c.bf16 %v6133, %v6132
        %v6299 = vpack.c.bf16 %v6135, %v6134
        %v6300 = vpack.c.bf16 %v6137, %v6136
        %v6301 = vpack.c.bf16 %v6139, %v6138
        %v6302 = vpack.c.bf16 %v6141, %v6140
        %v6303 = vpack.c.bf16 %v6143, %v6142
        %v6304 = vpack.c.bf16 %v6145, %v6144
        %v6305 = vpack.c.bf16 %v6147, %v6146
        %v6306 = vpack.c.bf16 %v6149, %v6148
        %v6307 = vpack.c.bf16 %v6151, %v6150
        %v6308 = vpack.c.bf16 %v6153, %v6152
        %v6309 = vpack.c.bf16 %v6155, %v6154
        %v6310 = vpack.c.bf16 %v6157, %v6156
        %v6311 = vpack.c.bf16 %v6159, %v6158
        %v6312 = vpack.c.bf16 %v6161, %v6160
        %v6313 = vpack.c.bf16 %v6163, %v6162
        %v6314 = vpack.c.bf16 %v6165, %v6164
        %v6315 = vpack.c.bf16 %v6167, %v6166
        %v6316 = vpack.c.bf16 %v6169, %v6168
        %v6317 = vpack.c.bf16 %v6171, %v6170
        %v6318 = vpack.c.bf16 %v6173, %v6172
        %v6319 = vpack.c.bf16 %v6175, %v6174
        %v6320 = vpack.c.bf16 %v6177, %v6176
        %v6321 = vpack.c.bf16 %v6179, %v6178
        %v6322 = vpack.c.bf16 %v6181, %v6180
        %v6323 = vpack.c.bf16 %v6183, %v6182
        %v6324 = vpack.c.bf16 %v6185, %v6184
        %v6325 = vpack.c.bf16 %v6187, %v6186
        %v6326 = vpack.c.bf16 %v6189, %v6188
        %v6327 = vpack.c.bf16 %v6191, %v6190
        %v6328 = vpack.c.bf16 %v6193, %v6192
        %v6329 = vpack.c.bf16 %v6195, %v6194
        %v6330 = vpack.c.bf16 %v6197, %v6196
        %v6331 = vpack.c.bf16 %v6199, %v6198
        %v6332 = vpack.c.bf16 %v6201, %v6200
        %v6333 = vpack.c.bf16 %v6203, %v6202
        %v6334 = vpack.c.bf16 %v6205, %v6204
        %v6335 = vpack.c.bf16 %v6207, %v6206
        %v6336 = vld [vmem:[%s4] sm:$0xf]
        %v6337 = vld [vmem:[%s4 + $0x4] sm:$0xf]
        %v6338 = vld [vmem:[%s4 + $0x8] sm:$0xf]
        %v6339 = vld [vmem:[%s4 + $0xc] sm:$0xf]
        %v6340 = vld [vmem:[%s4 + $0x10] sm:$0xf]
        %v6341 = vld [vmem:[%s4 + $0x14] sm:$0xf]
        %v6342 = vld [vmem:[%s4 + $0x18] sm:$0xf]
        %v6343 = vld [vmem:[%s4 + $0x1c] sm:$0xf]
        %v6344 = vld [vmem:[%s6 + $0x3] sm:$0x1]
        %v6345 = vlaneseq
        %v6346 = vshrl.u32 %v6345, 7
        %v6347 = vsub.s32 0, %v6346
        %v6348 = vrot.slane %v6344, %v6347
        %v6357 = vunpack.c.l.b16 %v6336
        %v6358 = vunpack.c.l.b16 %v6337
        %v6359 = vunpack.c.l.b16 %v6338
        %v6360 = vunpack.c.l.b16 %v6339
        %v6361 = vunpack.c.l.b16 %v6340
        %v6362 = vunpack.c.l.b16 %v6341
        %v6363 = vunpack.c.l.b16 %v6342
        %v6364 = vunpack.c.l.b16 %v6343
        %v6365 = vpack.c.b16 %v6358, %v6357
        %v6366 = vpack.c.b16 %v6360, %v6359
        %v6367 = vpack.c.b16 %v6362, %v6361
        %v6368 = vpack.c.b16 %v6364, %v6363
        %v6374 = vsel %vm2648, %v6208, 0
        %v6377 = vsel %vm2648, %v6209, 0
        %v6380 = vsel %vm2648, %v6210, 0
        %v6383 = vsel %vm2648, %v6211, 0
        %v6386 = vsel %vm2648, %v6212, 0
        %v6389 = vsel %vm2648, %v6213, 0
        %v6392 = vsel %vm2648, %v6214, 0
        %v6395 = vsel %vm2648, %v6215, 0
        %v6398 = vsel %vm2648, %v6216, 0
        %v6401 = vsel %vm2648, %v6217, 0
        %v6404 = vsel %vm2648, %v6218, 0
        %v6407 = vsel %vm2648, %v6219, 0
        %v6410 = vsel %vm2648, %v6220, 0
        %v6413 = vsel %vm2648, %v6221, 0
        %v6416 = vsel %vm2648, %v6222, 0
        %v6419 = vsel %vm2648, %v6223, 0
        %v6422 = vsel %vm2648, %v6224, 0
        %v6425 = vsel %vm2648, %v6225, 0
        %v6428 = vsel %vm2648, %v6226, 0
        %v6431 = vsel %vm2648, %v6227, 0
        %v6434 = vsel %vm2648, %v6228, 0
        %v6437 = vsel %vm2648, %v6229, 0
        %v6440 = vsel %vm2648, %v6230, 0
        %v6443 = vsel %vm2648, %v6231, 0
        %v6446 = vsel %vm2648, %v6232, 0
        %v6449 = vsel %vm2648, %v6233, 0
        %v6452 = vsel %vm2648, %v6234, 0
        %v6455 = vsel %vm2648, %v6235, 0
        %v6458 = vsel %vm2648, %v6236, 0
        %v6461 = vsel %vm2648, %v6237, 0
        %v6464 = vsel %vm2648, %v6238, 0
        %v6467 = vsel %vm2648, %v6239, 0
        %v6470 = vsel %vm2648, %v6240, 0
        %v6473 = vsel %vm2648, %v6241, 0
        %v6476 = vsel %vm2648, %v6242, 0
        %v6479 = vsel %vm2648, %v6243, 0
        %v6482 = vsel %vm2648, %v6244, 0
        %v6485 = vsel %vm2648, %v6245, 0
        %v6488 = vsel %vm2648, %v6246, 0
        %v6491 = vsel %vm2648, %v6247, 0
        %v6494 = vsel %vm2648, %v6248, 0
        %v6497 = vsel %vm2648, %v6249, 0
        %v6500 = vsel %vm2648, %v6250, 0
        %v6503 = vsel %vm2648, %v6251, 0
        %v6506 = vsel %vm2648, %v6252, 0
        %v6509 = vsel %vm2648, %v6253, 0
        %v6512 = vsel %vm2648, %v6254, 0
        %v6515 = vsel %vm2648, %v6255, 0
        %v6518 = vsel %vm2648, %v6256, 0
        %v6521 = vsel %vm2648, %v6257, 0
        %v6524 = vsel %vm2648, %v6258, 0
        %v6527 = vsel %vm2648, %v6259, 0
        %v6530 = vsel %vm2648, %v6260, 0
        %v6533 = vsel %vm2648, %v6261, 0
        %v6536 = vsel %vm2648, %v6262, 0
        %v6539 = vsel %vm2648, %v6263, 0
        %v6542 = vsel %vm2648, %v6264, 0
        %v6545 = vsel %vm2648, %v6265, 0
        %v6548 = vsel %vm2648, %v6266, 0
        %v6551 = vsel %vm2648, %v6267, 0
        %v6554 = vsel %vm2648, %v6268, 0
        %v6557 = vsel %vm2648, %v6269, 0
        %v6560 = vsel %vm2648, %v6270, 0
        %v6563 = vsel %vm2648, %v6271, 0
        %v6566 = vsel %vm2648, %v6272, 0
        %v6569 = vsel %vm2648, %v6273, 0
        %v6572 = vsel %vm2648, %v6274, 0
        %v6575 = vsel %vm2648, %v6275, 0
        %v6578 = vsel %vm2648, %v6276, 0
        %v6581 = vsel %vm2648, %v6277, 0
        %v6584 = vsel %vm2648, %v6278, 0
        %v6587 = vsel %vm2648, %v6279, 0
        %v6590 = vsel %vm2648, %v6280, 0
        %v6593 = vsel %vm2648, %v6281, 0
        %v6596 = vsel %vm2648, %v6282, 0
        %v6599 = vsel %vm2648, %v6283, 0
        %v6602 = vsel %vm2648, %v6284, 0
        %v6605 = vsel %vm2648, %v6285, 0
        %v6608 = vsel %vm2648, %v6286, 0
        %v6611 = vsel %vm2648, %v6287, 0
        %v6614 = vsel %vm2648, %v6288, 0
        %v6617 = vsel %vm2648, %v6289, 0
        %v6620 = vsel %vm2648, %v6290, 0
        %v6623 = vsel %vm2648, %v6291, 0
        %v6626 = vsel %vm2648, %v6292, 0
        %v6629 = vsel %vm2648, %v6293, 0
        %v6632 = vsel %vm2648, %v6294, 0
        %v6635 = vsel %vm2648, %v6295, 0
        %v6638 = vsel %vm2648, %v6296, 0
        %v6641 = vsel %vm2648, %v6297, 0
        %v6644 = vsel %vm2648, %v6298, 0
        %v6647 = vsel %vm2648, %v6299, 0
        %v6650 = vsel %vm2648, %v6300, 0
        %v6653 = vsel %vm2648, %v6301, 0
        %v6656 = vsel %vm2648, %v6302, 0
        %v6659 = vsel %vm2648, %v6303, 0
        %v6662 = vsel %vm2648, %v6304, 0
        %v6665 = vsel %vm2648, %v6305, 0
        %v6668 = vsel %vm2648, %v6306, 0
        %v6671 = vsel %vm2648, %v6307, 0
        %v6674 = vsel %vm2648, %v6308, 0
        %v6677 = vsel %vm2648, %v6309, 0
        %v6680 = vsel %vm2648, %v6310, 0
        %v6683 = vsel %vm2648, %v6311, 0
        %v6686 = vsel %vm2648, %v6312, 0
        %v6689 = vsel %vm2648, %v6313, 0
        %v6692 = vsel %vm2648, %v6314, 0
        %v6695 = vsel %vm2648, %v6315, 0
        %v6698 = vsel %vm2648, %v6316, 0
        %v6701 = vsel %vm2648, %v6317, 0
        %v6704 = vsel %vm2648, %v6318, 0
        %v6707 = vsel %vm2648, %v6319, 0
        %v6710 = vsel %vm2648, %v6320, 0
        %v6713 = vsel %vm2648, %v6321, 0
        %v6716 = vsel %vm2648, %v6322, 0
        %v6719 = vsel %vm2648, %v6323, 0
        %v6722 = vsel %vm2648, %v6324, 0
        %v6725 = vsel %vm2648, %v6325, 0
        %v6728 = vsel %vm2648, %v6326, 0
        %v6731 = vsel %vm2648, %v6327, 0
        %v6734 = vsel %vm2648, %v6328, 0
        %v6737 = vsel %vm2648, %v6329, 0
        %v6740 = vsel %vm2648, %v6330, 0
        %v6743 = vsel %vm2648, %v6331, 0
        %v6746 = vsel %vm2648, %v6332, 0
        %v6749 = vsel %vm2648, %v6333, 0
        %v6752 = vsel %vm2648, %v6334, 0
        %v6755 = vsel %vm2648, %v6335, 0
        %6757 = vmatprep.subr.bf16.mxu0 0
        %6758 = vmatpush1.bf16.msra.mxu0 %v6365
        %6759 = vmatprep.subr.bf16.mxu0 0
        %6760 = vmatpush1.bf16.msra.mxu0 %v6366
        %6761 = vmatprep.subr.bf16.mxu0 0
        %6762 = vmatpush1.bf16.msra.mxu0 %v6367
        %6763 = vmatprep.subr.bf16.mxu0 0
        %6764 = vmatpush1.bf16.msra.mxu0 %v6368
        %6765 = vmatprep.subr.bf16.mxu0 0
        %6766 = vmatpush1.bf16.msra.mxu0 0
        %6767 = vmatprep.subr.bf16.mxu0 0
        %6768 = vmatpush1.bf16.msra.mxu0 0
        %6769 = vmatprep.subr.bf16.mxu0 0
        %6770 = vmatpush1.bf16.msra.mxu0 0
        %6771 = vmatprep.subr.bf16.mxu0 0
        %6772 = vmatpush1.bf16.msra.mxu0 0
        %6773 = vmatprep.subr.bf16.mxu0 0
        %6774 = vmatpush1.bf16.msra.mxu0 0
        %6775 = vmatprep.subr.bf16.mxu0 0
        %6776 = vmatpush1.bf16.msra.mxu0 0
        %6777 = vmatprep.subr.bf16.mxu0 0
        %6778 = vmatpush1.bf16.msra.mxu0 0
        %6779 = vmatprep.subr.bf16.mxu0 0
        %6780 = vmatpush1.bf16.msra.mxu0 0
        %6781 = vmatprep.subr.bf16.mxu0 0
        %6782 = vmatpush1.bf16.msra.mxu0 0
        %6783 = vmatprep.subr.bf16.mxu0 0
        %6784 = vmatpush1.bf16.msra.mxu0 0
        %6785 = vmatprep.subr.bf16.mxu0 0
        %6786 = vmatpush1.bf16.msra.mxu0 0
        %6787 = vmatprep.subr.bf16.mxu0 0
        %6788 = vmatpush1.bf16.msra.mxu0 0
        %6789 = vmatprep.mubr.bf16.mxu0 0
        %6790 = vmatmul.mubr.bf16.gmra.mrb[0].mxu0 %v6374
        %v6791 = vpop.f32.mrb[0].mxu0
        %v6792 = vadd.f32 %v6348, %v6791
        %v6793 = vpop.f32.mrb[0].mxu0
        %v6794 = vpop.f32.mrb[0].mxu0
        %v6795 = vadd.f32 %v6348, %v6794
        %v6796 = vpop.f32.mrb[0].mxu0
        %6797 = vmatprep.mubr.bf16.mxu0 0
        %6798 = vmatmul.mubr.bf16.gmra.mrb[0].mxu0 %v6377
        %v6799 = vpop.f32.mrb[0].mxu0
        %v6800 = vadd.f32 %v6348, %v6799
        %v6801 = vpop.f32.mrb[0].mxu0
        %v6802 = vpop.f32.mrb[0].mxu0
        %v6803 = vadd.f32 %v6348, %v6802
        %v6804 = vpop.f32.mrb[0].mxu0
        %6805 = vmatprep.mubr.bf16.mxu0 0
        %6806 = vmatmul.mubr.bf16.gmra.mrb[0].mxu0 %v6380
        %v6807 = vpop.f32.mrb[0].mxu0
        %v6808 = vadd.f32 %v6348, %v6807
        %v6809 = vpop.f32.mrb[0].mxu0
        %v6810 = vpop.f32.mrb[0].mxu0
        %v6811 = vadd.f32 %v6348, %v6810
        %v6812 = vpop.f32.mrb[0].mxu0
        %6813 = vmatprep.mubr.bf16.mxu0 0
        %6814 = vmatmul.mubr.bf16.gmra.mrb[0].mxu0 %v6383
        %v6815 = vpop.f32.mrb[0].mxu0
        %v6816 = vadd.f32 %v6348, %v6815
        %v6817 = vpop.f32.mrb[0].mxu0
        %v6818 = vpop.f32.mrb[0].mxu0
        %v6819 = vadd.f32 %v6348, %v6818
        %v6820 = vpop.f32.mrb[0].mxu0
        %6821 = vmatprep.mubr.bf16.mxu0 0
        %6822 = vmatmul.mubr.bf16.gmra.mrb[0].mxu0 %v6386
        %v6823 = vpop.f32.mrb[0].mxu0
        %v6824 = vadd.f32 %v6348, %v6823
        %v6825 = vpop.f32.mrb[0].mxu0
        %v6826 = vpop.f32.mrb[0].mxu0
        %v6827 = vadd.f32 %v6348, %v6826
        %v6828 = vpop.f32.mrb[0].mxu0
        %6829 = vmatprep.mubr.bf16.mxu0 0
        %6830 = vmatmul.mubr.bf16.gmra.mrb[0].mxu0 %v6389
        %v6831 = vpop.f32.mrb[0].mxu0
        %v6832 = vadd.f32 %v6348, %v6831
        %v6833 = vpop.f32.mrb[0].mxu0
        %v6834 = vpop.f32.mrb[0].mxu0
        %v6835 = vadd.f32 %v6348, %v6834
        %v6836 = vpop.f32.mrb[0].mxu0
        %6837 = vmatprep.mubr.bf16.mxu0 0
        %6838 = vmatmul.mubr.bf16.gmra.mrb[0].mxu0 %v6392
        %v6839 = vpop.f32.mrb[0].mxu0
        %v6840 = vadd.f32 %v6348, %v6839
        %v6841 = vpop.f32.mrb[0].mxu0
        %v6842 = vpop.f32.mrb[0].mxu0
        %v6843 = vadd.f32 %v6348, %v6842
        %v6844 = vpop.f32.mrb[0].mxu0
        %6845 = vmatprep.mubr.bf16.mxu0 0
        %6846 = vmatmul.mubr.bf16.gmra.mrb[0].mxu0 %v6395
        %v6847 = vpop.f32.mrb[0].mxu0
        %v6848 = vadd.f32 %v6348, %v6847
        %v6849 = vpop.f32.mrb[0].mxu0
        %v6850 = vpop.f32.mrb[0].mxu0
        %v6851 = vadd.f32 %v6348, %v6850
        %v6852 = vpop.f32.mrb[0].mxu0
        %6853 = vmatprep.mubr.bf16.mxu0 0
        %6854 = vmatmul.mubr.bf16.gmra.mrb[0].mxu0 %v6398
        %v6855 = vpop.f32.mrb[0].mxu0
        %v6856 = vadd.f32 %v6348, %v6855
        %v6857 = vpop.f32.mrb[0].mxu0
        %v6858 = vpop.f32.mrb[0].mxu0
        %v6859 = vadd.f32 %v6348, %v6858
        %v6860 = vpop.f32.mrb[0].mxu0
        %6861 = vmatprep.mubr.bf16.mxu0 0
        %6862 = vmatmul.mubr.bf16.gmra.mrb[0].mxu0 %v6401
        %v6863 = vpop.f32.mrb[0].mxu0
        %v6864 = vadd.f32 %v6348, %v6863
        %v6865 = vpop.f32.mrb[0].mxu0
        %v6866 = vpop.f32.mrb[0].mxu0
        %v6867 = vadd.f32 %v6348, %v6866
        %v6868 = vpop.f32.mrb[0].mxu0
        %6869 = vmatprep.mubr.bf16.mxu0 0
        %6870 = vmatmul.mubr.bf16.gmra.mrb[0].mxu0 %v6404
        %v6871 = vpop.f32.mrb[0].mxu0
        %v6872 = vadd.f32 %v6348, %v6871
        %v6873 = vpop.f32.mrb[0].mxu0
        %v6874 = vpop.f32.mrb[0].mxu0
        %v6875 = vadd.f32 %v6348, %v6874
        %v6876 = vpop.f32.mrb[0].mxu0
        %6877 = vmatprep.mubr.bf16.mxu0 0
        %6878 = vmatmul.mubr.bf16.gmra.mrb[0].mxu0 %v6407
        %v6879 = vpop.f32.mrb[0].mxu0
        %v6880 = vadd.f32 %v6348, %v6879
        %v6881 = vpop.f32.mrb[0].mxu0
        %v6882 = vpop.f32.mrb[0].mxu0
        %v6883 = vadd.f32 %v6348, %v6882
        %v6884 = vpop.f32.mrb[0].mxu0
        %6885 = vmatprep.mubr.bf16.mxu0 0
        %6886 = vmatmul.mubr.bf16.gmra.mrb[0].mxu0 %v6410
        %v6887 = vpop.f32.mrb[0].mxu0
        %v6888 = vadd.f32 %v6348, %v6887
        %v6889 = vpop.f32.mrb[0].mxu0
        %v6890 = vpop.f32.mrb[0].mxu0
        %v6891 = vadd.f32 %v6348, %v6890
        %v6892 = vpop.f32.mrb[0].mxu0
        %6893 = vmatprep.mubr.bf16.mxu0 0
        %6894 = vmatmul.mubr.bf16.gmra.mrb[0].mxu0 %v6413
        %v6895 = vpop.f32.mrb[0].mxu0
        %v6896 = vadd.f32 %v6348, %v6895
        %v6897 = vpop.f32.mrb[0].mxu0
        %v6898 = vpop.f32.mrb[0].mxu0
        %v6899 = vadd.f32 %v6348, %v6898
        %v6900 = vpop.f32.mrb[0].mxu0
        %6901 = vmatprep.mubr.bf16.mxu0 0
        %6902 = vmatmul.mubr.bf16.gmra.mrb[0].mxu0 %v6416
        %v6903 = vpop.f32.mrb[0].mxu0
        %v6904 = vadd.f32 %v6348, %v6903
        %v6905 = vpop.f32.mrb[0].mxu0
        %v6906 = vpop.f32.mrb[0].mxu0
        %v6907 = vadd.f32 %v6348, %v6906
        %v6908 = vpop.f32.mrb[0].mxu0
        %6909 = vmatprep.mubr.bf16.mxu0 0
        %6910 = vmatmul.mubr.bf16.gmra.mrb[0].mxu0 %v6419
        %v6911 = vpop.f32.mrb[0].mxu0
        %v6912 = vadd.f32 %v6348, %v6911
        %v6913 = vpop.f32.mrb[0].mxu0
        %v6914 = vpop.f32.mrb[0].mxu0
        %v6915 = vadd.f32 %v6348, %v6914
        %v6916 = vpop.f32.mrb[0].mxu0
        %6917 = vmatprep.mubr.bf16.mxu0 0
        %6918 = vmatmul.mubr.bf16.gmra.mrb[0].mxu0 %v6422
        %v6919 = vpop.f32.mrb[0].mxu0
        %v6920 = vadd.f32 %v6348, %v6919
        %v6921 = vpop.f32.mrb[0].mxu0
        %v6922 = vpop.f32.mrb[0].mxu0
        %v6923 = vadd.f32 %v6348, %v6922
        %v6924 = vpop.f32.mrb[0].mxu0
        %6925 = vmatprep.mubr.bf16.mxu0 0
        %6926 = vmatmul.mubr.bf16.gmra.mrb[0].mxu0 %v6425
        %v6927 = vpop.f32.mrb[0].mxu0
        %v6928 = vadd.f32 %v6348, %v6927
        %v6929 = vpop.f32.mrb[0].mxu0
        %v6930 = vpop.f32.mrb[0].mxu0
        %v6931 = vadd.f32 %v6348, %v6930
        %v6932 = vpop.f32.mrb[0].mxu0
        %6933 = vmatprep.mubr.bf16.mxu0 0
        %6934 = vmatmul.mubr.bf16.gmra.mrb[0].mxu0 %v6428
        %v6935 = vpop.f32.mrb[0].mxu0
        %v6936 = vadd.f32 %v6348, %v6935
        %v6937 = vpop.f32.mrb[0].mxu0
        %v6938 = vpop.f32.mrb[0].mxu0
        %v6939 = vadd.f32 %v6348, %v6938
        %v6940 = vpop.f32.mrb[0].mxu0
        %6941 = vmatprep.mubr.bf16.mxu0 0
        %6942 = vmatmul.mubr.bf16.gmra.mrb[0].mxu0 %v6431
        %v6943 = vpop.f32.mrb[0].mxu0
        %v6944 = vadd.f32 %v6348, %v6943
        %v6945 = vpop.f32.mrb[0].mxu0
        %v6946 = vpop.f32.mrb[0].mxu0
        %v6947 = vadd.f32 %v6348, %v6946
        %v6948 = vpop.f32.mrb[0].mxu0
        %6949 = vmatprep.mubr.bf16.mxu0 0
        %6950 = vmatmul.mubr.bf16.gmra.mrb[0].mxu0 %v6434
        %v6951 = vpop.f32.mrb[0].mxu0
        %v6952 = vadd.f32 %v6348, %v6951
        %v6953 = vpop.f32.mrb[0].mxu0
        %v6954 = vpop.f32.mrb[0].mxu0
        %v6955 = vadd.f32 %v6348, %v6954
        %v6956 = vpop.f32.mrb[0].mxu0
        %6957 = vmatprep.mubr.bf16.mxu0 0
        %6958 = vmatmul.mubr.bf16.gmra.mrb[0].mxu0 %v6437
        %v6959 = vpop.f32.mrb[0].mxu0
        %v6960 = vadd.f32 %v6348, %v6959
        %v6961 = vpop.f32.mrb[0].mxu0
        %v6962 = vpop.f32.mrb[0].mxu0
        %v6963 = vadd.f32 %v6348, %v6962
        %v6964 = vpop.f32.mrb[0].mxu0
        %6965 = vmatprep.mubr.bf16.mxu0 0
        %6966 = vmatmul.mubr.bf16.gmra.mrb[0].mxu0 %v6440
        %v6967 = vpop.f32.mrb[0].mxu0
        %v6968 = vadd.f32 %v6348, %v6967
        %v6969 = vpop.f32.mrb[0].mxu0
        %v6970 = vpop.f32.mrb[0].mxu0
        %v6971 = vadd.f32 %v6348, %v6970
        %v6972 = vpop.f32.mrb[0].mxu0
        %6973 = vmatprep.mubr.bf16.mxu0 0
        %6974 = vmatmul.mubr.bf16.gmra.mrb[0].mxu0 %v6443
        %v6975 = vpop.f32.mrb[0].mxu0
        %v6976 = vadd.f32 %v6348, %v6975
        %v6977 = vpop.f32.mrb[0].mxu0
        %v6978 = vpop.f32.mrb[0].mxu0
        %v6979 = vadd.f32 %v6348, %v6978
        %v6980 = vpop.f32.mrb[0].mxu0
        %6981 = vmatprep.mubr.bf16.mxu0 0
        %6982 = vmatmul.mubr.bf16.gmra.mrb[0].mxu0 %v6446
        %v6983 = vpop.f32.mrb[0].mxu0
        %v6984 = vadd.f32 %v6348, %v6983
        %v6985 = vpop.f32.mrb[0].mxu0
        %v6986 = vpop.f32.mrb[0].mxu0
        %v6987 = vadd.f32 %v6348, %v6986
        %v6988 = vpop.f32.mrb[0].mxu0
        %6989 = vmatprep.mubr.bf16.mxu0 0
        %6990 = vmatmul.mubr.bf16.gmra.mrb[0].mxu0 %v6449
        %v6991 = vpop.f32.mrb[0].mxu0
        %v6992 = vadd.f32 %v6348, %v6991
        %v6993 = vpop.f32.mrb[0].mxu0
        %v6994 = vpop.f32.mrb[0].mxu0
        %v6995 = vadd.f32 %v6348, %v6994
        %v6996 = vpop.f32.mrb[0].mxu0
        %6997 = vmatprep.mubr.bf16.mxu0 0
        %6998 = vmatmul.mubr.bf16.gmra.mrb[0].mxu0 %v6452
        %v6999 = vpop.f32.mrb[0].mxu0
        %v7000 = vadd.f32 %v6348, %v6999
        %v7001 = vpop.f32.mrb[0].mxu0
        %v7002 = vpop.f32.mrb[0].mxu0
        %v7003 = vadd.f32 %v6348, %v7002
        %v7004 = vpop.f32.mrb[0].mxu0
        %7005 = vmatprep.mubr.bf16.mxu0 0
        %7006 = vmatmul.mubr.bf16.gmra.mrb[0].mxu0 %v6455
        %v7007 = vpop.f32.mrb[0].mxu0
        %v7008 = vadd.f32 %v6348, %v7007
        %v7009 = vpop.f32.mrb[0].mxu0
        %v7010 = vpop.f32.mrb[0].mxu0
        %v7011 = vadd.f32 %v6348, %v7010
        %v7012 = vpop.f32.mrb[0].mxu0
        %7013 = vmatprep.mubr.bf16.mxu0 0
        %7014 = vmatmul.mubr.bf16.gmra.mrb[0].mxu0 %v6458
        %v7015 = vpop.f32.mrb[0].mxu0
        %v7016 = vadd.f32 %v6348, %v7015
        %v7017 = vpop.f32.mrb[0].mxu0
        %v7018 = vpop.f32.mrb[0].mxu0
        %v7019 = vadd.f32 %v6348, %v7018
        %v7020 = vpop.f32.mrb[0].mxu0
        %7021 = vmatprep.mubr.bf16.mxu0 0
        %7022 = vmatmul.mubr.bf16.gmra.mrb[0].mxu0 %v6461
        %v7023 = vpop.f32.mrb[0].mxu0
        %v7024 = vadd.f32 %v6348, %v7023
        %v7025 = vpop.f32.mrb[0].mxu0
        %v7026 = vpop.f32.mrb[0].mxu0
        %v7027 = vadd.f32 %v6348, %v7026
        %v7028 = vpop.f32.mrb[0].mxu0
        %7029 = vmatprep.mubr.bf16.mxu0 0
        %7030 = vmatmul.mubr.bf16.gmra.mrb[0].mxu0 %v6464
        %v7031 = vpop.f32.mrb[0].mxu0
        %v7032 = vadd.f32 %v6348, %v7031
        %v7033 = vpop.f32.mrb[0].mxu0
        %v7034 = vpop.f32.mrb[0].mxu0
        %v7035 = vadd.f32 %v6348, %v7034
        %v7036 = vpop.f32.mrb[0].mxu0
        %7037 = vmatprep.mubr.bf16.mxu0 0
        %7038 = vmatmul.mubr.bf16.gmra.mrb[0].mxu0 %v6467
        %v7039 = vpop.f32.mrb[0].mxu0
        %v7040 = vadd.f32 %v6348, %v7039
        %v7041 = vpop.f32.mrb[0].mxu0
        %v7042 = vpop.f32.mrb[0].mxu0
        %v7043 = vadd.f32 %v6348, %v7042
        %v7044 = vpop.f32.mrb[0].mxu0
        %7045 = vmatprep.mubr.bf16.mxu0 0
        %7046 = vmatmul.mubr.bf16.gmra.mrb[0].mxu0 %v6470
        %v7047 = vpop.f32.mrb[0].mxu0
        %v7048 = vadd.f32 %v6348, %v7047
        %v7049 = vpop.f32.mrb[0].mxu0
        %v7050 = vpop.f32.mrb[0].mxu0
        %v7051 = vadd.f32 %v6348, %v7050
        %v7052 = vpop.f32.mrb[0].mxu0
        %7053 = vmatprep.mubr.bf16.mxu0 0
        %7054 = vmatmul.mubr.bf16.gmra.mrb[0].mxu0 %v6473
        %v7055 = vpop.f32.mrb[0].mxu0
        %v7056 = vadd.f32 %v6348, %v7055
        %v7057 = vpop.f32.mrb[0].mxu0
        %v7058 = vpop.f32.mrb[0].mxu0
        %v7059 = vadd.f32 %v6348, %v7058
        %v7060 = vpop.f32.mrb[0].mxu0
        %7061 = vmatprep.mubr.bf16.mxu0 0
        %7062 = vmatmul.mubr.bf16.gmra.mrb[0].mxu0 %v6476
        %v7063 = vpop.f32.mrb[0].mxu0
        %v7064 = vadd.f32 %v6348, %v7063
        %v7065 = vpop.f32.mrb[0].mxu0
        %v7066 = vpop.f32.mrb[0].mxu0
        %v7067 = vadd.f32 %v6348, %v7066
        %v7068 = vpop.f32.mrb[0].mxu0
        %7069 = vmatprep.mubr.bf16.mxu0 0
        %7070 = vmatmul.mubr.bf16.gmra.mrb[0].mxu0 %v6479
        %v7071 = vpop.f32.mrb[0].mxu0
        %v7072 = vadd.f32 %v6348, %v7071
        %v7073 = vpop.f32.mrb[0].mxu0
        %v7074 = vpop.f32.mrb[0].mxu0
        %v7075 = vadd.f32 %v6348, %v7074
        %v7076 = vpop.f32.mrb[0].mxu0
        %7077 = vmatprep.mubr.bf16.mxu0 0
        %7078 = vmatmul.mubr.bf16.gmra.mrb[0].mxu0 %v6482
        %v7079 = vpop.f32.mrb[0].mxu0
        %v7080 = vadd.f32 %v6348, %v7079
        %v7081 = vpop.f32.mrb[0].mxu0
        %v7082 = vpop.f32.mrb[0].mxu0
        %v7083 = vadd.f32 %v6348, %v7082
        %v7084 = vpop.f32.mrb[0].mxu0
        %7085 = vmatprep.mubr.bf16.mxu0 0
        %7086 = vmatmul.mubr.bf16.gmra.mrb[0].mxu0 %v6485
        %v7087 = vpop.f32.mrb[0].mxu0
        %v7088 = vadd.f32 %v6348, %v7087
        %v7089 = vpop.f32.mrb[0].mxu0
        %v7090 = vpop.f32.mrb[0].mxu0
        %v7091 = vadd.f32 %v6348, %v7090
        %v7092 = vpop.f32.mrb[0].mxu0
        %7093 = vmatprep.mubr.bf16.mxu0 0
        %7094 = vmatmul.mubr.bf16.gmra.mrb[0].mxu0 %v6488
        %v7095 = vpop.f32.mrb[0].mxu0
        %v7096 = vadd.f32 %v6348, %v7095
        %v7097 = vpop.f32.mrb[0].mxu0
        %v7098 = vpop.f32.mrb[0].mxu0
        %v7099 = vadd.f32 %v6348, %v7098
        %v7100 = vpop.f32.mrb[0].mxu0
        %7101 = vmatprep.mubr.bf16.mxu0 0
        %7102 = vmatmul.mubr.bf16.gmra.mrb[0].mxu0 %v6491
        %v7103 = vpop.f32.mrb[0].mxu0
        %v7104 = vadd.f32 %v6348, %v7103
        %v7105 = vpop.f32.mrb[0].mxu0
        %v7106 = vpop.f32.mrb[0].mxu0
        %v7107 = vadd.f32 %v6348, %v7106
        %v7108 = vpop.f32.mrb[0].mxu0
        %7109 = vmatprep.mubr.bf16.mxu0 0
        %7110 = vmatmul.mubr.bf16.gmra.mrb[0].mxu0 %v6494
        %v7111 = vpop.f32.mrb[0].mxu0
        %v7112 = vadd.f32 %v6348, %v7111
        %v7113 = vpop.f32.mrb[0].mxu0
        %v7114 = vpop.f32.mrb[0].mxu0
        %v7115 = vadd.f32 %v6348, %v7114
        %v7116 = vpop.f32.mrb[0].mxu0
        %7117 = vmatprep.mubr.bf16.mxu0 0
        %7118 = vmatmul.mubr.bf16.gmra.mrb[0].mxu0 %v6497
        %v7119 = vpop.f32.mrb[0].mxu0
        %v7120 = vadd.f32 %v6348, %v7119
        %v7121 = vpop.f32.mrb[0].mxu0
        %v7122 = vpop.f32.mrb[0].mxu0
        %v7123 = vadd.f32 %v6348, %v7122
        %v7124 = vpop.f32.mrb[0].mxu0
        %7125 = vmatprep.mubr.bf16.mxu0 0
        %7126 = vmatmul.mubr.bf16.gmra.mrb[0].mxu0 %v6500
        %v7127 = vpop.f32.mrb[0].mxu0
        %v7128 = vadd.f32 %v6348, %v7127
        %v7129 = vpop.f32.mrb[0].mxu0
        %v7130 = vpop.f32.mrb[0].mxu0
        %v7131 = vadd.f32 %v6348, %v7130
        %v7132 = vpop.f32.mrb[0].mxu0
        %7133 = vmatprep.mubr.bf16.mxu0 0
        %7134 = vmatmul.mubr.bf16.gmra.mrb[0].mxu0 %v6503
        %v7135 = vpop.f32.mrb[0].mxu0
        %v7136 = vadd.f32 %v6348, %v7135
        %v7137 = vpop.f32.mrb[0].mxu0
        %v7138 = vpop.f32.mrb[0].mxu0
        %v7139 = vadd.f32 %v6348, %v7138
        %v7140 = vpop.f32.mrb[0].mxu0
        %7141 = vmatprep.mubr.bf16.mxu0 0
        %7142 = vmatmul.mubr.bf16.gmra.mrb[0].mxu0 %v6506
        %v7143 = vpop.f32.mrb[0].mxu0
        %v7144 = vadd.f32 %v6348, %v7143
        %v7145 = vpop.f32.mrb[0].mxu0
        %v7146 = vpop.f32.mrb[0].mxu0
        %v7147 = vadd.f32 %v6348, %v7146
        %v7148 = vpop.f32.mrb[0].mxu0
        %7149 = vmatprep.mubr.bf16.mxu0 0
        %7150 = vmatmul.mubr.bf16.gmra.mrb[0].mxu0 %v6509
        %v7151 = vpop.f32.mrb[0].mxu0
        %v7152 = vadd.f32 %v6348, %v7151
        %v7153 = vpop.f32.mrb[0].mxu0
        %v7154 = vpop.f32.mrb[0].mxu0
        %v7155 = vadd.f32 %v6348, %v7154
        %v7156 = vpop.f32.mrb[0].mxu0
        %7157 = vmatprep.mubr.bf16.mxu0 0
        %7158 = vmatmul.mubr.bf16.gmra.mrb[0].mxu0 %v6512
        %v7159 = vpop.f32.mrb[0].mxu0
        %v7160 = vadd.f32 %v6348, %v7159
        %v7161 = vpop.f32.mrb[0].mxu0
        %v7162 = vpop.f32.mrb[0].mxu0
        %v7163 = vadd.f32 %v6348, %v7162
        %v7164 = vpop.f32.mrb[0].mxu0
        %7165 = vmatprep.mubr.bf16.mxu0 0
        %7166 = vmatmul.mubr.bf16.gmra.mrb[0].mxu0 %v6515
        %v7167 = vpop.f32.mrb[0].mxu0
        %v7168 = vadd.f32 %v6348, %v7167
        %v7169 = vpop.f32.mrb[0].mxu0
        %v7170 = vpop.f32.mrb[0].mxu0
        %v7171 = vadd.f32 %v6348, %v7170
        %v7172 = vpop.f32.mrb[0].mxu0
        %7173 = vmatprep.mubr.bf16.mxu0 0
        %7174 = vmatmul.mubr.bf16.gmra.mrb[0].mxu0 %v6518
        %v7175 = vpop.f32.mrb[0].mxu0
        %v7176 = vadd.f32 %v6348, %v7175
        %v7177 = vpop.f32.mrb[0].mxu0
        %v7178 = vpop.f32.mrb[0].mxu0
        %v7179 = vadd.f32 %v6348, %v7178
        %v7180 = vpop.f32.mrb[0].mxu0
        %7181 = vmatprep.mubr.bf16.mxu0 0
        %7182 = vmatmul.mubr.bf16.gmra.mrb[0].mxu0 %v6521
        %v7183 = vpop.f32.mrb[0].mxu0
        %v7184 = vadd.f32 %v6348, %v7183
        %v7185 = vpop.f32.mrb[0].mxu0
        %v7186 = vpop.f32.mrb[0].mxu0
        %v7187 = vadd.f32 %v6348, %v7186
        %v7188 = vpop.f32.mrb[0].mxu0
        %7189 = vmatprep.mubr.bf16.mxu0 0
        %7190 = vmatmul.mubr.bf16.gmra.mrb[0].mxu0 %v6524
        %v7191 = vpop.f32.mrb[0].mxu0
        %v7192 = vadd.f32 %v6348, %v7191
        %v7193 = vpop.f32.mrb[0].mxu0
        %v7194 = vpop.f32.mrb[0].mxu0
        %v7195 = vadd.f32 %v6348, %v7194
        %v7196 = vpop.f32.mrb[0].mxu0
        %7197 = vmatprep.mubr.bf16.mxu0 0
        %7198 = vmatmul.mubr.bf16.gmra.mrb[0].mxu0 %v6527
        %v7199 = vpop.f32.mrb[0].mxu0
        %v7200 = vadd.f32 %v6348, %v7199
        %v7201 = vpop.f32.mrb[0].mxu0
        %v7202 = vpop.f32.mrb[0].mxu0
        %v7203 = vadd.f32 %v6348, %v7202
        %v7204 = vpop.f32.mrb[0].mxu0
        %7205 = vmatprep.mubr.bf16.mxu0 0
        %7206 = vmatmul.mubr.bf16.gmra.mrb[0].mxu0 %v6530
        %v7207 = vpop.f32.mrb[0].mxu0
        %v7208 = vadd.f32 %v6348, %v7207
        %v7209 = vpop.f32.mrb[0].mxu0
        %v7210 = vpop.f32.mrb[0].mxu0
        %v7211 = vadd.f32 %v6348, %v7210
        %v7212 = vpop.f32.mrb[0].mxu0
        %7213 = vmatprep.mubr.bf16.mxu0 0
        %7214 = vmatmul.mubr.bf16.gmra.mrb[0].mxu0 %v6533
        %v7215 = vpop.f32.mrb[0].mxu0
        %v7216 = vadd.f32 %v6348, %v7215
        %v7217 = vpop.f32.mrb[0].mxu0
        %v7218 = vpop.f32.mrb[0].mxu0
        %v7219 = vadd.f32 %v6348, %v7218
        %v7220 = vpop.f32.mrb[0].mxu0
        %7221 = vmatprep.mubr.bf16.mxu0 0
        %7222 = vmatmul.mubr.bf16.gmra.mrb[0].mxu0 %v6536
        %v7223 = vpop.f32.mrb[0].mxu0
        %v7224 = vadd.f32 %v6348, %v7223
        %v7225 = vpop.f32.mrb[0].mxu0
        %v7226 = vpop.f32.mrb[0].mxu0
        %v7227 = vadd.f32 %v6348, %v7226
        %v7228 = vpop.f32.mrb[0].mxu0
        %7229 = vmatprep.mubr.bf16.mxu0 0
        %7230 = vmatmul.mubr.bf16.gmra.mrb[0].mxu0 %v6539
        %v7231 = vpop.f32.mrb[0].mxu0
        %v7232 = vadd.f32 %v6348, %v7231
        %v7233 = vpop.f32.mrb[0].mxu0
        %v7234 = vpop.f32.mrb[0].mxu0
        %v7235 = vadd.f32 %v6348, %v7234
        %v7236 = vpop.f32.mrb[0].mxu0
        %7237 = vmatprep.mubr.bf16.mxu0 0
        %7238 = vmatmul.mubr.bf16.gmra.mrb[0].mxu0 %v6542
        %v7239 = vpop.f32.mrb[0].mxu0
        %v7240 = vadd.f32 %v6348, %v7239
        %v7241 = vpop.f32.mrb[0].mxu0
        %v7242 = vpop.f32.mrb[0].mxu0
        %v7243 = vadd.f32 %v6348, %v7242
        %v7244 = vpop.f32.mrb[0].mxu0
        %7245 = vmatprep.mubr.bf16.mxu0 0
        %7246 = vmatmul.mubr.bf16.gmra.mrb[0].mxu0 %v6545
        %v7247 = vpop.f32.mrb[0].mxu0
        %v7248 = vadd.f32 %v6348, %v7247
        %v7249 = vpop.f32.mrb[0].mxu0
        %v7250 = vpop.f32.mrb[0].mxu0
        %v7251 = vadd.f32 %v6348, %v7250
        %v7252 = vpop.f32.mrb[0].mxu0
        %7253 = vmatprep.mubr.bf16.mxu0 0
        %7254 = vmatmul.mubr.bf16.gmra.mrb[0].mxu0 %v6548
        %v7255 = vpop.f32.mrb[0].mxu0
        %v7256 = vadd.f32 %v6348, %v7255
        %v7257 = vpop.f32.mrb[0].mxu0
        %v7258 = vpop.f32.mrb[0].mxu0
        %v7259 = vadd.f32 %v6348, %v7258
        %v7260 = vpop.f32.mrb[0].mxu0
        %7261 = vmatprep.mubr.bf16.mxu0 0
        %7262 = vmatmul.mubr.bf16.gmra.mrb[0].mxu0 %v6551
        %v7263 = vpop.f32.mrb[0].mxu0
        %v7264 = vadd.f32 %v6348, %v7263
        %v7265 = vpop.f32.mrb[0].mxu0
        %v7266 = vpop.f32.mrb[0].mxu0
        %v7267 = vadd.f32 %v6348, %v7266
        %v7268 = vpop.f32.mrb[0].mxu0
        %7269 = vmatprep.mubr.bf16.mxu0 0
        %7270 = vmatmul.mubr.bf16.gmra.mrb[0].mxu0 %v6554
        %v7271 = vpop.f32.mrb[0].mxu0
        %v7272 = vadd.f32 %v6348, %v7271
        %v7273 = vpop.f32.mrb[0].mxu0
        %v7274 = vpop.f32.mrb[0].mxu0
        %v7275 = vadd.f32 %v6348, %v7274
        %v7276 = vpop.f32.mrb[0].mxu0
        %7277 = vmatprep.mubr.bf16.mxu0 0
        %7278 = vmatmul.mubr.bf16.gmra.mrb[0].mxu0 %v6557
        %v7279 = vpop.f32.mrb[0].mxu0
        %v7280 = vadd.f32 %v6348, %v7279
        %v7281 = vpop.f32.mrb[0].mxu0
        %v7282 = vpop.f32.mrb[0].mxu0
        %v7283 = vadd.f32 %v6348, %v7282
        %v7284 = vpop.f32.mrb[0].mxu0
        %7285 = vmatprep.mubr.bf16.mxu0 0
        %7286 = vmatmul.mubr.bf16.gmra.mrb[0].mxu0 %v6560
        %v7287 = vpop.f32.mrb[0].mxu0
        %v7288 = vadd.f32 %v6348, %v7287
        %v7289 = vpop.f32.mrb[0].mxu0
        %v7290 = vpop.f32.mrb[0].mxu0
        %v7291 = vadd.f32 %v6348, %v7290
        %v7292 = vpop.f32.mrb[0].mxu0
        %7293 = vmatprep.mubr.bf16.mxu0 0
        %7294 = vmatmul.mubr.bf16.gmra.mrb[0].mxu0 %v6563
        %v7295 = vpop.f32.mrb[0].mxu0
        %v7296 = vadd.f32 %v6348, %v7295
        %v7297 = vpop.f32.mrb[0].mxu0
        %v7298 = vpop.f32.mrb[0].mxu0
        %v7299 = vadd.f32 %v6348, %v7298
        %v7300 = vpop.f32.mrb[0].mxu0
        %7301 = vmatprep.mubr.bf16.mxu0 0
        %7302 = vmatmul.mubr.bf16.gmra.mrb[0].mxu0 %v6566
        %v7303 = vpop.f32.mrb[0].mxu0
        %v7304 = vadd.f32 %v6348, %v7303
        %v7305 = vpop.f32.mrb[0].mxu0
        %v7306 = vpop.f32.mrb[0].mxu0
        %v7307 = vadd.f32 %v6348, %v7306
        %v7308 = vpop.f32.mrb[0].mxu0
        %7309 = vmatprep.mubr.bf16.mxu0 0
        %7310 = vmatmul.mubr.bf16.gmra.mrb[0].mxu0 %v6569
        %v7311 = vpop.f32.mrb[0].mxu0
        %v7312 = vadd.f32 %v6348, %v7311
        %v7313 = vpop.f32.mrb[0].mxu0
        %v7314 = vpop.f32.mrb[0].mxu0
        %v7315 = vadd.f32 %v6348, %v7314
        %v7316 = vpop.f32.mrb[0].mxu0
        %7317 = vmatprep.mubr.bf16.mxu0 0
        %7318 = vmatmul.mubr.bf16.gmra.mrb[0].mxu0 %v6572
        %v7319 = vpop.f32.mrb[0].mxu0
        %v7320 = vadd.f32 %v6348, %v7319
        %v7321 = vpop.f32.mrb[0].mxu0
        %v7322 = vpop.f32.mrb[0].mxu0
        %v7323 = vadd.f32 %v6348, %v7322
        %v7324 = vpop.f32.mrb[0].mxu0
        %7325 = vmatprep.mubr.bf16.mxu0 0
        %7326 = vmatmul.mubr.bf16.gmra.mrb[0].mxu0 %v6575
        %v7327 = vpop.f32.mrb[0].mxu0
        %v7328 = vadd.f32 %v6348, %v7327
        %v7329 = vpop.f32.mrb[0].mxu0
        %v7330 = vpop.f32.mrb[0].mxu0
        %v7331 = vadd.f32 %v6348, %v7330
        %v7332 = vpop.f32.mrb[0].mxu0
        %7333 = vmatprep.mubr.bf16.mxu0 0
        %7334 = vmatmul.mubr.bf16.gmra.mrb[0].mxu0 %v6578
        %v7335 = vpop.f32.mrb[0].mxu0
        %v7336 = vadd.f32 %v6348, %v7335
        %v7337 = vpop.f32.mrb[0].mxu0
        %v7338 = vpop.f32.mrb[0].mxu0
        %v7339 = vadd.f32 %v6348, %v7338
        %v7340 = vpop.f32.mrb[0].mxu0
        %7341 = vmatprep.mubr.bf16.mxu0 0
        %7342 = vmatmul.mubr.bf16.gmra.mrb[0].mxu0 %v6581
        %v7343 = vpop.f32.mrb[0].mxu0
        %v7344 = vadd.f32 %v6348, %v7343
        %v7345 = vpop.f32.mrb[0].mxu0
        %v7346 = vpop.f32.mrb[0].mxu0
        %v7347 = vadd.f32 %v6348, %v7346
        %v7348 = vpop.f32.mrb[0].mxu0
        %7349 = vmatprep.mubr.bf16.mxu0 0
        %7350 = vmatmul.mubr.bf16.gmra.mrb[0].mxu0 %v6584
        %v7351 = vpop.f32.mrb[0].mxu0
        %v7352 = vadd.f32 %v6348, %v7351
        %v7353 = vpop.f32.mrb[0].mxu0
        %v7354 = vpop.f32.mrb[0].mxu0
        %v7355 = vadd.f32 %v6348, %v7354
        %v7356 = vpop.f32.mrb[0].mxu0
        %7357 = vmatprep.mubr.bf16.mxu0 0
        %7358 = vmatmul.mubr.bf16.gmra.mrb[0].mxu0 %v6587
        %v7359 = vpop.f32.mrb[0].mxu0
        %v7360 = vadd.f32 %v6348, %v7359
        %v7361 = vpop.f32.mrb[0].mxu0
        %v7362 = vpop.f32.mrb[0].mxu0
        %v7363 = vadd.f32 %v6348, %v7362
        %v7364 = vpop.f32.mrb[0].mxu0
        %7365 = vmatprep.mubr.bf16.mxu0 0
        %7366 = vmatmul.mubr.bf16.gmra.mrb[0].mxu0 %v6590
        %v7367 = vpop.f32.mrb[0].mxu0
        %v7368 = vadd.f32 %v6348, %v7367
        %v7369 = vpop.f32.mrb[0].mxu0
        %v7370 = vpop.f32.mrb[0].mxu0
        %v7371 = vadd.f32 %v6348, %v7370
        %v7372 = vpop.f32.mrb[0].mxu0
        %7373 = vmatprep.mubr.bf16.mxu0 0
        %7374 = vmatmul.mubr.bf16.gmra.mrb[0].mxu0 %v6593
        %v7375 = vpop.f32.mrb[0].mxu0
        %v7376 = vadd.f32 %v6348, %v7375
        %v7377 = vpop.f32.mrb[0].mxu0
        %v7378 = vpop.f32.mrb[0].mxu0
        %v7379 = vadd.f32 %v6348, %v7378
        %v7380 = vpop.f32.mrb[0].mxu0
        %7381 = vmatprep.mubr.bf16.mxu0 0
        %7382 = vmatmul.mubr.bf16.gmra.mrb[0].mxu0 %v6596
        %v7383 = vpop.f32.mrb[0].mxu0
        %v7384 = vadd.f32 %v6348, %v7383
        %v7385 = vpop.f32.mrb[0].mxu0
        %v7386 = vpop.f32.mrb[0].mxu0
        %v7387 = vadd.f32 %v6348, %v7386
        %v7388 = vpop.f32.mrb[0].mxu0
        %7389 = vmatprep.mubr.bf16.mxu0 0
        %7390 = vmatmul.mubr.bf16.gmra.mrb[0].mxu0 %v6599
        %v7391 = vpop.f32.mrb[0].mxu0
        %v7392 = vadd.f32 %v6348, %v7391
        %v7393 = vpop.f32.mrb[0].mxu0
        %v7394 = vpop.f32.mrb[0].mxu0
        %v7395 = vadd.f32 %v6348, %v7394
        %v7396 = vpop.f32.mrb[0].mxu0
        %7397 = vmatprep.mubr.bf16.mxu0 0
        %7398 = vmatmul.mubr.bf16.gmra.mrb[0].mxu0 %v6602
        %v7399 = vpop.f32.mrb[0].mxu0
        %v7400 = vadd.f32 %v6348, %v7399
        %v7401 = vpop.f32.mrb[0].mxu0
        %v7402 = vpop.f32.mrb[0].mxu0
        %v7403 = vadd.f32 %v6348, %v7402
        %v7404 = vpop.f32.mrb[0].mxu0
        %7405 = vmatprep.mubr.bf16.mxu0 0
        %7406 = vmatmul.mubr.bf16.gmra.mrb[0].mxu0 %v6605
        %v7407 = vpop.f32.mrb[0].mxu0
        %v7408 = vadd.f32 %v6348, %v7407
        %v7409 = vpop.f32.mrb[0].mxu0
        %v7410 = vpop.f32.mrb[0].mxu0
        %v7411 = vadd.f32 %v6348, %v7410
        %v7412 = vpop.f32.mrb[0].mxu0
        %7413 = vmatprep.mubr.bf16.mxu0 0
        %7414 = vmatmul.mubr.bf16.gmra.mrb[0].mxu0 %v6608
        %v7415 = vpop.f32.mrb[0].mxu0
        %v7416 = vadd.f32 %v6348, %v7415
        %v7417 = vpop.f32.mrb[0].mxu0
        %v7418 = vpop.f32.mrb[0].mxu0
        %v7419 = vadd.f32 %v6348, %v7418
        %v7420 = vpop.f32.mrb[0].mxu0
        %7421 = vmatprep.mubr.bf16.mxu0 0
        %7422 = vmatmul.mubr.bf16.gmra.mrb[0].mxu0 %v6611
        %v7423 = vpop.f32.mrb[0].mxu0
        %v7424 = vadd.f32 %v6348, %v7423
        %v7425 = vpop.f32.mrb[0].mxu0
        %v7426 = vpop.f32.mrb[0].mxu0
        %v7427 = vadd.f32 %v6348, %v7426
        %v7428 = vpop.f32.mrb[0].mxu0
        %7429 = vmatprep.mubr.bf16.mxu0 0
        %7430 = vmatmul.mubr.bf16.gmra.mrb[0].mxu0 %v6614
        %v7431 = vpop.f32.mrb[0].mxu0
        %v7432 = vadd.f32 %v6348, %v7431
        %v7433 = vpop.f32.mrb[0].mxu0
        %v7434 = vpop.f32.mrb[0].mxu0
        %v7435 = vadd.f32 %v6348, %v7434
        %v7436 = vpop.f32.mrb[0].mxu0
        %7437 = vmatprep.mubr.bf16.mxu0 0
        %7438 = vmatmul.mubr.bf16.gmra.mrb[0].mxu0 %v6617
        %v7439 = vpop.f32.mrb[0].mxu0
        %v7440 = vadd.f32 %v6348, %v7439
        %v7441 = vpop.f32.mrb[0].mxu0
        %v7442 = vpop.f32.mrb[0].mxu0
        %v7443 = vadd.f32 %v6348, %v7442
        %v7444 = vpop.f32.mrb[0].mxu0
        %7445 = vmatprep.mubr.bf16.mxu0 0
        %7446 = vmatmul.mubr.bf16.gmra.mrb[0].mxu0 %v6620
        %v7447 = vpop.f32.mrb[0].mxu0
        %v7448 = vadd.f32 %v6348, %v7447
        %v7449 = vpop.f32.mrb[0].mxu0
        %v7450 = vpop.f32.mrb[0].mxu0
        %v7451 = vadd.f32 %v6348, %v7450
        %v7452 = vpop.f32.mrb[0].mxu0
        %7453 = vmatprep.mubr.bf16.mxu0 0
        %7454 = vmatmul.mubr.bf16.gmra.mrb[0].mxu0 %v6623
        %v7455 = vpop.f32.mrb[0].mxu0
        %v7456 = vadd.f32 %v6348, %v7455
        %v7457 = vpop.f32.mrb[0].mxu0
        %v7458 = vpop.f32.mrb[0].mxu0
        %v7459 = vadd.f32 %v6348, %v7458
        %v7460 = vpop.f32.mrb[0].mxu0
        %7461 = vmatprep.mubr.bf16.mxu0 0
        %7462 = vmatmul.mubr.bf16.gmra.mrb[0].mxu0 %v6626
        %v7463 = vpop.f32.mrb[0].mxu0
        %v7464 = vadd.f32 %v6348, %v7463
        %v7465 = vpop.f32.mrb[0].mxu0
        %v7466 = vpop.f32.mrb[0].mxu0
        %v7467 = vadd.f32 %v6348, %v7466
        %v7468 = vpop.f32.mrb[0].mxu0
        %7469 = vmatprep.mubr.bf16.mxu0 0
        %7470 = vmatmul.mubr.bf16.gmra.mrb[0].mxu0 %v6629
        %v7471 = vpop.f32.mrb[0].mxu0
        %v7472 = vadd.f32 %v6348, %v7471
        %v7473 = vpop.f32.mrb[0].mxu0
        %v7474 = vpop.f32.mrb[0].mxu0
        %v7475 = vadd.f32 %v6348, %v7474
        %v7476 = vpop.f32.mrb[0].mxu0
        %7477 = vmatprep.mubr.bf16.mxu0 0
        %7478 = vmatmul.mubr.bf16.gmra.mrb[0].mxu0 %v6632
        %v7479 = vpop.f32.mrb[0].mxu0
        %v7480 = vadd.f32 %v6348, %v7479
        %v7481 = vpop.f32.mrb[0].mxu0
        %v7482 = vpop.f32.mrb[0].mxu0
        %v7483 = vadd.f32 %v6348, %v7482
        %v7484 = vpop.f32.mrb[0].mxu0
        %7485 = vmatprep.mubr.bf16.mxu0 0
        %7486 = vmatmul.mubr.bf16.gmra.mrb[0].mxu0 %v6635
        %v7487 = vpop.f32.mrb[0].mxu0
        %v7488 = vadd.f32 %v6348, %v7487
        %v7489 = vpop.f32.mrb[0].mxu0
        %v7490 = vpop.f32.mrb[0].mxu0
        %v7491 = vadd.f32 %v6348, %v7490
        %v7492 = vpop.f32.mrb[0].mxu0
        %7493 = vmatprep.mubr.bf16.mxu0 0
        %7494 = vmatmul.mubr.bf16.gmra.mrb[0].mxu0 %v6638
        %v7495 = vpop.f32.mrb[0].mxu0
        %v7496 = vadd.f32 %v6348, %v7495
        %v7497 = vpop.f32.mrb[0].mxu0
        %v7498 = vpop.f32.mrb[0].mxu0
        %v7499 = vadd.f32 %v6348, %v7498
        %v7500 = vpop.f32.mrb[0].mxu0
        %7501 = vmatprep.mubr.bf16.mxu0 0
        %7502 = vmatmul.mubr.bf16.gmra.mrb[0].mxu0 %v6641
        %v7503 = vpop.f32.mrb[0].mxu0
        %v7504 = vadd.f32 %v6348, %v7503
        %v7505 = vpop.f32.mrb[0].mxu0
        %v7506 = vpop.f32.mrb[0].mxu0
        %v7507 = vadd.f32 %v6348, %v7506
        %v7508 = vpop.f32.mrb[0].mxu0
        %7509 = vmatprep.mubr.bf16.mxu0 0
        %7510 = vmatmul.mubr.bf16.gmra.mrb[0].mxu0 %v6644
        %v7511 = vpop.f32.mrb[0].mxu0
        %v7512 = vadd.f32 %v6348, %v7511
        %v7513 = vpop.f32.mrb[0].mxu0
        %v7514 = vpop.f32.mrb[0].mxu0
        %v7515 = vadd.f32 %v6348, %v7514
        %v7516 = vpop.f32.mrb[0].mxu0
        %7517 = vmatprep.mubr.bf16.mxu0 0
        %7518 = vmatmul.mubr.bf16.gmra.mrb[0].mxu0 %v6647
        %v7519 = vpop.f32.mrb[0].mxu0
        %v7520 = vadd.f32 %v6348, %v7519
        %v7521 = vpop.f32.mrb[0].mxu0
        %v7522 = vpop.f32.mrb[0].mxu0
        %v7523 = vadd.f32 %v6348, %v7522
        %v7524 = vpop.f32.mrb[0].mxu0
        %7525 = vmatprep.mubr.bf16.mxu0 0
        %7526 = vmatmul.mubr.bf16.gmra.mrb[0].mxu0 %v6650
        %v7527 = vpop.f32.mrb[0].mxu0
        %v7528 = vadd.f32 %v6348, %v7527
        %v7529 = vpop.f32.mrb[0].mxu0
        %v7530 = vpop.f32.mrb[0].mxu0
        %v7531 = vadd.f32 %v6348, %v7530
        %v7532 = vpop.f32.mrb[0].mxu0
        %7533 = vmatprep.mubr.bf16.mxu0 0
        %7534 = vmatmul.mubr.bf16.gmra.mrb[0].mxu0 %v6653
        %v7535 = vpop.f32.mrb[0].mxu0
        %v7536 = vadd.f32 %v6348, %v7535
        %v7537 = vpop.f32.mrb[0].mxu0
        %v7538 = vpop.f32.mrb[0].mxu0
        %v7539 = vadd.f32 %v6348, %v7538
        %v7540 = vpop.f32.mrb[0].mxu0
        %7541 = vmatprep.mubr.bf16.mxu0 0
        %7542 = vmatmul.mubr.bf16.gmra.mrb[0].mxu0 %v6656
        %v7543 = vpop.f32.mrb[0].mxu0
        %v7544 = vadd.f32 %v6348, %v7543
        %v7545 = vpop.f32.mrb[0].mxu0
        %v7546 = vpop.f32.mrb[0].mxu0
        %v7547 = vadd.f32 %v6348, %v7546
        %v7548 = vpop.f32.mrb[0].mxu0
        %7549 = vmatprep.mubr.bf16.mxu0 0
        %7550 = vmatmul.mubr.bf16.gmra.mrb[0].mxu0 %v6659
        %v7551 = vpop.f32.mrb[0].mxu0
        %v7552 = vadd.f32 %v6348, %v7551
        %v7553 = vpop.f32.mrb[0].mxu0
        %v7554 = vpop.f32.mrb[0].mxu0
        %v7555 = vadd.f32 %v6348, %v7554
        %v7556 = vpop.f32.mrb[0].mxu0
        %7557 = vmatprep.mubr.bf16.mxu0 0
        %7558 = vmatmul.mubr.bf16.gmra.mrb[0].mxu0 %v6662
        %v7559 = vpop.f32.mrb[0].mxu0
        %v7560 = vadd.f32 %v6348, %v7559
        %v7561 = vpop.f32.mrb[0].mxu0
        %v7562 = vpop.f32.mrb[0].mxu0
        %v7563 = vadd.f32 %v6348, %v7562
        %v7564 = vpop.f32.mrb[0].mxu0
        %7565 = vmatprep.mubr.bf16.mxu0 0
        %7566 = vmatmul.mubr.bf16.gmra.mrb[0].mxu0 %v6665
        %v7567 = vpop.f32.mrb[0].mxu0
        %v7568 = vadd.f32 %v6348, %v7567
        %v7569 = vpop.f32.mrb[0].mxu0
        %v7570 = vpop.f32.mrb[0].mxu0
        %v7571 = vadd.f32 %v6348, %v7570
        %v7572 = vpop.f32.mrb[0].mxu0
        %7573 = vmatprep.mubr.bf16.mxu0 0
        %7574 = vmatmul.mubr.bf16.gmra.mrb[0].mxu0 %v6668
        %v7575 = vpop.f32.mrb[0].mxu0
        %v7576 = vadd.f32 %v6348, %v7575
        %v7577 = vpop.f32.mrb[0].mxu0
        %v7578 = vpop.f32.mrb[0].mxu0
        %v7579 = vadd.f32 %v6348, %v7578
        %v7580 = vpop.f32.mrb[0].mxu0
        %7581 = vmatprep.mubr.bf16.mxu0 0
        %7582 = vmatmul.mubr.bf16.gmra.mrb[0].mxu0 %v6671
        %v7583 = vpop.f32.mrb[0].mxu0
        %v7584 = vadd.f32 %v6348, %v7583
        %v7585 = vpop.f32.mrb[0].mxu0
        %v7586 = vpop.f32.mrb[0].mxu0
        %v7587 = vadd.f32 %v6348, %v7586
        %v7588 = vpop.f32.mrb[0].mxu0
        %7589 = vmatprep.mubr.bf16.mxu0 0
        %7590 = vmatmul.mubr.bf16.gmra.mrb[0].mxu0 %v6674
        %v7591 = vpop.f32.mrb[0].mxu0
        %v7592 = vadd.f32 %v6348, %v7591
        %v7593 = vpop.f32.mrb[0].mxu0
        %v7594 = vpop.f32.mrb[0].mxu0
        %v7595 = vadd.f32 %v6348, %v7594
        %v7596 = vpop.f32.mrb[0].mxu0
        %7597 = vmatprep.mubr.bf16.mxu0 0
        %7598 = vmatmul.mubr.bf16.gmra.mrb[0].mxu0 %v6677
        %v7599 = vpop.f32.mrb[0].mxu0
        %v7600 = vadd.f32 %v6348, %v7599
        %v7601 = vpop.f32.mrb[0].mxu0
        %v7602 = vpop.f32.mrb[0].mxu0
        %v7603 = vadd.f32 %v6348, %v7602
        %v7604 = vpop.f32.mrb[0].mxu0
        %7605 = vmatprep.mubr.bf16.mxu0 0
        %7606 = vmatmul.mubr.bf16.gmra.mrb[0].mxu0 %v6680
        %v7607 = vpop.f32.mrb[0].mxu0
        %v7608 = vadd.f32 %v6348, %v7607
        %v7609 = vpop.f32.mrb[0].mxu0
        %v7610 = vpop.f32.mrb[0].mxu0
        %v7611 = vadd.f32 %v6348, %v7610
        %v7612 = vpop.f32.mrb[0].mxu0
        %7613 = vmatprep.mubr.bf16.mxu0 0
        %7614 = vmatmul.mubr.bf16.gmra.mrb[0].mxu0 %v6683
        %v7615 = vpop.f32.mrb[0].mxu0
        %v7616 = vadd.f32 %v6348, %v7615
        %v7617 = vpop.f32.mrb[0].mxu0
        %v7618 = vpop.f32.mrb[0].mxu0
        %v7619 = vadd.f32 %v6348, %v7618
        %v7620 = vpop.f32.mrb[0].mxu0
        %7621 = vmatprep.mubr.bf16.mxu0 0
        %7622 = vmatmul.mubr.bf16.gmra.mrb[0].mxu0 %v6686
        %v7623 = vpop.f32.mrb[0].mxu0
        %v7624 = vadd.f32 %v6348, %v7623
        %v7625 = vpop.f32.mrb[0].mxu0
        %v7626 = vpop.f32.mrb[0].mxu0
        %v7627 = vadd.f32 %v6348, %v7626
        %v7628 = vpop.f32.mrb[0].mxu0
        %7629 = vmatprep.mubr.bf16.mxu0 0
        %7630 = vmatmul.mubr.bf16.gmra.mrb[0].mxu0 %v6689
        %v7631 = vpop.f32.mrb[0].mxu0
        %v7632 = vadd.f32 %v6348, %v7631
        %v7633 = vpop.f32.mrb[0].mxu0
        %v7634 = vpop.f32.mrb[0].mxu0
        %v7635 = vadd.f32 %v6348, %v7634
        %v7636 = vpop.f32.mrb[0].mxu0
        %7637 = vmatprep.mubr.bf16.mxu0 0
        %7638 = vmatmul.mubr.bf16.gmra.mrb[0].mxu0 %v6692
        %v7639 = vpop.f32.mrb[0].mxu0
        %v7640 = vadd.f32 %v6348, %v7639
        %v7641 = vpop.f32.mrb[0].mxu0
        %v7642 = vpop.f32.mrb[0].mxu0
        %v7643 = vadd.f32 %v6348, %v7642
        %v7644 = vpop.f32.mrb[0].mxu0
        %7645 = vmatprep.mubr.bf16.mxu0 0
        %7646 = vmatmul.mubr.bf16.gmra.mrb[0].mxu0 %v6695
        %v7647 = vpop.f32.mrb[0].mxu0
        %v7648 = vadd.f32 %v6348, %v7647
        %v7649 = vpop.f32.mrb[0].mxu0
        %v7650 = vpop.f32.mrb[0].mxu0
        %v7651 = vadd.f32 %v6348, %v7650
        %v7652 = vpop.f32.mrb[0].mxu0
        %7653 = vmatprep.mubr.bf16.mxu0 0
        %7654 = vmatmul.mubr.bf16.gmra.mrb[0].mxu0 %v6698
        %v7655 = vpop.f32.mrb[0].mxu0
        %v7656 = vadd.f32 %v6348, %v7655
        %v7657 = vpop.f32.mrb[0].mxu0
        %v7658 = vpop.f32.mrb[0].mxu0
        %v7659 = vadd.f32 %v6348, %v7658
        %v7660 = vpop.f32.mrb[0].mxu0
        %7661 = vmatprep.mubr.bf16.mxu0 0
        %7662 = vmatmul.mubr.bf16.gmra.mrb[0].mxu0 %v6701
        %v7663 = vpop.f32.mrb[0].mxu0
        %v7664 = vadd.f32 %v6348, %v7663
        %v7665 = vpop.f32.mrb[0].mxu0
        %v7666 = vpop.f32.mrb[0].mxu0
        %v7667 = vadd.f32 %v6348, %v7666
        %v7668 = vpop.f32.mrb[0].mxu0
        %7669 = vmatprep.mubr.bf16.mxu0 0
        %7670 = vmatmul.mubr.bf16.gmra.mrb[0].mxu0 %v6704
        %v7671 = vpop.f32.mrb[0].mxu0
        %v7672 = vadd.f32 %v6348, %v7671
        %v7673 = vpop.f32.mrb[0].mxu0
        %v7674 = vpop.f32.mrb[0].mxu0
        %v7675 = vadd.f32 %v6348, %v7674
        %v7676 = vpop.f32.mrb[0].mxu0
        %7677 = vmatprep.mubr.bf16.mxu0 0
        %7678 = vmatmul.mubr.bf16.gmra.mrb[0].mxu0 %v6707
        %v7679 = vpop.f32.mrb[0].mxu0
        %v7680 = vadd.f32 %v6348, %v7679
        %v7681 = vpop.f32.mrb[0].mxu0
        %v7682 = vpop.f32.mrb[0].mxu0
        %v7683 = vadd.f32 %v6348, %v7682
        %v7684 = vpop.f32.mrb[0].mxu0
        %7685 = vmatprep.mubr.bf16.mxu0 0
        %7686 = vmatmul.mubr.bf16.gmra.mrb[0].mxu0 %v6710
        %v7687 = vpop.f32.mrb[0].mxu0
        %v7688 = vadd.f32 %v6348, %v7687
        %v7689 = vpop.f32.mrb[0].mxu0
        %v7690 = vpop.f32.mrb[0].mxu0
        %v7691 = vadd.f32 %v6348, %v7690
        %v7692 = vpop.f32.mrb[0].mxu0
        %7693 = vmatprep.mubr.bf16.mxu0 0
        %7694 = vmatmul.mubr.bf16.gmra.mrb[0].mxu0 %v6713
        %v7695 = vpop.f32.mrb[0].mxu0
        %v7696 = vadd.f32 %v6348, %v7695
        %v7697 = vpop.f32.mrb[0].mxu0
        %v7698 = vpop.f32.mrb[0].mxu0
        %v7699 = vadd.f32 %v6348, %v7698
        %v7700 = vpop.f32.mrb[0].mxu0
        %7701 = vmatprep.mubr.bf16.mxu0 0
        %7702 = vmatmul.mubr.bf16.gmra.mrb[0].mxu0 %v6716
        %v7703 = vpop.f32.mrb[0].mxu0
        %v7704 = vadd.f32 %v6348, %v7703
        %v7705 = vpop.f32.mrb[0].mxu0
        %v7706 = vpop.f32.mrb[0].mxu0
        %v7707 = vadd.f32 %v6348, %v7706
        %v7708 = vpop.f32.mrb[0].mxu0
        %7709 = vmatprep.mubr.bf16.mxu0 0
        %7710 = vmatmul.mubr.bf16.gmra.mrb[0].mxu0 %v6719
        %v7711 = vpop.f32.mrb[0].mxu0
        %v7712 = vadd.f32 %v6348, %v7711
        %v7713 = vpop.f32.mrb[0].mxu0
        %v7714 = vpop.f32.mrb[0].mxu0
        %v7715 = vadd.f32 %v6348, %v7714
        %v7716 = vpop.f32.mrb[0].mxu0
        %7717 = vmatprep.mubr.bf16.mxu0 0
        %7718 = vmatmul.mubr.bf16.gmra.mrb[0].mxu0 %v6722
        %v7719 = vpop.f32.mrb[0].mxu0
        %v7720 = vadd.f32 %v6348, %v7719
        %v7721 = vpop.f32.mrb[0].mxu0
        %v7722 = vpop.f32.mrb[0].mxu0
        %v7723 = vadd.f32 %v6348, %v7722
        %v7724 = vpop.f32.mrb[0].mxu0
        %7725 = vmatprep.mubr.bf16.mxu0 0
        %7726 = vmatmul.mubr.bf16.gmra.mrb[0].mxu0 %v6725
        %v7727 = vpop.f32.mrb[0].mxu0
        %v7728 = vadd.f32 %v6348, %v7727
        %v7729 = vpop.f32.mrb[0].mxu0
        %v7730 = vpop.f32.mrb[0].mxu0
        %v7731 = vadd.f32 %v6348, %v7730
        %v7732 = vpop.f32.mrb[0].mxu0
        %7733 = vmatprep.mubr.bf16.mxu0 0
        %7734 = vmatmul.mubr.bf16.gmra.mrb[0].mxu0 %v6728
        %v7735 = vpop.f32.mrb[0].mxu0
        %v7736 = vadd.f32 %v6348, %v7735
        %v7737 = vpop.f32.mrb[0].mxu0
        %v7738 = vpop.f32.mrb[0].mxu0
        %v7739 = vadd.f32 %v6348, %v7738
        %v7740 = vpop.f32.mrb[0].mxu0
        %7741 = vmatprep.mubr.bf16.mxu0 0
        %7742 = vmatmul.mubr.bf16.gmra.mrb[0].mxu0 %v6731
        %v7743 = vpop.f32.mrb[0].mxu0
        %v7744 = vadd.f32 %v6348, %v7743
        %v7745 = vpop.f32.mrb[0].mxu0
        %v7746 = vpop.f32.mrb[0].mxu0
        %v7747 = vadd.f32 %v6348, %v7746
        %v7748 = vpop.f32.mrb[0].mxu0
        %7749 = vmatprep.mubr.bf16.mxu0 0
        %7750 = vmatmul.mubr.bf16.gmra.mrb[0].mxu0 %v6734
        %v7751 = vpop.f32.mrb[0].mxu0
        %v7752 = vadd.f32 %v6348, %v7751
        %v7753 = vpop.f32.mrb[0].mxu0
        %v7754 = vpop.f32.mrb[0].mxu0
        %v7755 = vadd.f32 %v6348, %v7754
        %v7756 = vpop.f32.mrb[0].mxu0
        %7757 = vmatprep.mubr.bf16.mxu0 0
        %7758 = vmatmul.mubr.bf16.gmra.mrb[0].mxu0 %v6737
        %v7759 = vpop.f32.mrb[0].mxu0
        %v7760 = vadd.f32 %v6348, %v7759
        %v7761 = vpop.f32.mrb[0].mxu0
        %v7762 = vpop.f32.mrb[0].mxu0
        %v7763 = vadd.f32 %v6348, %v7762
        %v7764 = vpop.f32.mrb[0].mxu0
        %7765 = vmatprep.mubr.bf16.mxu0 0
        %7766 = vmatmul.mubr.bf16.gmra.mrb[0].mxu0 %v6740
        %v7767 = vpop.f32.mrb[0].mxu0
        %v7768 = vadd.f32 %v6348, %v7767
        %v7769 = vpop.f32.mrb[0].mxu0
        %v7770 = vpop.f32.mrb[0].mxu0
        %v7771 = vadd.f32 %v6348, %v7770
        %v7772 = vpop.f32.mrb[0].mxu0
        %7773 = vmatprep.mubr.bf16.mxu0 0
        %7774 = vmatmul.mubr.bf16.gmra.mrb[0].mxu0 %v6743
        %v7775 = vpop.f32.mrb[0].mxu0
        %v7776 = vadd.f32 %v6348, %v7775
        %v7777 = vpop.f32.mrb[0].mxu0
        %v7778 = vpop.f32.mrb[0].mxu0
        %v7779 = vadd.f32 %v6348, %v7778
        %v7780 = vpop.f32.mrb[0].mxu0
        %7781 = vmatprep.mubr.bf16.mxu0 0
        %7782 = vmatmul.mubr.bf16.gmra.mrb[0].mxu0 %v6746
        %v7783 = vpop.f32.mrb[0].mxu0
        %v7784 = vadd.f32 %v6348, %v7783
        %v7785 = vpop.f32.mrb[0].mxu0
        %v7786 = vpop.f32.mrb[0].mxu0
        %v7787 = vadd.f32 %v6348, %v7786
        %v7788 = vpop.f32.mrb[0].mxu0
        %7789 = vmatprep.mubr.bf16.mxu0 0
        %7790 = vmatmul.mubr.bf16.gmra.mrb[0].mxu0 %v6749
        %v7791 = vpop.f32.mrb[0].mxu0
        %v7792 = vadd.f32 %v6348, %v7791
        %v7793 = vpop.f32.mrb[0].mxu0
        %v7794 = vpop.f32.mrb[0].mxu0
        %v7795 = vadd.f32 %v6348, %v7794
        %v7796 = vpop.f32.mrb[0].mxu0
        %7797 = vmatprep.mubr.bf16.mxu0 0
        %7798 = vmatmul.mubr.bf16.gmra.mrb[0].mxu0 %v6752
        %v7799 = vpop.f32.mrb[0].mxu0
        %v7800 = vadd.f32 %v6348, %v7799
        %v7801 = vpop.f32.mrb[0].mxu0
        %v7802 = vpop.f32.mrb[0].mxu0
        %v7803 = vadd.f32 %v6348, %v7802
        %v7804 = vpop.f32.mrb[0].mxu0
        %7805 = vmatprep.mubr.bf16.mxu0 0
        %7806 = vmatmul.mubr.bf16.gmra.mrb[0].mxu0 %v6755
        %v7807 = vpop.f32.mrb[0].mxu0
        %v7808 = vadd.f32 %v6348, %v7807
        %v7809 = vpop.f32.mrb[0].mxu0
        %v7810 = vpop.f32.mrb[0].mxu0
        %v7811 = vadd.f32 %v6348, %v7810
        %v7812 = vpop.f32.mrb[0].mxu0
        %7813 = vdwg.mxu0
        %v7814 = vmax.f32 %v6792, 0.0
        %v7815 = vmax.f32 %v6795, 0.0
        %v7816 = vmax.f32 %v6800, 0.0
        %v7817 = vmax.f32 %v6803, 0.0
        %v7818 = vmax.f32 %v6808, 0.0
        %v7819 = vmax.f32 %v6811, 0.0
        %v7820 = vmax.f32 %v6816, 0.0
        %v7821 = vmax.f32 %v6819, 0.0
        %v7822 = vmax.f32 %v6824, 0.0
        %v7823 = vmax.f32 %v6827, 0.0
        %v7824 = vmax.f32 %v6832, 0.0
        %v7825 = vmax.f32 %v6835, 0.0
        %v7826 = vmax.f32 %v6840, 0.0
        %v7827 = vmax.f32 %v6843, 0.0
        %v7828 = vmax.f32 %v6848, 0.0
        %v7829 = vmax.f32 %v6851, 0.0
        %v7830 = vmax.f32 %v6856, 0.0
        %v7831 = vmax.f32 %v6859, 0.0
        %v7832 = vmax.f32 %v6864, 0.0
        %v7833 = vmax.f32 %v6867, 0.0
        %v7834 = vmax.f32 %v6872, 0.0
        %v7835 = vmax.f32 %v6875, 0.0
        %v7836 = vmax.f32 %v6880, 0.0
        %v7837 = vmax.f32 %v6883, 0.0
        %v7838 = vmax.f32 %v6888, 0.0
        %v7839 = vmax.f32 %v6891, 0.0
        %v7840 = vmax.f32 %v6896, 0.0
        %v7841 = vmax.f32 %v6899, 0.0
        %v7842 = vmax.f32 %v6904, 0.0
        %v7843 = vmax.f32 %v6907, 0.0
        %v7844 = vmax.f32 %v6912, 0.0
        %v7845 = vmax.f32 %v6915, 0.0
        %v7846 = vmax.f32 %v6920, 0.0
        %v7847 = vmax.f32 %v6923, 0.0
        %v7848 = vmax.f32 %v6928, 0.0
        %v7849 = vmax.f32 %v6931, 0.0
        %v7850 = vmax.f32 %v6936, 0.0
        %v7851 = vmax.f32 %v6939, 0.0
        %v7852 = vmax.f32 %v6944, 0.0
        %v7853 = vmax.f32 %v6947, 0.0
        %v7854 = vmax.f32 %v6952, 0.0
        %v7855 = vmax.f32 %v6955, 0.0
        %v7856 = vmax.f32 %v6960, 0.0
        %v7857 = vmax.f32 %v6963, 0.0
        %v7858 = vmax.f32 %v6968, 0.0
        %v7859 = vmax.f32 %v6971, 0.0
        %v7860 = vmax.f32 %v6976, 0.0
        %v7861 = vmax.f32 %v6979, 0.0
        %v7862 = vmax.f32 %v6984, 0.0
        %v7863 = vmax.f32 %v6987, 0.0
        %v7864 = vmax.f32 %v6992, 0.0
        %v7865 = vmax.f32 %v6995, 0.0
        %v7866 = vmax.f32 %v7000, 0.0
        %v7867 = vmax.f32 %v7003, 0.0
        %v7868 = vmax.f32 %v7008, 0.0
        %v7869 = vmax.f32 %v7011, 0.0
        %v7870 = vmax.f32 %v7016, 0.0
        %v7871 = vmax.f32 %v7019, 0.0
        %v7872 = vmax.f32 %v7024, 0.0
        %v7873 = vmax.f32 %v7027, 0.0
        %v7874 = vmax.f32 %v7032, 0.0
        %v7875 = vmax.f32 %v7035, 0.0
        %v7876 = vmax.f32 %v7040, 0.0
        %v7877 = vmax.f32 %v7043, 0.0
        %v7878 = vmax.f32 %v7048, 0.0
        %v7879 = vmax.f32 %v7051, 0.0
        %v7880 = vmax.f32 %v7056, 0.0
        %v7881 = vmax.f32 %v7059, 0.0
        %v7882 = vmax.f32 %v7064, 0.0
        %v7883 = vmax.f32 %v7067, 0.0
        %v7884 = vmax.f32 %v7072, 0.0
        %v7885 = vmax.f32 %v7075, 0.0
        %v7886 = vmax.f32 %v7080, 0.0
        %v7887 = vmax.f32 %v7083, 0.0
        %v7888 = vmax.f32 %v7088, 0.0
        %v7889 = vmax.f32 %v7091, 0.0
        %v7890 = vmax.f32 %v7096, 0.0
        %v7891 = vmax.f32 %v7099, 0.0
        %v7892 = vmax.f32 %v7104, 0.0
        %v7893 = vmax.f32 %v7107, 0.0
        %v7894 = vmax.f32 %v7112, 0.0
        %v7895 = vmax.f32 %v7115, 0.0
        %v7896 = vmax.f32 %v7120, 0.0
        %v7897 = vmax.f32 %v7123, 0.0
        %v7898 = vmax.f32 %v7128, 0.0
        %v7899 = vmax.f32 %v7131, 0.0
        %v7900 = vmax.f32 %v7136, 0.0
        %v7901 = vmax.f32 %v7139, 0.0
        %v7902 = vmax.f32 %v7144, 0.0
        %v7903 = vmax.f32 %v7147, 0.0
        %v7904 = vmax.f32 %v7152, 0.0
        %v7905 = vmax.f32 %v7155, 0.0
        %v7906 = vmax.f32 %v7160, 0.0
        %v7907 = vmax.f32 %v7163, 0.0
        %v7908 = vmax.f32 %v7168, 0.0
        %v7909 = vmax.f32 %v7171, 0.0
        %v7910 = vmax.f32 %v7176, 0.0
        %v7911 = vmax.f32 %v7179, 0.0
        %v7912 = vmax.f32 %v7184, 0.0
        %v7913 = vmax.f32 %v7187, 0.0
        %v7914 = vmax.f32 %v7192, 0.0
        %v7915 = vmax.f32 %v7195, 0.0
        %v7916 = vmax.f32 %v7200, 0.0
        %v7917 = vmax.f32 %v7203, 0.0
        %v7918 = vmax.f32 %v7208, 0.0
        %v7919 = vmax.f32 %v7211, 0.0
        %v7920 = vmax.f32 %v7216, 0.0
        %v7921 = vmax.f32 %v7219, 0.0
        %v7922 = vmax.f32 %v7224, 0.0
        %v7923 = vmax.f32 %v7227, 0.0
        %v7924 = vmax.f32 %v7232, 0.0
        %v7925 = vmax.f32 %v7235, 0.0
        %v7926 = vmax.f32 %v7240, 0.0
        %v7927 = vmax.f32 %v7243, 0.0
        %v7928 = vmax.f32 %v7248, 0.0
        %v7929 = vmax.f32 %v7251, 0.0
        %v7930 = vmax.f32 %v7256, 0.0
        %v7931 = vmax.f32 %v7259, 0.0
        %v7932 = vmax.f32 %v7264, 0.0
        %v7933 = vmax.f32 %v7267, 0.0
        %v7934 = vmax.f32 %v7272, 0.0
        %v7935 = vmax.f32 %v7275, 0.0
        %v7936 = vmax.f32 %v7280, 0.0
        %v7937 = vmax.f32 %v7283, 0.0
        %v7938 = vmax.f32 %v7288, 0.0
        %v7939 = vmax.f32 %v7291, 0.0
        %v7940 = vmax.f32 %v7296, 0.0
        %v7941 = vmax.f32 %v7299, 0.0
        %v7942 = vmax.f32 %v7304, 0.0
        %v7943 = vmax.f32 %v7307, 0.0
        %v7944 = vmax.f32 %v7312, 0.0
        %v7945 = vmax.f32 %v7315, 0.0
        %v7946 = vmax.f32 %v7320, 0.0
        %v7947 = vmax.f32 %v7323, 0.0
        %v7948 = vmax.f32 %v7328, 0.0
        %v7949 = vmax.f32 %v7331, 0.0
        %v7950 = vmax.f32 %v7336, 0.0
        %v7951 = vmax.f32 %v7339, 0.0
        %v7952 = vmax.f32 %v7344, 0.0
        %v7953 = vmax.f32 %v7347, 0.0
        %v7954 = vmax.f32 %v7352, 0.0
        %v7955 = vmax.f32 %v7355, 0.0
        %v7956 = vmax.f32 %v7360, 0.0
        %v7957 = vmax.f32 %v7363, 0.0
        %v7958 = vmax.f32 %v7368, 0.0
        %v7959 = vmax.f32 %v7371, 0.0
        %v7960 = vmax.f32 %v7376, 0.0
        %v7961 = vmax.f32 %v7379, 0.0
        %v7962 = vmax.f32 %v7384, 0.0
        %v7963 = vmax.f32 %v7387, 0.0
        %v7964 = vmax.f32 %v7392, 0.0
        %v7965 = vmax.f32 %v7395, 0.0
        %v7966 = vmax.f32 %v7400, 0.0
        %v7967 = vmax.f32 %v7403, 0.0
        %v7968 = vmax.f32 %v7408, 0.0
        %v7969 = vmax.f32 %v7411, 0.0
        %v7970 = vmax.f32 %v7416, 0.0
        %v7971 = vmax.f32 %v7419, 0.0
        %v7972 = vmax.f32 %v7424, 0.0
        %v7973 = vmax.f32 %v7427, 0.0
        %v7974 = vmax.f32 %v7432, 0.0
        %v7975 = vmax.f32 %v7435, 0.0
        %v7976 = vmax.f32 %v7440, 0.0
        %v7977 = vmax.f32 %v7443, 0.0
        %v7978 = vmax.f32 %v7448, 0.0
        %v7979 = vmax.f32 %v7451, 0.0
        %v7980 = vmax.f32 %v7456, 0.0
        %v7981 = vmax.f32 %v7459, 0.0
        %v7982 = vmax.f32 %v7464, 0.0
        %v7983 = vmax.f32 %v7467, 0.0
        %v7984 = vmax.f32 %v7472, 0.0
        %v7985 = vmax.f32 %v7475, 0.0
        %v7986 = vmax.f32 %v7480, 0.0
        %v7987 = vmax.f32 %v7483, 0.0
        %v7988 = vmax.f32 %v7488, 0.0
        %v7989 = vmax.f32 %v7491, 0.0
        %v7990 = vmax.f32 %v7496, 0.0
        %v7991 = vmax.f32 %v7499, 0.0
        %v7992 = vmax.f32 %v7504, 0.0
        %v7993 = vmax.f32 %v7507, 0.0
        %v7994 = vmax.f32 %v7512, 0.0
        %v7995 = vmax.f32 %v7515, 0.0
        %v7996 = vmax.f32 %v7520, 0.0
        %v7997 = vmax.f32 %v7523, 0.0
        %v7998 = vmax.f32 %v7528, 0.0
        %v7999 = vmax.f32 %v7531, 0.0
        %v8000 = vmax.f32 %v7536, 0.0
        %v8001 = vmax.f32 %v7539, 0.0
        %v8002 = vmax.f32 %v7544, 0.0
        %v8003 = vmax.f32 %v7547, 0.0
        %v8004 = vmax.f32 %v7552, 0.0
        %v8005 = vmax.f32 %v7555, 0.0
        %v8006 = vmax.f32 %v7560, 0.0
        %v8007 = vmax.f32 %v7563, 0.0
        %v8008 = vmax.f32 %v7568, 0.0
        %v8009 = vmax.f32 %v7571, 0.0
        %v8010 = vmax.f32 %v7576, 0.0
        %v8011 = vmax.f32 %v7579, 0.0
        %v8012 = vmax.f32 %v7584, 0.0
        %v8013 = vmax.f32 %v7587, 0.0
        %v8014 = vmax.f32 %v7592, 0.0
        %v8015 = vmax.f32 %v7595, 0.0
        %v8016 = vmax.f32 %v7600, 0.0
        %v8017 = vmax.f32 %v7603, 0.0
        %v8018 = vmax.f32 %v7608, 0.0
        %v8019 = vmax.f32 %v7611, 0.0
        %v8020 = vmax.f32 %v7616, 0.0
        %v8021 = vmax.f32 %v7619, 0.0
        %v8022 = vmax.f32 %v7624, 0.0
        %v8023 = vmax.f32 %v7627, 0.0
        %v8024 = vmax.f32 %v7632, 0.0
        %v8025 = vmax.f32 %v7635, 0.0
        %v8026 = vmax.f32 %v7640, 0.0
        %v8027 = vmax.f32 %v7643, 0.0
        %v8028 = vmax.f32 %v7648, 0.0
        %v8029 = vmax.f32 %v7651, 0.0
        %v8030 = vmax.f32 %v7656, 0.0
        %v8031 = vmax.f32 %v7659, 0.0
        %v8032 = vmax.f32 %v7664, 0.0
        %v8033 = vmax.f32 %v7667, 0.0
        %v8034 = vmax.f32 %v7672, 0.0
        %v8035 = vmax.f32 %v7675, 0.0
        %v8036 = vmax.f32 %v7680, 0.0
        %v8037 = vmax.f32 %v7683, 0.0
        %v8038 = vmax.f32 %v7688, 0.0
        %v8039 = vmax.f32 %v7691, 0.0
        %v8040 = vmax.f32 %v7696, 0.0
        %v8041 = vmax.f32 %v7699, 0.0
        %v8042 = vmax.f32 %v7704, 0.0
        %v8043 = vmax.f32 %v7707, 0.0
        %v8044 = vmax.f32 %v7712, 0.0
        %v8045 = vmax.f32 %v7715, 0.0
        %v8046 = vmax.f32 %v7720, 0.0
        %v8047 = vmax.f32 %v7723, 0.0
        %v8048 = vmax.f32 %v7728, 0.0
        %v8049 = vmax.f32 %v7731, 0.0
        %v8050 = vmax.f32 %v7736, 0.0
        %v8051 = vmax.f32 %v7739, 0.0
        %v8052 = vmax.f32 %v7744, 0.0
        %v8053 = vmax.f32 %v7747, 0.0
        %v8054 = vmax.f32 %v7752, 0.0
        %v8055 = vmax.f32 %v7755, 0.0
        %v8056 = vmax.f32 %v7760, 0.0
        %v8057 = vmax.f32 %v7763, 0.0
        %v8058 = vmax.f32 %v7768, 0.0
        %v8059 = vmax.f32 %v7771, 0.0
        %v8060 = vmax.f32 %v7776, 0.0
        %v8061 = vmax.f32 %v7779, 0.0
        %v8062 = vmax.f32 %v7784, 0.0
        %v8063 = vmax.f32 %v7787, 0.0
        %v8064 = vmax.f32 %v7792, 0.0
        %v8065 = vmax.f32 %v7795, 0.0
        %v8066 = vmax.f32 %v7800, 0.0
        %v8067 = vmax.f32 %v7803, 0.0
        %v8068 = vmax.f32 %v7808, 0.0
        %v8069 = vmax.f32 %v7811, 0.0
        %v8070 = vpack.c.bf16 %v7815, %v7814
        %v8071 = vpack.c.bf16 %v7817, %v7816
        %v8072 = vpack.c.bf16 %v7819, %v7818
        %v8073 = vpack.c.bf16 %v7821, %v7820
        %v8074 = vpack.c.bf16 %v7823, %v7822
        %v8075 = vpack.c.bf16 %v7825, %v7824
        %v8076 = vpack.c.bf16 %v7827, %v7826
        %v8077 = vpack.c.bf16 %v7829, %v7828
        %v8078 = vpack.c.bf16 %v7831, %v7830
        %v8079 = vpack.c.bf16 %v7833, %v7832
        %v8080 = vpack.c.bf16 %v7835, %v7834
        %v8081 = vpack.c.bf16 %v7837, %v7836
        %v8082 = vpack.c.bf16 %v7839, %v7838
        %v8083 = vpack.c.bf16 %v7841, %v7840
        %v8084 = vpack.c.bf16 %v7843, %v7842
        %v8085 = vpack.c.bf16 %v7845, %v7844
        %v8086 = vpack.c.bf16 %v7847, %v7846
        %v8087 = vpack.c.bf16 %v7849, %v7848
        %v8088 = vpack.c.bf16 %v7851, %v7850
        %v8089 = vpack.c.bf16 %v7853, %v7852
        %v8090 = vpack.c.bf16 %v7855, %v7854
        %v8091 = vpack.c.bf16 %v7857, %v7856
        %v8092 = vpack.c.bf16 %v7859, %v7858
        %v8093 = vpack.c.bf16 %v7861, %v7860
        %v8094 = vpack.c.bf16 %v7863, %v7862
        %v8095 = vpack.c.bf16 %v7865, %v7864
        %v8096 = vpack.c.bf16 %v7867, %v7866
        %v8097 = vpack.c.bf16 %v7869, %v7868
        %v8098 = vpack.c.bf16 %v7871, %v7870
        %v8099 = vpack.c.bf16 %v7873, %v7872
        %v8100 = vpack.c.bf16 %v7875, %v7874
        %v8101 = vpack.c.bf16 %v7877, %v7876
        %v8102 = vpack.c.bf16 %v7879, %v7878
        %v8103 = vpack.c.bf16 %v7881, %v7880
        %v8104 = vpack.c.bf16 %v7883, %v7882
        %v8105 = vpack.c.bf16 %v7885, %v7884
        %v8106 = vpack.c.bf16 %v7887, %v7886
        %v8107 = vpack.c.bf16 %v7889, %v7888
        %v8108 = vpack.c.bf16 %v7891, %v7890
        %v8109 = vpack.c.bf16 %v7893, %v7892
        %v8110 = vpack.c.bf16 %v7895, %v7894
        %v8111 = vpack.c.bf16 %v7897, %v7896
        %v8112 = vpack.c.bf16 %v7899, %v7898
        %v8113 = vpack.c.bf16 %v7901, %v7900
        %v8114 = vpack.c.bf16 %v7903, %v7902
        %v8115 = vpack.c.bf16 %v7905, %v7904
        %v8116 = vpack.c.bf16 %v7907, %v7906
        %v8117 = vpack.c.bf16 %v7909, %v7908
        %v8118 = vpack.c.bf16 %v7911, %v7910
        %v8119 = vpack.c.bf16 %v7913, %v7912
        %v8120 = vpack.c.bf16 %v7915, %v7914
        %v8121 = vpack.c.bf16 %v7917, %v7916
        %v8122 = vpack.c.bf16 %v7919, %v7918
        %v8123 = vpack.c.bf16 %v7921, %v7920
        %v8124 = vpack.c.bf16 %v7923, %v7922
        %v8125 = vpack.c.bf16 %v7925, %v7924
        %v8126 = vpack.c.bf16 %v7927, %v7926
        %v8127 = vpack.c.bf16 %v7929, %v7928
        %v8128 = vpack.c.bf16 %v7931, %v7930
        %v8129 = vpack.c.bf16 %v7933, %v7932
        %v8130 = vpack.c.bf16 %v7935, %v7934
        %v8131 = vpack.c.bf16 %v7937, %v7936
        %v8132 = vpack.c.bf16 %v7939, %v7938
        %v8133 = vpack.c.bf16 %v7941, %v7940
        %v8134 = vpack.c.bf16 %v7943, %v7942
        %v8135 = vpack.c.bf16 %v7945, %v7944
        %v8136 = vpack.c.bf16 %v7947, %v7946
        %v8137 = vpack.c.bf16 %v7949, %v7948
        %v8138 = vpack.c.bf16 %v7951, %v7950
        %v8139 = vpack.c.bf16 %v7953, %v7952
        %v8140 = vpack.c.bf16 %v7955, %v7954
        %v8141 = vpack.c.bf16 %v7957, %v7956
        %v8142 = vpack.c.bf16 %v7959, %v7958
        %v8143 = vpack.c.bf16 %v7961, %v7960
        %v8144 = vpack.c.bf16 %v7963, %v7962
        %v8145 = vpack.c.bf16 %v7965, %v7964
        %v8146 = vpack.c.bf16 %v7967, %v7966
        %v8147 = vpack.c.bf16 %v7969, %v7968
        %v8148 = vpack.c.bf16 %v7971, %v7970
        %v8149 = vpack.c.bf16 %v7973, %v7972
        %v8150 = vpack.c.bf16 %v7975, %v7974
        %v8151 = vpack.c.bf16 %v7977, %v7976
        %v8152 = vpack.c.bf16 %v7979, %v7978
        %v8153 = vpack.c.bf16 %v7981, %v7980
        %v8154 = vpack.c.bf16 %v7983, %v7982
        %v8155 = vpack.c.bf16 %v7985, %v7984
        %v8156 = vpack.c.bf16 %v7987, %v7986
        %v8157 = vpack.c.bf16 %v7989, %v7988
        %v8158 = vpack.c.bf16 %v7991, %v7990
        %v8159 = vpack.c.bf16 %v7993, %v7992
        %v8160 = vpack.c.bf16 %v7995, %v7994
        %v8161 = vpack.c.bf16 %v7997, %v7996
        %v8162 = vpack.c.bf16 %v7999, %v7998
        %v8163 = vpack.c.bf16 %v8001, %v8000
        %v8164 = vpack.c.bf16 %v8003, %v8002
        %v8165 = vpack.c.bf16 %v8005, %v8004
        %v8166 = vpack.c.bf16 %v8007, %v8006
        %v8167 = vpack.c.bf16 %v8009, %v8008
        %v8168 = vpack.c.bf16 %v8011, %v8010
        %v8169 = vpack.c.bf16 %v8013, %v8012
        %v8170 = vpack.c.bf16 %v8015, %v8014
        %v8171 = vpack.c.bf16 %v8017, %v8016
        %v8172 = vpack.c.bf16 %v8019, %v8018
        %v8173 = vpack.c.bf16 %v8021, %v8020
        %v8174 = vpack.c.bf16 %v8023, %v8022
        %v8175 = vpack.c.bf16 %v8025, %v8024
        %v8176 = vpack.c.bf16 %v8027, %v8026
        %v8177 = vpack.c.bf16 %v8029, %v8028
        %v8178 = vpack.c.bf16 %v8031, %v8030
        %v8179 = vpack.c.bf16 %v8033, %v8032
        %v8180 = vpack.c.bf16 %v8035, %v8034
        %v8181 = vpack.c.bf16 %v8037, %v8036
        %v8182 = vpack.c.bf16 %v8039, %v8038
        %v8183 = vpack.c.bf16 %v8041, %v8040
        %v8184 = vpack.c.bf16 %v8043, %v8042
        %v8185 = vpack.c.bf16 %v8045, %v8044
        %v8186 = vpack.c.bf16 %v8047, %v8046
        %v8187 = vpack.c.bf16 %v8049, %v8048
        %v8188 = vpack.c.bf16 %v8051, %v8050
        %v8189 = vpack.c.bf16 %v8053, %v8052
        %v8190 = vpack.c.bf16 %v8055, %v8054
        %v8191 = vpack.c.bf16 %v8057, %v8056
        %v8192 = vpack.c.bf16 %v8059, %v8058
        %v8193 = vpack.c.bf16 %v8061, %v8060
        %v8194 = vpack.c.bf16 %v8063, %v8062
        %v8195 = vpack.c.bf16 %v8065, %v8064
        %v8196 = vpack.c.bf16 %v8067, %v8066
        %v8197 = vpack.c.bf16 %v8069, %v8068
        %v8198 = vld [vmem:[%s5] sm:$0xf]
        %v8199 = vld [vmem:[%s5 + $0x4] sm:$0xf]
        %v8200 = vld [vmem:[%s5 + $0x8] sm:$0xf]
        %v8201 = vld [vmem:[%s5 + $0xc] sm:$0xf]
        %v8202 = vld [vmem:[%s5 + $0x10] sm:$0xf]
        %v8203 = vld [vmem:[%s5 + $0x14] sm:$0xf]
        %v8204 = vld [vmem:[%s5 + $0x18] sm:$0xf]
        %v8205 = vld [vmem:[%s5 + $0x1c] sm:$0xf]
        %v8206 = vld [vmem:[%s5 + $0x20] sm:$0xf]
        %v8207 = vld [vmem:[%s5 + $0x24] sm:$0xf]
        %v8208 = vld [vmem:[%s5 + $0x28] sm:$0xf]
        %v8209 = vld [vmem:[%s5 + $0x2c] sm:$0xf]
        %v8210 = vld [vmem:[%s5 + $0x30] sm:$0xf]
        %v8211 = vld [vmem:[%s5 + $0x34] sm:$0xf]
        %v8212 = vld [vmem:[%s5 + $0x38] sm:$0xf]
        %v8213 = vld [vmem:[%s5 + $0x3c] sm:$0xf]
        %v8214 = vld [vmem:[%s6 + $0x4] sm:$0x1]
        %v8215 = vlaneseq
        %v8216 = vshrl.u32 %v8215, 7
        %v8217 = vsub.s32 0, %v8216
        %v8218 = vrot.slane %v8214, %v8217
        %v8235 = vunpack.c.l.b16 %v8198
        %v8236 = vunpack.c.l.b16 %v8199
        %v8237 = vunpack.c.l.b16 %v8200
        %v8238 = vunpack.c.l.b16 %v8201
        %v8239 = vunpack.c.l.b16 %v8202
        %v8240 = vunpack.c.l.b16 %v8203
        %v8241 = vunpack.c.l.b16 %v8204
        %v8242 = vunpack.c.l.b16 %v8205
        %v8243 = vunpack.c.l.b16 %v8206
        %v8244 = vunpack.c.l.b16 %v8207
        %v8245 = vunpack.c.l.b16 %v8208
        %v8246 = vunpack.c.l.b16 %v8209
        %v8247 = vunpack.c.l.b16 %v8210
        %v8248 = vunpack.c.l.b16 %v8211
        %v8249 = vunpack.c.l.b16 %v8212
        %v8250 = vunpack.c.l.b16 %v8213
        %v8251 = vpack.c.b16 %v8236, %v8235
        %v8252 = vpack.c.b16 %v8238, %v8237
        %v8253 = vpack.c.b16 %v8240, %v8239
        %v8254 = vpack.c.b16 %v8242, %v8241
        %v8255 = vpack.c.b16 %v8244, %v8243
        %v8256 = vpack.c.b16 %v8246, %v8245
        %v8257 = vpack.c.b16 %v8248, %v8247
        %v8258 = vpack.c.b16 %v8250, %v8249
        %8267 = vmatprep.subr.bf16.mxu0 0
        %8268 = vmatpush1.bf16.msra.mxu0 %v8251
        %8269 = vmatprep.subr.bf16.mxu0 0
        %8270 = vmatpush1.bf16.msra.mxu0 %v8252
        %8271 = vmatprep.subr.bf16.mxu0 0
        %8272 = vmatpush1.bf16.msra.mxu0 %v8253
        %8273 = vmatprep.subr.bf16.mxu0 0
        %8274 = vmatpush1.bf16.msra.mxu0 %v8254
        %8275 = vmatprep.subr.bf16.mxu0 0
        %8276 = vmatpush1.bf16.msra.mxu0 %v8255
        %8277 = vmatprep.subr.bf16.mxu0 0
        %8278 = vmatpush1.bf16.msra.mxu0 %v8256
        %8279 = vmatprep.subr.bf16.mxu0 0
        %8280 = vmatpush1.bf16.msra.mxu0 %v8257
        %8281 = vmatprep.subr.bf16.mxu0 0
        %8282 = vmatpush1.bf16.msra.mxu0 %v8258
        %8283 = vmatprep.subr.bf16.mxu0 0
        %8284 = vmatpush1.bf16.msra.mxu0 0
        %8285 = vmatprep.subr.bf16.mxu0 0
        %8286 = vmatpush1.bf16.msra.mxu0 0
        %8287 = vmatprep.subr.bf16.mxu0 0
        %8288 = vmatpush1.bf16.msra.mxu0 0
        %8289 = vmatprep.subr.bf16.mxu0 0
        %8290 = vmatpush1.bf16.msra.mxu0 0
        %8291 = vmatprep.subr.bf16.mxu0 0
        %8292 = vmatpush1.bf16.msra.mxu0 0
        %8293 = vmatprep.subr.bf16.mxu0 0
        %8294 = vmatpush1.bf16.msra.mxu0 0
        %8295 = vmatprep.subr.bf16.mxu0 0
        %8296 = vmatpush1.bf16.msra.mxu0 0
        %8297 = vmatprep.subr.bf16.mxu0 0
        %8298 = vmatpush1.bf16.msra.mxu0 0
        %8299 = vmatprep.mubr.bf16.mxu0 0
        %8300 = vmatmul.mubr.bf16.gmra.mrb[0].mxu0 %v8070
        %v8301 = vpop.f32.mrb[0].mxu0
        %v8302 = vadd.f32 %v8218, %v8301
        %v8303 = vpop.f32.mrb[0].mxu0
        %v8304 = vpop.f32.mrb[0].mxu0
        %v8305 = vadd.f32 %v8218, %v8304
        %v8306 = vpop.f32.mrb[0].mxu0
        %8307 = vmatprep.mubr.bf16.mxu0 0
        %8308 = vmatmul.mubr.bf16.gmra.mrb[0].mxu0 %v8071
        %v8309 = vpop.f32.mrb[0].mxu0
        %v8310 = vadd.f32 %v8218, %v8309
        %v8311 = vpop.f32.mrb[0].mxu0
        %v8312 = vpop.f32.mrb[0].mxu0
        %v8313 = vadd.f32 %v8218, %v8312
        %v8314 = vpop.f32.mrb[0].mxu0
        %8315 = vmatprep.mubr.bf16.mxu0 0
        %8316 = vmatmul.mubr.bf16.gmra.mrb[0].mxu0 %v8072
        %v8317 = vpop.f32.mrb[0].mxu0
        %v8318 = vadd.f32 %v8218, %v8317
        %v8319 = vpop.f32.mrb[0].mxu0
        %v8320 = vpop.f32.mrb[0].mxu0
        %v8321 = vadd.f32 %v8218, %v8320
        %v8322 = vpop.f32.mrb[0].mxu0
        %8323 = vmatprep.mubr.bf16.mxu0 0
        %8324 = vmatmul.mubr.bf16.gmra.mrb[0].mxu0 %v8073
        %v8325 = vpop.f32.mrb[0].mxu0
        %v8326 = vadd.f32 %v8218, %v8325
        %v8327 = vpop.f32.mrb[0].mxu0
        %v8328 = vpop.f32.mrb[0].mxu0
        %v8329 = vadd.f32 %v8218, %v8328
        %v8330 = vpop.f32.mrb[0].mxu0
        %8331 = vmatprep.mubr.bf16.mxu0 0
        %8332 = vmatmul.mubr.bf16.gmra.mrb[0].mxu0 %v8074
        %v8333 = vpop.f32.mrb[0].mxu0
        %v8334 = vadd.f32 %v8218, %v8333
        %v8335 = vpop.f32.mrb[0].mxu0
        %v8336 = vpop.f32.mrb[0].mxu0
        %v8337 = vadd.f32 %v8218, %v8336
        %v8338 = vpop.f32.mrb[0].mxu0
        %8339 = vmatprep.mubr.bf16.mxu0 0
        %8340 = vmatmul.mubr.bf16.gmra.mrb[0].mxu0 %v8075
        %v8341 = vpop.f32.mrb[0].mxu0
        %v8342 = vadd.f32 %v8218, %v8341
        %v8343 = vpop.f32.mrb[0].mxu0
        %v8344 = vpop.f32.mrb[0].mxu0
        %v8345 = vadd.f32 %v8218, %v8344
        %v8346 = vpop.f32.mrb[0].mxu0
        %8347 = vmatprep.mubr.bf16.mxu0 0
        %8348 = vmatmul.mubr.bf16.gmra.mrb[0].mxu0 %v8076
        %v8349 = vpop.f32.mrb[0].mxu0
        %v8350 = vadd.f32 %v8218, %v8349
        %v8351 = vpop.f32.mrb[0].mxu0
        %v8352 = vpop.f32.mrb[0].mxu0
        %v8353 = vadd.f32 %v8218, %v8352
        %v8354 = vpop.f32.mrb[0].mxu0
        %8355 = vmatprep.mubr.bf16.mxu0 0
        %8356 = vmatmul.mubr.bf16.gmra.mrb[0].mxu0 %v8077
        %v8357 = vpop.f32.mrb[0].mxu0
        %v8358 = vadd.f32 %v8218, %v8357
        %v8359 = vpop.f32.mrb[0].mxu0
        %v8360 = vpop.f32.mrb[0].mxu0
        %v8361 = vadd.f32 %v8218, %v8360
        %v8362 = vpop.f32.mrb[0].mxu0
        %8363 = vmatprep.mubr.bf16.mxu0 0
        %8364 = vmatmul.mubr.bf16.gmra.mrb[0].mxu0 %v8078
        %v8365 = vpop.f32.mrb[0].mxu0
        %v8366 = vadd.f32 %v8218, %v8365
        %v8367 = vpop.f32.mrb[0].mxu0
        %v8368 = vpop.f32.mrb[0].mxu0
        %v8369 = vadd.f32 %v8218, %v8368
        %v8370 = vpop.f32.mrb[0].mxu0
        %8371 = vmatprep.mubr.bf16.mxu0 0
        %8372 = vmatmul.mubr.bf16.gmra.mrb[0].mxu0 %v8079
        %v8373 = vpop.f32.mrb[0].mxu0
        %v8374 = vadd.f32 %v8218, %v8373
        %v8375 = vpop.f32.mrb[0].mxu0
        %v8376 = vpop.f32.mrb[0].mxu0
        %v8377 = vadd.f32 %v8218, %v8376
        %v8378 = vpop.f32.mrb[0].mxu0
        %8379 = vmatprep.mubr.bf16.mxu0 0
        %8380 = vmatmul.mubr.bf16.gmra.mrb[0].mxu0 %v8080
        %v8381 = vpop.f32.mrb[0].mxu0
        %v8382 = vadd.f32 %v8218, %v8381
        %v8383 = vpop.f32.mrb[0].mxu0
        %v8384 = vpop.f32.mrb[0].mxu0
        %v8385 = vadd.f32 %v8218, %v8384
        %v8386 = vpop.f32.mrb[0].mxu0
        %8387 = vmatprep.mubr.bf16.mxu0 0
        %8388 = vmatmul.mubr.bf16.gmra.mrb[0].mxu0 %v8081
        %v8389 = vpop.f32.mrb[0].mxu0
        %v8390 = vadd.f32 %v8218, %v8389
        %v8391 = vpop.f32.mrb[0].mxu0
        %v8392 = vpop.f32.mrb[0].mxu0
        %v8393 = vadd.f32 %v8218, %v8392
        %v8394 = vpop.f32.mrb[0].mxu0
        %8395 = vmatprep.mubr.bf16.mxu0 0
        %8396 = vmatmul.mubr.bf16.gmra.mrb[0].mxu0 %v8082
        %v8397 = vpop.f32.mrb[0].mxu0
        %v8398 = vadd.f32 %v8218, %v8397
        %v8399 = vpop.f32.mrb[0].mxu0
        %v8400 = vpop.f32.mrb[0].mxu0
        %v8401 = vadd.f32 %v8218, %v8400
        %v8402 = vpop.f32.mrb[0].mxu0
        %8403 = vmatprep.mubr.bf16.mxu0 0
        %8404 = vmatmul.mubr.bf16.gmra.mrb[0].mxu0 %v8083
        %v8405 = vpop.f32.mrb[0].mxu0
        %v8406 = vadd.f32 %v8218, %v8405
        %v8407 = vpop.f32.mrb[0].mxu0
        %v8408 = vpop.f32.mrb[0].mxu0
        %v8409 = vadd.f32 %v8218, %v8408
        %v8410 = vpop.f32.mrb[0].mxu0
        %8411 = vmatprep.mubr.bf16.mxu0 0
        %8412 = vmatmul.mubr.bf16.gmra.mrb[0].mxu0 %v8084
        %v8413 = vpop.f32.mrb[0].mxu0
        %v8414 = vadd.f32 %v8218, %v8413
        %v8415 = vpop.f32.mrb[0].mxu0
        %v8416 = vpop.f32.mrb[0].mxu0
        %v8417 = vadd.f32 %v8218, %v8416
        %v8418 = vpop.f32.mrb[0].mxu0
        %8419 = vmatprep.mubr.bf16.mxu0 0
        %8420 = vmatmul.mubr.bf16.gmra.mrb[0].mxu0 %v8085
        %v8421 = vpop.f32.mrb[0].mxu0
        %v8422 = vadd.f32 %v8218, %v8421
        %v8423 = vpop.f32.mrb[0].mxu0
        %v8424 = vpop.f32.mrb[0].mxu0
        %v8425 = vadd.f32 %v8218, %v8424
        %v8426 = vpop.f32.mrb[0].mxu0
        %8427 = vmatprep.mubr.bf16.mxu0 0
        %8428 = vmatmul.mubr.bf16.gmra.mrb[0].mxu0 %v8086
        %v8429 = vpop.f32.mrb[0].mxu0
        %v8430 = vadd.f32 %v8218, %v8429
        %v8431 = vpop.f32.mrb[0].mxu0
        %v8432 = vpop.f32.mrb[0].mxu0
        %v8433 = vadd.f32 %v8218, %v8432
        %v8434 = vpop.f32.mrb[0].mxu0
        %8435 = vmatprep.mubr.bf16.mxu0 0
        %8436 = vmatmul.mubr.bf16.gmra.mrb[0].mxu0 %v8087
        %v8437 = vpop.f32.mrb[0].mxu0
        %v8438 = vadd.f32 %v8218, %v8437
        %v8439 = vpop.f32.mrb[0].mxu0
        %v8440 = vpop.f32.mrb[0].mxu0
        %v8441 = vadd.f32 %v8218, %v8440
        %v8442 = vpop.f32.mrb[0].mxu0
        %8443 = vmatprep.mubr.bf16.mxu0 0
        %8444 = vmatmul.mubr.bf16.gmra.mrb[0].mxu0 %v8088
        %v8445 = vpop.f32.mrb[0].mxu0
        %v8446 = vadd.f32 %v8218, %v8445
        %v8447 = vpop.f32.mrb[0].mxu0
        %v8448 = vpop.f32.mrb[0].mxu0
        %v8449 = vadd.f32 %v8218, %v8448
        %v8450 = vpop.f32.mrb[0].mxu0
        %8451 = vmatprep.mubr.bf16.mxu0 0
        %8452 = vmatmul.mubr.bf16.gmra.mrb[0].mxu0 %v8089
        %v8453 = vpop.f32.mrb[0].mxu0
        %v8454 = vadd.f32 %v8218, %v8453
        %v8455 = vpop.f32.mrb[0].mxu0
        %v8456 = vpop.f32.mrb[0].mxu0
        %v8457 = vadd.f32 %v8218, %v8456
        %v8458 = vpop.f32.mrb[0].mxu0
        %8459 = vmatprep.mubr.bf16.mxu0 0
        %8460 = vmatmul.mubr.bf16.gmra.mrb[0].mxu0 %v8090
        %v8461 = vpop.f32.mrb[0].mxu0
        %v8462 = vadd.f32 %v8218, %v8461
        %v8463 = vpop.f32.mrb[0].mxu0
        %v8464 = vpop.f32.mrb[0].mxu0
        %v8465 = vadd.f32 %v8218, %v8464
        %v8466 = vpop.f32.mrb[0].mxu0
        %8467 = vmatprep.mubr.bf16.mxu0 0
        %8468 = vmatmul.mubr.bf16.gmra.mrb[0].mxu0 %v8091
        %v8469 = vpop.f32.mrb[0].mxu0
        %v8470 = vadd.f32 %v8218, %v8469
        %v8471 = vpop.f32.mrb[0].mxu0
        %v8472 = vpop.f32.mrb[0].mxu0
        %v8473 = vadd.f32 %v8218, %v8472
        %v8474 = vpop.f32.mrb[0].mxu0
        %8475 = vmatprep.mubr.bf16.mxu0 0
        %8476 = vmatmul.mubr.bf16.gmra.mrb[0].mxu0 %v8092
        %v8477 = vpop.f32.mrb[0].mxu0
        %v8478 = vadd.f32 %v8218, %v8477
        %v8479 = vpop.f32.mrb[0].mxu0
        %v8480 = vpop.f32.mrb[0].mxu0
        %v8481 = vadd.f32 %v8218, %v8480
        %v8482 = vpop.f32.mrb[0].mxu0
        %8483 = vmatprep.mubr.bf16.mxu0 0
        %8484 = vmatmul.mubr.bf16.gmra.mrb[0].mxu0 %v8093
        %v8485 = vpop.f32.mrb[0].mxu0
        %v8486 = vadd.f32 %v8218, %v8485
        %v8487 = vpop.f32.mrb[0].mxu0
        %v8488 = vpop.f32.mrb[0].mxu0
        %v8489 = vadd.f32 %v8218, %v8488
        %v8490 = vpop.f32.mrb[0].mxu0
        %8491 = vmatprep.mubr.bf16.mxu0 0
        %8492 = vmatmul.mubr.bf16.gmra.mrb[0].mxu0 %v8094
        %v8493 = vpop.f32.mrb[0].mxu0
        %v8494 = vadd.f32 %v8218, %v8493
        %v8495 = vpop.f32.mrb[0].mxu0
        %v8496 = vpop.f32.mrb[0].mxu0
        %v8497 = vadd.f32 %v8218, %v8496
        %v8498 = vpop.f32.mrb[0].mxu0
        %8499 = vmatprep.mubr.bf16.mxu0 0
        %8500 = vmatmul.mubr.bf16.gmra.mrb[0].mxu0 %v8095
        %v8501 = vpop.f32.mrb[0].mxu0
        %v8502 = vadd.f32 %v8218, %v8501
        %v8503 = vpop.f32.mrb[0].mxu0
        %v8504 = vpop.f32.mrb[0].mxu0
        %v8505 = vadd.f32 %v8218, %v8504
        %v8506 = vpop.f32.mrb[0].mxu0
        %8507 = vmatprep.mubr.bf16.mxu0 0
        %8508 = vmatmul.mubr.bf16.gmra.mrb[0].mxu0 %v8096
        %v8509 = vpop.f32.mrb[0].mxu0
        %v8510 = vadd.f32 %v8218, %v8509
        %v8511 = vpop.f32.mrb[0].mxu0
        %v8512 = vpop.f32.mrb[0].mxu0
        %v8513 = vadd.f32 %v8218, %v8512
        %v8514 = vpop.f32.mrb[0].mxu0
        %8515 = vmatprep.mubr.bf16.mxu0 0
        %8516 = vmatmul.mubr.bf16.gmra.mrb[0].mxu0 %v8097
        %v8517 = vpop.f32.mrb[0].mxu0
        %v8518 = vadd.f32 %v8218, %v8517
        %v8519 = vpop.f32.mrb[0].mxu0
        %v8520 = vpop.f32.mrb[0].mxu0
        %v8521 = vadd.f32 %v8218, %v8520
        %v8522 = vpop.f32.mrb[0].mxu0
        %8523 = vmatprep.mubr.bf16.mxu0 0
        %8524 = vmatmul.mubr.bf16.gmra.mrb[0].mxu0 %v8098
        %v8525 = vpop.f32.mrb[0].mxu0
        %v8526 = vadd.f32 %v8218, %v8525
        %v8527 = vpop.f32.mrb[0].mxu0
        %v8528 = vpop.f32.mrb[0].mxu0
        %v8529 = vadd.f32 %v8218, %v8528
        %v8530 = vpop.f32.mrb[0].mxu0
        %8531 = vmatprep.mubr.bf16.mxu0 0
        %8532 = vmatmul.mubr.bf16.gmra.mrb[0].mxu0 %v8099
        %v8533 = vpop.f32.mrb[0].mxu0
        %v8534 = vadd.f32 %v8218, %v8533
        %v8535 = vpop.f32.mrb[0].mxu0
        %v8536 = vpop.f32.mrb[0].mxu0
        %v8537 = vadd.f32 %v8218, %v8536
        %v8538 = vpop.f32.mrb[0].mxu0
        %8539 = vmatprep.mubr.bf16.mxu0 0
        %8540 = vmatmul.mubr.bf16.gmra.mrb[0].mxu0 %v8100
        %v8541 = vpop.f32.mrb[0].mxu0
        %v8542 = vadd.f32 %v8218, %v8541
        %v8543 = vpop.f32.mrb[0].mxu0
        %v8544 = vpop.f32.mrb[0].mxu0
        %v8545 = vadd.f32 %v8218, %v8544
        %v8546 = vpop.f32.mrb[0].mxu0
        %8547 = vmatprep.mubr.bf16.mxu0 0
        %8548 = vmatmul.mubr.bf16.gmra.mrb[0].mxu0 %v8101
        %v8549 = vpop.f32.mrb[0].mxu0
        %v8550 = vadd.f32 %v8218, %v8549
        %v8551 = vpop.f32.mrb[0].mxu0
        %v8552 = vpop.f32.mrb[0].mxu0
        %v8553 = vadd.f32 %v8218, %v8552
        %v8554 = vpop.f32.mrb[0].mxu0
        %8555 = vmatprep.mubr.bf16.mxu0 0
        %8556 = vmatmul.mubr.bf16.gmra.mrb[0].mxu0 %v8102
        %v8557 = vpop.f32.mrb[0].mxu0
        %v8558 = vadd.f32 %v8218, %v8557
        %v8559 = vpop.f32.mrb[0].mxu0
        %v8560 = vpop.f32.mrb[0].mxu0
        %v8561 = vadd.f32 %v8218, %v8560
        %v8562 = vpop.f32.mrb[0].mxu0
        %8563 = vmatprep.mubr.bf16.mxu0 0
        %8564 = vmatmul.mubr.bf16.gmra.mrb[0].mxu0 %v8103
        %v8565 = vpop.f32.mrb[0].mxu0
        %v8566 = vadd.f32 %v8218, %v8565
        %v8567 = vpop.f32.mrb[0].mxu0
        %v8568 = vpop.f32.mrb[0].mxu0
        %v8569 = vadd.f32 %v8218, %v8568
        %v8570 = vpop.f32.mrb[0].mxu0
        %8571 = vmatprep.mubr.bf16.mxu0 0
        %8572 = vmatmul.mubr.bf16.gmra.mrb[0].mxu0 %v8104
        %v8573 = vpop.f32.mrb[0].mxu0
        %v8574 = vadd.f32 %v8218, %v8573
        %v8575 = vpop.f32.mrb[0].mxu0
        %v8576 = vpop.f32.mrb[0].mxu0
        %v8577 = vadd.f32 %v8218, %v8576
        %v8578 = vpop.f32.mrb[0].mxu0
        %8579 = vmatprep.mubr.bf16.mxu0 0
        %8580 = vmatmul.mubr.bf16.gmra.mrb[0].mxu0 %v8105
        %v8581 = vpop.f32.mrb[0].mxu0
        %v8582 = vadd.f32 %v8218, %v8581
        %v8583 = vpop.f32.mrb[0].mxu0
        %v8584 = vpop.f32.mrb[0].mxu0
        %v8585 = vadd.f32 %v8218, %v8584
        %v8586 = vpop.f32.mrb[0].mxu0
        %8587 = vmatprep.mubr.bf16.mxu0 0
        %8588 = vmatmul.mubr.bf16.gmra.mrb[0].mxu0 %v8106
        %v8589 = vpop.f32.mrb[0].mxu0
        %v8590 = vadd.f32 %v8218, %v8589
        %v8591 = vpop.f32.mrb[0].mxu0
        %v8592 = vpop.f32.mrb[0].mxu0
        %v8593 = vadd.f32 %v8218, %v8592
        %v8594 = vpop.f32.mrb[0].mxu0
        %8595 = vmatprep.mubr.bf16.mxu0 0
        %8596 = vmatmul.mubr.bf16.gmra.mrb[0].mxu0 %v8107
        %v8597 = vpop.f32.mrb[0].mxu0
        %v8598 = vadd.f32 %v8218, %v8597
        %v8599 = vpop.f32.mrb[0].mxu0
        %v8600 = vpop.f32.mrb[0].mxu0
        %v8601 = vadd.f32 %v8218, %v8600
        %v8602 = vpop.f32.mrb[0].mxu0
        %8603 = vmatprep.mubr.bf16.mxu0 0
        %8604 = vmatmul.mubr.bf16.gmra.mrb[0].mxu0 %v8108
        %v8605 = vpop.f32.mrb[0].mxu0
        %v8606 = vadd.f32 %v8218, %v8605
        %v8607 = vpop.f32.mrb[0].mxu0
        %v8608 = vpop.f32.mrb[0].mxu0
        %v8609 = vadd.f32 %v8218, %v8608
        %v8610 = vpop.f32.mrb[0].mxu0
        %8611 = vmatprep.mubr.bf16.mxu0 0
        %8612 = vmatmul.mubr.bf16.gmra.mrb[0].mxu0 %v8109
        %v8613 = vpop.f32.mrb[0].mxu0
        %v8614 = vadd.f32 %v8218, %v8613
        %v8615 = vpop.f32.mrb[0].mxu0
        %v8616 = vpop.f32.mrb[0].mxu0
        %v8617 = vadd.f32 %v8218, %v8616
        %v8618 = vpop.f32.mrb[0].mxu0
        %8619 = vmatprep.mubr.bf16.mxu0 0
        %8620 = vmatmul.mubr.bf16.gmra.mrb[0].mxu0 %v8110
        %v8621 = vpop.f32.mrb[0].mxu0
        %v8622 = vadd.f32 %v8218, %v8621
        %v8623 = vpop.f32.mrb[0].mxu0
        %v8624 = vpop.f32.mrb[0].mxu0
        %v8625 = vadd.f32 %v8218, %v8624
        %v8626 = vpop.f32.mrb[0].mxu0
        %8627 = vmatprep.mubr.bf16.mxu0 0
        %8628 = vmatmul.mubr.bf16.gmra.mrb[0].mxu0 %v8111
        %v8629 = vpop.f32.mrb[0].mxu0
        %v8630 = vadd.f32 %v8218, %v8629
        %v8631 = vpop.f32.mrb[0].mxu0
        %v8632 = vpop.f32.mrb[0].mxu0
        %v8633 = vadd.f32 %v8218, %v8632
        %v8634 = vpop.f32.mrb[0].mxu0
        %8635 = vmatprep.mubr.bf16.mxu0 0
        %8636 = vmatmul.mubr.bf16.gmra.mrb[0].mxu0 %v8112
        %v8637 = vpop.f32.mrb[0].mxu0
        %v8638 = vadd.f32 %v8218, %v8637
        %v8639 = vpop.f32.mrb[0].mxu0
        %v8640 = vpop.f32.mrb[0].mxu0
        %v8641 = vadd.f32 %v8218, %v8640
        %v8642 = vpop.f32.mrb[0].mxu0
        %8643 = vmatprep.mubr.bf16.mxu0 0
        %8644 = vmatmul.mubr.bf16.gmra.mrb[0].mxu0 %v8113
        %v8645 = vpop.f32.mrb[0].mxu0
        %v8646 = vadd.f32 %v8218, %v8645
        %v8647 = vpop.f32.mrb[0].mxu0
        %v8648 = vpop.f32.mrb[0].mxu0
        %v8649 = vadd.f32 %v8218, %v8648
        %v8650 = vpop.f32.mrb[0].mxu0
        %8651 = vmatprep.mubr.bf16.mxu0 0
        %8652 = vmatmul.mubr.bf16.gmra.mrb[0].mxu0 %v8114
        %v8653 = vpop.f32.mrb[0].mxu0
        %v8654 = vadd.f32 %v8218, %v8653
        %v8655 = vpop.f32.mrb[0].mxu0
        %v8656 = vpop.f32.mrb[0].mxu0
        %v8657 = vadd.f32 %v8218, %v8656
        %v8658 = vpop.f32.mrb[0].mxu0
        %8659 = vmatprep.mubr.bf16.mxu0 0
        %8660 = vmatmul.mubr.bf16.gmra.mrb[0].mxu0 %v8115
        %v8661 = vpop.f32.mrb[0].mxu0
        %v8662 = vadd.f32 %v8218, %v8661
        %v8663 = vpop.f32.mrb[0].mxu0
        %v8664 = vpop.f32.mrb[0].mxu0
        %v8665 = vadd.f32 %v8218, %v8664
        %v8666 = vpop.f32.mrb[0].mxu0
        %8667 = vmatprep.mubr.bf16.mxu0 0
        %8668 = vmatmul.mubr.bf16.gmra.mrb[0].mxu0 %v8116
        %v8669 = vpop.f32.mrb[0].mxu0
        %v8670 = vadd.f32 %v8218, %v8669
        %v8671 = vpop.f32.mrb[0].mxu0
        %v8672 = vpop.f32.mrb[0].mxu0
        %v8673 = vadd.f32 %v8218, %v8672
        %v8674 = vpop.f32.mrb[0].mxu0
        %8675 = vmatprep.mubr.bf16.mxu0 0
        %8676 = vmatmul.mubr.bf16.gmra.mrb[0].mxu0 %v8117
        %v8677 = vpop.f32.mrb[0].mxu0
        %v8678 = vadd.f32 %v8218, %v8677
        %v8679 = vpop.f32.mrb[0].mxu0
        %v8680 = vpop.f32.mrb[0].mxu0
        %v8681 = vadd.f32 %v8218, %v8680
        %v8682 = vpop.f32.mrb[0].mxu0
        %8683 = vmatprep.mubr.bf16.mxu0 0
        %8684 = vmatmul.mubr.bf16.gmra.mrb[0].mxu0 %v8118
        %v8685 = vpop.f32.mrb[0].mxu0
        %v8686 = vadd.f32 %v8218, %v8685
        %v8687 = vpop.f32.mrb[0].mxu0
        %v8688 = vpop.f32.mrb[0].mxu0
        %v8689 = vadd.f32 %v8218, %v8688
        %v8690 = vpop.f32.mrb[0].mxu0
        %8691 = vmatprep.mubr.bf16.mxu0 0
        %8692 = vmatmul.mubr.bf16.gmra.mrb[0].mxu0 %v8119
        %v8693 = vpop.f32.mrb[0].mxu0
        %v8694 = vadd.f32 %v8218, %v8693
        %v8695 = vpop.f32.mrb[0].mxu0
        %v8696 = vpop.f32.mrb[0].mxu0
        %v8697 = vadd.f32 %v8218, %v8696
        %v8698 = vpop.f32.mrb[0].mxu0
        %8699 = vmatprep.mubr.bf16.mxu0 0
        %8700 = vmatmul.mubr.bf16.gmra.mrb[0].mxu0 %v8120
        %v8701 = vpop.f32.mrb[0].mxu0
        %v8702 = vadd.f32 %v8218, %v8701
        %v8703 = vpop.f32.mrb[0].mxu0
        %v8704 = vpop.f32.mrb[0].mxu0
        %v8705 = vadd.f32 %v8218, %v8704
        %v8706 = vpop.f32.mrb[0].mxu0
        %8707 = vmatprep.mubr.bf16.mxu0 0
        %8708 = vmatmul.mubr.bf16.gmra.mrb[0].mxu0 %v8121
        %v8709 = vpop.f32.mrb[0].mxu0
        %v8710 = vadd.f32 %v8218, %v8709
        %v8711 = vpop.f32.mrb[0].mxu0
        %v8712 = vpop.f32.mrb[0].mxu0
        %v8713 = vadd.f32 %v8218, %v8712
        %v8714 = vpop.f32.mrb[0].mxu0
        %8715 = vmatprep.mubr.bf16.mxu0 0
        %8716 = vmatmul.mubr.bf16.gmra.mrb[0].mxu0 %v8122
        %v8717 = vpop.f32.mrb[0].mxu0
        %v8718 = vadd.f32 %v8218, %v8717
        %v8719 = vpop.f32.mrb[0].mxu0
        %v8720 = vpop.f32.mrb[0].mxu0
        %v8721 = vadd.f32 %v8218, %v8720
        %v8722 = vpop.f32.mrb[0].mxu0
        %8723 = vmatprep.mubr.bf16.mxu0 0
        %8724 = vmatmul.mubr.bf16.gmra.mrb[0].mxu0 %v8123
        %v8725 = vpop.f32.mrb[0].mxu0
        %v8726 = vadd.f32 %v8218, %v8725
        %v8727 = vpop.f32.mrb[0].mxu0
        %v8728 = vpop.f32.mrb[0].mxu0
        %v8729 = vadd.f32 %v8218, %v8728
        %v8730 = vpop.f32.mrb[0].mxu0
        %8731 = vmatprep.mubr.bf16.mxu0 0
        %8732 = vmatmul.mubr.bf16.gmra.mrb[0].mxu0 %v8124
        %v8733 = vpop.f32.mrb[0].mxu0
        %v8734 = vadd.f32 %v8218, %v8733
        %v8735 = vpop.f32.mrb[0].mxu0
        %v8736 = vpop.f32.mrb[0].mxu0
        %v8737 = vadd.f32 %v8218, %v8736
        %v8738 = vpop.f32.mrb[0].mxu0
        %8739 = vmatprep.mubr.bf16.mxu0 0
        %8740 = vmatmul.mubr.bf16.gmra.mrb[0].mxu0 %v8125
        %v8741 = vpop.f32.mrb[0].mxu0
        %v8742 = vadd.f32 %v8218, %v8741
        %v8743 = vpop.f32.mrb[0].mxu0
        %v8744 = vpop.f32.mrb[0].mxu0
        %v8745 = vadd.f32 %v8218, %v8744
        %v8746 = vpop.f32.mrb[0].mxu0
        %8747 = vmatprep.mubr.bf16.mxu0 0
        %8748 = vmatmul.mubr.bf16.gmra.mrb[0].mxu0 %v8126
        %v8749 = vpop.f32.mrb[0].mxu0
        %v8750 = vadd.f32 %v8218, %v8749
        %v8751 = vpop.f32.mrb[0].mxu0
        %v8752 = vpop.f32.mrb[0].mxu0
        %v8753 = vadd.f32 %v8218, %v8752
        %v8754 = vpop.f32.mrb[0].mxu0
        %8755 = vmatprep.mubr.bf16.mxu0 0
        %8756 = vmatmul.mubr.bf16.gmra.mrb[0].mxu0 %v8127
        %v8757 = vpop.f32.mrb[0].mxu0
        %v8758 = vadd.f32 %v8218, %v8757
        %v8759 = vpop.f32.mrb[0].mxu0
        %v8760 = vpop.f32.mrb[0].mxu0
        %v8761 = vadd.f32 %v8218, %v8760
        %v8762 = vpop.f32.mrb[0].mxu0
        %8763 = vmatprep.mubr.bf16.mxu0 0
        %8764 = vmatmul.mubr.bf16.gmra.mrb[0].mxu0 %v8128
        %v8765 = vpop.f32.mrb[0].mxu0
        %v8766 = vadd.f32 %v8218, %v8765
        %v8767 = vpop.f32.mrb[0].mxu0
        %v8768 = vpop.f32.mrb[0].mxu0
        %v8769 = vadd.f32 %v8218, %v8768
        %v8770 = vpop.f32.mrb[0].mxu0
        %8771 = vmatprep.mubr.bf16.mxu0 0
        %8772 = vmatmul.mubr.bf16.gmra.mrb[0].mxu0 %v8129
        %v8773 = vpop.f32.mrb[0].mxu0
        %v8774 = vadd.f32 %v8218, %v8773
        %v8775 = vpop.f32.mrb[0].mxu0
        %v8776 = vpop.f32.mrb[0].mxu0
        %v8777 = vadd.f32 %v8218, %v8776
        %v8778 = vpop.f32.mrb[0].mxu0
        %8779 = vmatprep.mubr.bf16.mxu0 0
        %8780 = vmatmul.mubr.bf16.gmra.mrb[0].mxu0 %v8130
        %v8781 = vpop.f32.mrb[0].mxu0
        %v8782 = vadd.f32 %v8218, %v8781
        %v8783 = vpop.f32.mrb[0].mxu0
        %v8784 = vpop.f32.mrb[0].mxu0
        %v8785 = vadd.f32 %v8218, %v8784
        %v8786 = vpop.f32.mrb[0].mxu0
        %8787 = vmatprep.mubr.bf16.mxu0 0
        %8788 = vmatmul.mubr.bf16.gmra.mrb[0].mxu0 %v8131
        %v8789 = vpop.f32.mrb[0].mxu0
        %v8790 = vadd.f32 %v8218, %v8789
        %v8791 = vpop.f32.mrb[0].mxu0
        %v8792 = vpop.f32.mrb[0].mxu0
        %v8793 = vadd.f32 %v8218, %v8792
        %v8794 = vpop.f32.mrb[0].mxu0
        %8795 = vmatprep.mubr.bf16.mxu0 0
        %8796 = vmatmul.mubr.bf16.gmra.mrb[0].mxu0 %v8132
        %v8797 = vpop.f32.mrb[0].mxu0
        %v8798 = vadd.f32 %v8218, %v8797
        %v8799 = vpop.f32.mrb[0].mxu0
        %v8800 = vpop.f32.mrb[0].mxu0
        %v8801 = vadd.f32 %v8218, %v8800
        %v8802 = vpop.f32.mrb[0].mxu0
        %8803 = vmatprep.mubr.bf16.mxu0 0
        %8804 = vmatmul.mubr.bf16.gmra.mrb[0].mxu0 %v8133
        %v8805 = vpop.f32.mrb[0].mxu0
        %v8806 = vadd.f32 %v8218, %v8805
        %v8807 = vpop.f32.mrb[0].mxu0
        %v8808 = vpop.f32.mrb[0].mxu0
        %v8809 = vadd.f32 %v8218, %v8808
        %v8810 = vpop.f32.mrb[0].mxu0
        %8811 = vmatprep.mubr.bf16.mxu0 0
        %8812 = vmatmul.mubr.bf16.gmra.mrb[0].mxu0 %v8134
        %v8813 = vpop.f32.mrb[0].mxu0
        %v8814 = vadd.f32 %v8218, %v8813
        %v8815 = vpop.f32.mrb[0].mxu0
        %v8816 = vpop.f32.mrb[0].mxu0
        %v8817 = vadd.f32 %v8218, %v8816
        %v8818 = vpop.f32.mrb[0].mxu0
        %8819 = vmatprep.mubr.bf16.mxu0 0
        %8820 = vmatmul.mubr.bf16.gmra.mrb[0].mxu0 %v8135
        %v8821 = vpop.f32.mrb[0].mxu0
        %v8822 = vadd.f32 %v8218, %v8821
        %v8823 = vpop.f32.mrb[0].mxu0
        %v8824 = vpop.f32.mrb[0].mxu0
        %v8825 = vadd.f32 %v8218, %v8824
        %v8826 = vpop.f32.mrb[0].mxu0
        %8827 = vmatprep.mubr.bf16.mxu0 0
        %8828 = vmatmul.mubr.bf16.gmra.mrb[0].mxu0 %v8136
        %v8829 = vpop.f32.mrb[0].mxu0
        %v8830 = vadd.f32 %v8218, %v8829
        %v8831 = vpop.f32.mrb[0].mxu0
        %v8832 = vpop.f32.mrb[0].mxu0
        %v8833 = vadd.f32 %v8218, %v8832
        %v8834 = vpop.f32.mrb[0].mxu0
        %8835 = vmatprep.mubr.bf16.mxu0 0
        %8836 = vmatmul.mubr.bf16.gmra.mrb[0].mxu0 %v8137
        %v8837 = vpop.f32.mrb[0].mxu0
        %v8838 = vadd.f32 %v8218, %v8837
        %v8839 = vpop.f32.mrb[0].mxu0
        %v8840 = vpop.f32.mrb[0].mxu0
        %v8841 = vadd.f32 %v8218, %v8840
        %v8842 = vpop.f32.mrb[0].mxu0
        %8843 = vmatprep.mubr.bf16.mxu0 0
        %8844 = vmatmul.mubr.bf16.gmra.mrb[0].mxu0 %v8138
        %v8845 = vpop.f32.mrb[0].mxu0
        %v8846 = vadd.f32 %v8218, %v8845
        %v8847 = vpop.f32.mrb[0].mxu0
        %v8848 = vpop.f32.mrb[0].mxu0
        %v8849 = vadd.f32 %v8218, %v8848
        %v8850 = vpop.f32.mrb[0].mxu0
        %8851 = vmatprep.mubr.bf16.mxu0 0
        %8852 = vmatmul.mubr.bf16.gmra.mrb[0].mxu0 %v8139
        %v8853 = vpop.f32.mrb[0].mxu0
        %v8854 = vadd.f32 %v8218, %v8853
        %v8855 = vpop.f32.mrb[0].mxu0
        %v8856 = vpop.f32.mrb[0].mxu0
        %v8857 = vadd.f32 %v8218, %v8856
        %v8858 = vpop.f32.mrb[0].mxu0
        %8859 = vmatprep.mubr.bf16.mxu0 0
        %8860 = vmatmul.mubr.bf16.gmra.mrb[0].mxu0 %v8140
        %v8861 = vpop.f32.mrb[0].mxu0
        %v8862 = vadd.f32 %v8218, %v8861
        %v8863 = vpop.f32.mrb[0].mxu0
        %v8864 = vpop.f32.mrb[0].mxu0
        %v8865 = vadd.f32 %v8218, %v8864
        %v8866 = vpop.f32.mrb[0].mxu0
        %8867 = vmatprep.mubr.bf16.mxu0 0
        %8868 = vmatmul.mubr.bf16.gmra.mrb[0].mxu0 %v8141
        %v8869 = vpop.f32.mrb[0].mxu0
        %v8870 = vadd.f32 %v8218, %v8869
        %v8871 = vpop.f32.mrb[0].mxu0
        %v8872 = vpop.f32.mrb[0].mxu0
        %v8873 = vadd.f32 %v8218, %v8872
        %v8874 = vpop.f32.mrb[0].mxu0
        %8875 = vmatprep.mubr.bf16.mxu0 0
        %8876 = vmatmul.mubr.bf16.gmra.mrb[0].mxu0 %v8142
        %v8877 = vpop.f32.mrb[0].mxu0
        %v8878 = vadd.f32 %v8218, %v8877
        %v8879 = vpop.f32.mrb[0].mxu0
        %v8880 = vpop.f32.mrb[0].mxu0
        %v8881 = vadd.f32 %v8218, %v8880
        %v8882 = vpop.f32.mrb[0].mxu0
        %8883 = vmatprep.mubr.bf16.mxu0 0
        %8884 = vmatmul.mubr.bf16.gmra.mrb[0].mxu0 %v8143
        %v8885 = vpop.f32.mrb[0].mxu0
        %v8886 = vadd.f32 %v8218, %v8885
        %v8887 = vpop.f32.mrb[0].mxu0
        %v8888 = vpop.f32.mrb[0].mxu0
        %v8889 = vadd.f32 %v8218, %v8888
        %v8890 = vpop.f32.mrb[0].mxu0
        %8891 = vmatprep.mubr.bf16.mxu0 0
        %8892 = vmatmul.mubr.bf16.gmra.mrb[0].mxu0 %v8144
        %v8893 = vpop.f32.mrb[0].mxu0
        %v8894 = vadd.f32 %v8218, %v8893
        %v8895 = vpop.f32.mrb[0].mxu0
        %v8896 = vpop.f32.mrb[0].mxu0
        %v8897 = vadd.f32 %v8218, %v8896
        %v8898 = vpop.f32.mrb[0].mxu0
        %8899 = vmatprep.mubr.bf16.mxu0 0
        %8900 = vmatmul.mubr.bf16.gmra.mrb[0].mxu0 %v8145
        %v8901 = vpop.f32.mrb[0].mxu0
        %v8902 = vadd.f32 %v8218, %v8901
        %v8903 = vpop.f32.mrb[0].mxu0
        %v8904 = vpop.f32.mrb[0].mxu0
        %v8905 = vadd.f32 %v8218, %v8904
        %v8906 = vpop.f32.mrb[0].mxu0
        %8907 = vmatprep.mubr.bf16.mxu0 0
        %8908 = vmatmul.mubr.bf16.gmra.mrb[0].mxu0 %v8146
        %v8909 = vpop.f32.mrb[0].mxu0
        %v8910 = vadd.f32 %v8218, %v8909
        %v8911 = vpop.f32.mrb[0].mxu0
        %v8912 = vpop.f32.mrb[0].mxu0
        %v8913 = vadd.f32 %v8218, %v8912
        %v8914 = vpop.f32.mrb[0].mxu0
        %8915 = vmatprep.mubr.bf16.mxu0 0
        %8916 = vmatmul.mubr.bf16.gmra.mrb[0].mxu0 %v8147
        %v8917 = vpop.f32.mrb[0].mxu0
        %v8918 = vadd.f32 %v8218, %v8917
        %v8919 = vpop.f32.mrb[0].mxu0
        %v8920 = vpop.f32.mrb[0].mxu0
        %v8921 = vadd.f32 %v8218, %v8920
        %v8922 = vpop.f32.mrb[0].mxu0
        %8923 = vmatprep.mubr.bf16.mxu0 0
        %8924 = vmatmul.mubr.bf16.gmra.mrb[0].mxu0 %v8148
        %v8925 = vpop.f32.mrb[0].mxu0
        %v8926 = vadd.f32 %v8218, %v8925
        %v8927 = vpop.f32.mrb[0].mxu0
        %v8928 = vpop.f32.mrb[0].mxu0
        %v8929 = vadd.f32 %v8218, %v8928
        %v8930 = vpop.f32.mrb[0].mxu0
        %8931 = vmatprep.mubr.bf16.mxu0 0
        %8932 = vmatmul.mubr.bf16.gmra.mrb[0].mxu0 %v8149
        %v8933 = vpop.f32.mrb[0].mxu0
        %v8934 = vadd.f32 %v8218, %v8933
        %v8935 = vpop.f32.mrb[0].mxu0
        %v8936 = vpop.f32.mrb[0].mxu0
        %v8937 = vadd.f32 %v8218, %v8936
        %v8938 = vpop.f32.mrb[0].mxu0
        %8939 = vmatprep.mubr.bf16.mxu0 0
        %8940 = vmatmul.mubr.bf16.gmra.mrb[0].mxu0 %v8150
        %v8941 = vpop.f32.mrb[0].mxu0
        %v8942 = vadd.f32 %v8218, %v8941
        %v8943 = vpop.f32.mrb[0].mxu0
        %v8944 = vpop.f32.mrb[0].mxu0
        %v8945 = vadd.f32 %v8218, %v8944
        %v8946 = vpop.f32.mrb[0].mxu0
        %8947 = vmatprep.mubr.bf16.mxu0 0
        %8948 = vmatmul.mubr.bf16.gmra.mrb[0].mxu0 %v8151
        %v8949 = vpop.f32.mrb[0].mxu0
        %v8950 = vadd.f32 %v8218, %v8949
        %v8951 = vpop.f32.mrb[0].mxu0
        %v8952 = vpop.f32.mrb[0].mxu0
        %v8953 = vadd.f32 %v8218, %v8952
        %v8954 = vpop.f32.mrb[0].mxu0
        %8955 = vmatprep.mubr.bf16.mxu0 0
        %8956 = vmatmul.mubr.bf16.gmra.mrb[0].mxu0 %v8152
        %v8957 = vpop.f32.mrb[0].mxu0
        %v8958 = vadd.f32 %v8218, %v8957
        %v8959 = vpop.f32.mrb[0].mxu0
        %v8960 = vpop.f32.mrb[0].mxu0
        %v8961 = vadd.f32 %v8218, %v8960
        %v8962 = vpop.f32.mrb[0].mxu0
        %8963 = vmatprep.mubr.bf16.mxu0 0
        %8964 = vmatmul.mubr.bf16.gmra.mrb[0].mxu0 %v8153
        %v8965 = vpop.f32.mrb[0].mxu0
        %v8966 = vadd.f32 %v8218, %v8965
        %v8967 = vpop.f32.mrb[0].mxu0
        %v8968 = vpop.f32.mrb[0].mxu0
        %v8969 = vadd.f32 %v8218, %v8968
        %v8970 = vpop.f32.mrb[0].mxu0
        %8971 = vmatprep.mubr.bf16.mxu0 0
        %8972 = vmatmul.mubr.bf16.gmra.mrb[0].mxu0 %v8154
        %v8973 = vpop.f32.mrb[0].mxu0
        %v8974 = vadd.f32 %v8218, %v8973
        %v8975 = vpop.f32.mrb[0].mxu0
        %v8976 = vpop.f32.mrb[0].mxu0
        %v8977 = vadd.f32 %v8218, %v8976
        %v8978 = vpop.f32.mrb[0].mxu0
        %8979 = vmatprep.mubr.bf16.mxu0 0
        %8980 = vmatmul.mubr.bf16.gmra.mrb[0].mxu0 %v8155
        %v8981 = vpop.f32.mrb[0].mxu0
        %v8982 = vadd.f32 %v8218, %v8981
        %v8983 = vpop.f32.mrb[0].mxu0
        %v8984 = vpop.f32.mrb[0].mxu0
        %v8985 = vadd.f32 %v8218, %v8984
        %v8986 = vpop.f32.mrb[0].mxu0
        %8987 = vmatprep.mubr.bf16.mxu0 0
        %8988 = vmatmul.mubr.bf16.gmra.mrb[0].mxu0 %v8156
        %v8989 = vpop.f32.mrb[0].mxu0
        %v8990 = vadd.f32 %v8218, %v8989
        %v8991 = vpop.f32.mrb[0].mxu0
        %v8992 = vpop.f32.mrb[0].mxu0
        %v8993 = vadd.f32 %v8218, %v8992
        %v8994 = vpop.f32.mrb[0].mxu0
        %8995 = vmatprep.mubr.bf16.mxu0 0
        %8996 = vmatmul.mubr.bf16.gmra.mrb[0].mxu0 %v8157
        %v8997 = vpop.f32.mrb[0].mxu0
        %v8998 = vadd.f32 %v8218, %v8997
        %v8999 = vpop.f32.mrb[0].mxu0
        %v9000 = vpop.f32.mrb[0].mxu0
        %v9001 = vadd.f32 %v8218, %v9000
        %v9002 = vpop.f32.mrb[0].mxu0
        %9003 = vmatprep.mubr.bf16.mxu0 0
        %9004 = vmatmul.mubr.bf16.gmra.mrb[0].mxu0 %v8158
        %v9005 = vpop.f32.mrb[0].mxu0
        %v9006 = vadd.f32 %v8218, %v9005
        %v9007 = vpop.f32.mrb[0].mxu0
        %v9008 = vpop.f32.mrb[0].mxu0
        %v9009 = vadd.f32 %v8218, %v9008
        %v9010 = vpop.f32.mrb[0].mxu0
        %9011 = vmatprep.mubr.bf16.mxu0 0
        %9012 = vmatmul.mubr.bf16.gmra.mrb[0].mxu0 %v8159
        %v9013 = vpop.f32.mrb[0].mxu0
        %v9014 = vadd.f32 %v8218, %v9013
        %v9015 = vpop.f32.mrb[0].mxu0
        %v9016 = vpop.f32.mrb[0].mxu0
        %v9017 = vadd.f32 %v8218, %v9016
        %v9018 = vpop.f32.mrb[0].mxu0
        %9019 = vmatprep.mubr.bf16.mxu0 0
        %9020 = vmatmul.mubr.bf16.gmra.mrb[0].mxu0 %v8160
        %v9021 = vpop.f32.mrb[0].mxu0
        %v9022 = vadd.f32 %v8218, %v9021
        %v9023 = vpop.f32.mrb[0].mxu0
        %v9024 = vpop.f32.mrb[0].mxu0
        %v9025 = vadd.f32 %v8218, %v9024
        %v9026 = vpop.f32.mrb[0].mxu0
        %9027 = vmatprep.mubr.bf16.mxu0 0
        %9028 = vmatmul.mubr.bf16.gmra.mrb[0].mxu0 %v8161
        %v9029 = vpop.f32.mrb[0].mxu0
        %v9030 = vadd.f32 %v8218, %v9029
        %v9031 = vpop.f32.mrb[0].mxu0
        %v9032 = vpop.f32.mrb[0].mxu0
        %v9033 = vadd.f32 %v8218, %v9032
        %v9034 = vpop.f32.mrb[0].mxu0
        %9035 = vmatprep.mubr.bf16.mxu0 0
        %9036 = vmatmul.mubr.bf16.gmra.mrb[0].mxu0 %v8162
        %v9037 = vpop.f32.mrb[0].mxu0
        %v9038 = vadd.f32 %v8218, %v9037
        %v9039 = vpop.f32.mrb[0].mxu0
        %v9040 = vpop.f32.mrb[0].mxu0
        %v9041 = vadd.f32 %v8218, %v9040
        %v9042 = vpop.f32.mrb[0].mxu0
        %9043 = vmatprep.mubr.bf16.mxu0 0
        %9044 = vmatmul.mubr.bf16.gmra.mrb[0].mxu0 %v8163
        %v9045 = vpop.f32.mrb[0].mxu0
        %v9046 = vadd.f32 %v8218, %v9045
        %v9047 = vpop.f32.mrb[0].mxu0
        %v9048 = vpop.f32.mrb[0].mxu0
        %v9049 = vadd.f32 %v8218, %v9048
        %v9050 = vpop.f32.mrb[0].mxu0
        %9051 = vmatprep.mubr.bf16.mxu0 0
        %9052 = vmatmul.mubr.bf16.gmra.mrb[0].mxu0 %v8164
        %v9053 = vpop.f32.mrb[0].mxu0
        %v9054 = vadd.f32 %v8218, %v9053
        %v9055 = vpop.f32.mrb[0].mxu0
        %v9056 = vpop.f32.mrb[0].mxu0
        %v9057 = vadd.f32 %v8218, %v9056
        %v9058 = vpop.f32.mrb[0].mxu0
        %9059 = vmatprep.mubr.bf16.mxu0 0
        %9060 = vmatmul.mubr.bf16.gmra.mrb[0].mxu0 %v8165
        %v9061 = vpop.f32.mrb[0].mxu0
        %v9062 = vadd.f32 %v8218, %v9061
        %v9063 = vpop.f32.mrb[0].mxu0
        %v9064 = vpop.f32.mrb[0].mxu0
        %v9065 = vadd.f32 %v8218, %v9064
        %v9066 = vpop.f32.mrb[0].mxu0
        %9067 = vmatprep.mubr.bf16.mxu0 0
        %9068 = vmatmul.mubr.bf16.gmra.mrb[0].mxu0 %v8166
        %v9069 = vpop.f32.mrb[0].mxu0
        %v9070 = vadd.f32 %v8218, %v9069
        %v9071 = vpop.f32.mrb[0].mxu0
        %v9072 = vpop.f32.mrb[0].mxu0
        %v9073 = vadd.f32 %v8218, %v9072
        %v9074 = vpop.f32.mrb[0].mxu0
        %9075 = vmatprep.mubr.bf16.mxu0 0
        %9076 = vmatmul.mubr.bf16.gmra.mrb[0].mxu0 %v8167
        %v9077 = vpop.f32.mrb[0].mxu0
        %v9078 = vadd.f32 %v8218, %v9077
        %v9079 = vpop.f32.mrb[0].mxu0
        %v9080 = vpop.f32.mrb[0].mxu0
        %v9081 = vadd.f32 %v8218, %v9080
        %v9082 = vpop.f32.mrb[0].mxu0
        %9083 = vmatprep.mubr.bf16.mxu0 0
        %9084 = vmatmul.mubr.bf16.gmra.mrb[0].mxu0 %v8168
        %v9085 = vpop.f32.mrb[0].mxu0
        %v9086 = vadd.f32 %v8218, %v9085
        %v9087 = vpop.f32.mrb[0].mxu0
        %v9088 = vpop.f32.mrb[0].mxu0
        %v9089 = vadd.f32 %v8218, %v9088
        %v9090 = vpop.f32.mrb[0].mxu0
        %9091 = vmatprep.mubr.bf16.mxu0 0
        %9092 = vmatmul.mubr.bf16.gmra.mrb[0].mxu0 %v8169
        %v9093 = vpop.f32.mrb[0].mxu0
        %v9094 = vadd.f32 %v8218, %v9093
        %v9095 = vpop.f32.mrb[0].mxu0
        %v9096 = vpop.f32.mrb[0].mxu0
        %v9097 = vadd.f32 %v8218, %v9096
        %v9098 = vpop.f32.mrb[0].mxu0
        %9099 = vmatprep.mubr.bf16.mxu0 0
        %9100 = vmatmul.mubr.bf16.gmra.mrb[0].mxu0 %v8170
        %v9101 = vpop.f32.mrb[0].mxu0
        %v9102 = vadd.f32 %v8218, %v9101
        %v9103 = vpop.f32.mrb[0].mxu0
        %v9104 = vpop.f32.mrb[0].mxu0
        %v9105 = vadd.f32 %v8218, %v9104
        %v9106 = vpop.f32.mrb[0].mxu0
        %9107 = vmatprep.mubr.bf16.mxu0 0
        %9108 = vmatmul.mubr.bf16.gmra.mrb[0].mxu0 %v8171
        %v9109 = vpop.f32.mrb[0].mxu0
        %v9110 = vadd.f32 %v8218, %v9109
        %v9111 = vpop.f32.mrb[0].mxu0
        %v9112 = vpop.f32.mrb[0].mxu0
        %v9113 = vadd.f32 %v8218, %v9112
        %v9114 = vpop.f32.mrb[0].mxu0
        %9115 = vmatprep.mubr.bf16.mxu0 0
        %9116 = vmatmul.mubr.bf16.gmra.mrb[0].mxu0 %v8172
        %v9117 = vpop.f32.mrb[0].mxu0
        %v9118 = vadd.f32 %v8218, %v9117
        %v9119 = vpop.f32.mrb[0].mxu0
        %v9120 = vpop.f32.mrb[0].mxu0
        %v9121 = vadd.f32 %v8218, %v9120
        %v9122 = vpop.f32.mrb[0].mxu0
        %9123 = vmatprep.mubr.bf16.mxu0 0
        %9124 = vmatmul.mubr.bf16.gmra.mrb[0].mxu0 %v8173
        %v9125 = vpop.f32.mrb[0].mxu0
        %v9126 = vadd.f32 %v8218, %v9125
        %v9127 = vpop.f32.mrb[0].mxu0
        %v9128 = vpop.f32.mrb[0].mxu0
        %v9129 = vadd.f32 %v8218, %v9128
        %v9130 = vpop.f32.mrb[0].mxu0
        %9131 = vmatprep.mubr.bf16.mxu0 0
        %9132 = vmatmul.mubr.bf16.gmra.mrb[0].mxu0 %v8174
        %v9133 = vpop.f32.mrb[0].mxu0
        %v9134 = vadd.f32 %v8218, %v9133
        %v9135 = vpop.f32.mrb[0].mxu0
        %v9136 = vpop.f32.mrb[0].mxu0
        %v9137 = vadd.f32 %v8218, %v9136
        %v9138 = vpop.f32.mrb[0].mxu0
        %9139 = vmatprep.mubr.bf16.mxu0 0
        %9140 = vmatmul.mubr.bf16.gmra.mrb[0].mxu0 %v8175
        %v9141 = vpop.f32.mrb[0].mxu0
        %v9142 = vadd.f32 %v8218, %v9141
        %v9143 = vpop.f32.mrb[0].mxu0
        %v9144 = vpop.f32.mrb[0].mxu0
        %v9145 = vadd.f32 %v8218, %v9144
        %v9146 = vpop.f32.mrb[0].mxu0
        %9147 = vmatprep.mubr.bf16.mxu0 0
        %9148 = vmatmul.mubr.bf16.gmra.mrb[0].mxu0 %v8176
        %v9149 = vpop.f32.mrb[0].mxu0
        %v9150 = vadd.f32 %v8218, %v9149
        %v9151 = vpop.f32.mrb[0].mxu0
        %v9152 = vpop.f32.mrb[0].mxu0
        %v9153 = vadd.f32 %v8218, %v9152
        %v9154 = vpop.f32.mrb[0].mxu0
        %9155 = vmatprep.mubr.bf16.mxu0 0
        %9156 = vmatmul.mubr.bf16.gmra.mrb[0].mxu0 %v8177
        %v9157 = vpop.f32.mrb[0].mxu0
        %v9158 = vadd.f32 %v8218, %v9157
        %v9159 = vpop.f32.mrb[0].mxu0
        %v9160 = vpop.f32.mrb[0].mxu0
        %v9161 = vadd.f32 %v8218, %v9160
        %v9162 = vpop.f32.mrb[0].mxu0
        %9163 = vmatprep.mubr.bf16.mxu0 0
        %9164 = vmatmul.mubr.bf16.gmra.mrb[0].mxu0 %v8178
        %v9165 = vpop.f32.mrb[0].mxu0
        %v9166 = vadd.f32 %v8218, %v9165
        %v9167 = vpop.f32.mrb[0].mxu0
        %v9168 = vpop.f32.mrb[0].mxu0
        %v9169 = vadd.f32 %v8218, %v9168
        %v9170 = vpop.f32.mrb[0].mxu0
        %9171 = vmatprep.mubr.bf16.mxu0 0
        %9172 = vmatmul.mubr.bf16.gmra.mrb[0].mxu0 %v8179
        %v9173 = vpop.f32.mrb[0].mxu0
        %v9174 = vadd.f32 %v8218, %v9173
        %v9175 = vpop.f32.mrb[0].mxu0
        %v9176 = vpop.f32.mrb[0].mxu0
        %v9177 = vadd.f32 %v8218, %v9176
        %v9178 = vpop.f32.mrb[0].mxu0
        %9179 = vmatprep.mubr.bf16.mxu0 0
        %9180 = vmatmul.mubr.bf16.gmra.mrb[0].mxu0 %v8180
        %v9181 = vpop.f32.mrb[0].mxu0
        %v9182 = vadd.f32 %v8218, %v9181
        %v9183 = vpop.f32.mrb[0].mxu0
        %v9184 = vpop.f32.mrb[0].mxu0
        %v9185 = vadd.f32 %v8218, %v9184
        %v9186 = vpop.f32.mrb[0].mxu0
        %9187 = vmatprep.mubr.bf16.mxu0 0
        %9188 = vmatmul.mubr.bf16.gmra.mrb[0].mxu0 %v8181
        %v9189 = vpop.f32.mrb[0].mxu0
        %v9190 = vadd.f32 %v8218, %v9189
        %v9191 = vpop.f32.mrb[0].mxu0
        %v9192 = vpop.f32.mrb[0].mxu0
        %v9193 = vadd.f32 %v8218, %v9192
        %v9194 = vpop.f32.mrb[0].mxu0
        %9195 = vmatprep.mubr.bf16.mxu0 0
        %9196 = vmatmul.mubr.bf16.gmra.mrb[0].mxu0 %v8182
        %v9197 = vpop.f32.mrb[0].mxu0
        %v9198 = vadd.f32 %v8218, %v9197
        %v9199 = vpop.f32.mrb[0].mxu0
        %v9200 = vpop.f32.mrb[0].mxu0
        %v9201 = vadd.f32 %v8218, %v9200
        %v9202 = vpop.f32.mrb[0].mxu0
        %9203 = vmatprep.mubr.bf16.mxu0 0
        %9204 = vmatmul.mubr.bf16.gmra.mrb[0].mxu0 %v8183
        %v9205 = vpop.f32.mrb[0].mxu0
        %v9206 = vadd.f32 %v8218, %v9205
        %v9207 = vpop.f32.mrb[0].mxu0
        %v9208 = vpop.f32.mrb[0].mxu0
        %v9209 = vadd.f32 %v8218, %v9208
        %v9210 = vpop.f32.mrb[0].mxu0
        %9211 = vmatprep.mubr.bf16.mxu0 0
        %9212 = vmatmul.mubr.bf16.gmra.mrb[0].mxu0 %v8184
        %v9213 = vpop.f32.mrb[0].mxu0
        %v9214 = vadd.f32 %v8218, %v9213
        %v9215 = vpop.f32.mrb[0].mxu0
        %v9216 = vpop.f32.mrb[0].mxu0
        %v9217 = vadd.f32 %v8218, %v9216
        %v9218 = vpop.f32.mrb[0].mxu0
        %9219 = vmatprep.mubr.bf16.mxu0 0
        %9220 = vmatmul.mubr.bf16.gmra.mrb[0].mxu0 %v8185
        %v9221 = vpop.f32.mrb[0].mxu0
        %v9222 = vadd.f32 %v8218, %v9221
        %v9223 = vpop.f32.mrb[0].mxu0
        %v9224 = vpop.f32.mrb[0].mxu0
        %v9225 = vadd.f32 %v8218, %v9224
        %v9226 = vpop.f32.mrb[0].mxu0
        %9227 = vmatprep.mubr.bf16.mxu0 0
        %9228 = vmatmul.mubr.bf16.gmra.mrb[0].mxu0 %v8186
        %v9229 = vpop.f32.mrb[0].mxu0
        %v9230 = vadd.f32 %v8218, %v9229
        %v9231 = vpop.f32.mrb[0].mxu0
        %v9232 = vpop.f32.mrb[0].mxu0
        %v9233 = vadd.f32 %v8218, %v9232
        %v9234 = vpop.f32.mrb[0].mxu0
        %9235 = vmatprep.mubr.bf16.mxu0 0
        %9236 = vmatmul.mubr.bf16.gmra.mrb[0].mxu0 %v8187
        %v9237 = vpop.f32.mrb[0].mxu0
        %v9238 = vadd.f32 %v8218, %v9237
        %v9239 = vpop.f32.mrb[0].mxu0
        %v9240 = vpop.f32.mrb[0].mxu0
        %v9241 = vadd.f32 %v8218, %v9240
        %v9242 = vpop.f32.mrb[0].mxu0
        %9243 = vmatprep.mubr.bf16.mxu0 0
        %9244 = vmatmul.mubr.bf16.gmra.mrb[0].mxu0 %v8188
        %v9245 = vpop.f32.mrb[0].mxu0
        %v9246 = vadd.f32 %v8218, %v9245
        %v9247 = vpop.f32.mrb[0].mxu0
        %v9248 = vpop.f32.mrb[0].mxu0
        %v9249 = vadd.f32 %v8218, %v9248
        %v9250 = vpop.f32.mrb[0].mxu0
        %9251 = vmatprep.mubr.bf16.mxu0 0
        %9252 = vmatmul.mubr.bf16.gmra.mrb[0].mxu0 %v8189
        %v9253 = vpop.f32.mrb[0].mxu0
        %v9254 = vadd.f32 %v8218, %v9253
        %v9255 = vpop.f32.mrb[0].mxu0
        %v9256 = vpop.f32.mrb[0].mxu0
        %v9257 = vadd.f32 %v8218, %v9256
        %v9258 = vpop.f32.mrb[0].mxu0
        %9259 = vmatprep.mubr.bf16.mxu0 0
        %9260 = vmatmul.mubr.bf16.gmra.mrb[0].mxu0 %v8190
        %v9261 = vpop.f32.mrb[0].mxu0
        %v9262 = vadd.f32 %v8218, %v9261
        %v9263 = vpop.f32.mrb[0].mxu0
        %v9264 = vpop.f32.mrb[0].mxu0
        %v9265 = vadd.f32 %v8218, %v9264
        %v9266 = vpop.f32.mrb[0].mxu0
        %9267 = vmatprep.mubr.bf16.mxu0 0
        %9268 = vmatmul.mubr.bf16.gmra.mrb[0].mxu0 %v8191
        %v9269 = vpop.f32.mrb[0].mxu0
        %v9270 = vadd.f32 %v8218, %v9269
        %v9271 = vpop.f32.mrb[0].mxu0
        %v9272 = vpop.f32.mrb[0].mxu0
        %v9273 = vadd.f32 %v8218, %v9272
        %v9274 = vpop.f32.mrb[0].mxu0
        %9275 = vmatprep.mubr.bf16.mxu0 0
        %9276 = vmatmul.mubr.bf16.gmra.mrb[0].mxu0 %v8192
        %v9277 = vpop.f32.mrb[0].mxu0
        %v9278 = vadd.f32 %v8218, %v9277
        %v9279 = vpop.f32.mrb[0].mxu0
        %v9280 = vpop.f32.mrb[0].mxu0
        %v9281 = vadd.f32 %v8218, %v9280
        %v9282 = vpop.f32.mrb[0].mxu0
        %9283 = vmatprep.mubr.bf16.mxu0 0
        %9284 = vmatmul.mubr.bf16.gmra.mrb[0].mxu0 %v8193
        %v9285 = vpop.f32.mrb[0].mxu0
        %v9286 = vadd.f32 %v8218, %v9285
        %v9287 = vpop.f32.mrb[0].mxu0
        %v9288 = vpop.f32.mrb[0].mxu0
        %v9289 = vadd.f32 %v8218, %v9288
        %v9290 = vpop.f32.mrb[0].mxu0
        %9291 = vmatprep.mubr.bf16.mxu0 0
        %9292 = vmatmul.mubr.bf16.gmra.mrb[0].mxu0 %v8194
        %v9293 = vpop.f32.mrb[0].mxu0
        %v9294 = vadd.f32 %v8218, %v9293
        %v9295 = vpop.f32.mrb[0].mxu0
        %v9296 = vpop.f32.mrb[0].mxu0
        %v9297 = vadd.f32 %v8218, %v9296
        %v9298 = vpop.f32.mrb[0].mxu0
        %9299 = vmatprep.mubr.bf16.mxu0 0
        %9300 = vmatmul.mubr.bf16.gmra.mrb[0].mxu0 %v8195
        %v9301 = vpop.f32.mrb[0].mxu0
        %v9302 = vadd.f32 %v8218, %v9301
        %v9303 = vpop.f32.mrb[0].mxu0
        %v9304 = vpop.f32.mrb[0].mxu0
        %v9305 = vadd.f32 %v8218, %v9304
        %v9306 = vpop.f32.mrb[0].mxu0
        %9307 = vmatprep.mubr.bf16.mxu0 0
        %9308 = vmatmul.mubr.bf16.gmra.mrb[0].mxu0 %v8196
        %v9309 = vpop.f32.mrb[0].mxu0
        %v9310 = vadd.f32 %v8218, %v9309
        %v9311 = vpop.f32.mrb[0].mxu0
        %v9312 = vpop.f32.mrb[0].mxu0
        %v9313 = vadd.f32 %v8218, %v9312
        %v9314 = vpop.f32.mrb[0].mxu0
        %9315 = vmatprep.mubr.bf16.mxu0 0
        %9316 = vmatmul.mubr.bf16.gmra.mrb[0].mxu0 %v8197
        %v9317 = vpop.f32.mrb[0].mxu0
        %v9318 = vadd.f32 %v8218, %v9317
        %v9319 = vpop.f32.mrb[0].mxu0
        %v9320 = vpop.f32.mrb[0].mxu0
        %v9321 = vadd.f32 %v8218, %v9320
        %v9322 = vpop.f32.mrb[0].mxu0
        %9323 = vdwg.mxu0
        %v9324 = vmax.f32 %v8302, 0.0
        %v9325 = vmax.f32 %v8305, 0.0
        %v9326 = vmax.f32 %v8310, 0.0
        %v9327 = vmax.f32 %v8313, 0.0
        %v9328 = vmax.f32 %v8318, 0.0
        %v9329 = vmax.f32 %v8321, 0.0
        %v9330 = vmax.f32 %v8326, 0.0
        %v9331 = vmax.f32 %v8329, 0.0
        %v9332 = vmax.f32 %v8334, 0.0
        %v9333 = vmax.f32 %v8337, 0.0
        %v9334 = vmax.f32 %v8342, 0.0
        %v9335 = vmax.f32 %v8345, 0.0
        %v9336 = vmax.f32 %v8350, 0.0
        %v9337 = vmax.f32 %v8353, 0.0
        %v9338 = vmax.f32 %v8358, 0.0
        %v9339 = vmax.f32 %v8361, 0.0
        %v9340 = vmax.f32 %v8366, 0.0
        %v9341 = vmax.f32 %v8369, 0.0
        %v9342 = vmax.f32 %v8374, 0.0
        %v9343 = vmax.f32 %v8377, 0.0
        %v9344 = vmax.f32 %v8382, 0.0
        %v9345 = vmax.f32 %v8385, 0.0
        %v9346 = vmax.f32 %v8390, 0.0
        %v9347 = vmax.f32 %v8393, 0.0
        %v9348 = vmax.f32 %v8398, 0.0
        %v9349 = vmax.f32 %v8401, 0.0
        %v9350 = vmax.f32 %v8406, 0.0
        %v9351 = vmax.f32 %v8409, 0.0
        %v9352 = vmax.f32 %v8414, 0.0
        %v9353 = vmax.f32 %v8417, 0.0
        %v9354 = vmax.f32 %v8422, 0.0
        %v9355 = vmax.f32 %v8425, 0.0
        %v9356 = vmax.f32 %v8430, 0.0
        %v9357 = vmax.f32 %v8433, 0.0
        %v9358 = vmax.f32 %v8438, 0.0
        %v9359 = vmax.f32 %v8441, 0.0
        %v9360 = vmax.f32 %v8446, 0.0
        %v9361 = vmax.f32 %v8449, 0.0
        %v9362 = vmax.f32 %v8454, 0.0
        %v9363 = vmax.f32 %v8457, 0.0
        %v9364 = vmax.f32 %v8462, 0.0
        %v9365 = vmax.f32 %v8465, 0.0
        %v9366 = vmax.f32 %v8470, 0.0
        %v9367 = vmax.f32 %v8473, 0.0
        %v9368 = vmax.f32 %v8478, 0.0
        %v9369 = vmax.f32 %v8481, 0.0
        %v9370 = vmax.f32 %v8486, 0.0
        %v9371 = vmax.f32 %v8489, 0.0
        %v9372 = vmax.f32 %v8494, 0.0
        %v9373 = vmax.f32 %v8497, 0.0
        %v9374 = vmax.f32 %v8502, 0.0
        %v9375 = vmax.f32 %v8505, 0.0
        %v9376 = vmax.f32 %v8510, 0.0
        %v9377 = vmax.f32 %v8513, 0.0
        %v9378 = vmax.f32 %v8518, 0.0
        %v9379 = vmax.f32 %v8521, 0.0
        %v9380 = vmax.f32 %v8526, 0.0
        %v9381 = vmax.f32 %v8529, 0.0
        %v9382 = vmax.f32 %v8534, 0.0
        %v9383 = vmax.f32 %v8537, 0.0
        %v9384 = vmax.f32 %v8542, 0.0
        %v9385 = vmax.f32 %v8545, 0.0
        %v9386 = vmax.f32 %v8550, 0.0
        %v9387 = vmax.f32 %v8553, 0.0
        %v9388 = vmax.f32 %v8558, 0.0
        %v9389 = vmax.f32 %v8561, 0.0
        %v9390 = vmax.f32 %v8566, 0.0
        %v9391 = vmax.f32 %v8569, 0.0
        %v9392 = vmax.f32 %v8574, 0.0
        %v9393 = vmax.f32 %v8577, 0.0
        %v9394 = vmax.f32 %v8582, 0.0
        %v9395 = vmax.f32 %v8585, 0.0
        %v9396 = vmax.f32 %v8590, 0.0
        %v9397 = vmax.f32 %v8593, 0.0
        %v9398 = vmax.f32 %v8598, 0.0
        %v9399 = vmax.f32 %v8601, 0.0
        %v9400 = vmax.f32 %v8606, 0.0
        %v9401 = vmax.f32 %v8609, 0.0
        %v9402 = vmax.f32 %v8614, 0.0
        %v9403 = vmax.f32 %v8617, 0.0
        %v9404 = vmax.f32 %v8622, 0.0
        %v9405 = vmax.f32 %v8625, 0.0
        %v9406 = vmax.f32 %v8630, 0.0
        %v9407 = vmax.f32 %v8633, 0.0
        %v9408 = vmax.f32 %v8638, 0.0
        %v9409 = vmax.f32 %v8641, 0.0
        %v9410 = vmax.f32 %v8646, 0.0
        %v9411 = vmax.f32 %v8649, 0.0
        %v9412 = vmax.f32 %v8654, 0.0
        %v9413 = vmax.f32 %v8657, 0.0
        %v9414 = vmax.f32 %v8662, 0.0
        %v9415 = vmax.f32 %v8665, 0.0
        %v9416 = vmax.f32 %v8670, 0.0
        %v9417 = vmax.f32 %v8673, 0.0
        %v9418 = vmax.f32 %v8678, 0.0
        %v9419 = vmax.f32 %v8681, 0.0
        %v9420 = vmax.f32 %v8686, 0.0
        %v9421 = vmax.f32 %v8689, 0.0
        %v9422 = vmax.f32 %v8694, 0.0
        %v9423 = vmax.f32 %v8697, 0.0
        %v9424 = vmax.f32 %v8702, 0.0
        %v9425 = vmax.f32 %v8705, 0.0
        %v9426 = vmax.f32 %v8710, 0.0
        %v9427 = vmax.f32 %v8713, 0.0
        %v9428 = vmax.f32 %v8718, 0.0
        %v9429 = vmax.f32 %v8721, 0.0
        %v9430 = vmax.f32 %v8726, 0.0
        %v9431 = vmax.f32 %v8729, 0.0
        %v9432 = vmax.f32 %v8734, 0.0
        %v9433 = vmax.f32 %v8737, 0.0
        %v9434 = vmax.f32 %v8742, 0.0
        %v9435 = vmax.f32 %v8745, 0.0
        %v9436 = vmax.f32 %v8750, 0.0
        %v9437 = vmax.f32 %v8753, 0.0
        %v9438 = vmax.f32 %v8758, 0.0
        %v9439 = vmax.f32 %v8761, 0.0
        %v9440 = vmax.f32 %v8766, 0.0
        %v9441 = vmax.f32 %v8769, 0.0
        %v9442 = vmax.f32 %v8774, 0.0
        %v9443 = vmax.f32 %v8777, 0.0
        %v9444 = vmax.f32 %v8782, 0.0
        %v9445 = vmax.f32 %v8785, 0.0
        %v9446 = vmax.f32 %v8790, 0.0
        %v9447 = vmax.f32 %v8793, 0.0
        %v9448 = vmax.f32 %v8798, 0.0
        %v9449 = vmax.f32 %v8801, 0.0
        %v9450 = vmax.f32 %v8806, 0.0
        %v9451 = vmax.f32 %v8809, 0.0
        %v9452 = vmax.f32 %v8814, 0.0
        %v9453 = vmax.f32 %v8817, 0.0
        %v9454 = vmax.f32 %v8822, 0.0
        %v9455 = vmax.f32 %v8825, 0.0
        %v9456 = vmax.f32 %v8830, 0.0
        %v9457 = vmax.f32 %v8833, 0.0
        %v9458 = vmax.f32 %v8838, 0.0
        %v9459 = vmax.f32 %v8841, 0.0
        %v9460 = vmax.f32 %v8846, 0.0
        %v9461 = vmax.f32 %v8849, 0.0
        %v9462 = vmax.f32 %v8854, 0.0
        %v9463 = vmax.f32 %v8857, 0.0
        %v9464 = vmax.f32 %v8862, 0.0
        %v9465 = vmax.f32 %v8865, 0.0
        %v9466 = vmax.f32 %v8870, 0.0
        %v9467 = vmax.f32 %v8873, 0.0
        %v9468 = vmax.f32 %v8878, 0.0
        %v9469 = vmax.f32 %v8881, 0.0
        %v9470 = vmax.f32 %v8886, 0.0
        %v9471 = vmax.f32 %v8889, 0.0
        %v9472 = vmax.f32 %v8894, 0.0
        %v9473 = vmax.f32 %v8897, 0.0
        %v9474 = vmax.f32 %v8902, 0.0
        %v9475 = vmax.f32 %v8905, 0.0
        %v9476 = vmax.f32 %v8910, 0.0
        %v9477 = vmax.f32 %v8913, 0.0
        %v9478 = vmax.f32 %v8918, 0.0
        %v9479 = vmax.f32 %v8921, 0.0
        %v9480 = vmax.f32 %v8926, 0.0
        %v9481 = vmax.f32 %v8929, 0.0
        %v9482 = vmax.f32 %v8934, 0.0
        %v9483 = vmax.f32 %v8937, 0.0
        %v9484 = vmax.f32 %v8942, 0.0
        %v9485 = vmax.f32 %v8945, 0.0
        %v9486 = vmax.f32 %v8950, 0.0
        %v9487 = vmax.f32 %v8953, 0.0
        %v9488 = vmax.f32 %v8958, 0.0
        %v9489 = vmax.f32 %v8961, 0.0
        %v9490 = vmax.f32 %v8966, 0.0
        %v9491 = vmax.f32 %v8969, 0.0
        %v9492 = vmax.f32 %v8974, 0.0
        %v9493 = vmax.f32 %v8977, 0.0
        %v9494 = vmax.f32 %v8982, 0.0
        %v9495 = vmax.f32 %v8985, 0.0
        %v9496 = vmax.f32 %v8990, 0.0
        %v9497 = vmax.f32 %v8993, 0.0
        %v9498 = vmax.f32 %v8998, 0.0
        %v9499 = vmax.f32 %v9001, 0.0
        %v9500 = vmax.f32 %v9006, 0.0
        %v9501 = vmax.f32 %v9009, 0.0
        %v9502 = vmax.f32 %v9014, 0.0
        %v9503 = vmax.f32 %v9017, 0.0
        %v9504 = vmax.f32 %v9022, 0.0
        %v9505 = vmax.f32 %v9025, 0.0
        %v9506 = vmax.f32 %v9030, 0.0
        %v9507 = vmax.f32 %v9033, 0.0
        %v9508 = vmax.f32 %v9038, 0.0
        %v9509 = vmax.f32 %v9041, 0.0
        %v9510 = vmax.f32 %v9046, 0.0
        %v9511 = vmax.f32 %v9049, 0.0
        %v9512 = vmax.f32 %v9054, 0.0
        %v9513 = vmax.f32 %v9057, 0.0
        %v9514 = vmax.f32 %v9062, 0.0
        %v9515 = vmax.f32 %v9065, 0.0
        %v9516 = vmax.f32 %v9070, 0.0
        %v9517 = vmax.f32 %v9073, 0.0
        %v9518 = vmax.f32 %v9078, 0.0
        %v9519 = vmax.f32 %v9081, 0.0
        %v9520 = vmax.f32 %v9086, 0.0
        %v9521 = vmax.f32 %v9089, 0.0
        %v9522 = vmax.f32 %v9094, 0.0
        %v9523 = vmax.f32 %v9097, 0.0
        %v9524 = vmax.f32 %v9102, 0.0
        %v9525 = vmax.f32 %v9105, 0.0
        %v9526 = vmax.f32 %v9110, 0.0
        %v9527 = vmax.f32 %v9113, 0.0
        %v9528 = vmax.f32 %v9118, 0.0
        %v9529 = vmax.f32 %v9121, 0.0
        %v9530 = vmax.f32 %v9126, 0.0
        %v9531 = vmax.f32 %v9129, 0.0
        %v9532 = vmax.f32 %v9134, 0.0
        %v9533 = vmax.f32 %v9137, 0.0
        %v9534 = vmax.f32 %v9142, 0.0
        %v9535 = vmax.f32 %v9145, 0.0
        %v9536 = vmax.f32 %v9150, 0.0
        %v9537 = vmax.f32 %v9153, 0.0
        %v9538 = vmax.f32 %v9158, 0.0
        %v9539 = vmax.f32 %v9161, 0.0
        %v9540 = vmax.f32 %v9166, 0.0
        %v9541 = vmax.f32 %v9169, 0.0
        %v9542 = vmax.f32 %v9174, 0.0
        %v9543 = vmax.f32 %v9177, 0.0
        %v9544 = vmax.f32 %v9182, 0.0
        %v9545 = vmax.f32 %v9185, 0.0
        %v9546 = vmax.f32 %v9190, 0.0
        %v9547 = vmax.f32 %v9193, 0.0
        %v9548 = vmax.f32 %v9198, 0.0
        %v9549 = vmax.f32 %v9201, 0.0
        %v9550 = vmax.f32 %v9206, 0.0
        %v9551 = vmax.f32 %v9209, 0.0
        %v9552 = vmax.f32 %v9214, 0.0
        %v9553 = vmax.f32 %v9217, 0.0
        %v9554 = vmax.f32 %v9222, 0.0
        %v9555 = vmax.f32 %v9225, 0.0
        %v9556 = vmax.f32 %v9230, 0.0
        %v9557 = vmax.f32 %v9233, 0.0
        %v9558 = vmax.f32 %v9238, 0.0
        %v9559 = vmax.f32 %v9241, 0.0
        %v9560 = vmax.f32 %v9246, 0.0
        %v9561 = vmax.f32 %v9249, 0.0
        %v9562 = vmax.f32 %v9254, 0.0
        %v9563 = vmax.f32 %v9257, 0.0
        %v9564 = vmax.f32 %v9262, 0.0
        %v9565 = vmax.f32 %v9265, 0.0
        %v9566 = vmax.f32 %v9270, 0.0
        %v9567 = vmax.f32 %v9273, 0.0
        %v9568 = vmax.f32 %v9278, 0.0
        %v9569 = vmax.f32 %v9281, 0.0
        %v9570 = vmax.f32 %v9286, 0.0
        %v9571 = vmax.f32 %v9289, 0.0
        %v9572 = vmax.f32 %v9294, 0.0
        %v9573 = vmax.f32 %v9297, 0.0
        %v9574 = vmax.f32 %v9302, 0.0
        %v9575 = vmax.f32 %v9305, 0.0
        %v9576 = vmax.f32 %v9310, 0.0
        %v9577 = vmax.f32 %v9313, 0.0
        %v9578 = vmax.f32 %v9318, 0.0
        %v9579 = vmax.f32 %v9321, 0.0
        %v9580 = vmax.f32 %v9324, %v9325
        %v9581 = vmax.f32 %v9580, %v9326
        %v9582 = vmax.f32 %v9581, %v9327
        %v9583 = vmax.f32 %v9582, %v9328
        %v9584 = vmax.f32 %v9583, %v9329
        %v9585 = vmax.f32 %v9584, %v9330
        %v9586 = vmax.f32 %v9585, %v9331
        %v9587 = vmax.f32 %v9586, %v9332
        %v9588 = vmax.f32 %v9587, %v9333
        %v9589 = vmax.f32 %v9588, %v9334
        %v9590 = vmax.f32 %v9589, %v9335
        %v9591 = vmax.f32 %v9590, %v9336
        %v9592 = vmax.f32 %v9591, %v9337
        %v9593 = vmax.f32 %v9592, %v9338
        %v9594 = vmax.f32 %v9593, %v9339
        %v9595 = vmax.f32 %v9594, %v9340
        %v9596 = vmax.f32 %v9595, %v9341
        %v9597 = vmax.f32 %v9596, %v9342
        %v9598 = vmax.f32 %v9597, %v9343
        %v9599 = vmax.f32 %v9598, %v9344
        %v9600 = vmax.f32 %v9599, %v9345
        %v9601 = vmax.f32 %v9600, %v9346
        %v9602 = vmax.f32 %v9601, %v9347
        %v9603 = vmax.f32 %v9602, %v9348
        %v9604 = vmax.f32 %v9603, %v9349
        %v9605 = vmax.f32 %v9604, %v9350
        %v9606 = vmax.f32 %v9605, %v9351
        %v9607 = vmax.f32 %v9606, %v9352
        %v9608 = vmax.f32 %v9607, %v9353
        %v9609 = vmax.f32 %v9608, %v9354
        %v9610 = vmax.f32 %v9609, %v9355
        %v9611 = vrot.slane %v9610, 4
        %v9612 = vmax.f32 %v9610, %v9611
        %v9613 = vrot.slane %v9612, 2
        %v9614 = vmax.f32 %v9612, %v9613
        %v9615 = vrot.slane %v9614, 1
        %v9616 = vmax.f32 %v9614, %v9615
        %v9617 = vmax.f32 %v9356, %v9357
        %v9618 = vmax.f32 %v9617, %v9358
        %v9619 = vmax.f32 %v9618, %v9359
        %v9620 = vmax.f32 %v9619, %v9360
        %v9621 = vmax.f32 %v9620, %v9361
        %v9622 = vmax.f32 %v9621, %v9362
        %v9623 = vmax.f32 %v9622, %v9363
        %v9624 = vmax.f32 %v9623, %v9364
        %v9625 = vmax.f32 %v9624, %v9365
        %v9626 = vmax.f32 %v9625, %v9366
        %v9627 = vmax.f32 %v9626, %v9367
        %v9628 = vmax.f32 %v9627, %v9368
        %v9629 = vmax.f32 %v9628, %v9369
        %v9630 = vmax.f32 %v9629, %v9370
        %v9631 = vmax.f32 %v9630, %v9371
        %v9632 = vmax.f32 %v9631, %v9372
        %v9633 = vmax.f32 %v9632, %v9373
        %v9634 = vmax.f32 %v9633, %v9374
        %v9635 = vmax.f32 %v9634, %v9375
        %v9636 = vmax.f32 %v9635, %v9376
        %v9637 = vmax.f32 %v9636, %v9377
        %v9638 = vmax.f32 %v9637, %v9378
        %v9639 = vmax.f32 %v9638, %v9379
        %v9640 = vmax.f32 %v9639, %v9380
        %v9641 = vmax.f32 %v9640, %v9381
        %v9642 = vmax.f32 %v9641, %v9382
        %v9643 = vmax.f32 %v9642, %v9383
        %v9644 = vmax.f32 %v9643, %v9384
        %v9645 = vmax.f32 %v9644, %v9385
        %v9646 = vmax.f32 %v9645, %v9386
        %v9647 = vmax.f32 %v9646, %v9387
        %v9648 = vrot.slane %v9647, 4
        %v9649 = vmax.f32 %v9647, %v9648
        %v9650 = vrot.slane %v9649, 2
        %v9651 = vmax.f32 %v9649, %v9650
        %v9652 = vrot.slane %v9651, 1
        %v9653 = vmax.f32 %v9651, %v9652
        %v9654 = vmax.f32 %v9388, %v9389
        %v9655 = vmax.f32 %v9654, %v9390
        %v9656 = vmax.f32 %v9655, %v9391
        %v9657 = vmax.f32 %v9656, %v9392
        %v9658 = vmax.f32 %v9657, %v9393
        %v9659 = vmax.f32 %v9658, %v9394
        %v9660 = vmax.f32 %v9659, %v9395
        %v9661 = vmax.f32 %v9660, %v9396
        %v9662 = vmax.f32 %v9661, %v9397
        %v9663 = vmax.f32 %v9662, %v9398
        %v9664 = vmax.f32 %v9663, %v9399
        %v9665 = vmax.f32 %v9664, %v9400
        %v9666 = vmax.f32 %v9665, %v9401
        %v9667 = vmax.f32 %v9666, %v9402
        %v9668 = vmax.f32 %v9667, %v9403
        %v9669 = vmax.f32 %v9668, %v9404
        %v9670 = vmax.f32 %v9669, %v9405
        %v9671 = vmax.f32 %v9670, %v9406
        %v9672 = vmax.f32 %v9671, %v9407
        %v9673 = vmax.f32 %v9672, %v9408
        %v9674 = vmax.f32 %v9673, %v9409
        %v9675 = vmax.f32 %v9674, %v9410
        %v9676 = vmax.f32 %v9675, %v9411
        %v9677 = vmax.f32 %v9676, %v9412
        %v9678 = vmax.f32 %v9677, %v9413
        %v9679 = vmax.f32 %v9678, %v9414
        %v9680 = vmax.f32 %v9679, %v9415
        %v9681 = vmax.f32 %v9680, %v9416
        %v9682 = vmax.f32 %v9681, %v9417
        %v9683 = vmax.f32 %v9682, %v9418
        %v9684 = vmax.f32 %v9683, %v9419
        %v9685 = vrot.slane %v9684, 4
        %v9686 = vmax.f32 %v9684, %v9685
        %v9687 = vrot.slane %v9686, 2
        %v9688 = vmax.f32 %v9686, %v9687
        %v9689 = vrot.slane %v9688, 1
        %v9690 = vmax.f32 %v9688, %v9689
        %v9691 = vmax.f32 %v9420, %v9421
        %v9692 = vmax.f32 %v9691, %v9422
        %v9693 = vmax.f32 %v9692, %v9423
        %v9694 = vmax.f32 %v9693, %v9424
        %v9695 = vmax.f32 %v9694, %v9425
        %v9696 = vmax.f32 %v9695, %v9426
        %v9697 = vmax.f32 %v9696, %v9427
        %v9698 = vmax.f32 %v9697, %v9428
        %v9699 = vmax.f32 %v9698, %v9429
        %v9700 = vmax.f32 %v9699, %v9430
        %v9701 = vmax.f32 %v9700, %v9431
        %v9702 = vmax.f32 %v9701, %v9432
        %v9703 = vmax.f32 %v9702, %v9433
        %v9704 = vmax.f32 %v9703, %v9434
        %v9705 = vmax.f32 %v9704, %v9435
        %v9706 = vmax.f32 %v9705, %v9436
        %v9707 = vmax.f32 %v9706, %v9437
        %v9708 = vmax.f32 %v9707, %v9438
        %v9709 = vmax.f32 %v9708, %v9439
        %v9710 = vmax.f32 %v9709, %v9440
        %v9711 = vmax.f32 %v9710, %v9441
        %v9712 = vmax.f32 %v9711, %v9442
        %v9713 = vmax.f32 %v9712, %v9443
        %v9714 = vmax.f32 %v9713, %v9444
        %v9715 = vmax.f32 %v9714, %v9445
        %v9716 = vmax.f32 %v9715, %v9446
        %v9717 = vmax.f32 %v9716, %v9447
        %v9718 = vmax.f32 %v9717, %v9448
        %v9719 = vmax.f32 %v9718, %v9449
        %v9720 = vmax.f32 %v9719, %v9450
        %v9721 = vmax.f32 %v9720, %v9451
        %v9722 = vrot.slane %v9721, 4
        %v9723 = vmax.f32 %v9721, %v9722
        %v9724 = vrot.slane %v9723, 2
        %v9725 = vmax.f32 %v9723, %v9724
        %v9726 = vrot.slane %v9725, 1
        %v9727 = vmax.f32 %v9725, %v9726
        %v9728 = vmax.f32 %v9452, %v9453
        %v9729 = vmax.f32 %v9728, %v9454
        %v9730 = vmax.f32 %v9729, %v9455
        %v9731 = vmax.f32 %v9730, %v9456
        %v9732 = vmax.f32 %v9731, %v9457
        %v9733 = vmax.f32 %v9732, %v9458
        %v9734 = vmax.f32 %v9733, %v9459
        %v9735 = vmax.f32 %v9734, %v9460
        %v9736 = vmax.f32 %v9735, %v9461
        %v9737 = vmax.f32 %v9736, %v9462
        %v9738 = vmax.f32 %v9737, %v9463
        %v9739 = vmax.f32 %v9738, %v9464
        %v9740 = vmax.f32 %v9739, %v9465
        %v9741 = vmax.f32 %v9740, %v9466
        %v9742 = vmax.f32 %v9741, %v9467
        %v9743 = vmax.f32 %v9742, %v9468
        %v9744 = vmax.f32 %v9743, %v9469
        %v9745 = vmax.f32 %v9744, %v9470
        %v9746 = vmax.f32 %v9745, %v9471
        %v9747 = vmax.f32 %v9746, %v9472
        %v9748 = vmax.f32 %v9747, %v9473
        %v9749 = vmax.f32 %v9748, %v9474
        %v9750 = vmax.f32 %v9749, %v9475
        %v9751 = vmax.f32 %v9750, %v9476
        %v9752 = vmax.f32 %v9751, %v9477
        %v9753 = vmax.f32 %v9752, %v9478
        %v9754 = vmax.f32 %v9753, %v9479
        %v9755 = vmax.f32 %v9754, %v9480
        %v9756 = vmax.f32 %v9755, %v9481
        %v9757 = vmax.f32 %v9756, %v9482
        %v9758 = vmax.f32 %v9757, %v9483
        %v9759 = vrot.slane %v9758, 4
        %v9760 = vmax.f32 %v9758, %v9759
        %v9761 = vrot.slane %v9760, 2
        %v9762 = vmax.f32 %v9760, %v9761
        %v9763 = vrot.slane %v9762, 1
        %v9764 = vmax.f32 %v9762, %v9763
        %v9765 = vmax.f32 %v9484, %v9485
        %v9766 = vmax.f32 %v9765, %v9486
        %v9767 = vmax.f32 %v9766, %v9487
        %v9768 = vmax.f32 %v9767, %v9488
        %v9769 = vmax.f32 %v9768, %v9489
        %v9770 = vmax.f32 %v9769, %v9490
        %v9771 = vmax.f32 %v9770, %v9491
        %v9772 = vmax.f32 %v9771, %v9492
        %v9773 = vmax.f32 %v9772, %v9493
        %v9774 = vmax.f32 %v9773, %v9494
        %v9775 = vmax.f32 %v9774, %v9495
        %v9776 = vmax.f32 %v9775, %v9496
        %v9777 = vmax.f32 %v9776, %v9497
        %v9778 = vmax.f32 %v9777, %v9498
        %v9779 = vmax.f32 %v9778, %v9499
        %v9780 = vmax.f32 %v9779, %v9500
        %v9781 = vmax.f32 %v9780, %v9501
        %v9782 = vmax.f32 %v9781, %v9502
        %v9783 = vmax.f32 %v9782, %v9503
        %v9784 = vmax.f32 %v9783, %v9504
        %v9785 = vmax.f32 %v9784, %v9505
        %v9786 = vmax.f32 %v9785, %v9506
        %v9787 = vmax.f32 %v9786, %v9507
        %v9788 = vmax.f32 %v9787, %v9508
        %v9789 = vmax.f32 %v9788, %v9509
        %v9790 = vmax.f32 %v9789, %v9510
        %v9791 = vmax.f32 %v9790, %v9511
        %v9792 = vmax.f32 %v9791, %v9512
        %v9793 = vmax.f32 %v9792, %v9513
        %v9794 = vmax.f32 %v9793, %v9514
        %v9795 = vmax.f32 %v9794, %v9515
        %v9796 = vrot.slane %v9795, 4
        %v9797 = vmax.f32 %v9795, %v9796
        %v9798 = vrot.slane %v9797, 2
        %v9799 = vmax.f32 %v9797, %v9798
        %v9800 = vrot.slane %v9799, 1
        %v9801 = vmax.f32 %v9799, %v9800
        %v9802 = vmax.f32 %v9516, %v9517
        %v9803 = vmax.f32 %v9802, %v9518
        %v9804 = vmax.f32 %v9803, %v9519
        %v9805 = vmax.f32 %v9804, %v9520
        %v9806 = vmax.f32 %v9805, %v9521
        %v9807 = vmax.f32 %v9806, %v9522
        %v9808 = vmax.f32 %v9807, %v9523
        %v9809 = vmax.f32 %v9808, %v9524
        %v9810 = vmax.f32 %v9809, %v9525
        %v9811 = vmax.f32 %v9810, %v9526
        %v9812 = vmax.f32 %v9811, %v9527
        %v9813 = vmax.f32 %v9812, %v9528
        %v9814 = vmax.f32 %v9813, %v9529
        %v9815 = vmax.f32 %v9814, %v9530
        %v9816 = vmax.f32 %v9815, %v9531
        %v9817 = vmax.f32 %v9816, %v9532
        %v9818 = vmax.f32 %v9817, %v9533
        %v9819 = vmax.f32 %v9818, %v9534
        %v9820 = vmax.f32 %v9819, %v9535
        %v9821 = vmax.f32 %v9820, %v9536
        %v9822 = vmax.f32 %v9821, %v9537
        %v9823 = vmax.f32 %v9822, %v9538
        %v9824 = vmax.f32 %v9823, %v9539
        %v9825 = vmax.f32 %v9824, %v9540
        %v9826 = vmax.f32 %v9825, %v9541
        %v9827 = vmax.f32 %v9826, %v9542
        %v9828 = vmax.f32 %v9827, %v9543
        %v9829 = vmax.f32 %v9828, %v9544
        %v9830 = vmax.f32 %v9829, %v9545
        %v9831 = vmax.f32 %v9830, %v9546
        %v9832 = vmax.f32 %v9831, %v9547
        %v9833 = vrot.slane %v9832, 4
        %v9834 = vmax.f32 %v9832, %v9833
        %v9835 = vrot.slane %v9834, 2
        %v9836 = vmax.f32 %v9834, %v9835
        %v9837 = vrot.slane %v9836, 1
        %v9838 = vmax.f32 %v9836, %v9837
        %v9839 = vmax.f32 %v9548, %v9549
        %v9840 = vmax.f32 %v9839, %v9550
        %v9841 = vmax.f32 %v9840, %v9551
        %v9842 = vmax.f32 %v9841, %v9552
        %v9843 = vmax.f32 %v9842, %v9553
        %v9844 = vmax.f32 %v9843, %v9554
        %v9845 = vmax.f32 %v9844, %v9555
        %v9846 = vmax.f32 %v9845, %v9556
        %v9847 = vmax.f32 %v9846, %v9557
        %v9848 = vmax.f32 %v9847, %v9558
        %v9849 = vmax.f32 %v9848, %v9559
        %v9850 = vmax.f32 %v9849, %v9560
        %v9851 = vmax.f32 %v9850, %v9561
        %v9852 = vmax.f32 %v9851, %v9562
        %v9853 = vmax.f32 %v9852, %v9563
        %v9854 = vmax.f32 %v9853, %v9564
        %v9855 = vmax.f32 %v9854, %v9565
        %v9856 = vmax.f32 %v9855, %v9566
        %v9857 = vmax.f32 %v9856, %v9567
        %v9858 = vmax.f32 %v9857, %v9568
        %v9859 = vmax.f32 %v9858, %v9569
        %v9860 = vmax.f32 %v9859, %v9570
        %v9861 = vmax.f32 %v9860, %v9571
        %v9862 = vmax.f32 %v9861, %v9572
        %v9863 = vmax.f32 %v9862, %v9573
        %v9864 = vmax.f32 %v9863, %v9574
        %v9865 = vmax.f32 %v9864, %v9575
        %v9866 = vmax.f32 %v9865, %v9576
        %v9867 = vmax.f32 %v9866, %v9577
        %v9868 = vmax.f32 %v9867, %v9578
        %v9869 = vmax.f32 %v9868, %v9579
        %v9870 = vrot.slane %v9869, 4
        %v9871 = vmax.f32 %v9869, %v9870
        %v9872 = vrot.slane %v9871, 2
        %v9873 = vmax.f32 %v9871, %v9872
        %v9874 = vrot.slane %v9873, 1
        %v9875 = vmax.f32 %v9873, %v9874
        %v9876 = vpack.c.bf16 %v9616, %v9616
        %v9877 = vpack.c.bf16 %v9653, %v9653
        %v9878 = vpack.c.bf16 %v9690, %v9690
        %v9879 = vpack.c.bf16 %v9727, %v9727
        %v9880 = vpack.c.bf16 %v9764, %v9764
        %v9881 = vpack.c.bf16 %v9801, %v9801
        %v9882 = vpack.c.bf16 %v9838, %v9838
        %v9883 = vpack.c.bf16 %v9875, %v9875
        %v9884 = vld [vmem:[%s7] sm:$0xff]
        %v9885 = vld [vmem:[%s7 + $0x8] sm:$0xff]
        %v9886 = vld [vmem:[%s7 + $0x10] sm:$0xff]
        %v9887 = vld [vmem:[%s7 + $0x18] sm:$0xff]
        %v9888 = vld [vmem:[%s7 + $0x20] sm:$0xff]
        %v9889 = vld [vmem:[%s7 + $0x28] sm:$0xff]
        %v9890 = vld [vmem:[%s7 + $0x30] sm:$0xff]
        %v9891 = vld [vmem:[%s7 + $0x38] sm:$0xff]
        %v9892 = vld [vmem:[%s7 + $0x40] sm:$0xff]
        %v9893 = vld [vmem:[%s7 + $0x48] sm:$0xff]
        %v9894 = vld [vmem:[%s7 + $0x50] sm:$0xff]
        %v9895 = vld [vmem:[%s7 + $0x58] sm:$0xff]
        %v9896 = vld [vmem:[%s7 + $0x60] sm:$0xff]
        %v9897 = vld [vmem:[%s7 + $0x68] sm:$0xff]
        %v9898 = vld [vmem:[%s7 + $0x70] sm:$0xff]
        %v9899 = vld [vmem:[%s7 + $0x78] sm:$0xff]
        %v9900 = vld [vmem:[%s8] sm:$0x3]
        %v9902 = vlaneseq
        %v9903 = vshrl.u32 %v9902, 7
        %v9904 = vsub.s32 0, %v9903
        %v9905 = vrot.slane %v9900, %v9904
        %v9906 = vlaneseq
        %v9907 = vshrl.u32 %v9906, 7
        %v9908 = vsub.s32 1, %v9907
        %v9909 = vrot.slane %v9900, %v9908
        %v9920 = vunpack.c.l.b16 %v9876
        %v9921 = vunpack.c.l.b16 %v9877
        %v9922 = vunpack.c.l.b16 %v9878
        %v9923 = vunpack.c.l.b16 %v9879
        %v9924 = vunpack.c.l.b16 %v9880
        %v9925 = vunpack.c.l.b16 %v9881
        %v9926 = vunpack.c.l.b16 %v9882
        %v9927 = vunpack.c.l.b16 %v9883
        %vm9928 = vcmask 1041409
        %v9929 = vsel %vm9928, %v9921, %v9920
        %vm9930 = vcmask 1042434
        %v9931 = vsel %vm9930, %v9922, %v9929
        %vm9932 = vcmask 1043459
        %v9933 = vsel %vm9932, %v9923, %v9931
        %vm9934 = vcmask 1044484
        %v9935 = vsel %vm9934, %v9924, %v9933
        %vm9936 = vcmask 1045509
        %v9937 = vsel %vm9936, %v9925, %v9935
        %vm9938 = vcmask 1046534
        %v9939 = vsel %vm9938, %v9926, %v9937
        %vm9940 = vcmask 1047559
        %v9941 = vsel %vm9940, %v9927, %v9939
        %v9942 = vpack.c.b16 %v9941, %v9941
        %v9960 = vunpack.c.l.b16 %v9884
        %v9961 = vunpack.c.h.b16 %v9884
        %v9962 = vunpack.c.l.b16 %v9885
        %v9963 = vunpack.c.h.b16 %v9885
        %v9964 = vunpack.c.l.b16 %v9886
        %v9965 = vunpack.c.h.b16 %v9886
        %v9966 = vunpack.c.l.b16 %v9887
        %v9967 = vunpack.c.h.b16 %v9887
        %v9968 = vunpack.c.l.b16 %v9888
        %v9969 = vunpack.c.h.b16 %v9888
        %v9970 = vunpack.c.l.b16 %v9889
        %v9971 = vunpack.c.h.b16 %v9889
        %v9972 = vunpack.c.l.b16 %v9890
        %v9973 = vunpack.c.h.b16 %v9890
        %v9974 = vunpack.c.l.b16 %v9891
        %v9975 = vunpack.c.h.b16 %v9891
        %v9976 = vunpack.c.l.b16 %v9892
        %v9977 = vunpack.c.h.b16 %v9892
        %v9978 = vunpack.c.l.b16 %v9893
        %v9979 = vunpack.c.h.b16 %v9893
        %v9980 = vunpack.c.l.b16 %v9894
        %v9981 = vunpack.c.h.b16 %v9894
        %v9982 = vunpack.c.l.b16 %v9895
        %v9983 = vunpack.c.h.b16 %v9895
        %v9984 = vunpack.c.l.b16 %v9896
        %v9985 = vunpack.c.h.b16 %v9896
        %v9986 = vunpack.c.l.b16 %v9897
        %v9987 = vunpack.c.h.b16 %v9897
        %v9988 = vunpack.c.l.b16 %v9898
        %v9989 = vunpack.c.h.b16 %v9898
        %v9990 = vunpack.c.l.b16 %v9899
        %v9991 = vunpack.c.h.b16 %v9899
        %v9992 = vpack.c.b16 %v9962, %v9960
        %v9993 = vpack.c.b16 %v9963, %v9961
        %v9994 = vpack.c.b16 %v9966, %v9964
        %v9995 = vpack.c.b16 %v9967, %v9965
        %v9996 = vpack.c.b16 %v9970, %v9968
        %v9997 = vpack.c.b16 %v9971, %v9969
        %v9998 = vpack.c.b16 %v9974, %v9972
        %v9999 = vpack.c.b16 %v9975, %v9973
        %v10000 = vpack.c.b16 %v9978, %v9976
        %v10001 = vpack.c.b16 %v9979, %v9977
        %v10002 = vpack.c.b16 %v9982, %v9980
        %v10003 = vpack.c.b16 %v9983, %v9981
        %v10004 = vpack.c.b16 %v9986, %v9984
        %v10005 = vpack.c.b16 %v9987, %v9985
        %v10006 = vpack.c.b16 %v9990, %v9988
        %v10007 = vpack.c.b16 %v9991, %v9989
        %10024 = vmatprep.subr.bf16.mxu0 %v9993
        %10025 = vmatpush1.bf16.msra.mxu0 %v9992
        %10026 = vmatprep.subr.bf16.mxu0 %v9995
        %10027 = vmatpush1.bf16.msra.mxu0 %v9994
        %10028 = vmatprep.subr.bf16.mxu0 %v9997
        %10029 = vmatpush1.bf16.msra.mxu0 %v9996
        %10030 = vmatprep.subr.bf16.mxu0 %v9999
        %10031 = vmatpush1.bf16.msra.mxu0 %v9998
        %10032 = vmatprep.subr.bf16.mxu0 %v10001
        %10033 = vmatpush1.bf16.msra.mxu0 %v10000
        %10034 = vmatprep.subr.bf16.mxu0 %v10003
        %10035 = vmatpush1.bf16.msra.mxu0 %v10002
        %10036 = vmatprep.subr.bf16.mxu0 %v10005
        %10037 = vmatpush1.bf16.msra.mxu0 %v10004
        %10038 = vmatprep.subr.bf16.mxu0 %v10007
        %10039 = vmatpush1.bf16.msra.mxu0 %v10006
        %10040 = vmatprep.subr.bf16.mxu0 0
        %10041 = vmatpush1.bf16.msra.mxu0 0
        %10042 = vmatprep.subr.bf16.mxu0 0
        %10043 = vmatpush1.bf16.msra.mxu0 0
        %10044 = vmatprep.subr.bf16.mxu0 0
        %10045 = vmatpush1.bf16.msra.mxu0 0
        %10046 = vmatprep.subr.bf16.mxu0 0
        %10047 = vmatpush1.bf16.msra.mxu0 0
        %10048 = vmatprep.subr.bf16.mxu0 0
        %10049 = vmatpush1.bf16.msra.mxu0 0
        %10050 = vmatprep.subr.bf16.mxu0 0
        %10051 = vmatpush1.bf16.msra.mxu0 0
        %10052 = vmatprep.subr.bf16.mxu0 0
        %10053 = vmatpush1.bf16.msra.mxu0 0
        %10054 = vmatprep.subr.bf16.mxu0 0
        %10055 = vmatpush1.bf16.msra.mxu0 0
        %10056 = vmatprep.mubr.bf16.mxu0 0
        %10057 = vmatmul.mubr.bf16.gmra.mrb[0].mxu0 %v9942
        %v10058 = vpop.f32.mrb[0].mxu0
        %v10059 = vadd.f32 %v9905, %v10058
        %v10060 = vpop.f32.mrb[0].mxu0
        %v10061 = vadd.f32 %v9909, %v10060
        %v10062 = vpop.f32.mrb[0].mxu0
        %v10063 = vpop.f32.mrb[0].mxu0
        %10064 = vdwg.mxu0
        %v10065 = vmax.f32 %v10059, 0.0
        %v10066 = vmax.f32 %v10061, 0.0
        %v10067 = vpack.c.bf16 %v10065, %v10065
        %v10068 = vpack.c.bf16 %v10066, %v10066
        %v10069 = vld [vmem:[%s9] sm:$0xf]
        %v10070 = vld [vmem:[%s9 + $0x4] sm:$0xf]
        %v10071 = vld [vmem:[%s9 + $0x8] sm:$0xf]
        %v10072 = vld [vmem:[%s9 + $0xc] sm:$0xf]
        %v10073 = vld [vmem:[%s9 + $0x10] sm:$0xf]
        %v10074 = vld [vmem:[%s9 + $0x14] sm:$0xf]
        %v10075 = vld [vmem:[%s9 + $0x18] sm:$0xf]
        %v10076 = vld [vmem:[%s9 + $0x1c] sm:$0xf]
        %v10077 = vld [vmem:[%s9 + $0x20] sm:$0xf]
        %v10078 = vld [vmem:[%s9 + $0x24] sm:$0xf]
        %v10079 = vld [vmem:[%s9 + $0x28] sm:$0xf]
        %v10080 = vld [vmem:[%s9 + $0x2c] sm:$0xf]
        %v10081 = vld [vmem:[%s9 + $0x30] sm:$0xf]
        %v10082 = vld [vmem:[%s9 + $0x34] sm:$0xf]
        %v10083 = vld [vmem:[%s9 + $0x38] sm:$0xf]
        %v10084 = vld [vmem:[%s9 + $0x3c] sm:$0xf]
        %v10085 = vld [vmem:[%s9 + $0x40] sm:$0xf]
        %v10086 = vld [vmem:[%s9 + $0x44] sm:$0xf]
        %v10087 = vld [vmem:[%s9 + $0x48] sm:$0xf]
        %v10088 = vld [vmem:[%s9 + $0x4c] sm:$0xf]
        %v10089 = vld [vmem:[%s9 + $0x50] sm:$0xf]
        %v10090 = vld [vmem:[%s9 + $0x54] sm:$0xf]
        %v10091 = vld [vmem:[%s9 + $0x58] sm:$0xf]
        %v10092 = vld [vmem:[%s9 + $0x5c] sm:$0xf]
        %v10093 = vld [vmem:[%s9 + $0x60] sm:$0xf]
        %v10094 = vld [vmem:[%s9 + $0x64] sm:$0xf]
        %v10095 = vld [vmem:[%s9 + $0x68] sm:$0xf]
        %v10096 = vld [vmem:[%s9 + $0x6c] sm:$0xf]
        %v10097 = vld [vmem:[%s9 + $0x70] sm:$0xf]
        %v10098 = vld [vmem:[%s9 + $0x74] sm:$0xf]
        %v10099 = vld [vmem:[%s9 + $0x78] sm:$0xf]
        %v10100 = vld [vmem:[%s9 + $0x7c] sm:$0xf]
        %v10101 = vld [vmem:[%s10] sm:$0x1]
        %v10103 = vlaneseq
        %v10104 = vshrl.u32 %v10103, 7
        %v10105 = vsub.s32 0, %v10104
        %v10106 = vrot.slane %v10101, %v10105
        %v10140 = vunpack.c.l.b16 %v10069
        %v10141 = vunpack.c.l.b16 %v10070
        %v10142 = vunpack.c.l.b16 %v10071
        %v10143 = vunpack.c.l.b16 %v10072
        %v10144 = vunpack.c.l.b16 %v10073
        %v10145 = vunpack.c.l.b16 %v10074
        %v10146 = vunpack.c.l.b16 %v10075
        %v10147 = vunpack.c.l.b16 %v10076
        %v10148 = vunpack.c.l.b16 %v10077
        %v10149 = vunpack.c.l.b16 %v10078
        %v10150 = vunpack.c.l.b16 %v10079
        %v10151 = vunpack.c.l.b16 %v10080
        %v10152 = vunpack.c.l.b16 %v10081
        %v10153 = vunpack.c.l.b16 %v10082
        %v10154 = vunpack.c.l.b16 %v10083
        %v10155 = vunpack.c.l.b16 %v10084
        %v10156 = vunpack.c.l.b16 %v10085
        %v10157 = vunpack.c.l.b16 %v10086
        %v10158 = vunpack.c.l.b16 %v10087
        %v10159 = vunpack.c.l.b16 %v10088
        %v10160 = vunpack.c.l.b16 %v10089
        %v10161 = vunpack.c.l.b16 %v10090
        %v10162 = vunpack.c.l.b16 %v10091
        %v10163 = vunpack.c.l.b16 %v10092
        %v10164 = vunpack.c.l.b16 %v10093
        %v10165 = vunpack.c.l.b16 %v10094
        %v10166 = vunpack.c.l.b16 %v10095
        %v10167 = vunpack.c.l.b16 %v10096
        %v10168 = vunpack.c.l.b16 %v10097
        %v10169 = vunpack.c.l.b16 %v10098
        %v10170 = vunpack.c.l.b16 %v10099
        %v10171 = vunpack.c.l.b16 %v10100
        %v10172 = vpack.c.b16 %v10141, %v10140
        %v10173 = vpack.c.b16 %v10143, %v10142
        %v10174 = vpack.c.b16 %v10145, %v10144
        %v10175 = vpack.c.b16 %v10147, %v10146
        %v10176 = vpack.c.b16 %v10149, %v10148
        %v10177 = vpack.c.b16 %v10151, %v10150
        %v10178 = vpack.c.b16 %v10153, %v10152
        %v10179 = vpack.c.b16 %v10155, %v10154
        %v10180 = vpack.c.b16 %v10157, %v10156
        %v10181 = vpack.c.b16 %v10159, %v10158
        %v10182 = vpack.c.b16 %v10161, %v10160
        %v10183 = vpack.c.b16 %v10163, %v10162
        %v10184 = vpack.c.b16 %v10165, %v10164
        %v10185 = vpack.c.b16 %v10167, %v10166
        %v10186 = vpack.c.b16 %v10169, %v10168
        %v10187 = vpack.c.b16 %v10171, %v10170
        %10204 = vmatprep.subr.bf16.mxu0 0
        %10205 = vmatpush1.bf16.msra.mxu0 %v10172
        %10206 = vmatprep.subr.bf16.mxu0 0
        %10207 = vmatpush1.bf16.msra.mxu0 %v10173
        %10208 = vmatprep.subr.bf16.mxu0 0
        %10209 = vmatpush1.bf16.msra.mxu0 %v10174
        %10210 = vmatprep.subr.bf16.mxu0 0
        %10211 = vmatpush1.bf16.msra.mxu0 %v10175
        %10212 = vmatprep.subr.bf16.mxu0 0
        %10213 = vmatpush1.bf16.msra.mxu0 %v10176
        %10214 = vmatprep.subr.bf16.mxu0 0
        %10215 = vmatpush1.bf16.msra.mxu0 %v10177
        %10216 = vmatprep.subr.bf16.mxu0 0
        %10217 = vmatpush1.bf16.msra.mxu0 %v10178
        %10218 = vmatprep.subr.bf16.mxu0 0
        %10219 = vmatpush1.bf16.msra.mxu0 %v10179
        %10220 = vmatprep.subr.bf16.mxu0 0
        %10221 = vmatpush1.bf16.msra.mxu0 %v10180
        %10222 = vmatprep.subr.bf16.mxu0 0
        %10223 = vmatpush1.bf16.msra.mxu0 %v10181
        %10224 = vmatprep.subr.bf16.mxu0 0
        %10225 = vmatpush1.bf16.msra.mxu0 %v10182
        %10226 = vmatprep.subr.bf16.mxu0 0
        %10227 = vmatpush1.bf16.msra.mxu0 %v10183
        %10228 = vmatprep.subr.bf16.mxu0 0
        %10229 = vmatpush1.bf16.msra.mxu0 %v10184
        %10230 = vmatprep.subr.bf16.mxu0 0
        %10231 = vmatpush1.bf16.msra.mxu0 %v10185
        %10232 = vmatprep.subr.bf16.mxu0 0
        %10233 = vmatpush1.bf16.msra.mxu0 %v10186
        %10234 = vmatprep.subr.bf16.mxu0 0
        %10235 = vmatpush1.bf16.msra.mxu0 %v10187
        %10236 = vmatprep.mubr.bf16.mxu0 %v10068
        %10237 = vmatmul.mubr.bf16.gmra.mrb[0].mxu0 %v10067
        %v10238 = vpop.f32.mrb[0].mxu0
        %v10239 = vadd.f32 %v10106, %v10238
        %v10240 = vpop.f32.mrb[0].mxu0
        %v10241 = vpop.f32.mrb[0].mxu0
        %v10242 = vpop.f32.mrb[0].mxu0
        %10243 = vdwg.mxu0
        %10244 = vst [vmem:[%s382] sm:$0xff] %v10239
        %s10245 = sand.u32 %s269, 1
        %s10246 = scalar_lea.sflag [#allocation3], %s10245
        %s10247 = sand.u32 %s269, 1
        %s10248 = smul.addr %s10247, 8
        %s10249 = scalar_lea.vmem [#allocation2], %s10248
        // Predicated region
        $region65: #{tpu_custom_call.1} parent=63 // pred_check
          %p10250 = pneg %p279
        $region66: #{tpu_custom_call.1} parent=63 // pred_check_branch
          %10252 = sbr.rel (%p10250) target = $region68
        $region67: #{tpu_custom_call.1} parent=63 // pred_region
          %s10254 = ssub.s32 128, 128
          %10255 = vsyncadd %s10246, %s10254
          %s10256 = smul.addr %s25, 128
          %s10257 = scalar_lea.hbm %s11, %s10256
          %s10259 = sshll.u32 %s10249, 4
          %s10260 = int_to_ptr.vmem [resolvable:$true] %s10259
          %10262 = dma.vmem_to_hbm [thread:$0]  %s10260, 128, %s10257, %s10246
        $region68: #{tpu_custom_call.1} parent=63 // pred_fallthru
          _
      $region64: #{tpu_custom_call.1} parent=5 // pred_fallthru
        _
      %p10263 = scmp.le.s32.totalorder 2, %s20
      // Predicated region
      $region69: #{tpu_custom_call.1} parent=5 // pred_check
        %p10264 = pneg %p10263
      $region70: #{tpu_custom_call.1} parent=5 // pred_check_branch
        %10266 = sbr.rel (%p10264) target = $region72
      $region71: #{tpu_custom_call.1} parent=5 // pred_region
        %s10267 = ssub.s32 %s20, 2
        // Predicated region
        $region73: #{tpu_custom_call.1} parent=71 // pred_check
          %p10268 = pneg %p285
        $region74: #{tpu_custom_call.1} parent=71 // pred_check_branch
          %10270 = sbr.rel (%p10268) target = $region76
        $region75: #{tpu_custom_call.1} parent=71 // pred_region
          %s10271 = sand.u32 %s270, 1
          %s10272 = scalar_lea.sflag [#allocation3], %s10271
          %s10273 = sand.u32 %s270, 1
          %s10274 = smul.addr %s10273, 8
          %s10275 = scalar_lea.vmem [#allocation2], %s10274
          %10276 = dma.done %s10272, 128
        $region76: #{tpu_custom_call.1} parent=71 // pred_fallthru
          _
      $region72: #{tpu_custom_call.1} parent=5 // pred_fallthru
        _
    $region6: #{tpu_custom_call.1} parent=1 // loop_footer
      %s24 = sadd.s32 1, %s20
    $region7: #{tpu_custom_call.1} parent=1 // loop_footer_branch
      %19 = sbr.rel target = $region3
    $region8: #{tpu_custom_call.1} parent=1 // loop_exit
      _
    %10277 = vsyncpa [#allocation3], 1
    %s10278 = scalar_lea.sflag [#allocation3], 1
    %10279 = vsyncpa %s10278, 1

</llo_original>
